<compile_context>
chip_gen: v5e
topology: v5e:2x2
jax: 0.10.0
libtpu: 0.0.40
codegen_flags: <defaults>
</compile_context>

<pallas_src>
import functools

import jax
import jax.numpy as jnp
from jax.experimental import pallas as pl
from jax.experimental.pallas import tpu as pltpu


# ----------------------------------------------------------------------------
# In-kernel helper: 2x2 pixel interleave of the 4 transposed-conv phase planes.
# p2d[k] is the GEMM output for kernel tap (kh, kw) = (k // 2, k % 2), shape (H*W, C).
# Returns the full-resolution (2H, 2W, C) upsample, built entirely in VMEM/vregs.
# ----------------------------------------------------------------------------
def _upsample2x2_interleave(p2d, H, W, C):
    def cols(pe, po):
        # width interleave: out[:, 2w] = pe[:, w], out[:, 2w+1] = po[:, w]
        e = jnp.broadcast_to(pe.reshape(H, W, 1, C), (H, W, 2, C)).reshape(H, 2 * W, C)
        o = jnp.broadcast_to(po.reshape(H, W, 1, C), (H, W, 2, C)).reshape(H, 2 * W, C)
        col = jax.lax.broadcasted_iota(jnp.int32, (H, 2 * W, C), 1)
        return jnp.where((col & 1) == 0, e, o)

    r0 = cols(p2d[0], p2d[1])          # output rows 2h   (kh = 0)
    r1 = cols(p2d[2], p2d[3])          # output rows 2h+1 (kh = 1)
    # row interleave via a major-dim stack + trivial row-major reshape
    return jnp.concatenate(
        [r0.reshape(H, 1, 2 * W, C), r1.reshape(H, 1, 2 * W, C)], axis=1
    ).reshape(2 * H, 2 * W, C)


# ----------------------------------------------------------------------------
# Fused per-stage kernel: upconv (2x2/stride2) + concat + conv3x3 + ReLU + conv3x3
# ----------------------------------------------------------------------------
def _stage_kernel(x_ref, y_ref, wup_ref, bup_ref, w1y_ref, w1x_ref, b1_ref,
                  w2_ref, b2_ref, o_ref, xpy_ref, xpx_ref, xph_ref,
                  *, H, W, cin, cy, cup, cmid, cout):
    Ho, Wo = 2 * H, 2 * W

    # ---- zero only the 1-pixel halo of the padded buffers (interiors are fully
    #      overwritten below), done every step so it is megacore-safe.
    for ref in (xpy_ref, xpx_ref, xph_ref):
        Hp, Wp, C = ref.shape
        ref[0:1, :, :] = jnp.zeros((1, Wp, C), ref.dtype)
        ref[Hp - 1:Hp, :, :] = jnp.zeros((1, Wp, C), ref.dtype)
        ref[:, 0:1, :] = jnp.zeros((Hp, 1, C), ref.dtype)
        ref[:, Wp - 1:Wp, :] = jnp.zeros((Hp, 1, C), ref.dtype)

    # ---- ConvTranspose2d(cin, cup, 2, stride=2): four per-phase GEMMs, fused.
    x2 = x_ref[0].reshape(H * W, cin)
    phases = [
        jnp.dot(x2, wup_ref[k], preferred_element_type=jnp.float32) + bup_ref[...]
        for k in range(4)
    ]
    up_full = _upsample2x2_interleave(phases, H, W, cup)       # (2H, 2W, cup), f32

    # ---- channel concat as two separate zero-padded buffers (no lane offset).
    xpy_ref[1:Ho + 1, 1:Wo + 1, :] = y_ref[0]                  # skip channels
    xpx_ref[1:Ho + 1, 1:Wo + 1, :] = up_full.astype(xpx_ref.dtype)

    # ---- conv1 (3x3, pad 1) + ReLU: 9 shifted matmuls per concat half, f32 acc.
    xpy = xpy_ref[...]
    xpx = xpx_ref[...]
    acc1 = jnp.zeros((Ho * Wo, cmid), jnp.float32) + b1_ref[...]
    for kh in range(3):
        for kw in range(3):
            k = kh * 3 + kw
            acc1 = acc1 + jnp.dot(
                xpy[kh:kh + Ho, kw:kw + Wo, :].reshape(Ho * Wo, cy),
                w1y_ref[k], preferred_element_type=jnp.float32)
            acc1 = acc1 + jnp.dot(
                xpx[kh:kh + Ho, kw:kw + Wo, :].reshape(Ho * Wo, cup),
                w1x_ref[k], preferred_element_type=jnp.float32)
    h1 = jnp.maximum(acc1, 0.0)                                 # (Ho*Wo, cmid), f32

    # ---- conv2 (3x3, pad 1): the ReLU intermediate never leaves VMEM.
    xph_ref[1:Ho + 1, 1:Wo + 1, :] = h1.reshape(Ho, Wo, cmid).astype(xph_ref.dtype)
    xph = xph_ref[...]
    acc2 = jnp.zeros((Ho * Wo, cout), jnp.float32) + b2_ref[...]
    for kh in range(3):
        for kw in range(3):
            k = kh * 3 + kw
            acc2 = acc2 + jnp.dot(
                xph[kh:kh + Ho, kw:kw + Wo, :].reshape(Ho * Wo, cmid),
                w2_ref[k], preferred_element_type=jnp.float32)

    o_ref[0] = acc2.reshape(Ho, Wo, cout).astype(o_ref.dtype)


def stage_forward(x_nhwc, y_nhwc, p, *, compute_dtype=jnp.float32):
    """One decoder stage: upconv(x) -> cat([y, up]) -> conv3x3 -> ReLU -> conv3x3."""
    N, H, W, cin = x_nhwc.shape
    Ny, Ho, Wo, cy = y_nhwc.shape
    assert Ny == N and Ho == 2 * H and Wo == 2 * W
    cup = p["w_up"].shape[1]
    cmid = p["w1"].shape[0]
    cout = p["w2"].shape[0]
    assert p["w_up"].shape == (cin, cup, 2, 2)
    assert p["w1"].shape == (cmid, cy + cup, 3, 3)
    assert p["w2"].shape == (cout, cmid, 3, 3)

    # Weight prep (done once per stage, outside the kernel).
    # upconv: (Cin, Cup, 2, 2) -> (4, Cin, Cup), phase k = 2*kh + kw.
    wup = jnp.transpose(p["w_up"], (2, 3, 0, 1)).reshape(4, cin, cup).astype(compute_dtype)
    bup = p["b_up"].reshape(1, cup).astype(jnp.float32)
    # conv1 weight split along K into the skip half and the upconv half,
    # each (9, C, Cmid) with tap k = 3*kh + kw.
    w1y = jnp.transpose(p["w1"][:, :cy], (2, 3, 1, 0)).reshape(9, cy, cmid).astype(compute_dtype)
    w1x = jnp.transpose(p["w1"][:, cy:], (2, 3, 1, 0)).reshape(9, cup, cmid).astype(compute_dtype)
    b1 = p["b1"].reshape(1, cmid).astype(jnp.float32)
    w2 = jnp.transpose(p["w2"], (2, 3, 1, 0)).reshape(9, cmid, cout).astype(compute_dtype)
    b2 = p["b2"].reshape(1, cout).astype(jnp.float32)

    x_c = x_nhwc.astype(compute_dtype)
    y_c = y_nhwc.astype(compute_dtype)

    kern = functools.partial(_stage_kernel, H=H, W=W, cin=cin, cy=cy,
                             cup=cup, cmid=cmid, cout=cout)

    nb = jnp.dtype(compute_dtype).itemsize
    flops = 2 * N * (H * W * 4 * cin * cup
                     + Ho * Wo * 9 * (cy + cup) * cmid
                     + Ho * Wo * 9 * cmid * cout)
    bytes_accessed = int(nb * N * (H * W * cin + Ho * Wo * cy)
                         + 4 * N * Ho * Wo * cout
                         + nb * (4 * cin * cup + 9 * (cy + cup) * cmid + 9 * cmid * cout))

    return pl.pallas_call(
        kern,
        out_shape=jax.ShapeDtypeStruct((N, Ho, Wo, cout), jnp.float32),
        grid=(N,),
        in_specs=[
            pl.BlockSpec((1, H, W, cin), lambda n: (n, 0, 0, 0)),
            pl.BlockSpec((1, Ho, Wo, cy), lambda n: (n, 0, 0, 0)),
            pl.BlockSpec((4, cin, cup), lambda n: (0, 0, 0)),
            pl.BlockSpec((1, cup), lambda n: (0, 0)),
            pl.BlockSpec((9, cy, cmid), lambda n: (0, 0, 0)),
            pl.BlockSpec((9, cup, cmid), lambda n: (0, 0, 0)),
            pl.BlockSpec((1, cmid), lambda n: (0, 0)),
            pl.BlockSpec((9, cmid, cout), lambda n: (0, 0, 0)),
            pl.BlockSpec((1, cout), lambda n: (0, 0)),
        ],
        out_specs=pl.BlockSpec((1, Ho, Wo, cout), lambda n: (n, 0, 0, 0)),
        scratch_shapes=[
            pltpu.VMEM((Ho + 2, Wo + 2, cy), compute_dtype),    # padded skip half
            pltpu.VMEM((Ho + 2, Wo + 2, cup), compute_dtype),   # padded upconv half
            pltpu.VMEM((Ho + 2, Wo + 2, cmid), compute_dtype),  # padded conv1 output
        ],
        compiler_params=pltpu.CompilerParams(
            dimension_semantics=("parallel",),
            vmem_limit_bytes=64 * 1024 * 1024),
        cost_estimate=pl.CostEstimate(flops=flops, transcendentals=0,
                                      bytes_accessed=bytes_accessed),
    )(x_c, y_c, wup, bup, w1y, w1x, b1, w2, b2)


# ----------------------------------------------------------------------------
# Decoder forward (NCHW in / NCHW out, matching PyTorch)
# ----------------------------------------------------------------------------
def decoder_forward(params, x_nchw, ys_nchw, *, compute_dtype=jnp.float32):
    x = jnp.transpose(x_nchw, (0, 2, 3, 1))                       # NCHW -> NHWC
    ys = [jnp.transpose(y, (0, 2, 3, 1)) for y in ys_nchw]        # hoisted out of the loop
    for p, y in zip(params, ys):
        x = stage_forward(x, y, p, compute_dtype=compute_dtype)
    return jnp.transpose(x, (0, 3, 1, 2))                         # NHWC -> NCHW


# ----------------------------------------------------------------------------
# Pure-JAX reference (independent of the Pallas kernels) for validation
# ----------------------------------------------------------------------------
def _ref_conv_transpose2x2(x_nhwc, w_iohw, b):
    t = jnp.einsum("nhwi,iokl->nhkwlo", x_nhwc, w_iohw)
    N, H, _, W, _, Co = t.shape
    return t.reshape(N, 2 * H, 2 * W, Co) + b


def _ref_conv3x3(x_nhwc, w_oihw, b, *, apply_relu):
    w_hwio = jnp.transpose(w_oihw, (2, 3, 1, 0))
    out = jax.lax.conv_general_dilated(
        x_nhwc, w_hwio, window_strides=(1, 1), padding=((1, 1), (1, 1)),
        dimension_numbers=("NHWC", "HWIO", "NHWC")) + b
    return jnp.maximum(out, 0.0) if apply_relu else out


def decoder_ref(params, x_nchw, ys_nchw):
    x = jnp.transpose(x_nchw, (0, 2, 3, 1))
    for i, p in enumerate(params):
        x = _ref_conv_transpose2x2(x, p["w_up"], p["b_up"])
        y = jnp.transpose(ys_nchw[i], (0, 2, 3, 1))
        x = jnp.concatenate([y, x], axis=-1)
        x = _ref_conv3x3(x, p["w1"], p["b1"], apply_relu=True)
        x = _ref_conv3x3(x, p["w2"], p["b2"], apply_relu=False)
    return jnp.transpose(x, (0, 3, 1, 2))


if __name__ == "__main__":
    # Small, decoder-consistent shapes (scaled-down channel pyramid).
    channels = (32, 16, 8)
    B, H0 = 2, 8

    key = jax.random.PRNGKey(0)
    params = []
    for i in range(len(channels) - 1):
        cin, cout = channels[i], channels[i + 1]
        key, *ks = jax.random.split(key, 7)
        params.append(dict(
            w_up=jax.random.normal(ks[0], (cin, cout, 2, 2), jnp.float32)
                 / jnp.sqrt(cin * 4.0),
            b_up=jax.random.normal(ks[1], (cout,), jnp.float32) * 0.01,
            w1=jax.random.normal(ks[2], (cout, cin, 3, 3), jnp.float32)
               / jnp.sqrt(cin * 9.0),
            b1=jax.random.normal(ks[3], (cout,), jnp.float32) * 0.01,
            w2=jax.random.normal(ks[4], (cout, cout, 3, 3), jnp.float32)
               / jnp.sqrt(cout * 9.0),
            b2=jax.random.normal(ks[5], (cout,), jnp.float32) * 0.01,
        ))

    key, kx, ky0, ky1 = jax.random.split(key, 4)
    x = jax.random.normal(kx, (B, channels[0], H0, H0), jnp.float32)
    ys = [
        jax.random.normal(ky0, (B, channels[1], 2 * H0, 2 * H0), jnp.float32),
        jax.random.normal(ky1, (B, channels[2], 4 * H0, 4 * H0), jnp.float32),
    ]

    out = decoder_forward(params, x, ys)
    out = jax.block_until_ready(out)

    assert out.shape == (B, channels[-1], 4 * H0, 4 * H0), out.shape
    ref = decoder_ref(params, x, ys)
    max_err = float(jnp.max(jnp.abs(out - ref)))
    assert max_err < 1e-3, f"max abs error {max_err}"

    print("KERNEL_OK")
</pallas_src>

<mosaic_0001>
module attributes {stable_mosaic.version = 11 : i64} {
  func.func @_stage_kernel(%arg0: i32, %arg1: memref<1x8x8x32xf32, #tpu.memory_space<vmem>>, %arg2: memref<1x16x16x16xf32, #tpu.memory_space<vmem>>, %arg3: memref<4x32x16xf32, #tpu.memory_space<vmem>>, %arg4: memref<1x16xf32, #tpu.memory_space<vmem>>, %arg5: memref<9x16x16xf32, #tpu.memory_space<vmem>>, %arg6: memref<9x16x16xf32, #tpu.memory_space<vmem>>, %arg7: memref<1x16xf32, #tpu.memory_space<vmem>>, %arg8: memref<9x16x16xf32, #tpu.memory_space<vmem>>, %arg9: memref<1x16xf32, #tpu.memory_space<vmem>>, %arg10: memref<1x16x16x16xf32, #tpu.memory_space<vmem>>, %arg11: memref<18x18x16xf32, #tpu.memory_space<vmem>>, %arg12: memref<18x18x16xf32, #tpu.memory_space<vmem>>, %arg13: memref<18x18x16xf32, #tpu.memory_space<vmem>>) attributes {dimension_semantics = [#tpu.dimension_semantics<parallel>], iteration_bounds = array<i64: 2>, scalar_prefetch = 0 : i64, scratch_operands = 3 : i64, tpu.core_type = #tpu.core_type<tc>, window_params = [{transform_indices = @transform_0, window_bounds = array<i64: 1, 8, 8, 32>}, {transform_indices = @transform_1, window_bounds = array<i64: 1, 16, 16, 16>}, {pipeline_mode = #tpu.pipeline_mode<synchronous>, transform_indices = @transform_2, window_bounds = array<i64: 4, 32, 16>}, {pipeline_mode = #tpu.pipeline_mode<synchronous>, transform_indices = @transform_3, window_bounds = array<i64: 1, 16>}, {pipeline_mode = #tpu.pipeline_mode<synchronous>, transform_indices = @transform_4, window_bounds = array<i64: 9, 16, 16>}, {pipeline_mode = #tpu.pipeline_mode<synchronous>, transform_indices = @transform_5, window_bounds = array<i64: 9, 16, 16>}, {pipeline_mode = #tpu.pipeline_mode<synchronous>, transform_indices = @transform_6, window_bounds = array<i64: 1, 16>}, {pipeline_mode = #tpu.pipeline_mode<synchronous>, transform_indices = @transform_7, window_bounds = array<i64: 9, 16, 16>}, {pipeline_mode = #tpu.pipeline_mode<synchronous>, transform_indices = @transform_8, window_bounds = array<i64: 1, 16>}, {transform_indices = @transform_9, window_bounds = array<i64: 1, 16, 16, 16>}]} {
    %cst = arith.constant 0.000000e+00 : f32
    %0 = vector.broadcast %cst : f32 to vector<1x18x16xf32>
    %c0 = arith.constant 0 : index
    %c0_0 = arith.constant 0 : index
    %c0_1 = arith.constant 0 : index
    %1 = vector.load %arg11[%c0, %c0_0, %c0_1] : memref<18x18x16xf32, #tpu.memory_space<vmem>>, vector<1x18x16xf32>
    tpu.vector_store %arg11[%c0, %c0_0, %c0_1], %0 {strides = array<i32>} : memref<18x18x16xf32, #tpu.memory_space<vmem>>, vector<1x18x16xf32>,
    %cst_2 = arith.constant 0.000000e+00 : f32
    %2 = vector.broadcast %cst_2 : f32 to vector<1x18x16xf32>
    %c17 = arith.constant 17 : index
    %c0_3 = arith.constant 0 : index
    %c0_4 = arith.constant 0 : index
    %3 = vector.load %arg11[%c17, %c0_3, %c0_4] : memref<18x18x16xf32, #tpu.memory_space<vmem>>, vector<1x18x16xf32>
    tpu.vector_store %arg11[%c17, %c0_3, %c0_4], %2 {strides = array<i32>} : memref<18x18x16xf32, #tpu.memory_space<vmem>>, vector<1x18x16xf32>,
    %cst_5 = arith.constant 0.000000e+00 : f32
    %4 = vector.broadcast %cst_5 : f32 to vector<18x1x16xf32>
    %c0_6 = arith.constant 0 : index
    %c0_7 = arith.constant 0 : index
    %c0_8 = arith.constant 0 : index
    %5 = vector.load %arg11[%c0_6, %c0_7, %c0_8] : memref<18x18x16xf32, #tpu.memory_space<vmem>>, vector<18x1x16xf32>
    tpu.vector_store %arg11[%c0_6, %c0_7, %c0_8], %4 {strides = array<i32>} : memref<18x18x16xf32, #tpu.memory_space<vmem>>, vector<18x1x16xf32>,
    %cst_9 = arith.constant 0.000000e+00 : f32
    %6 = vector.broadcast %cst_9 : f32 to vector<18x1x16xf32>
    %c0_10 = arith.constant 0 : index
    %c17_11 = arith.constant 17 : index
    %c0_12 = arith.constant 0 : index
    %7 = vector.load %arg11[%c0_10, %c17_11, %c0_12] : memref<18x18x16xf32, #tpu.memory_space<vmem>>, vector<18x1x16xf32>
    tpu.vector_store %arg11[%c0_10, %c17_11, %c0_12], %6 {strides = array<i32>} : memref<18x18x16xf32, #tpu.memory_space<vmem>>, vector<18x1x16xf32>,
    %cst_13 = arith.constant 0.000000e+00 : f32
    %8 = vector.broadcast %cst_13 : f32 to vector<1x18x16xf32>
    %c0_14 = arith.constant 0 : index
    %c0_15 = arith.constant 0 : index
    %c0_16 = arith.constant 0 : index
    %9 = vector.load %arg12[%c0_14, %c0_15, %c0_16] : memref<18x18x16xf32, #tpu.memory_space<vmem>>, vector<1x18x16xf32>
    tpu.vector_store %arg12[%c0_14, %c0_15, %c0_16], %8 {strides = array<i32>} : memref<18x18x16xf32, #tpu.memory_space<vmem>>, vector<1x18x16xf32>,
    %cst_17 = arith.constant 0.000000e+00 : f32
    %10 = vector.broadcast %cst_17 : f32 to vector<1x18x16xf32>
    %c17_18 = arith.constant 17 : index
    %c0_19 = arith.constant 0 : index
    %c0_20 = arith.constant 0 : index
    %11 = vector.load %arg12[%c17_18, %c0_19, %c0_20] : memref<18x18x16xf32, #tpu.memory_space<vmem>>, vector<1x18x16xf32>
    tpu.vector_store %arg12[%c17_18, %c0_19, %c0_20], %10 {strides = array<i32>} : memref<18x18x16xf32, #tpu.memory_space<vmem>>, vector<1x18x16xf32>,
    %cst_21 = arith.constant 0.000000e+00 : f32
    %12 = vector.broadcast %cst_21 : f32 to vector<18x1x16xf32>
    %c0_22 = arith.constant 0 : index
    %c0_23 = arith.constant 0 : index
    %c0_24 = arith.constant 0 : index
    %13 = vector.load %arg12[%c0_22, %c0_23, %c0_24] : memref<18x18x16xf32, #tpu.memory_space<vmem>>, vector<18x1x16xf32>
    tpu.vector_store %arg12[%c0_22, %c0_23, %c0_24], %12 {strides = array<i32>} : memref<18x18x16xf32, #tpu.memory_space<vmem>>, vector<18x1x16xf32>,
    %cst_25 = arith.constant 0.000000e+00 : f32
    %14 = vector.broadcast %cst_25 : f32 to vector<18x1x16xf32>
    %c0_26 = arith.constant 0 : index
    %c17_27 = arith.constant 17 : index
    %c0_28 = arith.constant 0 : index
    %15 = vector.load %arg12[%c0_26, %c17_27, %c0_28] : memref<18x18x16xf32, #tpu.memory_space<vmem>>, vector<18x1x16xf32>
    tpu.vector_store %arg12[%c0_26, %c17_27, %c0_28], %14 {strides = array<i32>} : memref<18x18x16xf32, #tpu.memory_space<vmem>>, vector<18x1x16xf32>,
    %cst_29 = arith.constant 0.000000e+00 : f32
    %16 = vector.broadcast %cst_29 : f32 to vector<1x18x16xf32>
    %c0_30 = arith.constant 0 : index
    %c0_31 = arith.constant 0 : index
    %c0_32 = arith.constant 0 : index
    %17 = vector.load %arg13[%c0_30, %c0_31, %c0_32] : memref<18x18x16xf32, #tpu.memory_space<vmem>>, vector<1x18x16xf32>
    tpu.vector_store %arg13[%c0_30, %c0_31, %c0_32], %16 {strides = array<i32>} : memref<18x18x16xf32, #tpu.memory_space<vmem>>, vector<1x18x16xf32>,
    %cst_33 = arith.constant 0.000000e+00 : f32
    %18 = vector.broadcast %cst_33 : f32 to vector<1x18x16xf32>
    %c17_34 = arith.constant 17 : index
    %c0_35 = arith.constant 0 : index
    %c0_36 = arith.constant 0 : index
    %19 = vector.load %arg13[%c17_34, %c0_35, %c0_36] : memref<18x18x16xf32, #tpu.memory_space<vmem>>, vector<1x18x16xf32>
    tpu.vector_store %arg13[%c17_34, %c0_35, %c0_36], %18 {strides = array<i32>} : memref<18x18x16xf32, #tpu.memory_space<vmem>>, vector<1x18x16xf32>,
    %cst_37 = arith.constant 0.000000e+00 : f32
    %20 = vector.broadcast %cst_37 : f32 to vector<18x1x16xf32>
    %c0_38 = arith.constant 0 : index
    %c0_39 = arith.constant 0 : index
    %c0_40 = arith.constant 0 : index
    %21 = vector.load %arg13[%c0_38, %c0_39, %c0_40] : memref<18x18x16xf32, #tpu.memory_space<vmem>>, vector<18x1x16xf32>
    tpu.vector_store %arg13[%c0_38, %c0_39, %c0_40], %20 {strides = array<i32>} : memref<18x18x16xf32, #tpu.memory_space<vmem>>, vector<18x1x16xf32>,
    %cst_41 = arith.constant 0.000000e+00 : f32
    %22 = vector.broadcast %cst_41 : f32 to vector<18x1x16xf32>
    %c0_42 = arith.constant 0 : index
    %c17_43 = arith.constant 17 : index
    %c0_44 = arith.constant 0 : index
    %23 = vector.load %arg13[%c0_42, %c17_43, %c0_44] : memref<18x18x16xf32, #tpu.memory_space<vmem>>, vector<18x1x16xf32>
    tpu.vector_store %arg13[%c0_42, %c17_43, %c0_44], %22 {strides = array<i32>} : memref<18x18x16xf32, #tpu.memory_space<vmem>>, vector<18x1x16xf32>,
    %c0_45 = arith.constant 0 : index
    %c0_46 = arith.constant 0 : index
    %c0_47 = arith.constant 0 : index
    %c0_48 = arith.constant 0 : index
    %24 = vector.load %arg1[%c0_45, %c0_46, %c0_47, %c0_48] : memref<1x8x8x32xf32, #tpu.memory_space<vmem>>, vector<1x8x8x32xf32>
    %25 = vector.shape_cast %24 : vector<1x8x8x32xf32> to vector<8x8x32xf32>
    %26 = vector.shape_cast %25 : vector<8x8x32xf32> to vector<64x32xf32>
    %c0_49 = arith.constant 0 : index
    %c0_50 = arith.constant 0 : index
    %c0_51 = arith.constant 0 : index
    %27 = vector.load %arg3[%c0_49, %c0_50, %c0_51] : memref<4x32x16xf32, #tpu.memory_space<vmem>>, vector<1x32x16xf32>
    %28 = vector.shape_cast %27 : vector<1x32x16xf32> to vector<32x16xf32>
    %cst_52 = arith.constant dense<0.000000e+00> : vector<64x16xf32>
    %29 = tpu.matmul %26, %28, %cst_52 {dimension_numbers = #tpu.dot_dimension_numbers<[1], [0], [0], [1], [0, 0, 1, 1], [], []>} : vector<64x32xf32>, vector<32x16xf32>, vector<64x16xf32> -> vector<64x16xf32>
    %c0_53 = arith.constant 0 : index
    %c0_54 = arith.constant 0 : index
    %30 = vector.load %arg4[%c0_53, %c0_54] : memref<1x16xf32, #tpu.memory_space<vmem>>, vector<1x16xf32>
    %31 = vector.broadcast %30 : vector<1x16xf32> to vector<64x16xf32>
    %32 = arith.addf %29, %31 : vector<64x16xf32>
    %c1 = arith.constant 1 : index
    %c0_55 = arith.constant 0 : index
    %c0_56 = arith.constant 0 : index
    %33 = vector.load %arg3[%c1, %c0_55, %c0_56] : memref<4x32x16xf32, #tpu.memory_space<vmem>>, vector<1x32x16xf32>
    %34 = vector.shape_cast %33 : vector<1x32x16xf32> to vector<32x16xf32>
    %cst_57 = arith.constant dense<0.000000e+00> : vector<64x16xf32>
    %35 = tpu.matmul %26, %34, %cst_57 {dimension_numbers = #tpu.dot_dimension_numbers<[1], [0], [0], [1], [0, 0, 1, 1], [], []>} : vector<64x32xf32>, vector<32x16xf32>, vector<64x16xf32> -> vector<64x16xf32>
    %c0_58 = arith.constant 0 : index
    %c0_59 = arith.constant 0 : index
    %36 = vector.load %arg4[%c0_58, %c0_59] : memref<1x16xf32, #tpu.memory_space<vmem>>, vector<1x16xf32>
    %37 = vector.broadcast %36 : vector<1x16xf32> to vector<64x16xf32>
    %38 = arith.addf %35, %37 : vector<64x16xf32>
    %c2 = arith.constant 2 : index
    %c0_60 = arith.constant 0 : index
    %c0_61 = arith.constant 0 : index
    %39 = vector.load %arg3[%c2, %c0_60, %c0_61] : memref<4x32x16xf32, #tpu.memory_space<vmem>>, vector<1x32x16xf32>
    %40 = vector.shape_cast %39 : vector<1x32x16xf32> to vector<32x16xf32>
    %cst_62 = arith.constant dense<0.000000e+00> : vector<64x16xf32>
    %41 = tpu.matmul %26, %40, %cst_62 {dimension_numbers = #tpu.dot_dimension_numbers<[1], [0], [0], [1], [0, 0, 1, 1], [], []>} : vector<64x32xf32>, vector<32x16xf32>, vector<64x16xf32> -> vector<64x16xf32>
    %c0_63 = arith.constant 0 : index
    %c0_64 = arith.constant 0 : index
    %42 = vector.load %arg4[%c0_63, %c0_64] : memref<1x16xf32, #tpu.memory_space<vmem>>, vector<1x16xf32>
    %43 = vector.broadcast %42 : vector<1x16xf32> to vector<64x16xf32>
    %44 = arith.addf %41, %43 : vector<64x16xf32>
    %c3 = arith.constant 3 : index
    %c0_65 = arith.constant 0 : index
    %c0_66 = arith.constant 0 : index
    %45 = vector.load %arg3[%c3, %c0_65, %c0_66] : memref<4x32x16xf32, #tpu.memory_space<vmem>>, vector<1x32x16xf32>
    %46 = vector.shape_cast %45 : vector<1x32x16xf32> to vector<32x16xf32>
    %cst_67 = arith.constant dense<0.000000e+00> : vector<64x16xf32>
    %47 = tpu.matmul %26, %46, %cst_67 {dimension_numbers = #tpu.dot_dimension_numbers<[1], [0], [0], [1], [0, 0, 1, 1], [], []>} : vector<64x32xf32>, vector<32x16xf32>, vector<64x16xf32> -> vector<64x16xf32>
    %c0_68 = arith.constant 0 : index
    %c0_69 = arith.constant 0 : index
    %48 = vector.load %arg4[%c0_68, %c0_69] : memref<1x16xf32, #tpu.memory_space<vmem>>, vector<1x16xf32>
    %49 = vector.broadcast %48 : vector<1x16xf32> to vector<64x16xf32>
    %50 = arith.addf %47, %49 : vector<64x16xf32>
    %51 = vector.shape_cast %32 : vector<64x16xf32> to vector<8x8x1x16xf32>
    %52 = vector.shape_cast %51 : vector<8x8x1x16xf32> to vector<8x8x1x16xf32>
    %53 = vector.broadcast %52 : vector<8x8x1x16xf32> to vector<8x8x2x16xf32>
    %54 = vector.shape_cast %53 : vector<8x8x2x16xf32> to vector<8x16x16xf32>
    %55 = vector.shape_cast %38 : vector<64x16xf32> to vector<8x8x1x16xf32>
    %56 = vector.shape_cast %55 : vector<8x8x1x16xf32> to vector<8x8x1x16xf32>
    %57 = vector.broadcast %56 : vector<8x8x1x16xf32> to vector<8x8x2x16xf32>
    %58 = vector.shape_cast %57 : vector<8x8x2x16xf32> to vector<8x16x16xf32>
    %59 = tpu.iota {dimensions = array<i32: 1>} : vector<8x16x16xi32>
    %c1_i32 = arith.constant 1 : i32
    %60 = vector.broadcast %c1_i32 : i32 to vector<8x16x16xi32>
    %61 = arith.andi %59, %60 : vector<8x16x16xi32>
    %c0_i32 = arith.constant 0 : i32
    %62 = vector.broadcast %c0_i32 : i32 to vector<8x16x16xi32>
    %63 = arith.cmpi eq, %61, %62 : vector<8x16x16xi32>
    %64 = arith.select %63, %54, %58 : vector<8x16x16xi1>, vector<8x16x16xf32>
    %65 = vector.shape_cast %44 : vector<64x16xf32> to vector<8x8x1x16xf32>
    %66 = vector.shape_cast %65 : vector<8x8x1x16xf32> to vector<8x8x1x16xf32>
    %67 = vector.broadcast %66 : vector<8x8x1x16xf32> to vector<8x8x2x16xf32>
    %68 = vector.shape_cast %67 : vector<8x8x2x16xf32> to vector<8x16x16xf32>
    %69 = vector.shape_cast %50 : vector<64x16xf32> to vector<8x8x1x16xf32>
    %70 = vector.shape_cast %69 : vector<8x8x1x16xf32> to vector<8x8x1x16xf32>
    %71 = vector.broadcast %70 : vector<8x8x1x16xf32> to vector<8x8x2x16xf32>
    %72 = vector.shape_cast %71 : vector<8x8x2x16xf32> to vector<8x16x16xf32>
    %73 = tpu.iota {dimensions = array<i32: 1>} : vector<8x16x16xi32>
    %c1_i32_70 = arith.constant 1 : i32
    %74 = vector.broadcast %c1_i32_70 : i32 to vector<8x16x16xi32>
    %75 = arith.andi %73, %74 : vector<8x16x16xi32>
    %c0_i32_71 = arith.constant 0 : i32
    %76 = vector.broadcast %c0_i32_71 : i32 to vector<8x16x16xi32>
    %77 = arith.cmpi eq, %75, %76 : vector<8x16x16xi32>
    %78 = arith.select %77, %68, %72 : vector<8x16x16xi1>, vector<8x16x16xf32>
    %79 = vector.shape_cast %64 : vector<8x16x16xf32> to vector<8x1x16x16xf32>
    %80 = vector.shape_cast %78 : vector<8x16x16xf32> to vector<8x1x16x16xf32>
    %81 = tpu.concatenate %79, %80 in 1 : vector<8x1x16x16xf32>, vector<8x1x16x16xf32> -> vector<8x2x16x16xf32>
    %82 = vector.shape_cast %81 : vector<8x2x16x16xf32> to vector<16x16x16xf32>
    %c0_72 = arith.constant 0 : index
    %c0_73 = arith.constant 0 : index
    %c0_74 = arith.constant 0 : index
    %c0_75 = arith.constant 0 : index
    %83 = vector.load %arg2[%c0_72, %c0_73, %c0_74, %c0_75] : memref<1x16x16x16xf32, #tpu.memory_space<vmem>>, vector<1x16x16x16xf32>
    %84 = vector.shape_cast %83 : vector<1x16x16x16xf32> to vector<16x16x16xf32>
    %c1_76 = arith.constant 1 : index
    %c1_77 = arith.constant 1 : index
    %c0_78 = arith.constant 0 : index
    %85 = vector.load %arg11[%c1_76, %c1_77, %c0_78] : memref<18x18x16xf32, #tpu.memory_space<vmem>>, vector<16x16x16xf32>
    tpu.vector_store %arg11[%c1_76, %c1_77, %c0_78], %84 {strides = array<i32>} : memref<18x18x16xf32, #tpu.memory_space<vmem>>, vector<16x16x16xf32>,
    %c1_79 = arith.constant 1 : index
    %c1_80 = arith.constant 1 : index
    %c0_81 = arith.constant 0 : index
    %86 = vector.load %arg12[%c1_79, %c1_80, %c0_81] : memref<18x18x16xf32, #tpu.memory_space<vmem>>, vector<16x16x16xf32>
    tpu.vector_store %arg12[%c1_79, %c1_80, %c0_81], %82 {strides = array<i32>} : memref<18x18x16xf32, #tpu.memory_space<vmem>>, vector<16x16x16xf32>,
    %c0_82 = arith.constant 0 : index
    %c0_83 = arith.constant 0 : index
    %c0_84 = arith.constant 0 : index
    %87 = vector.load %arg11[%c0_82, %c0_83, %c0_84] : memref<18x18x16xf32, #tpu.memory_space<vmem>>, vector<18x18x16xf32>
    %c0_85 = arith.constant 0 : index
    %c0_86 = arith.constant 0 : index
    %c0_87 = arith.constant 0 : index
    %88 = vector.load %arg12[%c0_85, %c0_86, %c0_87] : memref<18x18x16xf32, #tpu.memory_space<vmem>>, vector<18x18x16xf32>
    %cst_88 = arith.constant 0.000000e+00 : f32
    %89 = vector.broadcast %cst_88 : f32 to vector<256x16xf32>
    %c0_89 = arith.constant 0 : index
    %c0_90 = arith.constant 0 : index
    %90 = vector.load %arg7[%c0_89, %c0_90] : memref<1x16xf32, #tpu.memory_space<vmem>>, vector<1x16xf32>
    %91 = vector.broadcast %90 : vector<1x16xf32> to vector<256x16xf32>
    %92 = arith.addf %89, %91 : vector<256x16xf32>
    %93 = vector.extract_strided_slice %87 {offsets = [0, 0, 0], sizes = [16, 16, 16], strides = [1, 1, 1]} : vector<18x18x16xf32> to vector<16x16x16xf32>
    %94 = vector.shape_cast %93 : vector<16x16x16xf32> to vector<256x16xf32>
    %c0_91 = arith.constant 0 : index
    %c0_92 = arith.constant 0 : index
    %c0_93 = arith.constant 0 : index
    %95 = vector.load %arg5[%c0_91, %c0_92, %c0_93] : memref<9x16x16xf32, #tpu.memory_space<vmem>>, vector<1x16x16xf32>
    %96 = vector.shape_cast %95 : vector<1x16x16xf32> to vector<16x16xf32>
    %cst_94 = arith.constant dense<0.000000e+00> : vector<256x16xf32>
    %97 = tpu.matmul %94, %96, %cst_94 {dimension_numbers = #tpu.dot_dimension_numbers<[1], [0], [0], [1], [0, 0, 1, 1], [], []>} : vector<256x16xf32>, vector<16x16xf32>, vector<256x16xf32> -> vector<256x16xf32>
    %98 = arith.addf %92, %97 : vector<256x16xf32>
    %99 = vector.extract_strided_slice %88 {offsets = [0, 0, 0], sizes = [16, 16, 16], strides = [1, 1, 1]} : vector<18x18x16xf32> to vector<16x16x16xf32>
    %100 = vector.shape_cast %99 : vector<16x16x16xf32> to vector<256x16xf32>
    %c0_95 = arith.constant 0 : index
    %c0_96 = arith.constant 0 : index
    %c0_97 = arith.constant 0 : index
    %101 = vector.load %arg6[%c0_95, %c0_96, %c0_97] : memref<9x16x16xf32, #tpu.memory_space<vmem>>, vector<1x16x16xf32>
    %102 = vector.shape_cast %101 : vector<1x16x16xf32> to vector<16x16xf32>
    %cst_98 = arith.constant dense<0.000000e+00> : vector<256x16xf32>
    %103 = tpu.matmul %100, %102, %cst_98 {dimension_numbers = #tpu.dot_dimension_numbers<[1], [0], [0], [1], [0, 0, 1, 1], [], []>} : vector<256x16xf32>, vector<16x16xf32>, vector<256x16xf32> -> vector<256x16xf32>
    %104 = arith.addf %98, %103 : vector<256x16xf32>
    %105 = vector.extract_strided_slice %87 {offsets = [0, 1, 0], sizes = [16, 16, 16], strides = [1, 1, 1]} : vector<18x18x16xf32> to vector<16x16x16xf32>
    %106 = vector.shape_cast %105 : vector<16x16x16xf32> to vector<256x16xf32>
    %c1_99 = arith.constant 1 : index
    %c0_100 = arith.constant 0 : index
    %c0_101 = arith.constant 0 : index
    %107 = vector.load %arg5[%c1_99, %c0_100, %c0_101] : memref<9x16x16xf32, #tpu.memory_space<vmem>>, vector<1x16x16xf32>
    %108 = vector.shape_cast %107 : vector<1x16x16xf32> to vector<16x16xf32>
    %cst_102 = arith.constant dense<0.000000e+00> : vector<256x16xf32>
    %109 = tpu.matmul %106, %108, %cst_102 {dimension_numbers = #tpu.dot_dimension_numbers<[1], [0], [0], [1], [0, 0, 1, 1], [], []>} : vector<256x16xf32>, vector<16x16xf32>, vector<256x16xf32> -> vector<256x16xf32>
    %110 = arith.addf %104, %109 : vector<256x16xf32>
    %111 = vector.extract_strided_slice %88 {offsets = [0, 1, 0], sizes = [16, 16, 16], strides = [1, 1, 1]} : vector<18x18x16xf32> to vector<16x16x16xf32>
    %112 = vector.shape_cast %111 : vector<16x16x16xf32> to vector<256x16xf32>
    %c1_103 = arith.constant 1 : index
    %c0_104 = arith.constant 0 : index
    %c0_105 = arith.constant 0 : index
    %113 = vector.load %arg6[%c1_103, %c0_104, %c0_105] : memref<9x16x16xf32, #tpu.memory_space<vmem>>, vector<1x16x16xf32>
    %114 = vector.shape_cast %113 : vector<1x16x16xf32> to vector<16x16xf32>
    %cst_106 = arith.constant dense<0.000000e+00> : vector<256x16xf32>
    %115 = tpu.matmul %112, %114, %cst_106 {dimension_numbers = #tpu.dot_dimension_numbers<[1], [0], [0], [1], [0, 0, 1, 1], [], []>} : vector<256x16xf32>, vector<16x16xf32>, vector<256x16xf32> -> vector<256x16xf32>
    %116 = arith.addf %110, %115 : vector<256x16xf32>
    %117 = vector.extract_strided_slice %87 {offsets = [0, 2, 0], sizes = [16, 16, 16], strides = [1, 1, 1]} : vector<18x18x16xf32> to vector<16x16x16xf32>
    %118 = vector.shape_cast %117 : vector<16x16x16xf32> to vector<256x16xf32>
    %c2_107 = arith.constant 2 : index
    %c0_108 = arith.constant 0 : index
    %c0_109 = arith.constant 0 : index
    %119 = vector.load %arg5[%c2_107, %c0_108, %c0_109] : memref<9x16x16xf32, #tpu.memory_space<vmem>>, vector<1x16x16xf32>
    %120 = vector.shape_cast %119 : vector<1x16x16xf32> to vector<16x16xf32>
    %cst_110 = arith.constant dense<0.000000e+00> : vector<256x16xf32>
    %121 = tpu.matmul %118, %120, %cst_110 {dimension_numbers = #tpu.dot_dimension_numbers<[1], [0], [0], [1], [0, 0, 1, 1], [], []>} : vector<256x16xf32>, vector<16x16xf32>, vector<256x16xf32> -> vector<256x16xf32>
    %122 = arith.addf %116, %121 : vector<256x16xf32>
    %123 = vector.extract_strided_slice %88 {offsets = [0, 2, 0], sizes = [16, 16, 16], strides = [1, 1, 1]} : vector<18x18x16xf32> to vector<16x16x16xf32>
    %124 = vector.shape_cast %123 : vector<16x16x16xf32> to vector<256x16xf32>
    %c2_111 = arith.constant 2 : index
    %c0_112 = arith.constant 0 : index
    %c0_113 = arith.constant 0 : index
    %125 = vector.load %arg6[%c2_111, %c0_112, %c0_113] : memref<9x16x16xf32, #tpu.memory_space<vmem>>, vector<1x16x16xf32>
    %126 = vector.shape_cast %125 : vector<1x16x16xf32> to vector<16x16xf32>
    %cst_114 = arith.constant dense<0.000000e+00> : vector<256x16xf32>
    %127 = tpu.matmul %124, %126, %cst_114 {dimension_numbers = #tpu.dot_dimension_numbers<[1], [0], [0], [1], [0, 0, 1, 1], [], []>} : vector<256x16xf32>, vector<16x16xf32>, vector<256x16xf32> -> vector<256x16xf32>
    %128 = arith.addf %122, %127 : vector<256x16xf32>
    %129 = vector.extract_strided_slice %87 {offsets = [1, 0, 0], sizes = [16, 16, 16], strides = [1, 1, 1]} : vector<18x18x16xf32> to vector<16x16x16xf32>
    %130 = vector.shape_cast %129 : vector<16x16x16xf32> to vector<256x16xf32>
    %c3_115 = arith.constant 3 : index
    %c0_116 = arith.constant 0 : index
    %c0_117 = arith.constant 0 : index
    %131 = vector.load %arg5[%c3_115, %c0_116, %c0_117] : memref<9x16x16xf32, #tpu.memory_space<vmem>>, vector<1x16x16xf32>
    %132 = vector.shape_cast %131 : vector<1x16x16xf32> to vector<16x16xf32>
    %cst_118 = arith.constant dense<0.000000e+00> : vector<256x16xf32>
    %133 = tpu.matmul %130, %132, %cst_118 {dimension_numbers = #tpu.dot_dimension_numbers<[1], [0], [0], [1], [0, 0, 1, 1], [], []>} : vector<256x16xf32>, vector<16x16xf32>, vector<256x16xf32> -> vector<256x16xf32>
    %134 = arith.addf %128, %133 : vector<256x16xf32>
    %135 = vector.extract_strided_slice %88 {offsets = [1, 0, 0], sizes = [16, 16, 16], strides = [1, 1, 1]} : vector<18x18x16xf32> to vector<16x16x16xf32>
    %136 = vector.shape_cast %135 : vector<16x16x16xf32> to vector<256x16xf32>
    %c3_119 = arith.constant 3 : index
    %c0_120 = arith.constant 0 : index
    %c0_121 = arith.constant 0 : index
    %137 = vector.load %arg6[%c3_119, %c0_120, %c0_121] : memref<9x16x16xf32, #tpu.memory_space<vmem>>, vector<1x16x16xf32>
    %138 = vector.shape_cast %137 : vector<1x16x16xf32> to vector<16x16xf32>
    %cst_122 = arith.constant dense<0.000000e+00> : vector<256x16xf32>
    %139 = tpu.matmul %136, %138, %cst_122 {dimension_numbers = #tpu.dot_dimension_numbers<[1], [0], [0], [1], [0, 0, 1, 1], [], []>} : vector<256x16xf32>, vector<16x16xf32>, vector<256x16xf32> -> vector<256x16xf32>
    %140 = arith.addf %134, %139 : vector<256x16xf32>
    %141 = vector.extract_strided_slice %87 {offsets = [1, 1, 0], sizes = [16, 16, 16], strides = [1, 1, 1]} : vector<18x18x16xf32> to vector<16x16x16xf32>
    %142 = vector.shape_cast %141 : vector<16x16x16xf32> to vector<256x16xf32>
    %c4 = arith.constant 4 : index
    %c0_123 = arith.constant 0 : index
    %c0_124 = arith.constant 0 : index
    %143 = vector.load %arg5[%c4, %c0_123, %c0_124] : memref<9x16x16xf32, #tpu.memory_space<vmem>>, vector<1x16x16xf32>
    %144 = vector.shape_cast %143 : vector<1x16x16xf32> to vector<16x16xf32>
    %cst_125 = arith.constant dense<0.000000e+00> : vector<256x16xf32>
    %145 = tpu.matmul %142, %144, %cst_125 {dimension_numbers = #tpu.dot_dimension_numbers<[1], [0], [0], [1], [0, 0, 1, 1], [], []>} : vector<256x16xf32>, vector<16x16xf32>, vector<256x16xf32> -> vector<256x16xf32>
    %146 = arith.addf %140, %145 : vector<256x16xf32>
    %147 = vector.extract_strided_slice %88 {offsets = [1, 1, 0], sizes = [16, 16, 16], strides = [1, 1, 1]} : vector<18x18x16xf32> to vector<16x16x16xf32>
    %148 = vector.shape_cast %147 : vector<16x16x16xf32> to vector<256x16xf32>
    %c4_126 = arith.constant 4 : index
    %c0_127 = arith.constant 0 : index
    %c0_128 = arith.constant 0 : index
    %149 = vector.load %arg6[%c4_126, %c0_127, %c0_128] : memref<9x16x16xf32, #tpu.memory_space<vmem>>, vector<1x16x16xf32>
    %150 = vector.shape_cast %149 : vector<1x16x16xf32> to vector<16x16xf32>
    %cst_129 = arith.constant dense<0.000000e+00> : vector<256x16xf32>
    %151 = tpu.matmul %148, %150, %cst_129 {dimension_numbers = #tpu.dot_dimension_numbers<[1], [0], [0], [1], [0, 0, 1, 1], [], []>} : vector<256x16xf32>, vector<16x16xf32>, vector<256x16xf32> -> vector<256x16xf32>
    %152 = arith.addf %146, %151 : vector<256x16xf32>
    %153 = vector.extract_strided_slice %87 {offsets = [1, 2, 0], sizes = [16, 16, 16], strides = [1, 1, 1]} : vector<18x18x16xf32> to vector<16x16x16xf32>
    %154 = vector.shape_cast %153 : vector<16x16x16xf32> to vector<256x16xf32>
    %c5 = arith.constant 5 : index
    %c0_130 = arith.constant 0 : index
    %c0_131 = arith.constant 0 : index
    %155 = vector.load %arg5[%c5, %c0_130, %c0_131] : memref<9x16x16xf32, #tpu.memory_space<vmem>>, vector<1x16x16xf32>
    %156 = vector.shape_cast %155 : vector<1x16x16xf32> to vector<16x16xf32>
    %cst_132 = arith.constant dense<0.000000e+00> : vector<256x16xf32>
    %157 = tpu.matmul %154, %156, %cst_132 {dimension_numbers = #tpu.dot_dimension_numbers<[1], [0], [0], [1], [0, 0, 1, 1], [], []>} : vector<256x16xf32>, vector<16x16xf32>, vector<256x16xf32> -> vector<256x16xf32>
    %158 = arith.addf %152, %157 : vector<256x16xf32>
    %159 = vector.extract_strided_slice %88 {offsets = [1, 2, 0], sizes = [16, 16, 16], strides = [1, 1, 1]} : vector<18x18x16xf32> to vector<16x16x16xf32>
    %160 = vector.shape_cast %159 : vector<16x16x16xf32> to vector<256x16xf32>
    %c5_133 = arith.constant 5 : index
    %c0_134 = arith.constant 0 : index
    %c0_135 = arith.constant 0 : index
    %161 = vector.load %arg6[%c5_133, %c0_134, %c0_135] : memref<9x16x16xf32, #tpu.memory_space<vmem>>, vector<1x16x16xf32>
    %162 = vector.shape_cast %161 : vector<1x16x16xf32> to vector<16x16xf32>
    %cst_136 = arith.constant dense<0.000000e+00> : vector<256x16xf32>
    %163 = tpu.matmul %160, %162, %cst_136 {dimension_numbers = #tpu.dot_dimension_numbers<[1], [0], [0], [1], [0, 0, 1, 1], [], []>} : vector<256x16xf32>, vector<16x16xf32>, vector<256x16xf32> -> vector<256x16xf32>
    %164 = arith.addf %158, %163 : vector<256x16xf32>
    %165 = vector.extract_strided_slice %87 {offsets = [2, 0, 0], sizes = [16, 16, 16], strides = [1, 1, 1]} : vector<18x18x16xf32> to vector<16x16x16xf32>
    %166 = vector.shape_cast %165 : vector<16x16x16xf32> to vector<256x16xf32>
    %c6 = arith.constant 6 : index
    %c0_137 = arith.constant 0 : index
    %c0_138 = arith.constant 0 : index
    %167 = vector.load %arg5[%c6, %c0_137, %c0_138] : memref<9x16x16xf32, #tpu.memory_space<vmem>>, vector<1x16x16xf32>
    %168 = vector.shape_cast %167 : vector<1x16x16xf32> to vector<16x16xf32>
    %cst_139 = arith.constant dense<0.000000e+00> : vector<256x16xf32>
    %169 = tpu.matmul %166, %168, %cst_139 {dimension_numbers = #tpu.dot_dimension_numbers<[1], [0], [0], [1], [0, 0, 1, 1], [], []>} : vector<256x16xf32>, vector<16x16xf32>, vector<256x16xf32> -> vector<256x16xf32>
    %170 = arith.addf %164, %169 : vector<256x16xf32>
    %171 = vector.extract_strided_slice %88 {offsets = [2, 0, 0], sizes = [16, 16, 16], strides = [1, 1, 1]} : vector<18x18x16xf32> to vector<16x16x16xf32>
    %172 = vector.shape_cast %171 : vector<16x16x16xf32> to vector<256x16xf32>
    %c6_140 = arith.constant 6 : index
    %c0_141 = arith.constant 0 : index
    %c0_142 = arith.constant 0 : index
    %173 = vector.load %arg6[%c6_140, %c0_141, %c0_142] : memref<9x16x16xf32, #tpu.memory_space<vmem>>, vector<1x16x16xf32>
    %174 = vector.shape_cast %173 : vector<1x16x16xf32> to vector<16x16xf32>
    %cst_143 = arith.constant dense<0.000000e+00> : vector<256x16xf32>
    %175 = tpu.matmul %172, %174, %cst_143 {dimension_numbers = #tpu.dot_dimension_numbers<[1], [0], [0], [1], [0, 0, 1, 1], [], []>} : vector<256x16xf32>, vector<16x16xf32>, vector<256x16xf32> -> vector<256x16xf32>
    %176 = arith.addf %170, %175 : vector<256x16xf32>
    %177 = vector.extract_strided_slice %87 {offsets = [2, 1, 0], sizes = [16, 16, 16], strides = [1, 1, 1]} : vector<18x18x16xf32> to vector<16x16x16xf32>
    %178 = vector.shape_cast %177 : vector<16x16x16xf32> to vector<256x16xf32>
    %c7 = arith.constant 7 : index
    %c0_144 = arith.constant 0 : index
    %c0_145 = arith.constant 0 : index
    %179 = vector.load %arg5[%c7, %c0_144, %c0_145] : memref<9x16x16xf32, #tpu.memory_space<vmem>>, vector<1x16x16xf32>
    %180 = vector.shape_cast %179 : vector<1x16x16xf32> to vector<16x16xf32>
    %cst_146 = arith.constant dense<0.000000e+00> : vector<256x16xf32>
    %181 = tpu.matmul %178, %180, %cst_146 {dimension_numbers = #tpu.dot_dimension_numbers<[1], [0], [0], [1], [0, 0, 1, 1], [], []>} : vector<256x16xf32>, vector<16x16xf32>, vector<256x16xf32> -> vector<256x16xf32>
    %182 = arith.addf %176, %181 : vector<256x16xf32>
    %183 = vector.extract_strided_slice %88 {offsets = [2, 1, 0], sizes = [16, 16, 16], strides = [1, 1, 1]} : vector<18x18x16xf32> to vector<16x16x16xf32>
    %184 = vector.shape_cast %183 : vector<16x16x16xf32> to vector<256x16xf32>
    %c7_147 = arith.constant 7 : index
    %c0_148 = arith.constant 0 : index
    %c0_149 = arith.constant 0 : index
    %185 = vector.load %arg6[%c7_147, %c0_148, %c0_149] : memref<9x16x16xf32, #tpu.memory_space<vmem>>, vector<1x16x16xf32>
    %186 = vector.shape_cast %185 : vector<1x16x16xf32> to vector<16x16xf32>
    %cst_150 = arith.constant dense<0.000000e+00> : vector<256x16xf32>
    %187 = tpu.matmul %184, %186, %cst_150 {dimension_numbers = #tpu.dot_dimension_numbers<[1], [0], [0], [1], [0, 0, 1, 1], [], []>} : vector<256x16xf32>, vector<16x16xf32>, vector<256x16xf32> -> vector<256x16xf32>
    %188 = arith.addf %182, %187 : vector<256x16xf32>
    %189 = vector.extract_strided_slice %87 {offsets = [2, 2, 0], sizes = [16, 16, 16], strides = [1, 1, 1]} : vector<18x18x16xf32> to vector<16x16x16xf32>
    %190 = vector.shape_cast %189 : vector<16x16x16xf32> to vector<256x16xf32>
    %c8 = arith.constant 8 : index
    %c0_151 = arith.constant 0 : index
    %c0_152 = arith.constant 0 : index
    %191 = vector.load %arg5[%c8, %c0_151, %c0_152] : memref<9x16x16xf32, #tpu.memory_space<vmem>>, vector<1x16x16xf32>
    %192 = vector.shape_cast %191 : vector<1x16x16xf32> to vector<16x16xf32>
    %cst_153 = arith.constant dense<0.000000e+00> : vector<256x16xf32>
    %193 = tpu.matmul %190, %192, %cst_153 {dimension_numbers = #tpu.dot_dimension_numbers<[1], [0], [0], [1], [0, 0, 1, 1], [], []>} : vector<256x16xf32>, vector<16x16xf32>, vector<256x16xf32> -> vector<256x16xf32>
    %194 = arith.addf %188, %193 : vector<256x16xf32>
    %195 = vector.extract_strided_slice %88 {offsets = [2, 2, 0], sizes = [16, 16, 16], strides = [1, 1, 1]} : vector<18x18x16xf32> to vector<16x16x16xf32>
    %196 = vector.shape_cast %195 : vector<16x16x16xf32> to vector<256x16xf32>
    %c8_154 = arith.constant 8 : index
    %c0_155 = arith.constant 0 : index
    %c0_156 = arith.constant 0 : index
    %197 = vector.load %arg6[%c8_154, %c0_155, %c0_156] : memref<9x16x16xf32, #tpu.memory_space<vmem>>, vector<1x16x16xf32>
    %198 = vector.shape_cast %197 : vector<1x16x16xf32> to vector<16x16xf32>
    %cst_157 = arith.constant dense<0.000000e+00> : vector<256x16xf32>
    %199 = tpu.matmul %196, %198, %cst_157 {dimension_numbers = #tpu.dot_dimension_numbers<[1], [0], [0], [1], [0, 0, 1, 1], [], []>} : vector<256x16xf32>, vector<16x16xf32>, vector<256x16xf32> -> vector<256x16xf32>
    %200 = arith.addf %194, %199 : vector<256x16xf32>
    %cst_158 = arith.constant 0.000000e+00 : f32
    %201 = vector.broadcast %cst_158 : f32 to vector<256x16xf32>
    %202 = arith.maximumf %200, %201 : vector<256x16xf32>
    %203 = vector.shape_cast %202 : vector<256x16xf32> to vector<16x16x16xf32>
    %c1_159 = arith.constant 1 : index
    %c1_160 = arith.constant 1 : index
    %c0_161 = arith.constant 0 : index
    %204 = vector.load %arg13[%c1_159, %c1_160, %c0_161] : memref<18x18x16xf32, #tpu.memory_space<vmem>>, vector<16x16x16xf32>
    tpu.vector_store %arg13[%c1_159, %c1_160, %c0_161], %203 {strides = array<i32>} : memref<18x18x16xf32, #tpu.memory_space<vmem>>, vector<16x16x16xf32>,
    %c0_162 = arith.constant 0 : index
    %c0_163 = arith.constant 0 : index
    %c0_164 = arith.constant 0 : index
    %205 = vector.load %arg13[%c0_162, %c0_163, %c0_164] : memref<18x18x16xf32, #tpu.memory_space<vmem>>, vector<18x18x16xf32>
    %cst_165 = arith.constant 0.000000e+00 : f32
    %206 = vector.broadcast %cst_165 : f32 to vector<256x16xf32>
    %c0_166 = arith.constant 0 : index
    %c0_167 = arith.constant 0 : index
    %207 = vector.load %arg9[%c0_166, %c0_167] : memref<1x16xf32, #tpu.memory_space<vmem>>, vector<1x16xf32>
    %208 = vector.broadcast %207 : vector<1x16xf32> to vector<256x16xf32>
    %209 = arith.addf %206, %208 : vector<256x16xf32>
    %210 = vector.extract_strided_slice %205 {offsets = [0, 0, 0], sizes = [16, 16, 16], strides = [1, 1, 1]} : vector<18x18x16xf32> to vector<16x16x16xf32>
    %211 = vector.shape_cast %210 : vector<16x16x16xf32> to vector<256x16xf32>
    %c0_168 = arith.constant 0 : index
    %c0_169 = arith.constant 0 : index
    %c0_170 = arith.constant 0 : index
    %212 = vector.load %arg8[%c0_168, %c0_169, %c0_170] : memref<9x16x16xf32, #tpu.memory_space<vmem>>, vector<1x16x16xf32>
    %213 = vector.shape_cast %212 : vector<1x16x16xf32> to vector<16x16xf32>
    %cst_171 = arith.constant dense<0.000000e+00> : vector<256x16xf32>
    %214 = tpu.matmul %211, %213, %cst_171 {dimension_numbers = #tpu.dot_dimension_numbers<[1], [0], [0], [1], [0, 0, 1, 1], [], []>} : vector<256x16xf32>, vector<16x16xf32>, vector<256x16xf32> -> vector<256x16xf32>
    %215 = arith.addf %209, %214 : vector<256x16xf32>
    %216 = vector.extract_strided_slice %205 {offsets = [0, 1, 0], sizes = [16, 16, 16], strides = [1, 1, 1]} : vector<18x18x16xf32> to vector<16x16x16xf32>
    %217 = vector.shape_cast %216 : vector<16x16x16xf32> to vector<256x16xf32>
    %c1_172 = arith.constant 1 : index
    %c0_173 = arith.constant 0 : index
    %c0_174 = arith.constant 0 : index
    %218 = vector.load %arg8[%c1_172, %c0_173, %c0_174] : memref<9x16x16xf32, #tpu.memory_space<vmem>>, vector<1x16x16xf32>
    %219 = vector.shape_cast %218 : vector<1x16x16xf32> to vector<16x16xf32>
    %cst_175 = arith.constant dense<0.000000e+00> : vector<256x16xf32>
    %220 = tpu.matmul %217, %219, %cst_175 {dimension_numbers = #tpu.dot_dimension_numbers<[1], [0], [0], [1], [0, 0, 1, 1], [], []>} : vector<256x16xf32>, vector<16x16xf32>, vector<256x16xf32> -> vector<256x16xf32>
    %221 = arith.addf %215, %220 : vector<256x16xf32>
    %222 = vector.extract_strided_slice %205 {offsets = [0, 2, 0], sizes = [16, 16, 16], strides = [1, 1, 1]} : vector<18x18x16xf32> to vector<16x16x16xf32>
    %223 = vector.shape_cast %222 : vector<16x16x16xf32> to vector<256x16xf32>
    %c2_176 = arith.constant 2 : index
    %c0_177 = arith.constant 0 : index
    %c0_178 = arith.constant 0 : index
    %224 = vector.load %arg8[%c2_176, %c0_177, %c0_178] : memref<9x16x16xf32, #tpu.memory_space<vmem>>, vector<1x16x16xf32>
    %225 = vector.shape_cast %224 : vector<1x16x16xf32> to vector<16x16xf32>
    %cst_179 = arith.constant dense<0.000000e+00> : vector<256x16xf32>
    %226 = tpu.matmul %223, %225, %cst_179 {dimension_numbers = #tpu.dot_dimension_numbers<[1], [0], [0], [1], [0, 0, 1, 1], [], []>} : vector<256x16xf32>, vector<16x16xf32>, vector<256x16xf32> -> vector<256x16xf32>
    %227 = arith.addf %221, %226 : vector<256x16xf32>
    %228 = vector.extract_strided_slice %205 {offsets = [1, 0, 0], sizes = [16, 16, 16], strides = [1, 1, 1]} : vector<18x18x16xf32> to vector<16x16x16xf32>
    %229 = vector.shape_cast %228 : vector<16x16x16xf32> to vector<256x16xf32>
    %c3_180 = arith.constant 3 : index
    %c0_181 = arith.constant 0 : index
    %c0_182 = arith.constant 0 : index
    %230 = vector.load %arg8[%c3_180, %c0_181, %c0_182] : memref<9x16x16xf32, #tpu.memory_space<vmem>>, vector<1x16x16xf32>
    %231 = vector.shape_cast %230 : vector<1x16x16xf32> to vector<16x16xf32>
    %cst_183 = arith.constant dense<0.000000e+00> : vector<256x16xf32>
    %232 = tpu.matmul %229, %231, %cst_183 {dimension_numbers = #tpu.dot_dimension_numbers<[1], [0], [0], [1], [0, 0, 1, 1], [], []>} : vector<256x16xf32>, vector<16x16xf32>, vector<256x16xf32> -> vector<256x16xf32>
    %233 = arith.addf %227, %232 : vector<256x16xf32>
    %234 = vector.extract_strided_slice %205 {offsets = [1, 1, 0], sizes = [16, 16, 16], strides = [1, 1, 1]} : vector<18x18x16xf32> to vector<16x16x16xf32>
    %235 = vector.shape_cast %234 : vector<16x16x16xf32> to vector<256x16xf32>
    %c4_184 = arith.constant 4 : index
    %c0_185 = arith.constant 0 : index
    %c0_186 = arith.constant 0 : index
    %236 = vector.load %arg8[%c4_184, %c0_185, %c0_186] : memref<9x16x16xf32, #tpu.memory_space<vmem>>, vector<1x16x16xf32>
    %237 = vector.shape_cast %236 : vector<1x16x16xf32> to vector<16x16xf32>
    %cst_187 = arith.constant dense<0.000000e+00> : vector<256x16xf32>
    %238 = tpu.matmul %235, %237, %cst_187 {dimension_numbers = #tpu.dot_dimension_numbers<[1], [0], [0], [1], [0, 0, 1, 1], [], []>} : vector<256x16xf32>, vector<16x16xf32>, vector<256x16xf32> -> vector<256x16xf32>
    %239 = arith.addf %233, %238 : vector<256x16xf32>
    %240 = vector.extract_strided_slice %205 {offsets = [1, 2, 0], sizes = [16, 16, 16], strides = [1, 1, 1]} : vector<18x18x16xf32> to vector<16x16x16xf32>
    %241 = vector.shape_cast %240 : vector<16x16x16xf32> to vector<256x16xf32>
    %c5_188 = arith.constant 5 : index
    %c0_189 = arith.constant 0 : index
    %c0_190 = arith.constant 0 : index
    %242 = vector.load %arg8[%c5_188, %c0_189, %c0_190] : memref<9x16x16xf32, #tpu.memory_space<vmem>>, vector<1x16x16xf32>
    %243 = vector.shape_cast %242 : vector<1x16x16xf32> to vector<16x16xf32>
    %cst_191 = arith.constant dense<0.000000e+00> : vector<256x16xf32>
    %244 = tpu.matmul %241, %243, %cst_191 {dimension_numbers = #tpu.dot_dimension_numbers<[1], [0], [0], [1], [0, 0, 1, 1], [], []>} : vector<256x16xf32>, vector<16x16xf32>, vector<256x16xf32> -> vector<256x16xf32>
    %245 = arith.addf %239, %244 : vector<256x16xf32>
    %246 = vector.extract_strided_slice %205 {offsets = [2, 0, 0], sizes = [16, 16, 16], strides = [1, 1, 1]} : vector<18x18x16xf32> to vector<16x16x16xf32>
    %247 = vector.shape_cast %246 : vector<16x16x16xf32> to vector<256x16xf32>
    %c6_192 = arith.constant 6 : index
    %c0_193 = arith.constant 0 : index
    %c0_194 = arith.constant 0 : index
    %248 = vector.load %arg8[%c6_192, %c0_193, %c0_194] : memref<9x16x16xf32, #tpu.memory_space<vmem>>, vector<1x16x16xf32>
    %249 = vector.shape_cast %248 : vector<1x16x16xf32> to vector<16x16xf32>
    %cst_195 = arith.constant dense<0.000000e+00> : vector<256x16xf32>
    %250 = tpu.matmul %247, %249, %cst_195 {dimension_numbers = #tpu.dot_dimension_numbers<[1], [0], [0], [1], [0, 0, 1, 1], [], []>} : vector<256x16xf32>, vector<16x16xf32>, vector<256x16xf32> -> vector<256x16xf32>
    %251 = arith.addf %245, %250 : vector<256x16xf32>
    %252 = vector.extract_strided_slice %205 {offsets = [2, 1, 0], sizes = [16, 16, 16], strides = [1, 1, 1]} : vector<18x18x16xf32> to vector<16x16x16xf32>
    %253 = vector.shape_cast %252 : vector<16x16x16xf32> to vector<256x16xf32>
    %c7_196 = arith.constant 7 : index
    %c0_197 = arith.constant 0 : index
    %c0_198 = arith.constant 0 : index
    %254 = vector.load %arg8[%c7_196, %c0_197, %c0_198] : memref<9x16x16xf32, #tpu.memory_space<vmem>>, vector<1x16x16xf32>
    %255 = vector.shape_cast %254 : vector<1x16x16xf32> to vector<16x16xf32>
    %cst_199 = arith.constant dense<0.000000e+00> : vector<256x16xf32>
    %256 = tpu.matmul %253, %255, %cst_199 {dimension_numbers = #tpu.dot_dimension_numbers<[1], [0], [0], [1], [0, 0, 1, 1], [], []>} : vector<256x16xf32>, vector<16x16xf32>, vector<256x16xf32> -> vector<256x16xf32>
    %257 = arith.addf %251, %256 : vector<256x16xf32>
    %258 = vector.extract_strided_slice %205 {offsets = [2, 2, 0], sizes = [16, 16, 16], strides = [1, 1, 1]} : vector<18x18x16xf32> to vector<16x16x16xf32>
    %259 = vector.shape_cast %258 : vector<16x16x16xf32> to vector<256x16xf32>
    %c8_200 = arith.constant 8 : index
    %c0_201 = arith.constant 0 : index
    %c0_202 = arith.constant 0 : index
    %260 = vector.load %arg8[%c8_200, %c0_201, %c0_202] : memref<9x16x16xf32, #tpu.memory_space<vmem>>, vector<1x16x16xf32>
    %261 = vector.shape_cast %260 : vector<1x16x16xf32> to vector<16x16xf32>
    %cst_203 = arith.constant dense<0.000000e+00> : vector<256x16xf32>
    %262 = tpu.matmul %259, %261, %cst_203 {dimension_numbers = #tpu.dot_dimension_numbers<[1], [0], [0], [1], [0, 0, 1, 1], [], []>} : vector<256x16xf32>, vector<16x16xf32>, vector<256x16xf32> -> vector<256x16xf32>
    %263 = arith.addf %257, %262 : vector<256x16xf32>
    %264 = vector.shape_cast %263 : vector<256x16xf32> to vector<16x16x16xf32>
    %c0_204 = arith.constant 0 : index
    %c0_205 = arith.constant 0 : index
    %c0_206 = arith.constant 0 : index
    %c0_207 = arith.constant 0 : index
    %265 = vector.load %arg10[%c0_204, %c0_205, %c0_206, %c0_207] : memref<1x16x16x16xf32, #tpu.memory_space<vmem>>, vector<1x16x16x16xf32>
    %266 = vector.shape_cast %265 : vector<1x16x16x16xf32> to vector<16x16x16xf32>
    %267 = vector.shape_cast %264 : vector<16x16x16xf32> to vector<1x16x16x16xf32>
    tpu.vector_store %arg10[%c0_204, %c0_205, %c0_206, %c0_207], %267 {strides = array<i32>} : memref<1x16x16x16xf32, #tpu.memory_space<vmem>>, vector<1x16x16x16xf32>,
    return
  }
  func.func @transform_0(%arg0: i32) -> (i32, i32, i32, i32) {
    %c0_i32 = arith.constant 0 : i32
    %c0_i32_0 = arith.constant 0 : i32
    %c0_i32_1 = arith.constant 0 : i32
    %c0_i32_2 = arith.constant 0 : i32
    return %arg0, %c0_i32, %c0_i32_0, %c0_i32_1 : i32, i32, i32, i32
  }
  func.func @transform_1(%arg0: i32) -> (i32, i32, i32, i32) {
    %c0_i32 = arith.constant 0 : i32
    %c0_i32_0 = arith.constant 0 : i32
    %c0_i32_1 = arith.constant 0 : i32
    %c0_i32_2 = arith.constant 0 : i32
    return %arg0, %c0_i32, %c0_i32_0, %c0_i32_1 : i32, i32, i32, i32
  }
  func.func @transform_2(%arg0: i32) -> (i32, i32, i32) {
    %c0_i32 = arith.constant 0 : i32
    %c0_i32_0 = arith.constant 0 : i32
    %c0_i32_1 = arith.constant 0 : i32
    %c0_i32_2 = arith.constant 0 : i32
    return %c0_i32, %c0_i32_0, %c0_i32_1 : i32, i32, i32
  }
  func.func @transform_3(%arg0: i32) -> (i32, i32) {
    %c0_i32 = arith.constant 0 : i32
    %c0_i32_0 = arith.constant 0 : i32
    %c0_i32_1 = arith.constant 0 : i32
    return %c0_i32, %c0_i32_0 : i32, i32
  }
  func.func @transform_4(%arg0: i32) -> (i32, i32, i32) {
    %c0_i32 = arith.constant 0 : i32
    %c0_i32_0 = arith.constant 0 : i32
    %c0_i32_1 = arith.constant 0 : i32
    %c0_i32_2 = arith.constant 0 : i32
    return %c0_i32, %c0_i32_0, %c0_i32_1 : i32, i32, i32
  }
  func.func @transform_5(%arg0: i32) -> (i32, i32, i32) {
    %c0_i32 = arith.constant 0 : i32
    %c0_i32_0 = arith.constant 0 : i32
    %c0_i32_1 = arith.constant 0 : i32
    %c0_i32_2 = arith.constant 0 : i32
    return %c0_i32, %c0_i32_0, %c0_i32_1 : i32, i32, i32
  }
  func.func @transform_6(%arg0: i32) -> (i32, i32) {
    %c0_i32 = arith.constant 0 : i32
    %c0_i32_0 = arith.constant 0 : i32
    %c0_i32_1 = arith.constant 0 : i32
    return %c0_i32, %c0_i32_0 : i32, i32
  }
  func.func @transform_7(%arg0: i32) -> (i32, i32, i32) {
    %c0_i32 = arith.constant 0 : i32
    %c0_i32_0 = arith.constant 0 : i32
    %c0_i32_1 = arith.constant 0 : i32
    %c0_i32_2 = arith.constant 0 : i32
    return %c0_i32, %c0_i32_0, %c0_i32_1 : i32, i32, i32
  }
  func.func @transform_8(%arg0: i32) -> (i32, i32) {
    %c0_i32 = arith.constant 0 : i32
    %c0_i32_0 = arith.constant 0 : i32
    %c0_i32_1 = arith.constant 0 : i32
    return %c0_i32, %c0_i32_0 : i32, i32
  }
  func.func @transform_9(%arg0: i32) -> (i32, i32, i32, i32) {
    %c0_i32 = arith.constant 0 : i32
    %c0_i32_0 = arith.constant 0 : i32
    %c0_i32_1 = arith.constant 0 : i32
    %c0_i32_2 = arith.constant 0 : i32
    return %arg0, %c0_i32, %c0_i32_0, %c0_i32_1 : i32, i32, i32, i32
  }
}

</mosaic_0001>

<llo_original>
// kernel: tpu_custom_call.1
$region0: #{tpu_custom_call.1}
  #allocation0 [shape = 'u32[]', space=smem, size = 0x4, offset = 0x4, fixed_abs, tag = 'smem constant byte address 0x4 - core index']
  #allocation1 [shape = 'u32[72,128]{1,0:T(1,128)}', space=vmem, size = 0x9000, scoped, tag = 'internal scratch']
  #allocation2 [shape = 'f32[18,18,16]{2,1,0:T(8,128)}', space=vmem, size = 0x36000, scoped, tag = 'scratch operand']
  #allocation3 [shape = 'f32[18,18,16]{2,1,0:T(8,128)}', space=vmem, size = 0x36000, scoped, tag = 'scratch operand']
  #allocation4 [shape = 'f32[18,18,16]{2,1,0:T(8,128)}', space=vmem, size = 0x36000, scoped, tag = 'scratch operand']
  %s0 = inlined_call_operand.hbm [shape: f32[2,8,8,32], index: 0, kind: input, shape index: {}]
  %s1 = inlined_call_operand.hbm [shape: f32[2,16,16,16], index: 1, kind: input, shape index: {}]
  %s2 = inlined_call_operand.vmem [shape: f32[4,32,16], index: 2, kind: input, shape index: {}]
  %s3 = inlined_call_operand.vmem [shape: f32[1,16], index: 3, kind: input, shape index: {}]
  %s4 = inlined_call_operand.vmem [shape: f32[9,16,16], index: 4, kind: input, shape index: {}]
  %s5 = inlined_call_operand.hbm [shape: f32[9,16,16], index: 5, kind: input, shape index: {}]
  %s6 = inlined_call_operand.vmem [shape: f32[1,16], index: 6, kind: input, shape index: {}]
  %s7 = inlined_call_operand.hbm [shape: f32[9,16,16], index: 7, kind: input, shape index: {}]
  %s8 = inlined_call_operand.vmem [shape: f32[1,16], index: 8, kind: input, shape index: {}]
  %s9 = inlined_call_operand.hbm [shape: f32[2,16,16,16], index: 9, kind: output, shape index: {}]
  %s10 = sld [smem:[#allocation0]]
  $region85: #{tpu_custom_call.1} parent=0
    _
  %s12 = ssub.s32 1, %s10
  %s13 = scalar_select 0, %s12, %s10
  $region1: #{tpu_custom_call.1} parent=0
    #allocation5 [shape = 'u8[65536]{0}', space=vmem, size = 0x10000, scoped, tag = 'input window, operand 0']
    #allocation6 [shape = 's32[2]{0}', space=sflag, size = 0x8, scoped, tag = 'scoped memory for tpu_custom_call.1']
    #allocation7 [shape = 's32[2]{0}', space=sflag, size = 0x8, scoped, tag = 'scoped memory for tpu_custom_call.1']
    #allocation8 [shape = 'u8[262144]{0}', space=vmem, size = 0x40000, scoped, tag = 'input window, operand 1']
    #allocation9 [shape = 's32[2]{0}', space=sflag, size = 0x8, scoped, tag = 'scoped memory for tpu_custom_call.1']
    #allocation10 [shape = 'u8[73728]{0}', space=vmem, size = 0x12000, scoped, tag = 'input window, operand 5, single buffered']
    #allocation11 [shape = 'u8[73728]{0}', space=vmem, size = 0x12000, scoped, tag = 'input window, operand 7, single buffered']
    #allocation12 [shape = 's32[1]{0}', space=sflag, size = 0x4, scoped, tag = 'scoped memory for tpu_custom_call.1']
    #allocation13 [shape = 'u8[262144]{0}', space=vmem, size = 0x40000, scoped, tag = 'output window, operand 0']
    %14 = vsyncpa [#allocation6], 0
    %s15 = scalar_lea.sflag [#allocation6], 1
    %16 = vsyncpa %s15, 0
    %17 = vsyncpa [#allocation9], 0
    %s18 = scalar_lea.sflag [#allocation9], 1
    %19 = vsyncpa %s18, 0
    %20 = vsyncpa [#allocation12], 0
    %21 = vsyncpa [#allocation7], 0
    %s22 = scalar_lea.sflag [#allocation7], 1
    %23 = vsyncpa %s22, 0
    loop: start=0, step=1, limit=4
    $region2: #{tpu_custom_call.1} parent=1 // loop_pre_header
      _
    $region3: #{tpu_custom_call.1} parent=1 // loop_header
      %s25 = sphi 0, %s29
      %p26 = scmp.ge.s32.totalorder %s25, 4
      %s35 = sphi 0, %s37
      %s38 = sphi 0, %s35
      %s39 = sphi 0, %s38
      %s55 = sphi 0, %s39
      %s61 = sphi 0, %s63
      %s64 = sphi 0, %s61
      %s65 = sphi 0, %s64
      %s81 = sphi 0, %s65
      %s85 = sphi 0, %s85
      %s87 = sphi 0, %s85
      %s88 = sphi 0, %s87
      %s102 = sphi 0, %s88
      %s106 = sphi 0, %s106
      %s108 = sphi 0, %s106
      %s109 = sphi 0, %s108
      %s123 = sphi 0, %s109
      %s127 = sphi 0, %s127
      %s129 = sphi 0, %s127
      %s130 = sphi 0, %s129
      %s144 = sphi 0, %s130
      %s148 = sphi 0, %s148
      %s150 = sphi 0, %s148
      %s151 = sphi 0, %s150
      %s165 = sphi 0, %s151
      %s169 = sphi 0, %s169
      %s171 = sphi 0, %s169
      %s172 = sphi 0, %s171
      %s186 = sphi 0, %s172
      %s190 = sphi 0, %s190
      %s192 = sphi 0, %s190
      %s193 = sphi 0, %s192
      %s207 = sphi 0, %s193
      %s211 = sphi 0, %s211
      %s213 = sphi 0, %s211
      %s214 = sphi 0, %s213
      %s228 = sphi 0, %s214
      %s234 = sphi 0, %s236
      %s237 = sphi 0, %s234
      %s238 = sphi 0, %s237
      %s254 = sphi 0, %s238
    $region4: #{tpu_custom_call.1} parent=1 // loop_header_branch
      %28 = sbr.rel (%p26) target = $region8
    $region5: #{tpu_custom_call.1} parent=1 // loop_body
      %s30 = ssub.s32 %s25, 1
      %s31 = ssub.s32 %s25, 2
      %s32 = sadd.s32 %s25, 1
      %s33 = ssub.s32 %s25, %s32
      %p34 = scmp.eq.s32.totalorder %s33, 0
      %s36 = sadd.s32 %s35, 1
      %s37 = scalar_select %p34, %s35, %s36
      %p40 = pneg %p34
      %p41 = scmp.eq.s32.totalorder %s25, 1
      %p42 = por %p40, %p41
      %p43 = scmp.ne.s32.totalorder %s35, %s38
      %p44 = scmp.eq.s32.totalorder %s25, 0
      %p45 = por %p43, %p44
      %p46 = scmp.ne.s32.totalorder %s35, %s38
      %p47 = scmp.eq.s32.totalorder %s30, 1
      %p48 = por %p46, %p47
      %p49 = scmp.ne.s32.totalorder %s38, %s39
      %p50 = scmp.eq.s32.totalorder %s30, 0
      %p51 = por %p49, %p50
      %p52 = scmp.ne.s32.totalorder %s38, %s39
      %p53 = scmp.eq.s32.totalorder %s31, 1
      %p54 = por %p52, %p53
      %p56 = scmp.ne.s32.totalorder %s39, %s55
      %p57 = scmp.eq.s32.totalorder %s31, 0
      %p58 = por %p56, %p57
      %s59 = ssub.s32 %s25, %s32
      %p60 = scmp.eq.s32.totalorder %s59, 0
      %s62 = sadd.s32 %s61, 1
      %s63 = scalar_select %p60, %s61, %s62
      %p66 = pneg %p60
      %p67 = scmp.eq.s32.totalorder %s25, 1
      %p68 = por %p66, %p67
      %p69 = scmp.ne.s32.totalorder %s61, %s64
      %p70 = scmp.eq.s32.totalorder %s25, 0
      %p71 = por %p69, %p70
      %p72 = scmp.ne.s32.totalorder %s61, %s64
      %p73 = scmp.eq.s32.totalorder %s30, 1
      %p74 = por %p72, %p73
      %p75 = scmp.ne.s32.totalorder %s64, %s65
      %p76 = scmp.eq.s32.totalorder %s30, 0
      %p77 = por %p75, %p76
      %p78 = scmp.ne.s32.totalorder %s64, %s65
      %p79 = scmp.eq.s32.totalorder %s31, 1
      %p80 = por %p78, %p79
      %p82 = scmp.ne.s32.totalorder %s65, %s81
      %p83 = scmp.eq.s32.totalorder %s31, 0
      %p84 = por %p82, %p83
      %s86 = sadd.s32 %s85, 1
      %p89 = scmp.eq.s32.totalorder %s25, 1
      %p90 = scmp.ne.s32.totalorder %s85, %s87
      %p91 = scmp.eq.s32.totalorder %s25, 0
      %p92 = por %p90, %p91
      %p93 = scmp.ne.s32.totalorder %s85, %s87
      %p94 = scmp.eq.s32.totalorder %s30, 1
      %p95 = por %p93, %p94
      %p96 = scmp.ne.s32.totalorder %s87, %s88
      %p97 = scmp.eq.s32.totalorder %s30, 0
      %p98 = por %p96, %p97
      %p99 = scmp.ne.s32.totalorder %s87, %s88
      %p100 = scmp.eq.s32.totalorder %s31, 1
      %p101 = por %p99, %p100
      %p103 = scmp.ne.s32.totalorder %s88, %s102
      %p104 = scmp.eq.s32.totalorder %s31, 0
      %p105 = por %p103, %p104
      %s107 = sadd.s32 %s106, 1
      %p110 = scmp.eq.s32.totalorder %s25, 1
      %p111 = scmp.ne.s32.totalorder %s106, %s108
      %p112 = scmp.eq.s32.totalorder %s25, 0
      %p113 = por %p111, %p112
      %p114 = scmp.ne.s32.totalorder %s106, %s108
      %p115 = scmp.eq.s32.totalorder %s30, 1
      %p116 = por %p114, %p115
      %p117 = scmp.ne.s32.totalorder %s108, %s109
      %p118 = scmp.eq.s32.totalorder %s30, 0
      %p119 = por %p117, %p118
      %p120 = scmp.ne.s32.totalorder %s108, %s109
      %p121 = scmp.eq.s32.totalorder %s31, 1
      %p122 = por %p120, %p121
      %p124 = scmp.ne.s32.totalorder %s109, %s123
      %p125 = scmp.eq.s32.totalorder %s31, 0
      %p126 = por %p124, %p125
      %s128 = sadd.s32 %s127, 1
      %p131 = scmp.eq.s32.totalorder %s25, 1
      %p132 = scmp.ne.s32.totalorder %s127, %s129
      %p133 = scmp.eq.s32.totalorder %s25, 0
      %p134 = por %p132, %p133
      %p135 = scmp.ne.s32.totalorder %s127, %s129
      %p136 = scmp.eq.s32.totalorder %s30, 1
      %p137 = por %p135, %p136
      %p138 = scmp.ne.s32.totalorder %s129, %s130
      %p139 = scmp.eq.s32.totalorder %s30, 0
      %p140 = por %p138, %p139
      %p141 = scmp.ne.s32.totalorder %s129, %s130
      %p142 = scmp.eq.s32.totalorder %s31, 1
      %p143 = por %p141, %p142
      %p145 = scmp.ne.s32.totalorder %s130, %s144
      %p146 = scmp.eq.s32.totalorder %s31, 0
      %p147 = por %p145, %p146
      %s149 = sadd.s32 %s148, 1
      %p152 = scmp.eq.s32.totalorder %s25, 1
      %p153 = scmp.ne.s32.totalorder %s148, %s150
      %p154 = scmp.eq.s32.totalorder %s25, 0
      %p155 = por %p153, %p154
      %p156 = scmp.ne.s32.totalorder %s148, %s150
      %p157 = scmp.eq.s32.totalorder %s30, 1
      %p158 = por %p156, %p157
      %p159 = scmp.ne.s32.totalorder %s150, %s151
      %p160 = scmp.eq.s32.totalorder %s30, 0
      %p161 = por %p159, %p160
      %p162 = scmp.ne.s32.totalorder %s150, %s151
      %p163 = scmp.eq.s32.totalorder %s31, 1
      %p164 = por %p162, %p163
      %p166 = scmp.ne.s32.totalorder %s151, %s165
      %p167 = scmp.eq.s32.totalorder %s31, 0
      %p168 = por %p166, %p167
      %s170 = sadd.s32 %s169, 1
      %p173 = scmp.eq.s32.totalorder %s25, 1
      %p174 = scmp.ne.s32.totalorder %s169, %s171
      %p175 = scmp.eq.s32.totalorder %s25, 0
      %p176 = por %p174, %p175
      %p177 = scmp.ne.s32.totalorder %s169, %s171
      %p178 = scmp.eq.s32.totalorder %s30, 1
      %p179 = por %p177, %p178
      %p180 = scmp.ne.s32.totalorder %s171, %s172
      %p181 = scmp.eq.s32.totalorder %s30, 0
      %p182 = por %p180, %p181
      %p183 = scmp.ne.s32.totalorder %s171, %s172
      %p184 = scmp.eq.s32.totalorder %s31, 1
      %p185 = por %p183, %p184
      %p187 = scmp.ne.s32.totalorder %s172, %s186
      %p188 = scmp.eq.s32.totalorder %s31, 0
      %p189 = por %p187, %p188
      %s191 = sadd.s32 %s190, 1
      %p194 = scmp.eq.s32.totalorder %s25, 1
      %p195 = scmp.ne.s32.totalorder %s190, %s192
      %p196 = scmp.eq.s32.totalorder %s25, 0
      %p197 = por %p195, %p196
      %p198 = scmp.ne.s32.totalorder %s190, %s192
      %p199 = scmp.eq.s32.totalorder %s30, 1
      %p200 = por %p198, %p199
      %p201 = scmp.ne.s32.totalorder %s192, %s193
      %p202 = scmp.eq.s32.totalorder %s30, 0
      %p203 = por %p201, %p202
      %p204 = scmp.ne.s32.totalorder %s192, %s193
      %p205 = scmp.eq.s32.totalorder %s31, 1
      %p206 = por %p204, %p205
      %p208 = scmp.ne.s32.totalorder %s193, %s207
      %p209 = scmp.eq.s32.totalorder %s31, 0
      %p210 = por %p208, %p209
      %s212 = sadd.s32 %s211, 1
      %p215 = scmp.eq.s32.totalorder %s25, 1
      %p216 = scmp.ne.s32.totalorder %s211, %s213
      %p217 = scmp.eq.s32.totalorder %s25, 0
      %p218 = por %p216, %p217
      %p219 = scmp.ne.s32.totalorder %s211, %s213
      %p220 = scmp.eq.s32.totalorder %s30, 1
      %p221 = por %p219, %p220
      %p222 = scmp.ne.s32.totalorder %s213, %s214
      %p223 = scmp.eq.s32.totalorder %s30, 0
      %p224 = por %p222, %p223
      %p225 = scmp.ne.s32.totalorder %s213, %s214
      %p226 = scmp.eq.s32.totalorder %s31, 1
      %p227 = por %p225, %p226
      %p229 = scmp.ne.s32.totalorder %s214, %s228
      %p230 = scmp.eq.s32.totalorder %s31, 0
      %p231 = por %p229, %p230
      %s232 = ssub.s32 %s25, %s32
      %p233 = scmp.eq.s32.totalorder %s232, 0
      %s235 = sadd.s32 %s234, 1
      %s236 = scalar_select %p233, %s234, %s235
      %p239 = pneg %p233
      %p240 = scmp.eq.s32.totalorder %s25, 1
      %p241 = por %p239, %p240
      %p242 = scmp.ne.s32.totalorder %s234, %s237
      %p243 = scmp.eq.s32.totalorder %s25, 0
      %p244 = por %p242, %p243
      %p245 = scmp.ne.s32.totalorder %s234, %s237
      %p246 = scmp.eq.s32.totalorder %s30, 1
      %p247 = por %p245, %p246
      %p248 = scmp.ne.s32.totalorder %s237, %s238
      %p249 = scmp.eq.s32.totalorder %s30, 0
      %p250 = por %p248, %p249
      %p251 = scmp.ne.s32.totalorder %s237, %s238
      %p252 = scmp.eq.s32.totalorder %s31, 1
      %p253 = por %p251, %p252
      %p255 = scmp.ne.s32.totalorder %s238, %s254
      %p256 = scmp.eq.s32.totalorder %s31, 0
      %p257 = por %p255, %p256
      %p258 = scmp.le.s32.totalorder 1, %s25
      %p259 = scmp.lt.s32.totalorder %s25, 3
      %p260 = pnand %p258, %p259
      %p261 = pneg %p260
      // Predicated region
      $region9: #{tpu_custom_call.1} parent=5 // pred_check
        _
      $region10: #{tpu_custom_call.1} parent=5 // pred_check_branch
        %263 = sbr.rel (%p260) target = $region12
      $region11: #{tpu_custom_call.1} parent=5 // pred_region
        %s264 = ssub.s32 %s25, 1
        // Predicated region
        $region13: #{tpu_custom_call.1} parent=11 // pred_check
          %p265 = pneg %p98
        $region14: #{tpu_custom_call.1} parent=11 // pred_check_branch
          %267 = sbr.rel (%p265) target = $region16
        $region15: #{tpu_custom_call.1} parent=11 // pred_region
          _
        $region16: #{tpu_custom_call.1} parent=11 // pred_fallthru
          _
        // Predicated region
        $region17: #{tpu_custom_call.1} parent=11 // pred_check
          %p268 = pneg %p119
        $region18: #{tpu_custom_call.1} parent=11 // pred_check_branch
          %270 = sbr.rel (%p268) target = $region20
        $region19: #{tpu_custom_call.1} parent=11 // pred_region
          _
        $region20: #{tpu_custom_call.1} parent=11 // pred_fallthru
          _
        // Predicated region
        $region21: #{tpu_custom_call.1} parent=11 // pred_check
          %p271 = pneg %p140
        $region22: #{tpu_custom_call.1} parent=11 // pred_check_branch
          %273 = sbr.rel (%p271) target = $region24
        $region23: #{tpu_custom_call.1} parent=11 // pred_region
          _
        $region24: #{tpu_custom_call.1} parent=11 // pred_fallthru
          _
        // Predicated region
        $region25: #{tpu_custom_call.1} parent=11 // pred_check
          %p274 = pneg %p161
        $region26: #{tpu_custom_call.1} parent=11 // pred_check_branch
          %276 = sbr.rel (%p274) target = $region28
        $region27: #{tpu_custom_call.1} parent=11 // pred_region
          %278 = vsyncadd [#allocation9], 0
          %s279 = sshll.u32 %s5, 4
          %s280 = int_to_ptr.hbm [resolvable:$true] %s279
          %s281 = sshll.u32 [#allocation10], 4
          %s282 = int_to_ptr.vmem [resolvable:$true] %s281
          %287 = dma.hbm_to_vmem [thread:$0]  %s280, 2304, %s282, [#allocation9], 128, 128, 8
        $region28: #{tpu_custom_call.1} parent=11 // pred_fallthru
          _
        // Predicated region
        $region29: #{tpu_custom_call.1} parent=11 // pred_check
          %p288 = pneg %p182
        $region30: #{tpu_custom_call.1} parent=11 // pred_check_branch
          %290 = sbr.rel (%p288) target = $region32
        $region31: #{tpu_custom_call.1} parent=11 // pred_region
          _
        $region32: #{tpu_custom_call.1} parent=11 // pred_fallthru
          _
        // Predicated region
        $region33: #{tpu_custom_call.1} parent=11 // pred_check
          %p291 = pneg %p203
        $region34: #{tpu_custom_call.1} parent=11 // pred_check_branch
          %293 = sbr.rel (%p291) target = $region36
        $region35: #{tpu_custom_call.1} parent=11 // pred_region
          %295 = vsyncadd [#allocation12], 0
          %s296 = sshll.u32 %s7, 4
          %s297 = int_to_ptr.hbm [resolvable:$true] %s296
          %s298 = sshll.u32 [#allocation11], 4
          %s299 = int_to_ptr.vmem [resolvable:$true] %s298
          %304 = dma.hbm_to_vmem [thread:$0]  %s297, 2304, %s299, [#allocation12], 128, 128, 8
        $region36: #{tpu_custom_call.1} parent=11 // pred_fallthru
          _
        // Predicated region
        $region37: #{tpu_custom_call.1} parent=11 // pred_check
          %p305 = pneg %p224
        $region38: #{tpu_custom_call.1} parent=11 // pred_check_branch
          %307 = sbr.rel (%p305) target = $region40
        $region39: #{tpu_custom_call.1} parent=11 // pred_region
          _
        $region40: #{tpu_custom_call.1} parent=11 // pred_fallthru
          _
      $region12: #{tpu_custom_call.1} parent=5 // pred_fallthru
        _
      %p308 = scmp.lt.s32.totalorder %s25, 2
      // Predicated region
      $region41: #{tpu_custom_call.1} parent=5 // pred_check
        %p309 = pneg %p308
      $region42: #{tpu_custom_call.1} parent=5 // pred_check_branch
        %311 = sbr.rel (%p309) target = $region44
      $region43: #{tpu_custom_call.1} parent=5 // pred_region
        // Predicated region
        $region45: #{tpu_custom_call.1} parent=43 // pred_check
          %p312 = pneg %p45
        $region46: #{tpu_custom_call.1} parent=43 // pred_check_branch
          %314 = sbr.rel (%p312) target = $region48
        $region47: #{tpu_custom_call.1} parent=43 // pred_region
          %s315 = sand.u32 %s35, 1
          %s316 = scalar_lea.sflag [#allocation6], %s315
          %s317 = sand.u32 %s35, 1
          %s318 = smul.addr %s317, 64
          %s319 = scalar_lea.vmem [#allocation5], %s318
          %321 = vsyncadd %s316, 0
          %s322 = smul.addr %s25, 8
          %s323 = smul.addr %s322, 8
          %s324 = scalar_lea.hbm %s0, %s323
          %s325 = sshll.u32 %s324, 4
          %s326 = int_to_ptr.hbm [resolvable:$true] %s325
          %s327 = sshll.u32 %s319, 4
          %s328 = int_to_ptr.vmem [resolvable:$true] %s327
          %333 = dma.hbm_to_vmem [thread:$0]  %s326, 1024, %s328, %s316, 128, 128, 8
        $region48: #{tpu_custom_call.1} parent=43 // pred_fallthru
          _
        // Predicated region
        $region49: #{tpu_custom_call.1} parent=43 // pred_check
          %p334 = pneg %p71
        $region50: #{tpu_custom_call.1} parent=43 // pred_check_branch
          %336 = sbr.rel (%p334) target = $region52
        $region51: #{tpu_custom_call.1} parent=43 // pred_region
          %s337 = sand.u32 %s25, 1
          %s338 = scalar_lea.sflag [#allocation9], %s337
          %s339 = sand.u32 %s61, 1
          %s340 = smul.addr %s339, 256
          %s341 = scalar_lea.vmem [#allocation8], %s340
          %343 = vsyncadd %s338, 0
          %s344 = smul.addr %s25, 32
          %s345 = smul.addr %s344, 8
          %s346 = scalar_lea.hbm %s1, %s345
          %s347 = sshll.u32 %s346, 4
          %s348 = int_to_ptr.hbm [resolvable:$true] %s347
          %s349 = sshll.u32 %s341, 4
          %s350 = int_to_ptr.vmem [resolvable:$true] %s349
          %355 = dma.hbm_to_vmem [thread:$0]  %s348, 4096, %s350, %s338, 128, 128, 8
        $region52: #{tpu_custom_call.1} parent=43 // pred_fallthru
          _
      $region44: #{tpu_custom_call.1} parent=5 // pred_fallthru
        _
      %p356 = scmp.le.s32.totalorder 1, %s25
      %p357 = scmp.lt.s32.totalorder %s25, 3
      %p358 = pnand %p356, %p357
      %p359 = pneg %p358
      // Predicated region
      $region53: #{tpu_custom_call.1} parent=5 // pred_check
        _
      $region54: #{tpu_custom_call.1} parent=5 // pred_check_branch
        %361 = sbr.rel (%p358) target = $region56
      $region55: #{tpu_custom_call.1} parent=5 // pred_region
        %s362 = ssub.s32 %s25, 1
        %s363 = sand.u32 %s38, 1
        %s364 = scalar_lea.sflag [#allocation6], %s363
        %s365 = sand.u32 %s38, 1
        %s366 = smul.addr %s365, 64
        %s367 = scalar_lea.vmem [#allocation5], %s366
        // Predicated region
        $region57: #{tpu_custom_call.1} parent=55 // pred_check
          %p368 = pneg %p51
        $region58: #{tpu_custom_call.1} parent=55 // pred_check_branch
          %370 = sbr.rel (%p368) target = $region60
        $region59: #{tpu_custom_call.1} parent=55 // pred_region
          %372 = dma.done %s364, 1024
        $region60: #{tpu_custom_call.1} parent=55 // pred_fallthru
          _
        %s373 = sand.u32 %s30, 1
        %s374 = scalar_lea.sflag [#allocation9], %s373
        %s375 = sand.u32 %s64, 1
        %s376 = smul.addr %s375, 256
        %s377 = scalar_lea.vmem [#allocation8], %s376
        // Predicated region
        $region61: #{tpu_custom_call.1} parent=55 // pred_check
          %p378 = pneg %p77
        $region62: #{tpu_custom_call.1} parent=55 // pred_check_branch
          %380 = sbr.rel (%p378) target = $region64
        $region63: #{tpu_custom_call.1} parent=55 // pred_region
          %382 = dma.done %s374, 4096
        $region64: #{tpu_custom_call.1} parent=55 // pred_fallthru
          _
        // Predicated region
        $region65: #{tpu_custom_call.1} parent=55 // pred_check
          %p383 = pneg %p161
        $region66: #{tpu_custom_call.1} parent=55 // pred_check_branch
          %385 = sbr.rel (%p383) target = $region68
        $region67: #{tpu_custom_call.1} parent=55 // pred_region
          %387 = dma.done [#allocation9], 2304
        $region68: #{tpu_custom_call.1} parent=55 // pred_fallthru
          _
        // Predicated region
        $region69: #{tpu_custom_call.1} parent=55 // pred_check
          %p388 = pneg %p203
        $region70: #{tpu_custom_call.1} parent=55 // pred_check_branch
          %390 = sbr.rel (%p388) target = $region72
        $region71: #{tpu_custom_call.1} parent=55 // pred_region
          %392 = dma.done [#allocation12], 2304
        $region72: #{tpu_custom_call.1} parent=55 // pred_fallthru
          _
        %s393 = sand.u32 %s38, 1
        %s394 = scalar_lea.sflag [#allocation6], %s393
        %s395 = sand.u32 %s38, 1
        %s396 = smul.addr %s395, 64
        %s397 = scalar_lea.vmem [#allocation5], %s396
        %p398 = pneg %p51
        %p399 = pneg %p48
        %s400 = sand.u32 %s30, 1
        %s401 = scalar_lea.sflag [#allocation9], %s400
        %s402 = sand.u32 %s64, 1
        %s403 = smul.addr %s402, 256
        %s404 = scalar_lea.vmem [#allocation8], %s403
        %p405 = pneg %p77
        %p406 = pneg %p74
        %p407 = pneg %p98
        %p408 = pneg %p95
        %p409 = pneg %p119
        %p410 = pneg %p116
        %p411 = pneg %p140
        %p412 = pneg %p137
        %p413 = pneg %p161
        %p414 = pneg %p158
        %p415 = pneg %p182
        %p416 = pneg %p179
        %p417 = pneg %p203
        %p418 = pneg %p200
        %p419 = pneg %p224
        %p420 = pneg %p221
        %p421 = pneg %p250
        %p422 = pneg %p247
        %s423 = sand.u32 %s237, 1
        %s424 = scalar_lea.sflag [#allocation7], %s423
        %s425 = sand.u32 %s237, 1
        %s426 = smul.addr %s425, 256
        %s427 = scalar_lea.vmem [#allocation13], %s426
        %vm428 = vcmask 130048
        %429 = vst.msk [vmem:[#allocation2] sm:$0xff] %vm428, 0.0
        %430 = vst.msk [vmem:[#allocation2 + $0x8] sm:$0xff] %vm428, 0.0
        %vm431 = vcmask 123904
        %432 = vst.msk [vmem:[#allocation2 + $0x10] sm:$0x3] %vm431, 0.0
        %s433 = scalar_lea.vmem [#allocation2], 408
        %434 = vst.msk [vmem:[%s433] sm:$0xff] %vm428, 0.0
        %435 = vst.msk [vmem:[%s433 + $0x8] sm:$0xff] %vm428, 0.0
        %436 = vst.msk [vmem:[%s433 + $0x10] sm:$0x3] %vm431, 0.0
        %vm437 = vcmask 122880
        %438 = vst.msk [vmem:[#allocation2] sm:$0x1] %vm437, 0.0
        %439 = vst.msk [vmem:[#allocation2 + $0x18] sm:$0x1] %vm437, 0.0
        %440 = vst.msk [vmem:[#allocation2 + $0x30] sm:$0x1] %vm437, 0.0
        %441 = vst.msk [vmem:[#allocation2 + $0x48] sm:$0x1] %vm437, 0.0
        %442 = vst.msk [vmem:[#allocation2 + $0x60] sm:$0x1] %vm437, 0.0
        %443 = vst.msk [vmem:[#allocation2 + $0x78] sm:$0x1] %vm437, 0.0
        %444 = vst.msk [vmem:[#allocation2 + $0x90] sm:$0x1] %vm437, 0.0
        %445 = vst.msk [vmem:[#allocation2 + $0xa8] sm:$0x1] %vm437, 0.0
        %446 = vst.msk [vmem:[#allocation2 + $0xc0] sm:$0x1] %vm437, 0.0
        %447 = vst.msk [vmem:[#allocation2 + $0xd8] sm:$0x1] %vm437, 0.0
        %448 = vst.msk [vmem:[#allocation2 + $0xf0] sm:$0x1] %vm437, 0.0
        %449 = vst.msk [vmem:[#allocation2 + $0x108] sm:$0x1] %vm437, 0.0
        %450 = vst.msk [vmem:[#allocation2 + $0x120] sm:$0x1] %vm437, 0.0
        %451 = vst.msk [vmem:[#allocation2 + $0x138] sm:$0x1] %vm437, 0.0
        %452 = vst.msk [vmem:[#allocation2 + $0x150] sm:$0x1] %vm437, 0.0
        %453 = vst.msk [vmem:[#allocation2 + $0x168] sm:$0x1] %vm437, 0.0
        %454 = vst.msk [vmem:[#allocation2 + $0x180] sm:$0x1] %vm437, 0.0
        %455 = vst.msk [vmem:[#allocation2 + $0x198] sm:$0x1] %vm437, 0.0
        %456 = vst.msk [vmem:[#allocation2 + $0x11] sm:$0x1] %vm437, 0.0
        %457 = vst.msk [vmem:[#allocation2 + $0x29] sm:$0x1] %vm437, 0.0
        %458 = vst.msk [vmem:[#allocation2 + $0x41] sm:$0x1] %vm437, 0.0
        %459 = vst.msk [vmem:[#allocation2 + $0x59] sm:$0x1] %vm437, 0.0
        %460 = vst.msk [vmem:[#allocation2 + $0x71] sm:$0x1] %vm437, 0.0
        %461 = vst.msk [vmem:[#allocation2 + $0x89] sm:$0x1] %vm437, 0.0
        %462 = vst.msk [vmem:[#allocation2 + $0xa1] sm:$0x1] %vm437, 0.0
        %463 = vst.msk [vmem:[#allocation2 + $0xb9] sm:$0x1] %vm437, 0.0
        %464 = vst.msk [vmem:[#allocation2 + $0xd1] sm:$0x1] %vm437, 0.0
        %465 = vst.msk [vmem:[#allocation2 + $0xe9] sm:$0x1] %vm437, 0.0
        %466 = vst.msk [vmem:[#allocation2 + $0x101] sm:$0x1] %vm437, 0.0
        %467 = vst.msk [vmem:[#allocation2 + $0x119] sm:$0x1] %vm437, 0.0
        %468 = vst.msk [vmem:[#allocation2 + $0x131] sm:$0x1] %vm437, 0.0
        %469 = vst.msk [vmem:[#allocation2 + $0x149] sm:$0x1] %vm437, 0.0
        %470 = vst.msk [vmem:[#allocation2 + $0x161] sm:$0x1] %vm437, 0.0
        %471 = vst.msk [vmem:[#allocation2 + $0x179] sm:$0x1] %vm437, 0.0
        %472 = vst.msk [vmem:[#allocation2 + $0x191] sm:$0x1] %vm437, 0.0
        %473 = vst.msk [vmem:[#allocation2 + $0x1a9] sm:$0x1] %vm437, 0.0
        %474 = vst.msk [vmem:[#allocation3] sm:$0xff] %vm428, 0.0
        %475 = vst.msk [vmem:[#allocation3 + $0x8] sm:$0xff] %vm428, 0.0
        %476 = vst.msk [vmem:[#allocation3 + $0x10] sm:$0x3] %vm431, 0.0
        %s477 = scalar_lea.vmem [#allocation3], 408
        %478 = vst.msk [vmem:[%s477] sm:$0xff] %vm428, 0.0
        %479 = vst.msk [vmem:[%s477 + $0x8] sm:$0xff] %vm428, 0.0
        %480 = vst.msk [vmem:[%s477 + $0x10] sm:$0x3] %vm431, 0.0
        %481 = vst.msk [vmem:[#allocation3] sm:$0x1] %vm437, 0.0
        %482 = vst.msk [vmem:[#allocation3 + $0x18] sm:$0x1] %vm437, 0.0
        %483 = vst.msk [vmem:[#allocation3 + $0x30] sm:$0x1] %vm437, 0.0
        %484 = vst.msk [vmem:[#allocation3 + $0x48] sm:$0x1] %vm437, 0.0
        %485 = vst.msk [vmem:[#allocation3 + $0x60] sm:$0x1] %vm437, 0.0
        %486 = vst.msk [vmem:[#allocation3 + $0x78] sm:$0x1] %vm437, 0.0
        %487 = vst.msk [vmem:[#allocation3 + $0x90] sm:$0x1] %vm437, 0.0
        %488 = vst.msk [vmem:[#allocation3 + $0xa8] sm:$0x1] %vm437, 0.0
        %489 = vst.msk [vmem:[#allocation3 + $0xc0] sm:$0x1] %vm437, 0.0
        %490 = vst.msk [vmem:[#allocation3 + $0xd8] sm:$0x1] %vm437, 0.0
        %491 = vst.msk [vmem:[#allocation3 + $0xf0] sm:$0x1] %vm437, 0.0
        %492 = vst.msk [vmem:[#allocation3 + $0x108] sm:$0x1] %vm437, 0.0
        %493 = vst.msk [vmem:[#allocation3 + $0x120] sm:$0x1] %vm437, 0.0
        %494 = vst.msk [vmem:[#allocation3 + $0x138] sm:$0x1] %vm437, 0.0
        %495 = vst.msk [vmem:[#allocation3 + $0x150] sm:$0x1] %vm437, 0.0
        %496 = vst.msk [vmem:[#allocation3 + $0x168] sm:$0x1] %vm437, 0.0
        %497 = vst.msk [vmem:[#allocation3 + $0x180] sm:$0x1] %vm437, 0.0
        %498 = vst.msk [vmem:[#allocation3 + $0x198] sm:$0x1] %vm437, 0.0
        %499 = vst.msk [vmem:[#allocation3 + $0x11] sm:$0x1] %vm437, 0.0
        %500 = vst.msk [vmem:[#allocation3 + $0x29] sm:$0x1] %vm437, 0.0
        %501 = vst.msk [vmem:[#allocation3 + $0x41] sm:$0x1] %vm437, 0.0
        %502 = vst.msk [vmem:[#allocation3 + $0x59] sm:$0x1] %vm437, 0.0
        %503 = vst.msk [vmem:[#allocation3 + $0x71] sm:$0x1] %vm437, 0.0
        %504 = vst.msk [vmem:[#allocation3 + $0x89] sm:$0x1] %vm437, 0.0
        %505 = vst.msk [vmem:[#allocation3 + $0xa1] sm:$0x1] %vm437, 0.0
        %506 = vst.msk [vmem:[#allocation3 + $0xb9] sm:$0x1] %vm437, 0.0
        %507 = vst.msk [vmem:[#allocation3 + $0xd1] sm:$0x1] %vm437, 0.0
        %508 = vst.msk [vmem:[#allocation3 + $0xe9] sm:$0x1] %vm437, 0.0
        %509 = vst.msk [vmem:[#allocation3 + $0x101] sm:$0x1] %vm437, 0.0
        %510 = vst.msk [vmem:[#allocation3 + $0x119] sm:$0x1] %vm437, 0.0
        %511 = vst.msk [vmem:[#allocation3 + $0x131] sm:$0x1] %vm437, 0.0
        %512 = vst.msk [vmem:[#allocation3 + $0x149] sm:$0x1] %vm437, 0.0
        %513 = vst.msk [vmem:[#allocation3 + $0x161] sm:$0x1] %vm437, 0.0
        %514 = vst.msk [vmem:[#allocation3 + $0x179] sm:$0x1] %vm437, 0.0
        %515 = vst.msk [vmem:[#allocation3 + $0x191] sm:$0x1] %vm437, 0.0
        %516 = vst.msk [vmem:[#allocation3 + $0x1a9] sm:$0x1] %vm437, 0.0
        %517 = vst.msk [vmem:[#allocation4] sm:$0xff] %vm428, 0.0
        %518 = vst.msk [vmem:[#allocation4 + $0x8] sm:$0xff] %vm428, 0.0
        %519 = vst.msk [vmem:[#allocation4 + $0x10] sm:$0x3] %vm431, 0.0
        %s520 = scalar_lea.vmem [#allocation4], 408
        %521 = vst.msk [vmem:[%s520] sm:$0xff] %vm428, 0.0
        %522 = vst.msk [vmem:[%s520 + $0x8] sm:$0xff] %vm428, 0.0
        %523 = vst.msk [vmem:[%s520 + $0x10] sm:$0x3] %vm431, 0.0
        %524 = vst.msk [vmem:[#allocation4] sm:$0x1] %vm437, 0.0
        %525 = vst.msk [vmem:[#allocation4 + $0x18] sm:$0x1] %vm437, 0.0
        %526 = vst.msk [vmem:[#allocation4 + $0x30] sm:$0x1] %vm437, 0.0
        %527 = vst.msk [vmem:[#allocation4 + $0x48] sm:$0x1] %vm437, 0.0
        %528 = vst.msk [vmem:[#allocation4 + $0x60] sm:$0x1] %vm437, 0.0
        %529 = vst.msk [vmem:[#allocation4 + $0x78] sm:$0x1] %vm437, 0.0
        %530 = vst.msk [vmem:[#allocation4 + $0x90] sm:$0x1] %vm437, 0.0
        %531 = vst.msk [vmem:[#allocation4 + $0xa8] sm:$0x1] %vm437, 0.0
        %532 = vst.msk [vmem:[#allocation4 + $0xc0] sm:$0x1] %vm437, 0.0
        %533 = vst.msk [vmem:[#allocation4 + $0xd8] sm:$0x1] %vm437, 0.0
        %534 = vst.msk [vmem:[#allocation4 + $0xf0] sm:$0x1] %vm437, 0.0
        %535 = vst.msk [vmem:[#allocation4 + $0x108] sm:$0x1] %vm437, 0.0
        %536 = vst.msk [vmem:[#allocation4 + $0x120] sm:$0x1] %vm437, 0.0
        %537 = vst.msk [vmem:[#allocation4 + $0x138] sm:$0x1] %vm437, 0.0
        %538 = vst.msk [vmem:[#allocation4 + $0x150] sm:$0x1] %vm437, 0.0
        %539 = vst.msk [vmem:[#allocation4 + $0x168] sm:$0x1] %vm437, 0.0
        %540 = vst.msk [vmem:[#allocation4 + $0x180] sm:$0x1] %vm437, 0.0
        %541 = vst.msk [vmem:[#allocation4 + $0x198] sm:$0x1] %vm437, 0.0
        %542 = vst.msk [vmem:[#allocation4 + $0x11] sm:$0x1] %vm437, 0.0
        %543 = vst.msk [vmem:[#allocation4 + $0x29] sm:$0x1] %vm437, 0.0
        %544 = vst.msk [vmem:[#allocation4 + $0x41] sm:$0x1] %vm437, 0.0
        %545 = vst.msk [vmem:[#allocation4 + $0x59] sm:$0x1] %vm437, 0.0
        %546 = vst.msk [vmem:[#allocation4 + $0x71] sm:$0x1] %vm437, 0.0
        %547 = vst.msk [vmem:[#allocation4 + $0x89] sm:$0x1] %vm437, 0.0
        %548 = vst.msk [vmem:[#allocation4 + $0xa1] sm:$0x1] %vm437, 0.0
        %549 = vst.msk [vmem:[#allocation4 + $0xb9] sm:$0x1] %vm437, 0.0
        %550 = vst.msk [vmem:[#allocation4 + $0xd1] sm:$0x1] %vm437, 0.0
        %551 = vst.msk [vmem:[#allocation4 + $0xe9] sm:$0x1] %vm437, 0.0
        %552 = vst.msk [vmem:[#allocation4 + $0x101] sm:$0x1] %vm437, 0.0
        %553 = vst.msk [vmem:[#allocation4 + $0x119] sm:$0x1] %vm437, 0.0
        %554 = vst.msk [vmem:[#allocation4 + $0x131] sm:$0x1] %vm437, 0.0
        %555 = vst.msk [vmem:[#allocation4 + $0x149] sm:$0x1] %vm437, 0.0
        %556 = vst.msk [vmem:[#allocation4 + $0x161] sm:$0x1] %vm437, 0.0
        %557 = vst.msk [vmem:[#allocation4 + $0x179] sm:$0x1] %vm437, 0.0
        %558 = vst.msk [vmem:[#allocation4 + $0x191] sm:$0x1] %vm437, 0.0
        %559 = vst.msk [vmem:[#allocation4 + $0x1a9] sm:$0x1] %vm437, 0.0
        %v560 = vld [vmem:[%s367] sm:$0xff]
        %v561 = vld [vmem:[%s367 + $0x8] sm:$0xff]
        %v562 = vld [vmem:[%s367 + $0x10] sm:$0xff]
        %v563 = vld [vmem:[%s367 + $0x18] sm:$0xff]
        %v564 = vld [vmem:[%s367 + $0x20] sm:$0xff]
        %v565 = vld [vmem:[%s367 + $0x28] sm:$0xff]
        %v566 = vld [vmem:[%s367 + $0x30] sm:$0xff]
        %v567 = vld [vmem:[%s367 + $0x38] sm:$0xff]
        %v568 = vld [vmem:[%s2] sm:$0xff]
        %v569 = vld [vmem:[%s2 + $0x8] sm:$0xff]
        %v570 = vld [vmem:[%s2 + $0x10] sm:$0xff]
        %v571 = vld [vmem:[%s2 + $0x18] sm:$0xff]
        %v572 = vld [vmem:[%s3] sm:$0x1]
        %v574 = vperm.slane %v572, 0
        %vm576 = vcmask 261120
        %v578 = vsel %vm576, %v560, 0
        %v581 = vsel %vm576, %v561, 0
        %v584 = vsel %vm576, %v562, 0
        %v587 = vsel %vm576, %v563, 0
        %v590 = vsel %vm576, %v564, 0
        %v593 = vsel %vm576, %v565, 0
        %v596 = vsel %vm576, %v566, 0
        %v599 = vsel %vm576, %v567, 0
        %601 = vmatpush.msra.mxu0 0.0
        %602 = vmatpush.msra.mxu0 0.0
        %603 = vmatpush.msra.mxu0 0.0
        %604 = vmatpush.msra.mxu0 0.0
        %605 = vmatpush.msra.mxu0 0.0
        %606 = vmatpush.msra.mxu0 0.0
        %607 = vmatpush.msra.mxu0 0.0
        %608 = vmatpush.msra.mxu0 0.0
        %609 = vmatpush.msra.mxu0 0.0
        %610 = vmatpush.msra.mxu0 0.0
        %611 = vmatpush.msra.mxu0 0.0
        %612 = vmatpush.msra.mxu0 0.0
        %613 = vmatpush.msra.mxu0 %v571
        %614 = vmatpush.msra.mxu0 %v570
        %615 = vmatpush.msra.mxu0 %v569
        %616 = vmatpush.msra.mxu0 %v568
        %617 = vmatmul.f32.gmra.mxu0 %v578
        %v618 = vpop.f32.mrf.mxu0
        %v619 = vadd.f32 %v574, %v618
        %620 = vmatmul.f32.gmra.mxu0 %v581
        %v621 = vpop.f32.mrf.mxu0
        %v622 = vadd.f32 %v574, %v621
        %623 = vmatmul.f32.gmra.mxu0 %v584
        %v624 = vpop.f32.mrf.mxu0
        %v625 = vadd.f32 %v574, %v624
        %626 = vmatmul.f32.gmra.mxu0 %v587
        %v627 = vpop.f32.mrf.mxu0
        %v628 = vadd.f32 %v574, %v627
        %629 = vmatmul.f32.gmra.mxu0 %v590
        %v630 = vpop.f32.mrf.mxu0
        %v631 = vadd.f32 %v574, %v630
        %632 = vmatmul.f32.gmra.mxu0 %v593
        %v633 = vpop.f32.mrf.mxu0
        %v634 = vadd.f32 %v574, %v633
        %635 = vmatmul.f32.gmra.mxu0 %v596
        %v636 = vpop.f32.mrf.mxu0
        %v637 = vadd.f32 %v574, %v636
        %638 = vmatmul.f32.gmra.mxu0 %v599
        %v639 = vpop.f32.mrf.mxu0
        %v640 = vadd.f32 %v574, %v639
        %641 = vdwg.mxu0
        %s642 = scalar_lea.vmem %s2, 32
        %v643 = vld [vmem:[%s642] sm:$0xff]
        %v644 = vld [vmem:[%s642 + $0x8] sm:$0xff]
        %v645 = vld [vmem:[%s642 + $0x10] sm:$0xff]
        %v646 = vld [vmem:[%s642 + $0x18] sm:$0xff]
        %647 = vmatpush.msra.mxu0 0.0
        %648 = vmatpush.msra.mxu0 0.0
        %649 = vmatpush.msra.mxu0 0.0
        %650 = vmatpush.msra.mxu0 0.0
        %651 = vmatpush.msra.mxu0 0.0
        %652 = vmatpush.msra.mxu0 0.0
        %653 = vmatpush.msra.mxu0 0.0
        %654 = vmatpush.msra.mxu0 0.0
        %655 = vmatpush.msra.mxu0 0.0
        %656 = vmatpush.msra.mxu0 0.0
        %657 = vmatpush.msra.mxu0 0.0
        %658 = vmatpush.msra.mxu0 0.0
        %659 = vmatpush.msra.mxu0 %v646
        %660 = vmatpush.msra.mxu0 %v645
        %661 = vmatpush.msra.mxu0 %v644
        %662 = vmatpush.msra.mxu0 %v643
        %663 = vmatmul.f32.gmra.mxu0 %v578
        %v664 = vpop.f32.mrf.mxu0
        %v665 = vadd.f32 %v574, %v664
        %666 = vmatmul.f32.gmra.mxu0 %v581
        %v667 = vpop.f32.mrf.mxu0
        %v668 = vadd.f32 %v574, %v667
        %669 = vmatmul.f32.gmra.mxu0 %v584
        %v670 = vpop.f32.mrf.mxu0
        %v671 = vadd.f32 %v574, %v670
        %672 = vmatmul.f32.gmra.mxu0 %v587
        %v673 = vpop.f32.mrf.mxu0
        %v674 = vadd.f32 %v574, %v673
        %675 = vmatmul.f32.gmra.mxu0 %v590
        %v676 = vpop.f32.mrf.mxu0
        %v677 = vadd.f32 %v574, %v676
        %678 = vmatmul.f32.gmra.mxu0 %v593
        %v679 = vpop.f32.mrf.mxu0
        %v680 = vadd.f32 %v574, %v679
        %681 = vmatmul.f32.gmra.mxu0 %v596
        %v682 = vpop.f32.mrf.mxu0
        %v683 = vadd.f32 %v574, %v682
        %684 = vmatmul.f32.gmra.mxu0 %v599
        %v685 = vpop.f32.mrf.mxu0
        %v686 = vadd.f32 %v574, %v685
        %687 = vdwg.mxu0
        %s688 = scalar_lea.vmem %s2, 64
        %v689 = vld [vmem:[%s688] sm:$0xff]
        %v690 = vld [vmem:[%s688 + $0x8] sm:$0xff]
        %v691 = vld [vmem:[%s688 + $0x10] sm:$0xff]
        %v692 = vld [vmem:[%s688 + $0x18] sm:$0xff]
        %693 = vmatpush.msra.mxu0 0.0
        %694 = vmatpush.msra.mxu0 0.0
        %695 = vmatpush.msra.mxu0 0.0
        %696 = vmatpush.msra.mxu0 0.0
        %697 = vmatpush.msra.mxu0 0.0
        %698 = vmatpush.msra.mxu0 0.0
        %699 = vmatpush.msra.mxu0 0.0
        %700 = vmatpush.msra.mxu0 0.0
        %701 = vmatpush.msra.mxu0 0.0
        %702 = vmatpush.msra.mxu0 0.0
        %703 = vmatpush.msra.mxu0 0.0
        %704 = vmatpush.msra.mxu0 0.0
        %705 = vmatpush.msra.mxu0 %v692
        %706 = vmatpush.msra.mxu0 %v691
        %707 = vmatpush.msra.mxu0 %v690
        %708 = vmatpush.msra.mxu0 %v689
        %709 = vmatmul.f32.gmra.mxu0 %v578
        %v710 = vpop.f32.mrf.mxu0
        %v711 = vadd.f32 %v574, %v710
        %712 = vmatmul.f32.gmra.mxu0 %v581
        %v713 = vpop.f32.mrf.mxu0
        %v714 = vadd.f32 %v574, %v713
        %715 = vmatmul.f32.gmra.mxu0 %v584
        %v716 = vpop.f32.mrf.mxu0
        %v717 = vadd.f32 %v574, %v716
        %718 = vmatmul.f32.gmra.mxu0 %v587
        %v719 = vpop.f32.mrf.mxu0
        %v720 = vadd.f32 %v574, %v719
        %721 = vmatmul.f32.gmra.mxu0 %v590
        %v722 = vpop.f32.mrf.mxu0
        %v723 = vadd.f32 %v574, %v722
        %724 = vmatmul.f32.gmra.mxu0 %v593
        %v725 = vpop.f32.mrf.mxu0
        %v726 = vadd.f32 %v574, %v725
        %727 = vmatmul.f32.gmra.mxu0 %v596
        %v728 = vpop.f32.mrf.mxu0
        %v729 = vadd.f32 %v574, %v728
        %730 = vmatmul.f32.gmra.mxu0 %v599
        %v731 = vpop.f32.mrf.mxu0
        %v732 = vadd.f32 %v574, %v731
        %733 = vdwg.mxu0
        %s734 = scalar_lea.vmem %s2, 96
        %v735 = vld [vmem:[%s734] sm:$0xff]
        %v736 = vld [vmem:[%s734 + $0x8] sm:$0xff]
        %v737 = vld [vmem:[%s734 + $0x10] sm:$0xff]
        %v738 = vld [vmem:[%s734 + $0x18] sm:$0xff]
        %739 = vmatpush.msra.mxu0 0.0
        %740 = vmatpush.msra.mxu0 0.0
        %741 = vmatpush.msra.mxu0 0.0
        %742 = vmatpush.msra.mxu0 0.0
        %743 = vmatpush.msra.mxu0 0.0
        %744 = vmatpush.msra.mxu0 0.0
        %745 = vmatpush.msra.mxu0 0.0
        %746 = vmatpush.msra.mxu0 0.0
        %747 = vmatpush.msra.mxu0 0.0
        %748 = vmatpush.msra.mxu0 0.0
        %749 = vmatpush.msra.mxu0 0.0
        %750 = vmatpush.msra.mxu0 0.0
        %751 = vmatpush.msra.mxu0 %v738
        %752 = vmatpush.msra.mxu0 %v737
        %753 = vmatpush.msra.mxu0 %v736
        %754 = vmatpush.msra.mxu0 %v735
        %755 = vmatmul.f32.gmra.mxu0 %v578
        %v756 = vpop.f32.mrf.mxu0
        %v757 = vadd.f32 %v574, %v756
        %758 = vmatmul.f32.gmra.mxu0 %v581
        %v759 = vpop.f32.mrf.mxu0
        %v760 = vadd.f32 %v574, %v759
        %761 = vmatmul.f32.gmra.mxu0 %v584
        %v762 = vpop.f32.mrf.mxu0
        %v763 = vadd.f32 %v574, %v762
        %764 = vmatmul.f32.gmra.mxu0 %v587
        %v765 = vpop.f32.mrf.mxu0
        %v766 = vadd.f32 %v574, %v765
        %767 = vmatmul.f32.gmra.mxu0 %v590
        %v768 = vpop.f32.mrf.mxu0
        %v769 = vadd.f32 %v574, %v768
        %770 = vmatmul.f32.gmra.mxu0 %v593
        %v771 = vpop.f32.mrf.mxu0
        %v772 = vadd.f32 %v574, %v771
        %773 = vmatmul.f32.gmra.mxu0 %v596
        %v774 = vpop.f32.mrf.mxu0
        %v775 = vadd.f32 %v574, %v774
        %776 = vmatmul.f32.gmra.mxu0 %v599
        %v777 = vpop.f32.mrf.mxu0
        %v778 = vadd.f32 %v574, %v777
        %779 = vdwg.mxu0
        %v788 = vrot.slane %v619, 1
        %v789 = vrot.slane %v619, 2
        %v790 = vrot.slane %v619, 3
        %v791 = vrot.slane %v619, 4
        %v792 = vrot.slane %v619, 5
        %v793 = vrot.slane %v619, 6
        %v794 = vrot.slane %v619, 7
        %v795 = vrot.slane %v622, 1
        %v796 = vrot.slane %v622, 2
        %v797 = vrot.slane %v622, 3
        %v798 = vrot.slane %v622, 4
        %v799 = vrot.slane %v622, 5
        %v800 = vrot.slane %v622, 6
        %v801 = vrot.slane %v622, 7
        %v802 = vrot.slane %v625, 1
        %v803 = vrot.slane %v625, 2
        %v804 = vrot.slane %v625, 3
        %v805 = vrot.slane %v625, 4
        %v806 = vrot.slane %v625, 5
        %v807 = vrot.slane %v625, 6
        %v808 = vrot.slane %v625, 7
        %v809 = vrot.slane %v628, 1
        %v810 = vrot.slane %v628, 2
        %v811 = vrot.slane %v628, 3
        %v812 = vrot.slane %v628, 4
        %v813 = vrot.slane %v628, 5
        %v814 = vrot.slane %v628, 6
        %v815 = vrot.slane %v628, 7
        %v816 = vrot.slane %v631, 1
        %v817 = vrot.slane %v631, 2
        %v818 = vrot.slane %v631, 3
        %v819 = vrot.slane %v631, 4
        %v820 = vrot.slane %v631, 5
        %v821 = vrot.slane %v631, 6
        %v822 = vrot.slane %v631, 7
        %v823 = vrot.slane %v634, 1
        %v824 = vrot.slane %v634, 2
        %v825 = vrot.slane %v634, 3
        %v826 = vrot.slane %v634, 4
        %v827 = vrot.slane %v634, 5
        %v828 = vrot.slane %v634, 6
        %v829 = vrot.slane %v634, 7
        %v830 = vrot.slane %v637, 1
        %v831 = vrot.slane %v637, 2
        %v832 = vrot.slane %v637, 3
        %v833 = vrot.slane %v637, 4
        %v834 = vrot.slane %v637, 5
        %v835 = vrot.slane %v637, 6
        %v836 = vrot.slane %v637, 7
        %v837 = vrot.slane %v640, 1
        %v838 = vrot.slane %v640, 2
        %v839 = vrot.slane %v640, 3
        %v840 = vrot.slane %v640, 4
        %v841 = vrot.slane %v640, 5
        %v842 = vrot.slane %v640, 6
        %v843 = vrot.slane %v640, 7
        %v844 = vperm.slane %v619, 0
        %v845 = vperm.slane %v788, 0
        %v846 = vperm.slane %v789, 0
        %v847 = vperm.slane %v790, 0
        %v848 = vperm.slane %v791, 0
        %v849 = vperm.slane %v792, 0
        %v850 = vperm.slane %v793, 0
        %v851 = vperm.slane %v794, 0
        %v852 = vperm.slane %v622, 0
        %v853 = vperm.slane %v795, 0
        %v854 = vperm.slane %v796, 0
        %v855 = vperm.slane %v797, 0
        %v856 = vperm.slane %v798, 0
        %v857 = vperm.slane %v799, 0
        %v858 = vperm.slane %v800, 0
        %v859 = vperm.slane %v801, 0
        %v860 = vperm.slane %v625, 0
        %v861 = vperm.slane %v802, 0
        %v862 = vperm.slane %v803, 0
        %v863 = vperm.slane %v804, 0
        %v864 = vperm.slane %v805, 0
        %v865 = vperm.slane %v806, 0
        %v866 = vperm.slane %v807, 0
        %v867 = vperm.slane %v808, 0
        %v868 = vperm.slane %v628, 0
        %v869 = vperm.slane %v809, 0
        %v870 = vperm.slane %v810, 0
        %v871 = vperm.slane %v811, 0
        %v872 = vperm.slane %v812, 0
        %v873 = vperm.slane %v813, 0
        %v874 = vperm.slane %v814, 0
        %v875 = vperm.slane %v815, 0
        %v876 = vperm.slane %v631, 0
        %v877 = vperm.slane %v816, 0
        %v878 = vperm.slane %v817, 0
        %v879 = vperm.slane %v818, 0
        %v880 = vperm.slane %v819, 0
        %v881 = vperm.slane %v820, 0
        %v882 = vperm.slane %v821, 0
        %v883 = vperm.slane %v822, 0
        %v884 = vperm.slane %v634, 0
        %v885 = vperm.slane %v823, 0
        %v886 = vperm.slane %v824, 0
        %v887 = vperm.slane %v825, 0
        %v888 = vperm.slane %v826, 0
        %v889 = vperm.slane %v827, 0
        %v890 = vperm.slane %v828, 0
        %v891 = vperm.slane %v829, 0
        %v892 = vperm.slane %v637, 0
        %v893 = vperm.slane %v830, 0
        %v894 = vperm.slane %v831, 0
        %v895 = vperm.slane %v832, 0
        %v896 = vperm.slane %v833, 0
        %v897 = vperm.slane %v834, 0
        %v898 = vperm.slane %v835, 0
        %v899 = vperm.slane %v836, 0
        %v900 = vperm.slane %v640, 0
        %v901 = vperm.slane %v837, 0
        %v902 = vperm.slane %v838, 0
        %v903 = vperm.slane %v839, 0
        %v904 = vperm.slane %v840, 0
        %v905 = vperm.slane %v841, 0
        %v906 = vperm.slane %v842, 0
        %v907 = vperm.slane %v843, 0
        %v916 = vrot.slane %v665, 1
        %v917 = vrot.slane %v665, 2
        %v918 = vrot.slane %v665, 3
        %v919 = vrot.slane %v665, 4
        %v920 = vrot.slane %v665, 5
        %v921 = vrot.slane %v665, 6
        %v922 = vrot.slane %v665, 7
        %v923 = vrot.slane %v668, 1
        %v924 = vrot.slane %v668, 2
        %v925 = vrot.slane %v668, 3
        %v926 = vrot.slane %v668, 4
        %v927 = vrot.slane %v668, 5
        %v928 = vrot.slane %v668, 6
        %v929 = vrot.slane %v668, 7
        %v930 = vrot.slane %v671, 1
        %v931 = vrot.slane %v671, 2
        %v932 = vrot.slane %v671, 3
        %v933 = vrot.slane %v671, 4
        %v934 = vrot.slane %v671, 5
        %v935 = vrot.slane %v671, 6
        %v936 = vrot.slane %v671, 7
        %v937 = vrot.slane %v674, 1
        %v938 = vrot.slane %v674, 2
        %v939 = vrot.slane %v674, 3
        %v940 = vrot.slane %v674, 4
        %v941 = vrot.slane %v674, 5
        %v942 = vrot.slane %v674, 6
        %v943 = vrot.slane %v674, 7
        %v944 = vrot.slane %v677, 1
        %v945 = vrot.slane %v677, 2
        %v946 = vrot.slane %v677, 3
        %v947 = vrot.slane %v677, 4
        %v948 = vrot.slane %v677, 5
        %v949 = vrot.slane %v677, 6
        %v950 = vrot.slane %v677, 7
        %v951 = vrot.slane %v680, 1
        %v952 = vrot.slane %v680, 2
        %v953 = vrot.slane %v680, 3
        %v954 = vrot.slane %v680, 4
        %v955 = vrot.slane %v680, 5
        %v956 = vrot.slane %v680, 6
        %v957 = vrot.slane %v680, 7
        %v958 = vrot.slane %v683, 1
        %v959 = vrot.slane %v683, 2
        %v960 = vrot.slane %v683, 3
        %v961 = vrot.slane %v683, 4
        %v962 = vrot.slane %v683, 5
        %v963 = vrot.slane %v683, 6
        %v964 = vrot.slane %v683, 7
        %v965 = vrot.slane %v686, 1
        %v966 = vrot.slane %v686, 2
        %v967 = vrot.slane %v686, 3
        %v968 = vrot.slane %v686, 4
        %v969 = vrot.slane %v686, 5
        %v970 = vrot.slane %v686, 6
        %v971 = vrot.slane %v686, 7
        %v972 = vperm.slane %v665, 0
        %v973 = vperm.slane %v916, 0
        %v974 = vperm.slane %v917, 0
        %v975 = vperm.slane %v918, 0
        %v976 = vperm.slane %v919, 0
        %v977 = vperm.slane %v920, 0
        %v978 = vperm.slane %v921, 0
        %v979 = vperm.slane %v922, 0
        %v980 = vperm.slane %v668, 0
        %v981 = vperm.slane %v923, 0
        %v982 = vperm.slane %v924, 0
        %v983 = vperm.slane %v925, 0
        %v984 = vperm.slane %v926, 0
        %v985 = vperm.slane %v927, 0
        %v986 = vperm.slane %v928, 0
        %v987 = vperm.slane %v929, 0
        %v988 = vperm.slane %v671, 0
        %v989 = vperm.slane %v930, 0
        %v990 = vperm.slane %v931, 0
        %v991 = vperm.slane %v932, 0
        %v992 = vperm.slane %v933, 0
        %v993 = vperm.slane %v934, 0
        %v994 = vperm.slane %v935, 0
        %v995 = vperm.slane %v936, 0
        %v996 = vperm.slane %v674, 0
        %v997 = vperm.slane %v937, 0
        %v998 = vperm.slane %v938, 0
        %v999 = vperm.slane %v939, 0
        %v1000 = vperm.slane %v940, 0
        %v1001 = vperm.slane %v941, 0
        %v1002 = vperm.slane %v942, 0
        %v1003 = vperm.slane %v943, 0
        %v1004 = vperm.slane %v677, 0
        %v1005 = vperm.slane %v944, 0
        %v1006 = vperm.slane %v945, 0
        %v1007 = vperm.slane %v946, 0
        %v1008 = vperm.slane %v947, 0
        %v1009 = vperm.slane %v948, 0
        %v1010 = vperm.slane %v949, 0
        %v1011 = vperm.slane %v950, 0
        %v1012 = vperm.slane %v680, 0
        %v1013 = vperm.slane %v951, 0
        %v1014 = vperm.slane %v952, 0
        %v1015 = vperm.slane %v953, 0
        %v1016 = vperm.slane %v954, 0
        %v1017 = vperm.slane %v955, 0
        %v1018 = vperm.slane %v956, 0
        %v1019 = vperm.slane %v957, 0
        %v1020 = vperm.slane %v683, 0
        %v1021 = vperm.slane %v958, 0
        %v1022 = vperm.slane %v959, 0
        %v1023 = vperm.slane %v960, 0
        %v1024 = vperm.slane %v961, 0
        %v1025 = vperm.slane %v962, 0
        %v1026 = vperm.slane %v963, 0
        %v1027 = vperm.slane %v964, 0
        %v1028 = vperm.slane %v686, 0
        %v1029 = vperm.slane %v965, 0
        %v1030 = vperm.slane %v966, 0
        %v1031 = vperm.slane %v967, 0
        %v1032 = vperm.slane %v968, 0
        %v1033 = vperm.slane %v969, 0
        %v1034 = vperm.slane %v970, 0
        %v1035 = vperm.slane %v971, 0
        %v1036 = vlaneseq
        %v1037 = vshrl.u32 %v1036, 7
        %v1038 = vadd.s32 %v1037, 8
        %v1039 = vand.u32 %v1037, 1
        %v1040 = vand.u32 %v1038, 1
        %vm1041 = vcmp.eq.s32.totalorder %v1039, 0
        %vm1042 = vcmp.eq.s32.totalorder %v1040, 0
        %1043 = vst [vmem:[#allocation1] ss:$4 sm:$0xff] %v844
        %s1044 = scalar_lea.vmem [#allocation1], 1
        %1045 = vst [vmem:[%s1044] ss:$4 sm:$0xff] %v845
        %s1046 = scalar_lea.vmem [#allocation1], 2
        %1047 = vst [vmem:[%s1046] ss:$4 sm:$0xff] %v846
        %s1048 = scalar_lea.vmem [#allocation1], 3
        %1049 = vst [vmem:[%s1048] ss:$4 sm:$0xff] %v847
        %s1050 = scalar_lea.vmem [#allocation1], 32
        %1051 = vst [vmem:[%s1050] ss:$4 sm:$0xff] %v848
        %s1052 = scalar_lea.vmem [#allocation1], 33
        %1053 = vst [vmem:[%s1052] ss:$4 sm:$0xff] %v849
        %s1054 = scalar_lea.vmem [#allocation1], 34
        %1055 = vst [vmem:[%s1054] ss:$4 sm:$0xff] %v850
        %s1056 = scalar_lea.vmem [#allocation1], 35
        %1057 = vst [vmem:[%s1056] ss:$4 sm:$0xff] %v851
        %v1058 = vld.sshfl [vmem:[#allocation1] sm:$0xff pattern:$0x73625140]
        %v1059 = vld.sshfl [vmem:[#allocation1 + $0x20] sm:$0xff pattern:$0x73625140]
        %1060 = vst [vmem:[#allocation1] ss:$4 sm:$0xff] %v852
        %1061 = vst [vmem:[%s1044] ss:$4 sm:$0xff] %v853
        %1062 = vst [vmem:[%s1046] ss:$4 sm:$0xff] %v854
        %1063 = vst [vmem:[%s1048] ss:$4 sm:$0xff] %v855
        %1064 = vst [vmem:[%s1050] ss:$4 sm:$0xff] %v856
        %1065 = vst [vmem:[%s1052] ss:$4 sm:$0xff] %v857
        %1066 = vst [vmem:[%s1054] ss:$4 sm:$0xff] %v858
        %1067 = vst [vmem:[%s1056] ss:$4 sm:$0xff] %v859
        %v1068 = vld.sshfl [vmem:[#allocation1] sm:$0xff pattern:$0x73625140]
        %v1069 = vld.sshfl [vmem:[#allocation1 + $0x20] sm:$0xff pattern:$0x73625140]
        %1070 = vst [vmem:[#allocation1] ss:$4 sm:$0xff] %v860
        %1071 = vst [vmem:[%s1044] ss:$4 sm:$0xff] %v861
        %1072 = vst [vmem:[%s1046] ss:$4 sm:$0xff] %v862
        %1073 = vst [vmem:[%s1048] ss:$4 sm:$0xff] %v863
        %1074 = vst [vmem:[%s1050] ss:$4 sm:$0xff] %v864
        %1075 = vst [vmem:[%s1052] ss:$4 sm:$0xff] %v865
        %1076 = vst [vmem:[%s1054] ss:$4 sm:$0xff] %v866
        %1077 = vst [vmem:[%s1056] ss:$4 sm:$0xff] %v867
        %v1078 = vld.sshfl [vmem:[#allocation1] sm:$0xff pattern:$0x73625140]
        %v1079 = vld.sshfl [vmem:[#allocation1 + $0x20] sm:$0xff pattern:$0x73625140]
        %1080 = vst [vmem:[#allocation1] ss:$4 sm:$0xff] %v868
        %1081 = vst [vmem:[%s1044] ss:$4 sm:$0xff] %v869
        %1082 = vst [vmem:[%s1046] ss:$4 sm:$0xff] %v870
        %1083 = vst [vmem:[%s1048] ss:$4 sm:$0xff] %v871
        %1084 = vst [vmem:[%s1050] ss:$4 sm:$0xff] %v872
        %1085 = vst [vmem:[%s1052] ss:$4 sm:$0xff] %v873
        %1086 = vst [vmem:[%s1054] ss:$4 sm:$0xff] %v874
        %1087 = vst [vmem:[%s1056] ss:$4 sm:$0xff] %v875
        %v1088 = vld.sshfl [vmem:[#allocation1] sm:$0xff pattern:$0x73625140]
        %v1089 = vld.sshfl [vmem:[#allocation1 + $0x20] sm:$0xff pattern:$0x73625140]
        %1090 = vst [vmem:[#allocation1] ss:$4 sm:$0xff] %v876
        %1091 = vst [vmem:[%s1044] ss:$4 sm:$0xff] %v877
        %1092 = vst [vmem:[%s1046] ss:$4 sm:$0xff] %v878
        %1093 = vst [vmem:[%s1048] ss:$4 sm:$0xff] %v879
        %1094 = vst [vmem:[%s1050] ss:$4 sm:$0xff] %v880
        %1095 = vst [vmem:[%s1052] ss:$4 sm:$0xff] %v881
        %1096 = vst [vmem:[%s1054] ss:$4 sm:$0xff] %v882
        %1097 = vst [vmem:[%s1056] ss:$4 sm:$0xff] %v883
        %v1098 = vld.sshfl [vmem:[#allocation1] sm:$0xff pattern:$0x73625140]
        %v1099 = vld.sshfl [vmem:[#allocation1 + $0x20] sm:$0xff pattern:$0x73625140]
        %1100 = vst [vmem:[#allocation1] ss:$4 sm:$0xff] %v884
        %1101 = vst [vmem:[%s1044] ss:$4 sm:$0xff] %v885
        %1102 = vst [vmem:[%s1046] ss:$4 sm:$0xff] %v886
        %1103 = vst [vmem:[%s1048] ss:$4 sm:$0xff] %v887
        %1104 = vst [vmem:[%s1050] ss:$4 sm:$0xff] %v888
        %1105 = vst [vmem:[%s1052] ss:$4 sm:$0xff] %v889
        %1106 = vst [vmem:[%s1054] ss:$4 sm:$0xff] %v890
        %1107 = vst [vmem:[%s1056] ss:$4 sm:$0xff] %v891
        %v1108 = vld.sshfl [vmem:[#allocation1] sm:$0xff pattern:$0x73625140]
        %v1109 = vld.sshfl [vmem:[#allocation1 + $0x20] sm:$0xff pattern:$0x73625140]
        %1110 = vst [vmem:[#allocation1] ss:$4 sm:$0xff] %v892
        %1111 = vst [vmem:[%s1044] ss:$4 sm:$0xff] %v893
        %1112 = vst [vmem:[%s1046] ss:$4 sm:$0xff] %v894
        %1113 = vst [vmem:[%s1048] ss:$4 sm:$0xff] %v895
        %1114 = vst [vmem:[%s1050] ss:$4 sm:$0xff] %v896
        %1115 = vst [vmem:[%s1052] ss:$4 sm:$0xff] %v897
        %1116 = vst [vmem:[%s1054] ss:$4 sm:$0xff] %v898
        %1117 = vst [vmem:[%s1056] ss:$4 sm:$0xff] %v899
        %v1118 = vld.sshfl [vmem:[#allocation1] sm:$0xff pattern:$0x73625140]
        %v1119 = vld.sshfl [vmem:[#allocation1 + $0x20] sm:$0xff pattern:$0x73625140]
        %1120 = vst [vmem:[#allocation1] ss:$4 sm:$0xff] %v900
        %1121 = vst [vmem:[%s1044] ss:$4 sm:$0xff] %v901
        %1122 = vst [vmem:[%s1046] ss:$4 sm:$0xff] %v902
        %1123 = vst [vmem:[%s1048] ss:$4 sm:$0xff] %v903
        %1124 = vst [vmem:[%s1050] ss:$4 sm:$0xff] %v904
        %1125 = vst [vmem:[%s1052] ss:$4 sm:$0xff] %v905
        %1126 = vst [vmem:[%s1054] ss:$4 sm:$0xff] %v906
        %1127 = vst [vmem:[%s1056] ss:$4 sm:$0xff] %v907
        %v1128 = vld.sshfl [vmem:[#allocation1] sm:$0xff pattern:$0x73625140]
        %v1129 = vld.sshfl [vmem:[#allocation1 + $0x20] sm:$0xff pattern:$0x73625140]
        %1146 = vst [vmem:[#allocation1] ss:$4 sm:$0xff] %v972
        %s1147 = scalar_lea.vmem [#allocation1], 1
        %1148 = vst [vmem:[%s1147] ss:$4 sm:$0xff] %v973
        %s1149 = scalar_lea.vmem [#allocation1], 2
        %1150 = vst [vmem:[%s1149] ss:$4 sm:$0xff] %v974
        %s1151 = scalar_lea.vmem [#allocation1], 3
        %1152 = vst [vmem:[%s1151] ss:$4 sm:$0xff] %v975
        %s1153 = scalar_lea.vmem [#allocation1], 32
        %1154 = vst [vmem:[%s1153] ss:$4 sm:$0xff] %v976
        %s1155 = scalar_lea.vmem [#allocation1], 33
        %1156 = vst [vmem:[%s1155] ss:$4 sm:$0xff] %v977
        %s1157 = scalar_lea.vmem [#allocation1], 34
        %1158 = vst [vmem:[%s1157] ss:$4 sm:$0xff] %v978
        %s1159 = scalar_lea.vmem [#allocation1], 35
        %1160 = vst [vmem:[%s1159] ss:$4 sm:$0xff] %v979
        %v1161 = vld.sshfl [vmem:[#allocation1] sm:$0xff pattern:$0x73625140]
        %v1162 = vld.sshfl [vmem:[#allocation1 + $0x20] sm:$0xff pattern:$0x73625140]
        %1163 = vst [vmem:[#allocation1] ss:$4 sm:$0xff] %v980
        %1164 = vst [vmem:[%s1147] ss:$4 sm:$0xff] %v981
        %1165 = vst [vmem:[%s1149] ss:$4 sm:$0xff] %v982
        %1166 = vst [vmem:[%s1151] ss:$4 sm:$0xff] %v983
        %1167 = vst [vmem:[%s1153] ss:$4 sm:$0xff] %v984
        %1168 = vst [vmem:[%s1155] ss:$4 sm:$0xff] %v985
        %1169 = vst [vmem:[%s1157] ss:$4 sm:$0xff] %v986
        %1170 = vst [vmem:[%s1159] ss:$4 sm:$0xff] %v987
        %v1171 = vld.sshfl [vmem:[#allocation1] sm:$0xff pattern:$0x73625140]
        %v1172 = vld.sshfl [vmem:[#allocation1 + $0x20] sm:$0xff pattern:$0x73625140]
        %1173 = vst [vmem:[#allocation1] ss:$4 sm:$0xff] %v988
        %1174 = vst [vmem:[%s1147] ss:$4 sm:$0xff] %v989
        %1175 = vst [vmem:[%s1149] ss:$4 sm:$0xff] %v990
        %1176 = vst [vmem:[%s1151] ss:$4 sm:$0xff] %v991
        %1177 = vst [vmem:[%s1153] ss:$4 sm:$0xff] %v992
        %1178 = vst [vmem:[%s1155] ss:$4 sm:$0xff] %v993
        %1179 = vst [vmem:[%s1157] ss:$4 sm:$0xff] %v994
        %1180 = vst [vmem:[%s1159] ss:$4 sm:$0xff] %v995
        %v1181 = vld.sshfl [vmem:[#allocation1] sm:$0xff pattern:$0x73625140]
        %v1182 = vld.sshfl [vmem:[#allocation1 + $0x20] sm:$0xff pattern:$0x73625140]
        %1183 = vst [vmem:[#allocation1] ss:$4 sm:$0xff] %v996
        %1184 = vst [vmem:[%s1147] ss:$4 sm:$0xff] %v997
        %1185 = vst [vmem:[%s1149] ss:$4 sm:$0xff] %v998
        %1186 = vst [vmem:[%s1151] ss:$4 sm:$0xff] %v999
        %1187 = vst [vmem:[%s1153] ss:$4 sm:$0xff] %v1000
        %1188 = vst [vmem:[%s1155] ss:$4 sm:$0xff] %v1001
        %1189 = vst [vmem:[%s1157] ss:$4 sm:$0xff] %v1002
        %1190 = vst [vmem:[%s1159] ss:$4 sm:$0xff] %v1003
        %v1191 = vld.sshfl [vmem:[#allocation1] sm:$0xff pattern:$0x73625140]
        %v1192 = vld.sshfl [vmem:[#allocation1 + $0x20] sm:$0xff pattern:$0x73625140]
        %1193 = vst [vmem:[#allocation1] ss:$4 sm:$0xff] %v1004
        %1194 = vst [vmem:[%s1147] ss:$4 sm:$0xff] %v1005
        %1195 = vst [vmem:[%s1149] ss:$4 sm:$0xff] %v1006
        %1196 = vst [vmem:[%s1151] ss:$4 sm:$0xff] %v1007
        %1197 = vst [vmem:[%s1153] ss:$4 sm:$0xff] %v1008
        %1198 = vst [vmem:[%s1155] ss:$4 sm:$0xff] %v1009
        %1199 = vst [vmem:[%s1157] ss:$4 sm:$0xff] %v1010
        %1200 = vst [vmem:[%s1159] ss:$4 sm:$0xff] %v1011
        %v1201 = vld.sshfl [vmem:[#allocation1] sm:$0xff pattern:$0x73625140]
        %v1202 = vld.sshfl [vmem:[#allocation1 + $0x20] sm:$0xff pattern:$0x73625140]
        %1203 = vst [vmem:[#allocation1] ss:$4 sm:$0xff] %v1012
        %1204 = vst [vmem:[%s1147] ss:$4 sm:$0xff] %v1013
        %1205 = vst [vmem:[%s1149] ss:$4 sm:$0xff] %v1014
        %1206 = vst [vmem:[%s1151] ss:$4 sm:$0xff] %v1015
        %1207 = vst [vmem:[%s1153] ss:$4 sm:$0xff] %v1016
        %1208 = vst [vmem:[%s1155] ss:$4 sm:$0xff] %v1017
        %1209 = vst [vmem:[%s1157] ss:$4 sm:$0xff] %v1018
        %1210 = vst [vmem:[%s1159] ss:$4 sm:$0xff] %v1019
        %v1211 = vld.sshfl [vmem:[#allocation1] sm:$0xff pattern:$0x73625140]
        %v1212 = vld.sshfl [vmem:[#allocation1 + $0x20] sm:$0xff pattern:$0x73625140]
        %1213 = vst [vmem:[#allocation1] ss:$4 sm:$0xff] %v1020
        %1214 = vst [vmem:[%s1147] ss:$4 sm:$0xff] %v1021
        %1215 = vst [vmem:[%s1149] ss:$4 sm:$0xff] %v1022
        %1216 = vst [vmem:[%s1151] ss:$4 sm:$0xff] %v1023
        %1217 = vst [vmem:[%s1153] ss:$4 sm:$0xff] %v1024
        %1218 = vst [vmem:[%s1155] ss:$4 sm:$0xff] %v1025
        %1219 = vst [vmem:[%s1157] ss:$4 sm:$0xff] %v1026
        %1220 = vst [vmem:[%s1159] ss:$4 sm:$0xff] %v1027
        %v1221 = vld.sshfl [vmem:[#allocation1] sm:$0xff pattern:$0x73625140]
        %v1222 = vld.sshfl [vmem:[#allocation1 + $0x20] sm:$0xff pattern:$0x73625140]
        %1223 = vst [vmem:[#allocation1] ss:$4 sm:$0xff] %v1028
        %1224 = vst [vmem:[%s1147] ss:$4 sm:$0xff] %v1029
        %1225 = vst [vmem:[%s1149] ss:$4 sm:$0xff] %v1030
        %1226 = vst [vmem:[%s1151] ss:$4 sm:$0xff] %v1031
        %1227 = vst [vmem:[%s1153] ss:$4 sm:$0xff] %v1032
        %1228 = vst [vmem:[%s1155] ss:$4 sm:$0xff] %v1033
        %1229 = vst [vmem:[%s1157] ss:$4 sm:$0xff] %v1034
        %1230 = vst [vmem:[%s1159] ss:$4 sm:$0xff] %v1035
        %v1231 = vld.sshfl [vmem:[#allocation1] sm:$0xff pattern:$0x73625140]
        %v1232 = vld.sshfl [vmem:[#allocation1 + $0x20] sm:$0xff pattern:$0x73625140]
        %v1249 = vsel %vm1041, %v1058, %v1161
        %v1250 = vsel %vm1042, %v1059, %v1162
        %v1251 = vsel %vm1041, %v1068, %v1171
        %v1252 = vsel %vm1042, %v1069, %v1172
        %v1253 = vsel %vm1041, %v1078, %v1181
        %v1254 = vsel %vm1042, %v1079, %v1182
        %v1255 = vsel %vm1041, %v1088, %v1191
        %v1256 = vsel %vm1042, %v1089, %v1192
        %v1257 = vsel %vm1041, %v1098, %v1201
        %v1258 = vsel %vm1042, %v1099, %v1202
        %v1259 = vsel %vm1041, %v1108, %v1211
        %v1260 = vsel %vm1042, %v1109, %v1212
        %v1261 = vsel %vm1041, %v1118, %v1221
        %v1262 = vsel %vm1042, %v1119, %v1222
        %v1263 = vsel %vm1041, %v1128, %v1231
        %v1264 = vsel %vm1042, %v1129, %v1232
        %v1273 = vrot.slane %v711, 1
        %v1274 = vrot.slane %v711, 2
        %v1275 = vrot.slane %v711, 3
        %v1276 = vrot.slane %v711, 4
        %v1277 = vrot.slane %v711, 5
        %v1278 = vrot.slane %v711, 6
        %v1279 = vrot.slane %v711, 7
        %v1280 = vrot.slane %v714, 1
        %v1281 = vrot.slane %v714, 2
        %v1282 = vrot.slane %v714, 3
        %v1283 = vrot.slane %v714, 4
        %v1284 = vrot.slane %v714, 5
        %v1285 = vrot.slane %v714, 6
        %v1286 = vrot.slane %v714, 7
        %v1287 = vrot.slane %v717, 1
        %v1288 = vrot.slane %v717, 2
        %v1289 = vrot.slane %v717, 3
        %v1290 = vrot.slane %v717, 4
        %v1291 = vrot.slane %v717, 5
        %v1292 = vrot.slane %v717, 6
        %v1293 = vrot.slane %v717, 7
        %v1294 = vrot.slane %v720, 1
        %v1295 = vrot.slane %v720, 2
        %v1296 = vrot.slane %v720, 3
        %v1297 = vrot.slane %v720, 4
        %v1298 = vrot.slane %v720, 5
        %v1299 = vrot.slane %v720, 6
        %v1300 = vrot.slane %v720, 7
        %v1301 = vrot.slane %v723, 1
        %v1302 = vrot.slane %v723, 2
        %v1303 = vrot.slane %v723, 3
        %v1304 = vrot.slane %v723, 4
        %v1305 = vrot.slane %v723, 5
        %v1306 = vrot.slane %v723, 6
        %v1307 = vrot.slane %v723, 7
        %v1308 = vrot.slane %v726, 1
        %v1309 = vrot.slane %v726, 2
        %v1310 = vrot.slane %v726, 3
        %v1311 = vrot.slane %v726, 4
        %v1312 = vrot.slane %v726, 5
        %v1313 = vrot.slane %v726, 6
        %v1314 = vrot.slane %v726, 7
        %v1315 = vrot.slane %v729, 1
        %v1316 = vrot.slane %v729, 2
        %v1317 = vrot.slane %v729, 3
        %v1318 = vrot.slane %v729, 4
        %v1319 = vrot.slane %v729, 5
        %v1320 = vrot.slane %v729, 6
        %v1321 = vrot.slane %v729, 7
        %v1322 = vrot.slane %v732, 1
        %v1323 = vrot.slane %v732, 2
        %v1324 = vrot.slane %v732, 3
        %v1325 = vrot.slane %v732, 4
        %v1326 = vrot.slane %v732, 5
        %v1327 = vrot.slane %v732, 6
        %v1328 = vrot.slane %v732, 7
        %v1329 = vperm.slane %v711, 0
        %v1330 = vperm.slane %v1273, 0
        %v1331 = vperm.slane %v1274, 0
        %v1332 = vperm.slane %v1275, 0
        %v1333 = vperm.slane %v1276, 0
        %v1334 = vperm.slane %v1277, 0
        %v1335 = vperm.slane %v1278, 0
        %v1336 = vperm.slane %v1279, 0
        %v1337 = vperm.slane %v714, 0
        %v1338 = vperm.slane %v1280, 0
        %v1339 = vperm.slane %v1281, 0
        %v1340 = vperm.slane %v1282, 0
        %v1341 = vperm.slane %v1283, 0
        %v1342 = vperm.slane %v1284, 0
        %v1343 = vperm.slane %v1285, 0
        %v1344 = vperm.slane %v1286, 0
        %v1345 = vperm.slane %v717, 0
        %v1346 = vperm.slane %v1287, 0
        %v1347 = vperm.slane %v1288, 0
        %v1348 = vperm.slane %v1289, 0
        %v1349 = vperm.slane %v1290, 0
        %v1350 = vperm.slane %v1291, 0
        %v1351 = vperm.slane %v1292, 0
        %v1352 = vperm.slane %v1293, 0
        %v1353 = vperm.slane %v720, 0
        %v1354 = vperm.slane %v1294, 0
        %v1355 = vperm.slane %v1295, 0
        %v1356 = vperm.slane %v1296, 0
        %v1357 = vperm.slane %v1297, 0
        %v1358 = vperm.slane %v1298, 0
        %v1359 = vperm.slane %v1299, 0
        %v1360 = vperm.slane %v1300, 0
        %v1361 = vperm.slane %v723, 0
        %v1362 = vperm.slane %v1301, 0
        %v1363 = vperm.slane %v1302, 0
        %v1364 = vperm.slane %v1303, 0
        %v1365 = vperm.slane %v1304, 0
        %v1366 = vperm.slane %v1305, 0
        %v1367 = vperm.slane %v1306, 0
        %v1368 = vperm.slane %v1307, 0
        %v1369 = vperm.slane %v726, 0
        %v1370 = vperm.slane %v1308, 0
        %v1371 = vperm.slane %v1309, 0
        %v1372 = vperm.slane %v1310, 0
        %v1373 = vperm.slane %v1311, 0
        %v1374 = vperm.slane %v1312, 0
        %v1375 = vperm.slane %v1313, 0
        %v1376 = vperm.slane %v1314, 0
        %v1377 = vperm.slane %v729, 0
        %v1378 = vperm.slane %v1315, 0
        %v1379 = vperm.slane %v1316, 0
        %v1380 = vperm.slane %v1317, 0
        %v1381 = vperm.slane %v1318, 0
        %v1382 = vperm.slane %v1319, 0
        %v1383 = vperm.slane %v1320, 0
        %v1384 = vperm.slane %v1321, 0
        %v1385 = vperm.slane %v732, 0
        %v1386 = vperm.slane %v1322, 0
        %v1387 = vperm.slane %v1323, 0
        %v1388 = vperm.slane %v1324, 0
        %v1389 = vperm.slane %v1325, 0
        %v1390 = vperm.slane %v1326, 0
        %v1391 = vperm.slane %v1327, 0
        %v1392 = vperm.slane %v1328, 0
        %v1401 = vrot.slane %v757, 1
        %v1402 = vrot.slane %v757, 2
        %v1403 = vrot.slane %v757, 3
        %v1404 = vrot.slane %v757, 4
        %v1405 = vrot.slane %v757, 5
        %v1406 = vrot.slane %v757, 6
        %v1407 = vrot.slane %v757, 7
        %v1408 = vrot.slane %v760, 1
        %v1409 = vrot.slane %v760, 2
        %v1410 = vrot.slane %v760, 3
        %v1411 = vrot.slane %v760, 4
        %v1412 = vrot.slane %v760, 5
        %v1413 = vrot.slane %v760, 6
        %v1414 = vrot.slane %v760, 7
        %v1415 = vrot.slane %v763, 1
        %v1416 = vrot.slane %v763, 2
        %v1417 = vrot.slane %v763, 3
        %v1418 = vrot.slane %v763, 4
        %v1419 = vrot.slane %v763, 5
        %v1420 = vrot.slane %v763, 6
        %v1421 = vrot.slane %v763, 7
        %v1422 = vrot.slane %v766, 1
        %v1423 = vrot.slane %v766, 2
        %v1424 = vrot.slane %v766, 3
        %v1425 = vrot.slane %v766, 4
        %v1426 = vrot.slane %v766, 5
        %v1427 = vrot.slane %v766, 6
        %v1428 = vrot.slane %v766, 7
        %v1429 = vrot.slane %v769, 1
        %v1430 = vrot.slane %v769, 2
        %v1431 = vrot.slane %v769, 3
        %v1432 = vrot.slane %v769, 4
        %v1433 = vrot.slane %v769, 5
        %v1434 = vrot.slane %v769, 6
        %v1435 = vrot.slane %v769, 7
        %v1436 = vrot.slane %v772, 1
        %v1437 = vrot.slane %v772, 2
        %v1438 = vrot.slane %v772, 3
        %v1439 = vrot.slane %v772, 4
        %v1440 = vrot.slane %v772, 5
        %v1441 = vrot.slane %v772, 6
        %v1442 = vrot.slane %v772, 7
        %v1443 = vrot.slane %v775, 1
        %v1444 = vrot.slane %v775, 2
        %v1445 = vrot.slane %v775, 3
        %v1446 = vrot.slane %v775, 4
        %v1447 = vrot.slane %v775, 5
        %v1448 = vrot.slane %v775, 6
        %v1449 = vrot.slane %v775, 7
        %v1450 = vrot.slane %v778, 1
        %v1451 = vrot.slane %v778, 2
        %v1452 = vrot.slane %v778, 3
        %v1453 = vrot.slane %v778, 4
        %v1454 = vrot.slane %v778, 5
        %v1455 = vrot.slane %v778, 6
        %v1456 = vrot.slane %v778, 7
        %v1457 = vperm.slane %v757, 0
        %v1458 = vperm.slane %v1401, 0
        %v1459 = vperm.slane %v1402, 0
        %v1460 = vperm.slane %v1403, 0
        %v1461 = vperm.slane %v1404, 0
        %v1462 = vperm.slane %v1405, 0
        %v1463 = vperm.slane %v1406, 0
        %v1464 = vperm.slane %v1407, 0
        %v1465 = vperm.slane %v760, 0
        %v1466 = vperm.slane %v1408, 0
        %v1467 = vperm.slane %v1409, 0
        %v1468 = vperm.slane %v1410, 0
        %v1469 = vperm.slane %v1411, 0
        %v1470 = vperm.slane %v1412, 0
        %v1471 = vperm.slane %v1413, 0
        %v1472 = vperm.slane %v1414, 0
        %v1473 = vperm.slane %v763, 0
        %v1474 = vperm.slane %v1415, 0
        %v1475 = vperm.slane %v1416, 0
        %v1476 = vperm.slane %v1417, 0
        %v1477 = vperm.slane %v1418, 0
        %v1478 = vperm.slane %v1419, 0
        %v1479 = vperm.slane %v1420, 0
        %v1480 = vperm.slane %v1421, 0
        %v1481 = vperm.slane %v766, 0
        %v1482 = vperm.slane %v1422, 0
        %v1483 = vperm.slane %v1423, 0
        %v1484 = vperm.slane %v1424, 0
        %v1485 = vperm.slane %v1425, 0
        %v1486 = vperm.slane %v1426, 0
        %v1487 = vperm.slane %v1427, 0
        %v1488 = vperm.slane %v1428, 0
        %v1489 = vperm.slane %v769, 0
        %v1490 = vperm.slane %v1429, 0
        %v1491 = vperm.slane %v1430, 0
        %v1492 = vperm.slane %v1431, 0
        %v1493 = vperm.slane %v1432, 0
        %v1494 = vperm.slane %v1433, 0
        %v1495 = vperm.slane %v1434, 0
        %v1496 = vperm.slane %v1435, 0
        %v1497 = vperm.slane %v772, 0
        %v1498 = vperm.slane %v1436, 0
        %v1499 = vperm.slane %v1437, 0
        %v1500 = vperm.slane %v1438, 0
        %v1501 = vperm.slane %v1439, 0
        %v1502 = vperm.slane %v1440, 0
        %v1503 = vperm.slane %v1441, 0
        %v1504 = vperm.slane %v1442, 0
        %v1505 = vperm.slane %v775, 0
        %v1506 = vperm.slane %v1443, 0
        %v1507 = vperm.slane %v1444, 0
        %v1508 = vperm.slane %v1445, 0
        %v1509 = vperm.slane %v1446, 0
        %v1510 = vperm.slane %v1447, 0
        %v1511 = vperm.slane %v1448, 0
        %v1512 = vperm.slane %v1449, 0
        %v1513 = vperm.slane %v778, 0
        %v1514 = vperm.slane %v1450, 0
        %v1515 = vperm.slane %v1451, 0
        %v1516 = vperm.slane %v1452, 0
        %v1517 = vperm.slane %v1453, 0
        %v1518 = vperm.slane %v1454, 0
        %v1519 = vperm.slane %v1455, 0
        %v1520 = vperm.slane %v1456, 0
        %1521 = vst [vmem:[#allocation1] ss:$4 sm:$0xff] %v1329
        %s1522 = scalar_lea.vmem [#allocation1], 1
        %1523 = vst [vmem:[%s1522] ss:$4 sm:$0xff] %v1330
        %s1524 = scalar_lea.vmem [#allocation1], 2
        %1525 = vst [vmem:[%s1524] ss:$4 sm:$0xff] %v1331
        %s1526 = scalar_lea.vmem [#allocation1], 3
        %1527 = vst [vmem:[%s1526] ss:$4 sm:$0xff] %v1332
        %s1528 = scalar_lea.vmem [#allocation1], 32
        %1529 = vst [vmem:[%s1528] ss:$4 sm:$0xff] %v1333
        %s1530 = scalar_lea.vmem [#allocation1], 33
        %1531 = vst [vmem:[%s1530] ss:$4 sm:$0xff] %v1334
        %s1532 = scalar_lea.vmem [#allocation1], 34
        %1533 = vst [vmem:[%s1532] ss:$4 sm:$0xff] %v1335
        %s1534 = scalar_lea.vmem [#allocation1], 35
        %1535 = vst [vmem:[%s1534] ss:$4 sm:$0xff] %v1336
        %v1536 = vld.sshfl [vmem:[#allocation1] sm:$0xff pattern:$0x73625140]
        %v1537 = vld.sshfl [vmem:[#allocation1 + $0x20] sm:$0xff pattern:$0x73625140]
        %1538 = vst [vmem:[#allocation1] ss:$4 sm:$0xff] %v1337
        %1539 = vst [vmem:[%s1522] ss:$4 sm:$0xff] %v1338
        %1540 = vst [vmem:[%s1524] ss:$4 sm:$0xff] %v1339
        %1541 = vst [vmem:[%s1526] ss:$4 sm:$0xff] %v1340
        %1542 = vst [vmem:[%s1528] ss:$4 sm:$0xff] %v1341
        %1543 = vst [vmem:[%s1530] ss:$4 sm:$0xff] %v1342
        %1544 = vst [vmem:[%s1532] ss:$4 sm:$0xff] %v1343
        %1545 = vst [vmem:[%s1534] ss:$4 sm:$0xff] %v1344
        %v1546 = vld.sshfl [vmem:[#allocation1] sm:$0xff pattern:$0x73625140]
        %v1547 = vld.sshfl [vmem:[#allocation1 + $0x20] sm:$0xff pattern:$0x73625140]
        %1548 = vst [vmem:[#allocation1] ss:$4 sm:$0xff] %v1345
        %1549 = vst [vmem:[%s1522] ss:$4 sm:$0xff] %v1346
        %1550 = vst [vmem:[%s1524] ss:$4 sm:$0xff] %v1347
        %1551 = vst [vmem:[%s1526] ss:$4 sm:$0xff] %v1348
        %1552 = vst [vmem:[%s1528] ss:$4 sm:$0xff] %v1349
        %1553 = vst [vmem:[%s1530] ss:$4 sm:$0xff] %v1350
        %1554 = vst [vmem:[%s1532] ss:$4 sm:$0xff] %v1351
        %1555 = vst [vmem:[%s1534] ss:$4 sm:$0xff] %v1352
        %v1556 = vld.sshfl [vmem:[#allocation1] sm:$0xff pattern:$0x73625140]
        %v1557 = vld.sshfl [vmem:[#allocation1 + $0x20] sm:$0xff pattern:$0x73625140]
        %1558 = vst [vmem:[#allocation1] ss:$4 sm:$0xff] %v1353
        %1559 = vst [vmem:[%s1522] ss:$4 sm:$0xff] %v1354
        %1560 = vst [vmem:[%s1524] ss:$4 sm:$0xff] %v1355
        %1561 = vst [vmem:[%s1526] ss:$4 sm:$0xff] %v1356
        %1562 = vst [vmem:[%s1528] ss:$4 sm:$0xff] %v1357
        %1563 = vst [vmem:[%s1530] ss:$4 sm:$0xff] %v1358
        %1564 = vst [vmem:[%s1532] ss:$4 sm:$0xff] %v1359
        %1565 = vst [vmem:[%s1534] ss:$4 sm:$0xff] %v1360
        %v1566 = vld.sshfl [vmem:[#allocation1] sm:$0xff pattern:$0x73625140]
        %v1567 = vld.sshfl [vmem:[#allocation1 + $0x20] sm:$0xff pattern:$0x73625140]
        %1568 = vst [vmem:[#allocation1] ss:$4 sm:$0xff] %v1361
        %1569 = vst [vmem:[%s1522] ss:$4 sm:$0xff] %v1362
        %1570 = vst [vmem:[%s1524] ss:$4 sm:$0xff] %v1363
        %1571 = vst [vmem:[%s1526] ss:$4 sm:$0xff] %v1364
        %1572 = vst [vmem:[%s1528] ss:$4 sm:$0xff] %v1365
        %1573 = vst [vmem:[%s1530] ss:$4 sm:$0xff] %v1366
        %1574 = vst [vmem:[%s1532] ss:$4 sm:$0xff] %v1367
        %1575 = vst [vmem:[%s1534] ss:$4 sm:$0xff] %v1368
        %v1576 = vld.sshfl [vmem:[#allocation1] sm:$0xff pattern:$0x73625140]
        %v1577 = vld.sshfl [vmem:[#allocation1 + $0x20] sm:$0xff pattern:$0x73625140]
        %1578 = vst [vmem:[#allocation1] ss:$4 sm:$0xff] %v1369
        %1579 = vst [vmem:[%s1522] ss:$4 sm:$0xff] %v1370
        %1580 = vst [vmem:[%s1524] ss:$4 sm:$0xff] %v1371
        %1581 = vst [vmem:[%s1526] ss:$4 sm:$0xff] %v1372
        %1582 = vst [vmem:[%s1528] ss:$4 sm:$0xff] %v1373
        %1583 = vst [vmem:[%s1530] ss:$4 sm:$0xff] %v1374
        %1584 = vst [vmem:[%s1532] ss:$4 sm:$0xff] %v1375
        %1585 = vst [vmem:[%s1534] ss:$4 sm:$0xff] %v1376
        %v1586 = vld.sshfl [vmem:[#allocation1] sm:$0xff pattern:$0x73625140]
        %v1587 = vld.sshfl [vmem:[#allocation1 + $0x20] sm:$0xff pattern:$0x73625140]
        %1588 = vst [vmem:[#allocation1] ss:$4 sm:$0xff] %v1377
        %1589 = vst [vmem:[%s1522] ss:$4 sm:$0xff] %v1378
        %1590 = vst [vmem:[%s1524] ss:$4 sm:$0xff] %v1379
        %1591 = vst [vmem:[%s1526] ss:$4 sm:$0xff] %v1380
        %1592 = vst [vmem:[%s1528] ss:$4 sm:$0xff] %v1381
        %1593 = vst [vmem:[%s1530] ss:$4 sm:$0xff] %v1382
        %1594 = vst [vmem:[%s1532] ss:$4 sm:$0xff] %v1383
        %1595 = vst [vmem:[%s1534] ss:$4 sm:$0xff] %v1384
        %v1596 = vld.sshfl [vmem:[#allocation1] sm:$0xff pattern:$0x73625140]
        %v1597 = vld.sshfl [vmem:[#allocation1 + $0x20] sm:$0xff pattern:$0x73625140]
        %1598 = vst [vmem:[#allocation1] ss:$4 sm:$0xff] %v1385
        %1599 = vst [vmem:[%s1522] ss:$4 sm:$0xff] %v1386
        %1600 = vst [vmem:[%s1524] ss:$4 sm:$0xff] %v1387
        %1601 = vst [vmem:[%s1526] ss:$4 sm:$0xff] %v1388
        %1602 = vst [vmem:[%s1528] ss:$4 sm:$0xff] %v1389
        %1603 = vst [vmem:[%s1530] ss:$4 sm:$0xff] %v1390
        %1604 = vst [vmem:[%s1532] ss:$4 sm:$0xff] %v1391
        %1605 = vst [vmem:[%s1534] ss:$4 sm:$0xff] %v1392
        %v1606 = vld.sshfl [vmem:[#allocation1] sm:$0xff pattern:$0x73625140]
        %v1607 = vld.sshfl [vmem:[#allocation1 + $0x20] sm:$0xff pattern:$0x73625140]
        %1624 = vst [vmem:[#allocation1] ss:$4 sm:$0xff] %v1457
        %s1625 = scalar_lea.vmem [#allocation1], 1
        %1626 = vst [vmem:[%s1625] ss:$4 sm:$0xff] %v1458
        %s1627 = scalar_lea.vmem [#allocation1], 2
        %1628 = vst [vmem:[%s1627] ss:$4 sm:$0xff] %v1459
        %s1629 = scalar_lea.vmem [#allocation1], 3
        %1630 = vst [vmem:[%s1629] ss:$4 sm:$0xff] %v1460
        %s1631 = scalar_lea.vmem [#allocation1], 32
        %1632 = vst [vmem:[%s1631] ss:$4 sm:$0xff] %v1461
        %s1633 = scalar_lea.vmem [#allocation1], 33
        %1634 = vst [vmem:[%s1633] ss:$4 sm:$0xff] %v1462
        %s1635 = scalar_lea.vmem [#allocation1], 34
        %1636 = vst [vmem:[%s1635] ss:$4 sm:$0xff] %v1463
        %s1637 = scalar_lea.vmem [#allocation1], 35
        %1638 = vst [vmem:[%s1637] ss:$4 sm:$0xff] %v1464
        %v1639 = vld.sshfl [vmem:[#allocation1] sm:$0xff pattern:$0x73625140]
        %v1640 = vld.sshfl [vmem:[#allocation1 + $0x20] sm:$0xff pattern:$0x73625140]
        %1641 = vst [vmem:[#allocation1] ss:$4 sm:$0xff] %v1465
        %1642 = vst [vmem:[%s1625] ss:$4 sm:$0xff] %v1466
        %1643 = vst [vmem:[%s1627] ss:$4 sm:$0xff] %v1467
        %1644 = vst [vmem:[%s1629] ss:$4 sm:$0xff] %v1468
        %1645 = vst [vmem:[%s1631] ss:$4 sm:$0xff] %v1469
        %1646 = vst [vmem:[%s1633] ss:$4 sm:$0xff] %v1470
        %1647 = vst [vmem:[%s1635] ss:$4 sm:$0xff] %v1471
        %1648 = vst [vmem:[%s1637] ss:$4 sm:$0xff] %v1472
        %v1649 = vld.sshfl [vmem:[#allocation1] sm:$0xff pattern:$0x73625140]
        %v1650 = vld.sshfl [vmem:[#allocation1 + $0x20] sm:$0xff pattern:$0x73625140]
        %1651 = vst [vmem:[#allocation1] ss:$4 sm:$0xff] %v1473
        %1652 = vst [vmem:[%s1625] ss:$4 sm:$0xff] %v1474
        %1653 = vst [vmem:[%s1627] ss:$4 sm:$0xff] %v1475
        %1654 = vst [vmem:[%s1629] ss:$4 sm:$0xff] %v1476
        %1655 = vst [vmem:[%s1631] ss:$4 sm:$0xff] %v1477
        %1656 = vst [vmem:[%s1633] ss:$4 sm:$0xff] %v1478
        %1657 = vst [vmem:[%s1635] ss:$4 sm:$0xff] %v1479
        %1658 = vst [vmem:[%s1637] ss:$4 sm:$0xff] %v1480
        %v1659 = vld.sshfl [vmem:[#allocation1] sm:$0xff pattern:$0x73625140]
        %v1660 = vld.sshfl [vmem:[#allocation1 + $0x20] sm:$0xff pattern:$0x73625140]
        %1661 = vst [vmem:[#allocation1] ss:$4 sm:$0xff] %v1481
        %1662 = vst [vmem:[%s1625] ss:$4 sm:$0xff] %v1482
        %1663 = vst [vmem:[%s1627] ss:$4 sm:$0xff] %v1483
        %1664 = vst [vmem:[%s1629] ss:$4 sm:$0xff] %v1484
        %1665 = vst [vmem:[%s1631] ss:$4 sm:$0xff] %v1485
        %1666 = vst [vmem:[%s1633] ss:$4 sm:$0xff] %v1486
        %1667 = vst [vmem:[%s1635] ss:$4 sm:$0xff] %v1487
        %1668 = vst [vmem:[%s1637] ss:$4 sm:$0xff] %v1488
        %v1669 = vld.sshfl [vmem:[#allocation1] sm:$0xff pattern:$0x73625140]
        %v1670 = vld.sshfl [vmem:[#allocation1 + $0x20] sm:$0xff pattern:$0x73625140]
        %1671 = vst [vmem:[#allocation1] ss:$4 sm:$0xff] %v1489
        %1672 = vst [vmem:[%s1625] ss:$4 sm:$0xff] %v1490
        %1673 = vst [vmem:[%s1627] ss:$4 sm:$0xff] %v1491
        %1674 = vst [vmem:[%s1629] ss:$4 sm:$0xff] %v1492
        %1675 = vst [vmem:[%s1631] ss:$4 sm:$0xff] %v1493
        %1676 = vst [vmem:[%s1633] ss:$4 sm:$0xff] %v1494
        %1677 = vst [vmem:[%s1635] ss:$4 sm:$0xff] %v1495
        %1678 = vst [vmem:[%s1637] ss:$4 sm:$0xff] %v1496
        %v1679 = vld.sshfl [vmem:[#allocation1] sm:$0xff pattern:$0x73625140]
        %v1680 = vld.sshfl [vmem:[#allocation1 + $0x20] sm:$0xff pattern:$0x73625140]
        %1681 = vst [vmem:[#allocation1] ss:$4 sm:$0xff] %v1497
        %1682 = vst [vmem:[%s1625] ss:$4 sm:$0xff] %v1498
        %1683 = vst [vmem:[%s1627] ss:$4 sm:$0xff] %v1499
        %1684 = vst [vmem:[%s1629] ss:$4 sm:$0xff] %v1500
        %1685 = vst [vmem:[%s1631] ss:$4 sm:$0xff] %v1501
        %1686 = vst [vmem:[%s1633] ss:$4 sm:$0xff] %v1502
        %1687 = vst [vmem:[%s1635] ss:$4 sm:$0xff] %v1503
        %1688 = vst [vmem:[%s1637] ss:$4 sm:$0xff] %v1504
        %v1689 = vld.sshfl [vmem:[#allocation1] sm:$0xff pattern:$0x73625140]
        %v1690 = vld.sshfl [vmem:[#allocation1 + $0x20] sm:$0xff pattern:$0x73625140]
        %1691 = vst [vmem:[#allocation1] ss:$4 sm:$0xff] %v1505
        %1692 = vst [vmem:[%s1625] ss:$4 sm:$0xff] %v1506
        %1693 = vst [vmem:[%s1627] ss:$4 sm:$0xff] %v1507
        %1694 = vst [vmem:[%s1629] ss:$4 sm:$0xff] %v1508
        %1695 = vst [vmem:[%s1631] ss:$4 sm:$0xff] %v1509
        %1696 = vst [vmem:[%s1633] ss:$4 sm:$0xff] %v1510
        %1697 = vst [vmem:[%s1635] ss:$4 sm:$0xff] %v1511
        %1698 = vst [vmem:[%s1637] ss:$4 sm:$0xff] %v1512
        %v1699 = vld.sshfl [vmem:[#allocation1] sm:$0xff pattern:$0x73625140]
        %v1700 = vld.sshfl [vmem:[#allocation1 + $0x20] sm:$0xff pattern:$0x73625140]
        %1701 = vst [vmem:[#allocation1] ss:$4 sm:$0xff] %v1513
        %1702 = vst [vmem:[%s1625] ss:$4 sm:$0xff] %v1514
        %1703 = vst [vmem:[%s1627] ss:$4 sm:$0xff] %v1515
        %1704 = vst [vmem:[%s1629] ss:$4 sm:$0xff] %v1516
        %1705 = vst [vmem:[%s1631] ss:$4 sm:$0xff] %v1517
        %1706 = vst [vmem:[%s1633] ss:$4 sm:$0xff] %v1518
        %1707 = vst [vmem:[%s1635] ss:$4 sm:$0xff] %v1519
        %1708 = vst [vmem:[%s1637] ss:$4 sm:$0xff] %v1520
        %v1709 = vld.sshfl [vmem:[#allocation1] sm:$0xff pattern:$0x73625140]
        %v1710 = vld.sshfl [vmem:[#allocation1 + $0x20] sm:$0xff pattern:$0x73625140]
        %v1727 = vsel %vm1041, %v1536, %v1639
        %v1728 = vsel %vm1042, %v1537, %v1640
        %v1729 = vsel %vm1041, %v1546, %v1649
        %v1730 = vsel %vm1042, %v1547, %v1650
        %v1731 = vsel %vm1041, %v1556, %v1659
        %v1732 = vsel %vm1042, %v1557, %v1660
        %v1733 = vsel %vm1041, %v1566, %v1669
        %v1734 = vsel %vm1042, %v1567, %v1670
        %v1735 = vsel %vm1041, %v1576, %v1679
        %v1736 = vsel %vm1042, %v1577, %v1680
        %v1737 = vsel %vm1041, %v1586, %v1689
        %v1738 = vsel %vm1042, %v1587, %v1690
        %v1739 = vsel %vm1041, %v1596, %v1699
        %v1740 = vsel %vm1042, %v1597, %v1700
        %v1741 = vsel %vm1041, %v1606, %v1709
        %v1742 = vsel %vm1042, %v1607, %v1710
        %v1743 = vld [vmem:[%s377] sm:$0xff]
        %v1744 = vld [vmem:[%s377 + $0x8] sm:$0xff]
        %v1745 = vld [vmem:[%s377 + $0x10] sm:$0xff]
        %v1746 = vld [vmem:[%s377 + $0x18] sm:$0xff]
        %v1747 = vld [vmem:[%s377 + $0x20] sm:$0xff]
        %v1748 = vld [vmem:[%s377 + $0x28] sm:$0xff]
        %v1749 = vld [vmem:[%s377 + $0x30] sm:$0xff]
        %v1750 = vld [vmem:[%s377 + $0x38] sm:$0xff]
        %v1751 = vld [vmem:[%s377 + $0x40] sm:$0xff]
        %v1752 = vld [vmem:[%s377 + $0x48] sm:$0xff]
        %v1753 = vld [vmem:[%s377 + $0x50] sm:$0xff]
        %v1754 = vld [vmem:[%s377 + $0x58] sm:$0xff]
        %v1755 = vld [vmem:[%s377 + $0x60] sm:$0xff]
        %v1756 = vld [vmem:[%s377 + $0x68] sm:$0xff]
        %v1757 = vld [vmem:[%s377 + $0x70] sm:$0xff]
        %v1758 = vld [vmem:[%s377 + $0x78] sm:$0xff]
        %v1759 = vld [vmem:[%s377 + $0x80] sm:$0xff]
        %v1760 = vld [vmem:[%s377 + $0x88] sm:$0xff]
        %v1761 = vld [vmem:[%s377 + $0x90] sm:$0xff]
        %v1762 = vld [vmem:[%s377 + $0x98] sm:$0xff]
        %v1763 = vld [vmem:[%s377 + $0xa0] sm:$0xff]
        %v1764 = vld [vmem:[%s377 + $0xa8] sm:$0xff]
        %v1765 = vld [vmem:[%s377 + $0xb0] sm:$0xff]
        %v1766 = vld [vmem:[%s377 + $0xb8] sm:$0xff]
        %v1767 = vld [vmem:[%s377 + $0xc0] sm:$0xff]
        %v1768 = vld [vmem:[%s377 + $0xc8] sm:$0xff]
        %v1769 = vld [vmem:[%s377 + $0xd0] sm:$0xff]
        %v1770 = vld [vmem:[%s377 + $0xd8] sm:$0xff]
        %v1771 = vld [vmem:[%s377 + $0xe0] sm:$0xff]
        %v1772 = vld [vmem:[%s377 + $0xe8] sm:$0xff]
        %v1773 = vld [vmem:[%s377 + $0xf0] sm:$0xff]
        %v1774 = vld [vmem:[%s377 + $0xf8] sm:$0xff]
        %s1775 = scalar_lea.vmem [#allocation2], 24
        %1776 = vst.msk [vmem:[%s1775 + $0x1] sm:$0xff] %vm428, %v1743
        %1777 = vst.msk [vmem:[%s1775 + $0x9] sm:$0xff] %vm428, %v1744
        %1778 = vst.msk [vmem:[%s1775 + $0x19] sm:$0xff] %vm428, %v1745
        %1779 = vst.msk [vmem:[%s1775 + $0x21] sm:$0xff] %vm428, %v1746
        %1780 = vst.msk [vmem:[%s1775 + $0x31] sm:$0xff] %vm428, %v1747
        %1781 = vst.msk [vmem:[%s1775 + $0x39] sm:$0xff] %vm428, %v1748
        %1782 = vst.msk [vmem:[%s1775 + $0x49] sm:$0xff] %vm428, %v1749
        %1783 = vst.msk [vmem:[%s1775 + $0x51] sm:$0xff] %vm428, %v1750
        %1784 = vst.msk [vmem:[%s1775 + $0x61] sm:$0xff] %vm428, %v1751
        %1785 = vst.msk [vmem:[%s1775 + $0x69] sm:$0xff] %vm428, %v1752
        %1786 = vst.msk [vmem:[%s1775 + $0x79] sm:$0xff] %vm428, %v1753
        %1787 = vst.msk [vmem:[%s1775 + $0x81] sm:$0xff] %vm428, %v1754
        %1788 = vst.msk [vmem:[%s1775 + $0x91] sm:$0xff] %vm428, %v1755
        %1789 = vst.msk [vmem:[%s1775 + $0x99] sm:$0xff] %vm428, %v1756
        %1790 = vst.msk [vmem:[%s1775 + $0xa9] sm:$0xff] %vm428, %v1757
        %1791 = vst.msk [vmem:[%s1775 + $0xb1] sm:$0xff] %vm428, %v1758
        %1792 = vst.msk [vmem:[%s1775 + $0xc1] sm:$0xff] %vm428, %v1759
        %1793 = vst.msk [vmem:[%s1775 + $0xc9] sm:$0xff] %vm428, %v1760
        %1794 = vst.msk [vmem:[%s1775 + $0xd9] sm:$0xff] %vm428, %v1761
        %1795 = vst.msk [vmem:[%s1775 + $0xe1] sm:$0xff] %vm428, %v1762
        %1796 = vst.msk [vmem:[%s1775 + $0xf1] sm:$0xff] %vm428, %v1763
        %1797 = vst.msk [vmem:[%s1775 + $0xf9] sm:$0xff] %vm428, %v1764
        %1798 = vst.msk [vmem:[%s1775 + $0x109] sm:$0xff] %vm428, %v1765
        %1799 = vst.msk [vmem:[%s1775 + $0x111] sm:$0xff] %vm428, %v1766
        %1800 = vst.msk [vmem:[%s1775 + $0x121] sm:$0xff] %vm428, %v1767
        %1801 = vst.msk [vmem:[%s1775 + $0x129] sm:$0xff] %vm428, %v1768
        %1802 = vst.msk [vmem:[%s1775 + $0x139] sm:$0xff] %vm428, %v1769
        %1803 = vst.msk [vmem:[%s1775 + $0x141] sm:$0xff] %vm428, %v1770
        %1804 = vst.msk [vmem:[%s1775 + $0x151] sm:$0xff] %vm428, %v1771
        %1805 = vst.msk [vmem:[%s1775 + $0x159] sm:$0xff] %vm428, %v1772
        %1806 = vst.msk [vmem:[%s1775 + $0x169] sm:$0xff] %vm428, %v1773
        %1807 = vst.msk [vmem:[%s1775 + $0x171] sm:$0xff] %vm428, %v1774
        %s1808 = scalar_lea.vmem [#allocation3], 24
        %1809 = vst.msk [vmem:[%s1808 + $0x1] sm:$0xff] %vm428, %v1249
        %1810 = vst.msk [vmem:[%s1808 + $0x9] sm:$0xff] %vm428, %v1250
        %1811 = vst.msk [vmem:[%s1808 + $0x19] sm:$0xff] %vm428, %v1727
        %1812 = vst.msk [vmem:[%s1808 + $0x21] sm:$0xff] %vm428, %v1728
        %1813 = vst.msk [vmem:[%s1808 + $0x31] sm:$0xff] %vm428, %v1251
        %1814 = vst.msk [vmem:[%s1808 + $0x39] sm:$0xff] %vm428, %v1252
        %1815 = vst.msk [vmem:[%s1808 + $0x49] sm:$0xff] %vm428, %v1729
        %1816 = vst.msk [vmem:[%s1808 + $0x51] sm:$0xff] %vm428, %v1730
        %1817 = vst.msk [vmem:[%s1808 + $0x61] sm:$0xff] %vm428, %v1253
        %1818 = vst.msk [vmem:[%s1808 + $0x69] sm:$0xff] %vm428, %v1254
        %1819 = vst.msk [vmem:[%s1808 + $0x79] sm:$0xff] %vm428, %v1731
        %1820 = vst.msk [vmem:[%s1808 + $0x81] sm:$0xff] %vm428, %v1732
        %1821 = vst.msk [vmem:[%s1808 + $0x91] sm:$0xff] %vm428, %v1255
        %1822 = vst.msk [vmem:[%s1808 + $0x99] sm:$0xff] %vm428, %v1256
        %1823 = vst.msk [vmem:[%s1808 + $0xa9] sm:$0xff] %vm428, %v1733
        %1824 = vst.msk [vmem:[%s1808 + $0xb1] sm:$0xff] %vm428, %v1734
        %1825 = vst.msk [vmem:[%s1808 + $0xc1] sm:$0xff] %vm428, %v1257
        %1826 = vst.msk [vmem:[%s1808 + $0xc9] sm:$0xff] %vm428, %v1258
        %1827 = vst.msk [vmem:[%s1808 + $0xd9] sm:$0xff] %vm428, %v1735
        %1828 = vst.msk [vmem:[%s1808 + $0xe1] sm:$0xff] %vm428, %v1736
        %1829 = vst.msk [vmem:[%s1808 + $0xf1] sm:$0xff] %vm428, %v1259
        %1830 = vst.msk [vmem:[%s1808 + $0xf9] sm:$0xff] %vm428, %v1260
        %1831 = vst.msk [vmem:[%s1808 + $0x109] sm:$0xff] %vm428, %v1737
        %1832 = vst.msk [vmem:[%s1808 + $0x111] sm:$0xff] %vm428, %v1738
        %1833 = vst.msk [vmem:[%s1808 + $0x121] sm:$0xff] %vm428, %v1261
        %1834 = vst.msk [vmem:[%s1808 + $0x129] sm:$0xff] %vm428, %v1262
        %1835 = vst.msk [vmem:[%s1808 + $0x139] sm:$0xff] %vm428, %v1739
        %1836 = vst.msk [vmem:[%s1808 + $0x141] sm:$0xff] %vm428, %v1740
        %1837 = vst.msk [vmem:[%s1808 + $0x151] sm:$0xff] %vm428, %v1263
        %1838 = vst.msk [vmem:[%s1808 + $0x159] sm:$0xff] %vm428, %v1264
        %1839 = vst.msk [vmem:[%s1808 + $0x169] sm:$0xff] %vm428, %v1741
        %1840 = vst.msk [vmem:[%s1808 + $0x171] sm:$0xff] %vm428, %v1742
        %v1841 = vld [vmem:[#allocation2] sm:$0xff]
        %v1842 = vld [vmem:[#allocation2 + $0x8] sm:$0xff]
        %v1843 = vld [vmem:[#allocation2 + $0x10] sm:$0x3]
        %v1844 = vld [vmem:[#allocation2 + $0x18] sm:$0xff]
        %v1845 = vld [vmem:[#allocation2 + $0x20] sm:$0xff]
        %v1846 = vld [vmem:[#allocation2 + $0x28] sm:$0x3]
        %v1847 = vld [vmem:[#allocation2 + $0x30] sm:$0xff]
        %v1848 = vld [vmem:[#allocation2 + $0x38] sm:$0xff]
        %v1849 = vld [vmem:[#allocation2 + $0x40] sm:$0x3]
        %v1850 = vld [vmem:[#allocation2 + $0x48] sm:$0xff]
        %v1851 = vld [vmem:[#allocation2 + $0x50] sm:$0xff]
        %v1852 = vld [vmem:[#allocation2 + $0x58] sm:$0x3]
        %v1853 = vld [vmem:[#allocation2 + $0x60] sm:$0xff]
        %v1854 = vld [vmem:[#allocation2 + $0x68] sm:$0xff]
        %v1855 = vld [vmem:[#allocation2 + $0x70] sm:$0x3]
        %v1856 = vld [vmem:[#allocation2 + $0x78] sm:$0xff]
        %v1857 = vld [vmem:[#allocation2 + $0x80] sm:$0xff]
        %v1858 = vld [vmem:[#allocation2 + $0x88] sm:$0x3]
        %v1859 = vld [vmem:[#allocation2 + $0x90] sm:$0xff]
        %v1860 = vld [vmem:[#allocation2 + $0x98] sm:$0xff]
        %v1861 = vld [vmem:[#allocation2 + $0xa0] sm:$0x3]
        %v1862 = vld [vmem:[#allocation2 + $0xa8] sm:$0xff]
        %v1863 = vld [vmem:[#allocation2 + $0xb0] sm:$0xff]
        %v1864 = vld [vmem:[#allocation2 + $0xb8] sm:$0x3]
        %v1865 = vld [vmem:[#allocation2 + $0xc0] sm:$0xff]
        %v1866 = vld [vmem:[#allocation2 + $0xc8] sm:$0xff]
        %v1867 = vld [vmem:[#allocation2 + $0xd0] sm:$0x3]
        %v1868 = vld [vmem:[#allocation2 + $0xd8] sm:$0xff]
        %v1869 = vld [vmem:[#allocation2 + $0xe0] sm:$0xff]
        %v1870 = vld [vmem:[#allocation2 + $0xe8] sm:$0x3]
        %v1871 = vld [vmem:[#allocation2 + $0xf0] sm:$0xff]
        %v1872 = vld [vmem:[#allocation2 + $0xf8] sm:$0xff]
        %v1873 = vld [vmem:[#allocation2 + $0x100] sm:$0x3]
        %v1874 = vld [vmem:[#allocation2 + $0x108] sm:$0xff]
        %v1875 = vld [vmem:[#allocation2 + $0x110] sm:$0xff]
        %v1876 = vld [vmem:[#allocation2 + $0x118] sm:$0x3]
        %v1877 = vld [vmem:[#allocation2 + $0x120] sm:$0xff]
        %v1878 = vld [vmem:[#allocation2 + $0x128] sm:$0xff]
        %v1879 = vld [vmem:[#allocation2 + $0x130] sm:$0x3]
        %v1880 = vld [vmem:[#allocation2 + $0x138] sm:$0xff]
        %v1881 = vld [vmem:[#allocation2 + $0x140] sm:$0xff]
        %v1882 = vld [vmem:[#allocation2 + $0x148] sm:$0x3]
        %v1883 = vld [vmem:[#allocation2 + $0x150] sm:$0xff]
        %v1884 = vld [vmem:[#allocation2 + $0x158] sm:$0xff]
        %v1885 = vld [vmem:[#allocation2 + $0x160] sm:$0x3]
        %v1886 = vld [vmem:[#allocation2 + $0x168] sm:$0xff]
        %v1887 = vld [vmem:[#allocation2 + $0x170] sm:$0xff]
        %v1888 = vld [vmem:[#allocation2 + $0x178] sm:$0x3]
        %v1889 = vld [vmem:[#allocation2 + $0x180] sm:$0xff]
        %v1890 = vld [vmem:[#allocation2 + $0x188] sm:$0xff]
        %v1891 = vld [vmem:[#allocation2 + $0x190] sm:$0x3]
        %v1892 = vld [vmem:[#allocation2 + $0x198] sm:$0xff]
        %v1893 = vld [vmem:[#allocation2 + $0x1a0] sm:$0xff]
        %v1894 = vld [vmem:[#allocation2 + $0x1a8] sm:$0x3]
        %v1895 = vld [vmem:[#allocation3] sm:$0xff]
        %v1896 = vld [vmem:[#allocation3 + $0x8] sm:$0xff]
        %v1897 = vld [vmem:[#allocation3 + $0x10] sm:$0x3]
        %v1898 = vld [vmem:[#allocation3 + $0x18] sm:$0xff]
        %v1899 = vld [vmem:[#allocation3 + $0x20] sm:$0xff]
        %v1900 = vld [vmem:[#allocation3 + $0x28] sm:$0x3]
        %v1901 = vld [vmem:[#allocation3 + $0x30] sm:$0xff]
        %v1902 = vld [vmem:[#allocation3 + $0x38] sm:$0xff]
        %v1903 = vld [vmem:[#allocation3 + $0x40] sm:$0x3]
        %v1904 = vld [vmem:[#allocation3 + $0x48] sm:$0xff]
        %v1905 = vld [vmem:[#allocation3 + $0x50] sm:$0xff]
        %v1906 = vld [vmem:[#allocation3 + $0x58] sm:$0x3]
        %v1907 = vld [vmem:[#allocation3 + $0x60] sm:$0xff]
        %v1908 = vld [vmem:[#allocation3 + $0x68] sm:$0xff]
        %v1909 = vld [vmem:[#allocation3 + $0x70] sm:$0x3]
        %v1910 = vld [vmem:[#allocation3 + $0x78] sm:$0xff]
        %v1911 = vld [vmem:[#allocation3 + $0x80] sm:$0xff]
        %v1912 = vld [vmem:[#allocation3 + $0x88] sm:$0x3]
        %v1913 = vld [vmem:[#allocation3 + $0x90] sm:$0xff]
        %v1914 = vld [vmem:[#allocation3 + $0x98] sm:$0xff]
        %v1915 = vld [vmem:[#allocation3 + $0xa0] sm:$0x3]
        %v1916 = vld [vmem:[#allocation3 + $0xa8] sm:$0xff]
        %v1917 = vld [vmem:[#allocation3 + $0xb0] sm:$0xff]
        %v1918 = vld [vmem:[#allocation3 + $0xb8] sm:$0x3]
        %v1919 = vld [vmem:[#allocation3 + $0xc0] sm:$0xff]
        %v1920 = vld [vmem:[#allocation3 + $0xc8] sm:$0xff]
        %v1921 = vld [vmem:[#allocation3 + $0xd0] sm:$0x3]
        %v1922 = vld [vmem:[#allocation3 + $0xd8] sm:$0xff]
        %v1923 = vld [vmem:[#allocation3 + $0xe0] sm:$0xff]
        %v1924 = vld [vmem:[#allocation3 + $0xe8] sm:$0x3]
        %v1925 = vld [vmem:[#allocation3 + $0xf0] sm:$0xff]
        %v1926 = vld [vmem:[#allocation3 + $0xf8] sm:$0xff]
        %v1927 = vld [vmem:[#allocation3 + $0x100] sm:$0x3]
        %v1928 = vld [vmem:[#allocation3 + $0x108] sm:$0xff]
        %v1929 = vld [vmem:[#allocation3 + $0x110] sm:$0xff]
        %v1930 = vld [vmem:[#allocation3 + $0x118] sm:$0x3]
        %v1931 = vld [vmem:[#allocation3 + $0x120] sm:$0xff]
        %v1932 = vld [vmem:[#allocation3 + $0x128] sm:$0xff]
        %v1933 = vld [vmem:[#allocation3 + $0x130] sm:$0x3]
        %v1934 = vld [vmem:[#allocation3 + $0x138] sm:$0xff]
        %v1935 = vld [vmem:[#allocation3 + $0x140] sm:$0xff]
        %v1936 = vld [vmem:[#allocation3 + $0x148] sm:$0x3]
        %v1937 = vld [vmem:[#allocation3 + $0x150] sm:$0xff]
        %v1938 = vld [vmem:[#allocation3 + $0x158] sm:$0xff]
        %v1939 = vld [vmem:[#allocation3 + $0x160] sm:$0x3]
        %v1940 = vld [vmem:[#allocation3 + $0x168] sm:$0xff]
        %v1941 = vld [vmem:[#allocation3 + $0x170] sm:$0xff]
        %v1942 = vld [vmem:[#allocation3 + $0x178] sm:$0x3]
        %v1943 = vld [vmem:[#allocation3 + $0x180] sm:$0xff]
        %v1944 = vld [vmem:[#allocation3 + $0x188] sm:$0xff]
        %v1945 = vld [vmem:[#allocation3 + $0x190] sm:$0x3]
        %v1946 = vld [vmem:[#allocation3 + $0x198] sm:$0xff]
        %v1947 = vld [vmem:[#allocation3 + $0x1a0] sm:$0xff]
        %v1948 = vld [vmem:[#allocation3 + $0x1a8] sm:$0x3]
        %v1949 = vld [vmem:[%s6] sm:$0x1]
        %v1951 = vperm.slane %v1949, 0
        %v1953 = vadd.f32 %v1951, 0.0
        %v1954 = vld [vmem:[%s4] sm:$0xff]
        %v1955 = vld [vmem:[%s4 + $0x8] sm:$0xff]
        %v1957 = vsel %vm428, %v1841, 0
        %v1960 = vsel %vm428, %v1842, 0
        %v1963 = vsel %vm428, %v1844, 0
        %v1966 = vsel %vm428, %v1845, 0
        %v1969 = vsel %vm428, %v1847, 0
        %v1972 = vsel %vm428, %v1848, 0
        %v1975 = vsel %vm428, %v1850, 0
        %v1978 = vsel %vm428, %v1851, 0
        %v1981 = vsel %vm428, %v1853, 0
        %v1984 = vsel %vm428, %v1854, 0
        %v1987 = vsel %vm428, %v1856, 0
        %v1990 = vsel %vm428, %v1857, 0
        %v1993 = vsel %vm428, %v1859, 0
        %v1996 = vsel %vm428, %v1860, 0
        %v1999 = vsel %vm428, %v1862, 0
        %v2002 = vsel %vm428, %v1863, 0
        %v2005 = vsel %vm428, %v1865, 0
        %v2008 = vsel %vm428, %v1866, 0
        %v2011 = vsel %vm428, %v1868, 0
        %v2014 = vsel %vm428, %v1869, 0
        %v2017 = vsel %vm428, %v1871, 0
        %v2020 = vsel %vm428, %v1872, 0
        %v2023 = vsel %vm428, %v1874, 0
        %v2026 = vsel %vm428, %v1875, 0
        %v2029 = vsel %vm428, %v1877, 0
        %v2032 = vsel %vm428, %v1878, 0
        %v2035 = vsel %vm428, %v1880, 0
        %v2038 = vsel %vm428, %v1881, 0
        %v2041 = vsel %vm428, %v1883, 0
        %v2044 = vsel %vm428, %v1884, 0
        %v2047 = vsel %vm428, %v1886, 0
        %v2050 = vsel %vm428, %v1887, 0
        %2052 = vmatpush.msra.mxu0 0.0
        %2053 = vmatpush.msra.mxu0 0.0
        %2054 = vmatpush.msra.mxu0 0.0
        %2055 = vmatpush.msra.mxu0 0.0
        %2056 = vmatpush.msra.mxu0 0.0
        %2057 = vmatpush.msra.mxu0 0.0
        %2058 = vmatpush.msra.mxu0 0.0
        %2059 = vmatpush.msra.mxu0 0.0
        %2060 = vmatpush.msra.mxu0 0.0
        %2061 = vmatpush.msra.mxu0 0.0
        %2062 = vmatpush.msra.mxu0 0.0
        %2063 = vmatpush.msra.mxu0 0.0
        %2064 = vmatpush.msra.mxu0 0.0
        %2065 = vmatpush.msra.mxu0 0.0
        %2066 = vmatpush.msra.mxu0 %v1955
        %2067 = vmatpush.msra.mxu0 %v1954
        %2068 = vmatmul.f32.gmra.mxu0 %v1957
        %v2069 = vpop.f32.mrf.mxu0
        %v2070 = vadd.f32 0.0, %v2069
        %2071 = vmatmul.f32.gmra.mxu0 %v1960
        %v2072 = vpop.f32.mrf.mxu0
        %v2073 = vadd.f32 0.0, %v2072
        %2074 = vmatmul.f32.gmra.mxu0 %v1963
        %v2075 = vpop.f32.mrf.mxu0
        %v2076 = vadd.f32 0.0, %v2075
        %2077 = vmatmul.f32.gmra.mxu0 %v1966
        %v2078 = vpop.f32.mrf.mxu0
        %v2079 = vadd.f32 0.0, %v2078
        %2080 = vmatmul.f32.gmra.mxu0 %v1969
        %v2081 = vpop.f32.mrf.mxu0
        %v2082 = vadd.f32 0.0, %v2081
        %2083 = vmatmul.f32.gmra.mxu0 %v1972
        %v2084 = vpop.f32.mrf.mxu0
        %v2085 = vadd.f32 0.0, %v2084
        %2086 = vmatmul.f32.gmra.mxu0 %v1975
        %v2087 = vpop.f32.mrf.mxu0
        %v2088 = vadd.f32 0.0, %v2087
        %2089 = vmatmul.f32.gmra.mxu0 %v1978
        %v2090 = vpop.f32.mrf.mxu0
        %v2091 = vadd.f32 0.0, %v2090
        %2092 = vmatmul.f32.gmra.mxu0 %v1981
        %v2093 = vpop.f32.mrf.mxu0
        %v2094 = vadd.f32 0.0, %v2093
        %2095 = vmatmul.f32.gmra.mxu0 %v1984
        %v2096 = vpop.f32.mrf.mxu0
        %v2097 = vadd.f32 0.0, %v2096
        %2098 = vmatmul.f32.gmra.mxu0 %v1987
        %v2099 = vpop.f32.mrf.mxu0
        %v2100 = vadd.f32 0.0, %v2099
        %2101 = vmatmul.f32.gmra.mxu0 %v1990
        %v2102 = vpop.f32.mrf.mxu0
        %v2103 = vadd.f32 0.0, %v2102
        %2104 = vmatmul.f32.gmra.mxu0 %v1993
        %v2105 = vpop.f32.mrf.mxu0
        %v2106 = vadd.f32 0.0, %v2105
        %2107 = vmatmul.f32.gmra.mxu0 %v1996
        %v2108 = vpop.f32.mrf.mxu0
        %v2109 = vadd.f32 0.0, %v2108
        %2110 = vmatmul.f32.gmra.mxu0 %v1999
        %v2111 = vpop.f32.mrf.mxu0
        %v2112 = vadd.f32 0.0, %v2111
        %2113 = vmatmul.f32.gmra.mxu0 %v2002
        %v2114 = vpop.f32.mrf.mxu0
        %v2115 = vadd.f32 0.0, %v2114
        %2116 = vmatmul.f32.gmra.mxu0 %v2005
        %v2117 = vpop.f32.mrf.mxu0
        %v2118 = vadd.f32 0.0, %v2117
        %2119 = vmatmul.f32.gmra.mxu0 %v2008
        %v2120 = vpop.f32.mrf.mxu0
        %v2121 = vadd.f32 0.0, %v2120
        %2122 = vmatmul.f32.gmra.mxu0 %v2011
        %v2123 = vpop.f32.mrf.mxu0
        %v2124 = vadd.f32 0.0, %v2123
        %2125 = vmatmul.f32.gmra.mxu0 %v2014
        %v2126 = vpop.f32.mrf.mxu0
        %v2127 = vadd.f32 0.0, %v2126
        %2128 = vmatmul.f32.gmra.mxu0 %v2017
        %v2129 = vpop.f32.mrf.mxu0
        %v2130 = vadd.f32 0.0, %v2129
        %2131 = vmatmul.f32.gmra.mxu0 %v2020
        %v2132 = vpop.f32.mrf.mxu0
        %v2133 = vadd.f32 0.0, %v2132
        %2134 = vmatmul.f32.gmra.mxu0 %v2023
        %v2135 = vpop.f32.mrf.mxu0
        %v2136 = vadd.f32 0.0, %v2135
        %2137 = vmatmul.f32.gmra.mxu0 %v2026
        %v2138 = vpop.f32.mrf.mxu0
        %v2139 = vadd.f32 0.0, %v2138
        %2140 = vmatmul.f32.gmra.mxu0 %v2029
        %v2141 = vpop.f32.mrf.mxu0
        %v2142 = vadd.f32 0.0, %v2141
        %2143 = vmatmul.f32.gmra.mxu0 %v2032
        %v2144 = vpop.f32.mrf.mxu0
        %v2145 = vadd.f32 0.0, %v2144
        %2146 = vmatmul.f32.gmra.mxu0 %v2035
        %v2147 = vpop.f32.mrf.mxu0
        %v2148 = vadd.f32 0.0, %v2147
        %2149 = vmatmul.f32.gmra.mxu0 %v2038
        %v2150 = vpop.f32.mrf.mxu0
        %v2151 = vadd.f32 0.0, %v2150
        %2152 = vmatmul.f32.gmra.mxu0 %v2041
        %v2153 = vpop.f32.mrf.mxu0
        %v2154 = vadd.f32 0.0, %v2153
        %2155 = vmatmul.f32.gmra.mxu0 %v2044
        %v2156 = vpop.f32.mrf.mxu0
        %v2157 = vadd.f32 0.0, %v2156
        %2158 = vmatmul.f32.gmra.mxu0 %v2047
        %v2159 = vpop.f32.mrf.mxu0
        %v2160 = vadd.f32 0.0, %v2159
        %2161 = vmatmul.f32.gmra.mxu0 %v2050
        %v2162 = vpop.f32.mrf.mxu0
        %v2163 = vadd.f32 0.0, %v2162
        %2164 = vdwg.mxu0
        %v2165 = vadd.f32 %v1953, %v2070
        %v2166 = vadd.f32 %v1953, %v2073
        %v2167 = vadd.f32 %v1953, %v2076
        %v2168 = vadd.f32 %v1953, %v2079
        %v2169 = vadd.f32 %v1953, %v2082
        %v2170 = vadd.f32 %v1953, %v2085
        %v2171 = vadd.f32 %v1953, %v2088
        %v2172 = vadd.f32 %v1953, %v2091
        %v2173 = vadd.f32 %v1953, %v2094
        %v2174 = vadd.f32 %v1953, %v2097
        %v2175 = vadd.f32 %v1953, %v2100
        %v2176 = vadd.f32 %v1953, %v2103
        %v2177 = vadd.f32 %v1953, %v2106
        %v2178 = vadd.f32 %v1953, %v2109
        %v2179 = vadd.f32 %v1953, %v2112
        %v2180 = vadd.f32 %v1953, %v2115
        %v2181 = vadd.f32 %v1953, %v2118
        %v2182 = vadd.f32 %v1953, %v2121
        %v2183 = vadd.f32 %v1953, %v2124
        %v2184 = vadd.f32 %v1953, %v2127
        %v2185 = vadd.f32 %v1953, %v2130
        %v2186 = vadd.f32 %v1953, %v2133
        %v2187 = vadd.f32 %v1953, %v2136
        %v2188 = vadd.f32 %v1953, %v2139
        %v2189 = vadd.f32 %v1953, %v2142
        %v2190 = vadd.f32 %v1953, %v2145
        %v2191 = vadd.f32 %v1953, %v2148
        %v2192 = vadd.f32 %v1953, %v2151
        %v2193 = vadd.f32 %v1953, %v2154
        %v2194 = vadd.f32 %v1953, %v2157
        %v2195 = vadd.f32 %v1953, %v2160
        %v2196 = vadd.f32 %v1953, %v2163
        %v2197 = vld [vmem:[#allocation10] sm:$0xff]
        %v2198 = vld [vmem:[#allocation10 + $0x8] sm:$0xff]
        %v2200 = vsel %vm428, %v1895, 0
        %v2203 = vsel %vm428, %v1896, 0
        %v2206 = vsel %vm428, %v1898, 0
        %v2209 = vsel %vm428, %v1899, 0
        %v2212 = vsel %vm428, %v1901, 0
        %v2215 = vsel %vm428, %v1902, 0
        %v2218 = vsel %vm428, %v1904, 0
        %v2221 = vsel %vm428, %v1905, 0
        %v2224 = vsel %vm428, %v1907, 0
        %v2227 = vsel %vm428, %v1908, 0
        %v2230 = vsel %vm428, %v1910, 0
        %v2233 = vsel %vm428, %v1911, 0
        %v2236 = vsel %vm428, %v1913, 0
        %v2239 = vsel %vm428, %v1914, 0
        %v2242 = vsel %vm428, %v1916, 0
        %v2245 = vsel %vm428, %v1917, 0
        %v2248 = vsel %vm428, %v1919, 0
        %v2251 = vsel %vm428, %v1920, 0
        %v2254 = vsel %vm428, %v1922, 0
        %v2257 = vsel %vm428, %v1923, 0
        %v2260 = vsel %vm428, %v1925, 0
        %v2263 = vsel %vm428, %v1926, 0
        %v2266 = vsel %vm428, %v1928, 0
        %v2269 = vsel %vm428, %v1929, 0
        %v2272 = vsel %vm428, %v1931, 0
        %v2275 = vsel %vm428, %v1932, 0
        %v2278 = vsel %vm428, %v1934, 0
        %v2281 = vsel %vm428, %v1935, 0
        %v2284 = vsel %vm428, %v1937, 0
        %v2287 = vsel %vm428, %v1938, 0
        %v2290 = vsel %vm428, %v1940, 0
        %v2293 = vsel %vm428, %v1941, 0
        %2295 = vmatpush.msra.mxu0 0.0
        %2296 = vmatpush.msra.mxu0 0.0
        %2297 = vmatpush.msra.mxu0 0.0
        %2298 = vmatpush.msra.mxu0 0.0
        %2299 = vmatpush.msra.mxu0 0.0
        %2300 = vmatpush.msra.mxu0 0.0
        %2301 = vmatpush.msra.mxu0 0.0
        %2302 = vmatpush.msra.mxu0 0.0
        %2303 = vmatpush.msra.mxu0 0.0
        %2304 = vmatpush.msra.mxu0 0.0
        %2305 = vmatpush.msra.mxu0 0.0
        %2306 = vmatpush.msra.mxu0 0.0
        %2307 = vmatpush.msra.mxu0 0.0
        %2308 = vmatpush.msra.mxu0 0.0
        %2309 = vmatpush.msra.mxu0 %v2198
        %2310 = vmatpush.msra.mxu0 %v2197
        %2311 = vmatmul.f32.gmra.mxu0 %v2200
        %v2312 = vpop.f32.mrf.mxu0
        %v2313 = vadd.f32 0.0, %v2312
        %2314 = vmatmul.f32.gmra.mxu0 %v2203
        %v2315 = vpop.f32.mrf.mxu0
        %v2316 = vadd.f32 0.0, %v2315
        %2317 = vmatmul.f32.gmra.mxu0 %v2206
        %v2318 = vpop.f32.mrf.mxu0
        %v2319 = vadd.f32 0.0, %v2318
        %2320 = vmatmul.f32.gmra.mxu0 %v2209
        %v2321 = vpop.f32.mrf.mxu0
        %v2322 = vadd.f32 0.0, %v2321
        %2323 = vmatmul.f32.gmra.mxu0 %v2212
        %v2324 = vpop.f32.mrf.mxu0
        %v2325 = vadd.f32 0.0, %v2324
        %2326 = vmatmul.f32.gmra.mxu0 %v2215
        %v2327 = vpop.f32.mrf.mxu0
        %v2328 = vadd.f32 0.0, %v2327
        %2329 = vmatmul.f32.gmra.mxu0 %v2218
        %v2330 = vpop.f32.mrf.mxu0
        %v2331 = vadd.f32 0.0, %v2330
        %2332 = vmatmul.f32.gmra.mxu0 %v2221
        %v2333 = vpop.f32.mrf.mxu0
        %v2334 = vadd.f32 0.0, %v2333
        %2335 = vmatmul.f32.gmra.mxu0 %v2224
        %v2336 = vpop.f32.mrf.mxu0
        %v2337 = vadd.f32 0.0, %v2336
        %2338 = vmatmul.f32.gmra.mxu0 %v2227
        %v2339 = vpop.f32.mrf.mxu0
        %v2340 = vadd.f32 0.0, %v2339
        %2341 = vmatmul.f32.gmra.mxu0 %v2230
        %v2342 = vpop.f32.mrf.mxu0
        %v2343 = vadd.f32 0.0, %v2342
        %2344 = vmatmul.f32.gmra.mxu0 %v2233
        %v2345 = vpop.f32.mrf.mxu0
        %v2346 = vadd.f32 0.0, %v2345
        %2347 = vmatmul.f32.gmra.mxu0 %v2236
        %v2348 = vpop.f32.mrf.mxu0
        %v2349 = vadd.f32 0.0, %v2348
        %2350 = vmatmul.f32.gmra.mxu0 %v2239
        %v2351 = vpop.f32.mrf.mxu0
        %v2352 = vadd.f32 0.0, %v2351
        %2353 = vmatmul.f32.gmra.mxu0 %v2242
        %v2354 = vpop.f32.mrf.mxu0
        %v2355 = vadd.f32 0.0, %v2354
        %2356 = vmatmul.f32.gmra.mxu0 %v2245
        %v2357 = vpop.f32.mrf.mxu0
        %v2358 = vadd.f32 0.0, %v2357
        %2359 = vmatmul.f32.gmra.mxu0 %v2248
        %v2360 = vpop.f32.mrf.mxu0
        %v2361 = vadd.f32 0.0, %v2360
        %2362 = vmatmul.f32.gmra.mxu0 %v2251
        %v2363 = vpop.f32.mrf.mxu0
        %v2364 = vadd.f32 0.0, %v2363
        %2365 = vmatmul.f32.gmra.mxu0 %v2254
        %v2366 = vpop.f32.mrf.mxu0
        %v2367 = vadd.f32 0.0, %v2366
        %2368 = vmatmul.f32.gmra.mxu0 %v2257
        %v2369 = vpop.f32.mrf.mxu0
        %v2370 = vadd.f32 0.0, %v2369
        %2371 = vmatmul.f32.gmra.mxu0 %v2260
        %v2372 = vpop.f32.mrf.mxu0
        %v2373 = vadd.f32 0.0, %v2372
        %2374 = vmatmul.f32.gmra.mxu0 %v2263
        %v2375 = vpop.f32.mrf.mxu0
        %v2376 = vadd.f32 0.0, %v2375
        %2377 = vmatmul.f32.gmra.mxu0 %v2266
        %v2378 = vpop.f32.mrf.mxu0
        %v2379 = vadd.f32 0.0, %v2378
        %2380 = vmatmul.f32.gmra.mxu0 %v2269
        %v2381 = vpop.f32.mrf.mxu0
        %v2382 = vadd.f32 0.0, %v2381
        %2383 = vmatmul.f32.gmra.mxu0 %v2272
        %v2384 = vpop.f32.mrf.mxu0
        %v2385 = vadd.f32 0.0, %v2384
        %2386 = vmatmul.f32.gmra.mxu0 %v2275
        %v2387 = vpop.f32.mrf.mxu0
        %v2388 = vadd.f32 0.0, %v2387
        %2389 = vmatmul.f32.gmra.mxu0 %v2278
        %v2390 = vpop.f32.mrf.mxu0
        %v2391 = vadd.f32 0.0, %v2390
        %2392 = vmatmul.f32.gmra.mxu0 %v2281
        %v2393 = vpop.f32.mrf.mxu0
        %v2394 = vadd.f32 0.0, %v2393
        %2395 = vmatmul.f32.gmra.mxu0 %v2284
        %v2396 = vpop.f32.mrf.mxu0
        %v2397 = vadd.f32 0.0, %v2396
        %2398 = vmatmul.f32.gmra.mxu0 %v2287
        %v2399 = vpop.f32.mrf.mxu0
        %v2400 = vadd.f32 0.0, %v2399
        %2401 = vmatmul.f32.gmra.mxu0 %v2290
        %v2402 = vpop.f32.mrf.mxu0
        %v2403 = vadd.f32 0.0, %v2402
        %2404 = vmatmul.f32.gmra.mxu0 %v2293
        %v2405 = vpop.f32.mrf.mxu0
        %v2406 = vadd.f32 0.0, %v2405
        %2407 = vdwg.mxu0
        %v2408 = vadd.f32 %v2165, %v2313
        %v2409 = vadd.f32 %v2166, %v2316
        %v2410 = vadd.f32 %v2167, %v2319
        %v2411 = vadd.f32 %v2168, %v2322
        %v2412 = vadd.f32 %v2169, %v2325
        %v2413 = vadd.f32 %v2170, %v2328
        %v2414 = vadd.f32 %v2171, %v2331
        %v2415 = vadd.f32 %v2172, %v2334
        %v2416 = vadd.f32 %v2173, %v2337
        %v2417 = vadd.f32 %v2174, %v2340
        %v2418 = vadd.f32 %v2175, %v2343
        %v2419 = vadd.f32 %v2176, %v2346
        %v2420 = vadd.f32 %v2177, %v2349
        %v2421 = vadd.f32 %v2178, %v2352
        %v2422 = vadd.f32 %v2179, %v2355
        %v2423 = vadd.f32 %v2180, %v2358
        %v2424 = vadd.f32 %v2181, %v2361
        %v2425 = vadd.f32 %v2182, %v2364
        %v2426 = vadd.f32 %v2183, %v2367
        %v2427 = vadd.f32 %v2184, %v2370
        %v2428 = vadd.f32 %v2185, %v2373
        %v2429 = vadd.f32 %v2186, %v2376
        %v2430 = vadd.f32 %v2187, %v2379
        %v2431 = vadd.f32 %v2188, %v2382
        %v2432 = vadd.f32 %v2189, %v2385
        %v2433 = vadd.f32 %v2190, %v2388
        %v2434 = vadd.f32 %v2191, %v2391
        %v2435 = vadd.f32 %v2192, %v2394
        %v2436 = vadd.f32 %v2193, %v2397
        %v2437 = vadd.f32 %v2194, %v2400
        %v2438 = vadd.f32 %v2195, %v2403
        %v2439 = vadd.f32 %v2196, %v2406
        %vm2456 = vcmask 1046528
        %v2457 = vrot.slane %v1841, 1
        %v2458 = vrot.slane %v1842, 1
        %v2459 = vsel %vm2456, %v2457, %v2458
        %v2460 = vrot.slane %v1843, 1
        %v2461 = vsel %vm2456, %v2458, %v2460
        %v2462 = vrot.slane %v1844, 1
        %v2463 = vrot.slane %v1845, 1
        %v2464 = vsel %vm2456, %v2462, %v2463
        %v2465 = vrot.slane %v1846, 1
        %v2466 = vsel %vm2456, %v2463, %v2465
        %v2467 = vrot.slane %v1847, 1
        %v2468 = vrot.slane %v1848, 1
        %v2469 = vsel %vm2456, %v2467, %v2468
        %v2470 = vrot.slane %v1849, 1
        %v2471 = vsel %vm2456, %v2468, %v2470
        %v2472 = vrot.slane %v1850, 1
        %v2473 = vrot.slane %v1851, 1
        %v2474 = vsel %vm2456, %v2472, %v2473
        %v2475 = vrot.slane %v1852, 1
        %v2476 = vsel %vm2456, %v2473, %v2475
        %v2477 = vrot.slane %v1853, 1
        %v2478 = vrot.slane %v1854, 1
        %v2479 = vsel %vm2456, %v2477, %v2478
        %v2480 = vrot.slane %v1855, 1
        %v2481 = vsel %vm2456, %v2478, %v2480
        %v2482 = vrot.slane %v1856, 1
        %v2483 = vrot.slane %v1857, 1
        %v2484 = vsel %vm2456, %v2482, %v2483
        %v2485 = vrot.slane %v1858, 1
        %v2486 = vsel %vm2456, %v2483, %v2485
        %v2487 = vrot.slane %v1859, 1
        %v2488 = vrot.slane %v1860, 1
        %v2489 = vsel %vm2456, %v2487, %v2488
        %v2490 = vrot.slane %v1861, 1
        %v2491 = vsel %vm2456, %v2488, %v2490
        %v2492 = vrot.slane %v1862, 1
        %v2493 = vrot.slane %v1863, 1
        %v2494 = vsel %vm2456, %v2492, %v2493
        %v2495 = vrot.slane %v1864, 1
        %v2496 = vsel %vm2456, %v2493, %v2495
        %v2497 = vrot.slane %v1865, 1
        %v2498 = vrot.slane %v1866, 1
        %v2499 = vsel %vm2456, %v2497, %v2498
        %v2500 = vrot.slane %v1867, 1
        %v2501 = vsel %vm2456, %v2498, %v2500
        %v2502 = vrot.slane %v1868, 1
        %v2503 = vrot.slane %v1869, 1
        %v2504 = vsel %vm2456, %v2502, %v2503
        %v2505 = vrot.slane %v1870, 1
        %v2506 = vsel %vm2456, %v2503, %v2505
        %v2507 = vrot.slane %v1871, 1
        %v2508 = vrot.slane %v1872, 1
        %v2509 = vsel %vm2456, %v2507, %v2508
        %v2510 = vrot.slane %v1873, 1
        %v2511 = vsel %vm2456, %v2508, %v2510
        %v2512 = vrot.slane %v1874, 1
        %v2513 = vrot.slane %v1875, 1
        %v2514 = vsel %vm2456, %v2512, %v2513
        %v2515 = vrot.slane %v1876, 1
        %v2516 = vsel %vm2456, %v2513, %v2515
        %v2517 = vrot.slane %v1877, 1
        %v2518 = vrot.slane %v1878, 1
        %v2519 = vsel %vm2456, %v2517, %v2518
        %v2520 = vrot.slane %v1879, 1
        %v2521 = vsel %vm2456, %v2518, %v2520
        %v2522 = vrot.slane %v1880, 1
        %v2523 = vrot.slane %v1881, 1
        %v2524 = vsel %vm2456, %v2522, %v2523
        %v2525 = vrot.slane %v1882, 1
        %v2526 = vsel %vm2456, %v2523, %v2525
        %v2527 = vrot.slane %v1883, 1
        %v2528 = vrot.slane %v1884, 1
        %v2529 = vsel %vm2456, %v2527, %v2528
        %v2530 = vrot.slane %v1885, 1
        %v2531 = vsel %vm2456, %v2528, %v2530
        %v2532 = vrot.slane %v1886, 1
        %v2533 = vrot.slane %v1887, 1
        %v2534 = vsel %vm2456, %v2532, %v2533
        %v2535 = vrot.slane %v1888, 1
        %v2536 = vsel %vm2456, %v2533, %v2535
        %s2537 = scalar_lea.vmem %s4, 16
        %v2538 = vld [vmem:[%s2537] sm:$0xff]
        %v2539 = vld [vmem:[%s2537 + $0x8] sm:$0xff]
        %v2540 = vsel %vm428, %v2459, 0
        %v2542 = vsel %vm428, %v2461, 0
        %v2544 = vsel %vm428, %v2464, 0
        %v2546 = vsel %vm428, %v2466, 0
        %v2548 = vsel %vm428, %v2469, 0
        %v2550 = vsel %vm428, %v2471, 0
        %v2552 = vsel %vm428, %v2474, 0
        %v2554 = vsel %vm428, %v2476, 0
        %v2556 = vsel %vm428, %v2479, 0
        %v2558 = vsel %vm428, %v2481, 0
        %v2560 = vsel %vm428, %v2484, 0
        %v2562 = vsel %vm428, %v2486, 0
        %v2564 = vsel %vm428, %v2489, 0
        %v2566 = vsel %vm428, %v2491, 0
        %v2568 = vsel %vm428, %v2494, 0
        %v2570 = vsel %vm428, %v2496, 0
        %v2572 = vsel %vm428, %v2499, 0
        %v2574 = vsel %vm428, %v2501, 0
        %v2576 = vsel %vm428, %v2504, 0
        %v2578 = vsel %vm428, %v2506, 0
        %v2580 = vsel %vm428, %v2509, 0
        %v2582 = vsel %vm428, %v2511, 0
        %v2584 = vsel %vm428, %v2514, 0
        %v2586 = vsel %vm428, %v2516, 0
        %v2588 = vsel %vm428, %v2519, 0
        %v2590 = vsel %vm428, %v2521, 0
        %v2592 = vsel %vm428, %v2524, 0
        %v2594 = vsel %vm428, %v2526, 0
        %v2596 = vsel %vm428, %v2529, 0
        %v2598 = vsel %vm428, %v2531, 0
        %v2600 = vsel %vm428, %v2534, 0
        %v2602 = vsel %vm428, %v2536, 0
        %2604 = vmatpush.msra.mxu0 0.0
        %2605 = vmatpush.msra.mxu0 0.0
        %2606 = vmatpush.msra.mxu0 0.0
        %2607 = vmatpush.msra.mxu0 0.0
        %2608 = vmatpush.msra.mxu0 0.0
        %2609 = vmatpush.msra.mxu0 0.0
        %2610 = vmatpush.msra.mxu0 0.0
        %2611 = vmatpush.msra.mxu0 0.0
        %2612 = vmatpush.msra.mxu0 0.0
        %2613 = vmatpush.msra.mxu0 0.0
        %2614 = vmatpush.msra.mxu0 0.0
        %2615 = vmatpush.msra.mxu0 0.0
        %2616 = vmatpush.msra.mxu0 0.0
        %2617 = vmatpush.msra.mxu0 0.0
        %2618 = vmatpush.msra.mxu0 %v2539
        %2619 = vmatpush.msra.mxu0 %v2538
        %2620 = vmatmul.f32.gmra.mxu0 %v2540
        %v2621 = vpop.f32.mrf.mxu0
        %v2622 = vadd.f32 0.0, %v2621
        %2623 = vmatmul.f32.gmra.mxu0 %v2542
        %v2624 = vpop.f32.mrf.mxu0
        %v2625 = vadd.f32 0.0, %v2624
        %2626 = vmatmul.f32.gmra.mxu0 %v2544
        %v2627 = vpop.f32.mrf.mxu0
        %v2628 = vadd.f32 0.0, %v2627
        %2629 = vmatmul.f32.gmra.mxu0 %v2546
        %v2630 = vpop.f32.mrf.mxu0
        %v2631 = vadd.f32 0.0, %v2630
        %2632 = vmatmul.f32.gmra.mxu0 %v2548
        %v2633 = vpop.f32.mrf.mxu0
        %v2634 = vadd.f32 0.0, %v2633
        %2635 = vmatmul.f32.gmra.mxu0 %v2550
        %v2636 = vpop.f32.mrf.mxu0
        %v2637 = vadd.f32 0.0, %v2636
        %2638 = vmatmul.f32.gmra.mxu0 %v2552
        %v2639 = vpop.f32.mrf.mxu0
        %v2640 = vadd.f32 0.0, %v2639
        %2641 = vmatmul.f32.gmra.mxu0 %v2554
        %v2642 = vpop.f32.mrf.mxu0
        %v2643 = vadd.f32 0.0, %v2642
        %2644 = vmatmul.f32.gmra.mxu0 %v2556
        %v2645 = vpop.f32.mrf.mxu0
        %v2646 = vadd.f32 0.0, %v2645
        %2647 = vmatmul.f32.gmra.mxu0 %v2558
        %v2648 = vpop.f32.mrf.mxu0
        %v2649 = vadd.f32 0.0, %v2648
        %2650 = vmatmul.f32.gmra.mxu0 %v2560
        %v2651 = vpop.f32.mrf.mxu0
        %v2652 = vadd.f32 0.0, %v2651
        %2653 = vmatmul.f32.gmra.mxu0 %v2562
        %v2654 = vpop.f32.mrf.mxu0
        %v2655 = vadd.f32 0.0, %v2654
        %2656 = vmatmul.f32.gmra.mxu0 %v2564
        %v2657 = vpop.f32.mrf.mxu0
        %v2658 = vadd.f32 0.0, %v2657
        %2659 = vmatmul.f32.gmra.mxu0 %v2566
        %v2660 = vpop.f32.mrf.mxu0
        %v2661 = vadd.f32 0.0, %v2660
        %2662 = vmatmul.f32.gmra.mxu0 %v2568
        %v2663 = vpop.f32.mrf.mxu0
        %v2664 = vadd.f32 0.0, %v2663
        %2665 = vmatmul.f32.gmra.mxu0 %v2570
        %v2666 = vpop.f32.mrf.mxu0
        %v2667 = vadd.f32 0.0, %v2666
        %2668 = vmatmul.f32.gmra.mxu0 %v2572
        %v2669 = vpop.f32.mrf.mxu0
        %v2670 = vadd.f32 0.0, %v2669
        %2671 = vmatmul.f32.gmra.mxu0 %v2574
        %v2672 = vpop.f32.mrf.mxu0
        %v2673 = vadd.f32 0.0, %v2672
        %2674 = vmatmul.f32.gmra.mxu0 %v2576
        %v2675 = vpop.f32.mrf.mxu0
        %v2676 = vadd.f32 0.0, %v2675
        %2677 = vmatmul.f32.gmra.mxu0 %v2578
        %v2678 = vpop.f32.mrf.mxu0
        %v2679 = vadd.f32 0.0, %v2678
        %2680 = vmatmul.f32.gmra.mxu0 %v2580
        %v2681 = vpop.f32.mrf.mxu0
        %v2682 = vadd.f32 0.0, %v2681
        %2683 = vmatmul.f32.gmra.mxu0 %v2582
        %v2684 = vpop.f32.mrf.mxu0
        %v2685 = vadd.f32 0.0, %v2684
        %2686 = vmatmul.f32.gmra.mxu0 %v2584
        %v2687 = vpop.f32.mrf.mxu0
        %v2688 = vadd.f32 0.0, %v2687
        %2689 = vmatmul.f32.gmra.mxu0 %v2586
        %v2690 = vpop.f32.mrf.mxu0
        %v2691 = vadd.f32 0.0, %v2690
        %2692 = vmatmul.f32.gmra.mxu0 %v2588
        %v2693 = vpop.f32.mrf.mxu0
        %v2694 = vadd.f32 0.0, %v2693
        %2695 = vmatmul.f32.gmra.mxu0 %v2590
        %v2696 = vpop.f32.mrf.mxu0
        %v2697 = vadd.f32 0.0, %v2696
        %2698 = vmatmul.f32.gmra.mxu0 %v2592
        %v2699 = vpop.f32.mrf.mxu0
        %v2700 = vadd.f32 0.0, %v2699
        %2701 = vmatmul.f32.gmra.mxu0 %v2594
        %v2702 = vpop.f32.mrf.mxu0
        %v2703 = vadd.f32 0.0, %v2702
        %2704 = vmatmul.f32.gmra.mxu0 %v2596
        %v2705 = vpop.f32.mrf.mxu0
        %v2706 = vadd.f32 0.0, %v2705
        %2707 = vmatmul.f32.gmra.mxu0 %v2598
        %v2708 = vpop.f32.mrf.mxu0
        %v2709 = vadd.f32 0.0, %v2708
        %2710 = vmatmul.f32.gmra.mxu0 %v2600
        %v2711 = vpop.f32.mrf.mxu0
        %v2712 = vadd.f32 0.0, %v2711
        %2713 = vmatmul.f32.gmra.mxu0 %v2602
        %v2714 = vpop.f32.mrf.mxu0
        %v2715 = vadd.f32 0.0, %v2714
        %2716 = vdwg.mxu0
        %v2717 = vadd.f32 %v2408, %v2622
        %v2718 = vadd.f32 %v2409, %v2625
        %v2719 = vadd.f32 %v2410, %v2628
        %v2720 = vadd.f32 %v2411, %v2631
        %v2721 = vadd.f32 %v2412, %v2634
        %v2722 = vadd.f32 %v2413, %v2637
        %v2723 = vadd.f32 %v2414, %v2640
        %v2724 = vadd.f32 %v2415, %v2643
        %v2725 = vadd.f32 %v2416, %v2646
        %v2726 = vadd.f32 %v2417, %v2649
        %v2727 = vadd.f32 %v2418, %v2652
        %v2728 = vadd.f32 %v2419, %v2655
        %v2729 = vadd.f32 %v2420, %v2658
        %v2730 = vadd.f32 %v2421, %v2661
        %v2731 = vadd.f32 %v2422, %v2664
        %v2732 = vadd.f32 %v2423, %v2667
        %v2733 = vadd.f32 %v2424, %v2670
        %v2734 = vadd.f32 %v2425, %v2673
        %v2735 = vadd.f32 %v2426, %v2676
        %v2736 = vadd.f32 %v2427, %v2679
        %v2737 = vadd.f32 %v2428, %v2682
        %v2738 = vadd.f32 %v2429, %v2685
        %v2739 = vadd.f32 %v2430, %v2688
        %v2740 = vadd.f32 %v2431, %v2691
        %v2741 = vadd.f32 %v2432, %v2694
        %v2742 = vadd.f32 %v2433, %v2697
        %v2743 = vadd.f32 %v2434, %v2700
        %v2744 = vadd.f32 %v2435, %v2703
        %v2745 = vadd.f32 %v2436, %v2706
        %v2746 = vadd.f32 %v2437, %v2709
        %v2747 = vadd.f32 %v2438, %v2712
        %v2748 = vadd.f32 %v2439, %v2715
        %v2765 = vrot.slane %v1895, 1
        %v2766 = vrot.slane %v1896, 1
        %v2767 = vsel %vm2456, %v2765, %v2766
        %v2768 = vrot.slane %v1897, 1
        %v2769 = vsel %vm2456, %v2766, %v2768
        %v2770 = vrot.slane %v1898, 1
        %v2771 = vrot.slane %v1899, 1
        %v2772 = vsel %vm2456, %v2770, %v2771
        %v2773 = vrot.slane %v1900, 1
        %v2774 = vsel %vm2456, %v2771, %v2773
        %v2775 = vrot.slane %v1901, 1
        %v2776 = vrot.slane %v1902, 1
        %v2777 = vsel %vm2456, %v2775, %v2776
        %v2778 = vrot.slane %v1903, 1
        %v2779 = vsel %vm2456, %v2776, %v2778
        %v2780 = vrot.slane %v1904, 1
        %v2781 = vrot.slane %v1905, 1
        %v2782 = vsel %vm2456, %v2780, %v2781
        %v2783 = vrot.slane %v1906, 1
        %v2784 = vsel %vm2456, %v2781, %v2783
        %v2785 = vrot.slane %v1907, 1
        %v2786 = vrot.slane %v1908, 1
        %v2787 = vsel %vm2456, %v2785, %v2786
        %v2788 = vrot.slane %v1909, 1
        %v2789 = vsel %vm2456, %v2786, %v2788
        %v2790 = vrot.slane %v1910, 1
        %v2791 = vrot.slane %v1911, 1
        %v2792 = vsel %vm2456, %v2790, %v2791
        %v2793 = vrot.slane %v1912, 1
        %v2794 = vsel %vm2456, %v2791, %v2793
        %v2795 = vrot.slane %v1913, 1
        %v2796 = vrot.slane %v1914, 1
        %v2797 = vsel %vm2456, %v2795, %v2796
        %v2798 = vrot.slane %v1915, 1
        %v2799 = vsel %vm2456, %v2796, %v2798
        %v2800 = vrot.slane %v1916, 1
        %v2801 = vrot.slane %v1917, 1
        %v2802 = vsel %vm2456, %v2800, %v2801
        %v2803 = vrot.slane %v1918, 1
        %v2804 = vsel %vm2456, %v2801, %v2803
        %v2805 = vrot.slane %v1919, 1
        %v2806 = vrot.slane %v1920, 1
        %v2807 = vsel %vm2456, %v2805, %v2806
        %v2808 = vrot.slane %v1921, 1
        %v2809 = vsel %vm2456, %v2806, %v2808
        %v2810 = vrot.slane %v1922, 1
        %v2811 = vrot.slane %v1923, 1
        %v2812 = vsel %vm2456, %v2810, %v2811
        %v2813 = vrot.slane %v1924, 1
        %v2814 = vsel %vm2456, %v2811, %v2813
        %v2815 = vrot.slane %v1925, 1
        %v2816 = vrot.slane %v1926, 1
        %v2817 = vsel %vm2456, %v2815, %v2816
        %v2818 = vrot.slane %v1927, 1
        %v2819 = vsel %vm2456, %v2816, %v2818
        %v2820 = vrot.slane %v1928, 1
        %v2821 = vrot.slane %v1929, 1
        %v2822 = vsel %vm2456, %v2820, %v2821
        %v2823 = vrot.slane %v1930, 1
        %v2824 = vsel %vm2456, %v2821, %v2823
        %v2825 = vrot.slane %v1931, 1
        %v2826 = vrot.slane %v1932, 1
        %v2827 = vsel %vm2456, %v2825, %v2826
        %v2828 = vrot.slane %v1933, 1
        %v2829 = vsel %vm2456, %v2826, %v2828
        %v2830 = vrot.slane %v1934, 1
        %v2831 = vrot.slane %v1935, 1
        %v2832 = vsel %vm2456, %v2830, %v2831
        %v2833 = vrot.slane %v1936, 1
        %v2834 = vsel %vm2456, %v2831, %v2833
        %v2835 = vrot.slane %v1937, 1
        %v2836 = vrot.slane %v1938, 1
        %v2837 = vsel %vm2456, %v2835, %v2836
        %v2838 = vrot.slane %v1939, 1
        %v2839 = vsel %vm2456, %v2836, %v2838
        %v2840 = vrot.slane %v1940, 1
        %v2841 = vrot.slane %v1941, 1
        %v2842 = vsel %vm2456, %v2840, %v2841
        %v2843 = vrot.slane %v1942, 1
        %v2844 = vsel %vm2456, %v2841, %v2843
        %s2845 = scalar_lea.vmem [#allocation10], 16
        %v2846 = vld [vmem:[%s2845] sm:$0xff]
        %v2847 = vld [vmem:[%s2845 + $0x8] sm:$0xff]
        %v2848 = vsel %vm428, %v2767, 0
        %v2850 = vsel %vm428, %v2769, 0
        %v2852 = vsel %vm428, %v2772, 0
        %v2854 = vsel %vm428, %v2774, 0
        %v2856 = vsel %vm428, %v2777, 0
        %v2858 = vsel %vm428, %v2779, 0
        %v2860 = vsel %vm428, %v2782, 0
        %v2862 = vsel %vm428, %v2784, 0
        %v2864 = vsel %vm428, %v2787, 0
        %v2866 = vsel %vm428, %v2789, 0
        %v2868 = vsel %vm428, %v2792, 0
        %v2870 = vsel %vm428, %v2794, 0
        %v2872 = vsel %vm428, %v2797, 0
        %v2874 = vsel %vm428, %v2799, 0
        %v2876 = vsel %vm428, %v2802, 0
        %v2878 = vsel %vm428, %v2804, 0
        %v2880 = vsel %vm428, %v2807, 0
        %v2882 = vsel %vm428, %v2809, 0
        %v2884 = vsel %vm428, %v2812, 0
        %v2886 = vsel %vm428, %v2814, 0
        %v2888 = vsel %vm428, %v2817, 0
        %v2890 = vsel %vm428, %v2819, 0
        %v2892 = vsel %vm428, %v2822, 0
        %v2894 = vsel %vm428, %v2824, 0
        %v2896 = vsel %vm428, %v2827, 0
        %v2898 = vsel %vm428, %v2829, 0
        %v2900 = vsel %vm428, %v2832, 0
        %v2902 = vsel %vm428, %v2834, 0
        %v2904 = vsel %vm428, %v2837, 0
        %v2906 = vsel %vm428, %v2839, 0
        %v2908 = vsel %vm428, %v2842, 0
        %v2910 = vsel %vm428, %v2844, 0
        %2912 = vmatpush.msra.mxu0 0.0
        %2913 = vmatpush.msra.mxu0 0.0
        %2914 = vmatpush.msra.mxu0 0.0
        %2915 = vmatpush.msra.mxu0 0.0
        %2916 = vmatpush.msra.mxu0 0.0
        %2917 = vmatpush.msra.mxu0 0.0
        %2918 = vmatpush.msra.mxu0 0.0
        %2919 = vmatpush.msra.mxu0 0.0
        %2920 = vmatpush.msra.mxu0 0.0
        %2921 = vmatpush.msra.mxu0 0.0
        %2922 = vmatpush.msra.mxu0 0.0
        %2923 = vmatpush.msra.mxu0 0.0
        %2924 = vmatpush.msra.mxu0 0.0
        %2925 = vmatpush.msra.mxu0 0.0
        %2926 = vmatpush.msra.mxu0 %v2847
        %2927 = vmatpush.msra.mxu0 %v2846
        %2928 = vmatmul.f32.gmra.mxu0 %v2848
        %v2929 = vpop.f32.mrf.mxu0
        %v2930 = vadd.f32 0.0, %v2929
        %2931 = vmatmul.f32.gmra.mxu0 %v2850
        %v2932 = vpop.f32.mrf.mxu0
        %v2933 = vadd.f32 0.0, %v2932
        %2934 = vmatmul.f32.gmra.mxu0 %v2852
        %v2935 = vpop.f32.mrf.mxu0
        %v2936 = vadd.f32 0.0, %v2935
        %2937 = vmatmul.f32.gmra.mxu0 %v2854
        %v2938 = vpop.f32.mrf.mxu0
        %v2939 = vadd.f32 0.0, %v2938
        %2940 = vmatmul.f32.gmra.mxu0 %v2856
        %v2941 = vpop.f32.mrf.mxu0
        %v2942 = vadd.f32 0.0, %v2941
        %2943 = vmatmul.f32.gmra.mxu0 %v2858
        %v2944 = vpop.f32.mrf.mxu0
        %v2945 = vadd.f32 0.0, %v2944
        %2946 = vmatmul.f32.gmra.mxu0 %v2860
        %v2947 = vpop.f32.mrf.mxu0
        %v2948 = vadd.f32 0.0, %v2947
        %2949 = vmatmul.f32.gmra.mxu0 %v2862
        %v2950 = vpop.f32.mrf.mxu0
        %v2951 = vadd.f32 0.0, %v2950
        %2952 = vmatmul.f32.gmra.mxu0 %v2864
        %v2953 = vpop.f32.mrf.mxu0
        %v2954 = vadd.f32 0.0, %v2953
        %2955 = vmatmul.f32.gmra.mxu0 %v2866
        %v2956 = vpop.f32.mrf.mxu0
        %v2957 = vadd.f32 0.0, %v2956
        %2958 = vmatmul.f32.gmra.mxu0 %v2868
        %v2959 = vpop.f32.mrf.mxu0
        %v2960 = vadd.f32 0.0, %v2959
        %2961 = vmatmul.f32.gmra.mxu0 %v2870
        %v2962 = vpop.f32.mrf.mxu0
        %v2963 = vadd.f32 0.0, %v2962
        %2964 = vmatmul.f32.gmra.mxu0 %v2872
        %v2965 = vpop.f32.mrf.mxu0
        %v2966 = vadd.f32 0.0, %v2965
        %2967 = vmatmul.f32.gmra.mxu0 %v2874
        %v2968 = vpop.f32.mrf.mxu0
        %v2969 = vadd.f32 0.0, %v2968
        %2970 = vmatmul.f32.gmra.mxu0 %v2876
        %v2971 = vpop.f32.mrf.mxu0
        %v2972 = vadd.f32 0.0, %v2971
        %2973 = vmatmul.f32.gmra.mxu0 %v2878
        %v2974 = vpop.f32.mrf.mxu0
        %v2975 = vadd.f32 0.0, %v2974
        %2976 = vmatmul.f32.gmra.mxu0 %v2880
        %v2977 = vpop.f32.mrf.mxu0
        %v2978 = vadd.f32 0.0, %v2977
        %2979 = vmatmul.f32.gmra.mxu0 %v2882
        %v2980 = vpop.f32.mrf.mxu0
        %v2981 = vadd.f32 0.0, %v2980
        %2982 = vmatmul.f32.gmra.mxu0 %v2884
        %v2983 = vpop.f32.mrf.mxu0
        %v2984 = vadd.f32 0.0, %v2983
        %2985 = vmatmul.f32.gmra.mxu0 %v2886
        %v2986 = vpop.f32.mrf.mxu0
        %v2987 = vadd.f32 0.0, %v2986
        %2988 = vmatmul.f32.gmra.mxu0 %v2888
        %v2989 = vpop.f32.mrf.mxu0
        %v2990 = vadd.f32 0.0, %v2989
        %2991 = vmatmul.f32.gmra.mxu0 %v2890
        %v2992 = vpop.f32.mrf.mxu0
        %v2993 = vadd.f32 0.0, %v2992
        %2994 = vmatmul.f32.gmra.mxu0 %v2892
        %v2995 = vpop.f32.mrf.mxu0
        %v2996 = vadd.f32 0.0, %v2995
        %2997 = vmatmul.f32.gmra.mxu0 %v2894
        %v2998 = vpop.f32.mrf.mxu0
        %v2999 = vadd.f32 0.0, %v2998
        %3000 = vmatmul.f32.gmra.mxu0 %v2896
        %v3001 = vpop.f32.mrf.mxu0
        %v3002 = vadd.f32 0.0, %v3001
        %3003 = vmatmul.f32.gmra.mxu0 %v2898
        %v3004 = vpop.f32.mrf.mxu0
        %v3005 = vadd.f32 0.0, %v3004
        %3006 = vmatmul.f32.gmra.mxu0 %v2900
        %v3007 = vpop.f32.mrf.mxu0
        %v3008 = vadd.f32 0.0, %v3007
        %3009 = vmatmul.f32.gmra.mxu0 %v2902
        %v3010 = vpop.f32.mrf.mxu0
        %v3011 = vadd.f32 0.0, %v3010
        %3012 = vmatmul.f32.gmra.mxu0 %v2904
        %v3013 = vpop.f32.mrf.mxu0
        %v3014 = vadd.f32 0.0, %v3013
        %3015 = vmatmul.f32.gmra.mxu0 %v2906
        %v3016 = vpop.f32.mrf.mxu0
        %v3017 = vadd.f32 0.0, %v3016
        %3018 = vmatmul.f32.gmra.mxu0 %v2908
        %v3019 = vpop.f32.mrf.mxu0
        %v3020 = vadd.f32 0.0, %v3019
        %3021 = vmatmul.f32.gmra.mxu0 %v2910
        %v3022 = vpop.f32.mrf.mxu0
        %v3023 = vadd.f32 0.0, %v3022
        %3024 = vdwg.mxu0
        %v3025 = vadd.f32 %v2717, %v2930
        %v3026 = vadd.f32 %v2718, %v2933
        %v3027 = vadd.f32 %v2719, %v2936
        %v3028 = vadd.f32 %v2720, %v2939
        %v3029 = vadd.f32 %v2721, %v2942
        %v3030 = vadd.f32 %v2722, %v2945
        %v3031 = vadd.f32 %v2723, %v2948
        %v3032 = vadd.f32 %v2724, %v2951
        %v3033 = vadd.f32 %v2725, %v2954
        %v3034 = vadd.f32 %v2726, %v2957
        %v3035 = vadd.f32 %v2727, %v2960
        %v3036 = vadd.f32 %v2728, %v2963
        %v3037 = vadd.f32 %v2729, %v2966
        %v3038 = vadd.f32 %v2730, %v2969
        %v3039 = vadd.f32 %v2731, %v2972
        %v3040 = vadd.f32 %v2732, %v2975
        %v3041 = vadd.f32 %v2733, %v2978
        %v3042 = vadd.f32 %v2734, %v2981
        %v3043 = vadd.f32 %v2735, %v2984
        %v3044 = vadd.f32 %v2736, %v2987
        %v3045 = vadd.f32 %v2737, %v2990
        %v3046 = vadd.f32 %v2738, %v2993
        %v3047 = vadd.f32 %v2739, %v2996
        %v3048 = vadd.f32 %v2740, %v2999
        %v3049 = vadd.f32 %v2741, %v3002
        %v3050 = vadd.f32 %v2742, %v3005
        %v3051 = vadd.f32 %v2743, %v3008
        %v3052 = vadd.f32 %v2744, %v3011
        %v3053 = vadd.f32 %v2745, %v3014
        %v3054 = vadd.f32 %v2746, %v3017
        %v3055 = vadd.f32 %v2747, %v3020
        %v3056 = vadd.f32 %v2748, %v3023
        %vm3057 = vcmask 1045504
        %v3058 = vrot.slane %v1841, 2
        %v3059 = vrot.slane %v1842, 2
        %v3060 = vsel %vm3057, %v3058, %v3059
        %v3061 = vrot.slane %v1843, 2
        %v3062 = vsel %vm3057, %v3059, %v3061
        %v3063 = vrot.slane %v1844, 2
        %v3064 = vrot.slane %v1845, 2
        %v3065 = vsel %vm3057, %v3063, %v3064
        %v3066 = vrot.slane %v1846, 2
        %v3067 = vsel %vm3057, %v3064, %v3066
        %v3068 = vrot.slane %v1847, 2
        %v3069 = vrot.slane %v1848, 2
        %v3070 = vsel %vm3057, %v3068, %v3069
        %v3071 = vrot.slane %v1849, 2
        %v3072 = vsel %vm3057, %v3069, %v3071
        %v3073 = vrot.slane %v1850, 2
        %v3074 = vrot.slane %v1851, 2
        %v3075 = vsel %vm3057, %v3073, %v3074
        %v3076 = vrot.slane %v1852, 2
        %v3077 = vsel %vm3057, %v3074, %v3076
        %v3078 = vrot.slane %v1853, 2
        %v3079 = vrot.slane %v1854, 2
        %v3080 = vsel %vm3057, %v3078, %v3079
        %v3081 = vrot.slane %v1855, 2
        %v3082 = vsel %vm3057, %v3079, %v3081
        %v3083 = vrot.slane %v1856, 2
        %v3084 = vrot.slane %v1857, 2
        %v3085 = vsel %vm3057, %v3083, %v3084
        %v3086 = vrot.slane %v1858, 2
        %v3087 = vsel %vm3057, %v3084, %v3086
        %v3088 = vrot.slane %v1859, 2
        %v3089 = vrot.slane %v1860, 2
        %v3090 = vsel %vm3057, %v3088, %v3089
        %v3091 = vrot.slane %v1861, 2
        %v3092 = vsel %vm3057, %v3089, %v3091
        %v3093 = vrot.slane %v1862, 2
        %v3094 = vrot.slane %v1863, 2
        %v3095 = vsel %vm3057, %v3093, %v3094
        %v3096 = vrot.slane %v1864, 2
        %v3097 = vsel %vm3057, %v3094, %v3096
        %v3098 = vrot.slane %v1865, 2
        %v3099 = vrot.slane %v1866, 2
        %v3100 = vsel %vm3057, %v3098, %v3099
        %v3101 = vrot.slane %v1867, 2
        %v3102 = vsel %vm3057, %v3099, %v3101
        %v3103 = vrot.slane %v1868, 2
        %v3104 = vrot.slane %v1869, 2
        %v3105 = vsel %vm3057, %v3103, %v3104
        %v3106 = vrot.slane %v1870, 2
        %v3107 = vsel %vm3057, %v3104, %v3106
        %v3108 = vrot.slane %v1871, 2
        %v3109 = vrot.slane %v1872, 2
        %v3110 = vsel %vm3057, %v3108, %v3109
        %v3111 = vrot.slane %v1873, 2
        %v3112 = vsel %vm3057, %v3109, %v3111
        %v3113 = vrot.slane %v1874, 2
        %v3114 = vrot.slane %v1875, 2
        %v3115 = vsel %vm3057, %v3113, %v3114
        %v3116 = vrot.slane %v1876, 2
        %v3117 = vsel %vm3057, %v3114, %v3116
        %v3118 = vrot.slane %v1877, 2
        %v3119 = vrot.slane %v1878, 2
        %v3120 = vsel %vm3057, %v3118, %v3119
        %v3121 = vrot.slane %v1879, 2
        %v3122 = vsel %vm3057, %v3119, %v3121
        %v3123 = vrot.slane %v1880, 2
        %v3124 = vrot.slane %v1881, 2
        %v3125 = vsel %vm3057, %v3123, %v3124
        %v3126 = vrot.slane %v1882, 2
        %v3127 = vsel %vm3057, %v3124, %v3126
        %v3128 = vrot.slane %v1883, 2
        %v3129 = vrot.slane %v1884, 2
        %v3130 = vsel %vm3057, %v3128, %v3129
        %v3131 = vrot.slane %v1885, 2
        %v3132 = vsel %vm3057, %v3129, %v3131
        %v3133 = vrot.slane %v1886, 2
        %v3134 = vrot.slane %v1887, 2
        %v3135 = vsel %vm3057, %v3133, %v3134
        %v3136 = vrot.slane %v1888, 2
        %v3137 = vsel %vm3057, %v3134, %v3136
        %s3138 = scalar_lea.vmem %s4, 32
        %v3139 = vld [vmem:[%s3138] sm:$0xff]
        %v3140 = vld [vmem:[%s3138 + $0x8] sm:$0xff]
        %v3141 = vsel %vm428, %v3060, 0
        %v3143 = vsel %vm428, %v3062, 0
        %v3145 = vsel %vm428, %v3065, 0
        %v3147 = vsel %vm428, %v3067, 0
        %v3149 = vsel %vm428, %v3070, 0
        %v3151 = vsel %vm428, %v3072, 0
        %v3153 = vsel %vm428, %v3075, 0
        %v3155 = vsel %vm428, %v3077, 0
        %v3157 = vsel %vm428, %v3080, 0
        %v3159 = vsel %vm428, %v3082, 0
        %v3161 = vsel %vm428, %v3085, 0
        %v3163 = vsel %vm428, %v3087, 0
        %v3165 = vsel %vm428, %v3090, 0
        %v3167 = vsel %vm428, %v3092, 0
        %v3169 = vsel %vm428, %v3095, 0
        %v3171 = vsel %vm428, %v3097, 0
        %v3173 = vsel %vm428, %v3100, 0
        %v3175 = vsel %vm428, %v3102, 0
        %v3177 = vsel %vm428, %v3105, 0
        %v3179 = vsel %vm428, %v3107, 0
        %v3181 = vsel %vm428, %v3110, 0
        %v3183 = vsel %vm428, %v3112, 0
        %v3185 = vsel %vm428, %v3115, 0
        %v3187 = vsel %vm428, %v3117, 0
        %v3189 = vsel %vm428, %v3120, 0
        %v3191 = vsel %vm428, %v3122, 0
        %v3193 = vsel %vm428, %v3125, 0
        %v3195 = vsel %vm428, %v3127, 0
        %v3197 = vsel %vm428, %v3130, 0
        %v3199 = vsel %vm428, %v3132, 0
        %v3201 = vsel %vm428, %v3135, 0
        %v3203 = vsel %vm428, %v3137, 0
        %3205 = vmatpush.msra.mxu0 0.0
        %3206 = vmatpush.msra.mxu0 0.0
        %3207 = vmatpush.msra.mxu0 0.0
        %3208 = vmatpush.msra.mxu0 0.0
        %3209 = vmatpush.msra.mxu0 0.0
        %3210 = vmatpush.msra.mxu0 0.0
        %3211 = vmatpush.msra.mxu0 0.0
        %3212 = vmatpush.msra.mxu0 0.0
        %3213 = vmatpush.msra.mxu0 0.0
        %3214 = vmatpush.msra.mxu0 0.0
        %3215 = vmatpush.msra.mxu0 0.0
        %3216 = vmatpush.msra.mxu0 0.0
        %3217 = vmatpush.msra.mxu0 0.0
        %3218 = vmatpush.msra.mxu0 0.0
        %3219 = vmatpush.msra.mxu0 %v3140
        %3220 = vmatpush.msra.mxu0 %v3139
        %3221 = vmatmul.f32.gmra.mxu0 %v3141
        %v3222 = vpop.f32.mrf.mxu0
        %v3223 = vadd.f32 0.0, %v3222
        %3224 = vmatmul.f32.gmra.mxu0 %v3143
        %v3225 = vpop.f32.mrf.mxu0
        %v3226 = vadd.f32 0.0, %v3225
        %3227 = vmatmul.f32.gmra.mxu0 %v3145
        %v3228 = vpop.f32.mrf.mxu0
        %v3229 = vadd.f32 0.0, %v3228
        %3230 = vmatmul.f32.gmra.mxu0 %v3147
        %v3231 = vpop.f32.mrf.mxu0
        %v3232 = vadd.f32 0.0, %v3231
        %3233 = vmatmul.f32.gmra.mxu0 %v3149
        %v3234 = vpop.f32.mrf.mxu0
        %v3235 = vadd.f32 0.0, %v3234
        %3236 = vmatmul.f32.gmra.mxu0 %v3151
        %v3237 = vpop.f32.mrf.mxu0
        %v3238 = vadd.f32 0.0, %v3237
        %3239 = vmatmul.f32.gmra.mxu0 %v3153
        %v3240 = vpop.f32.mrf.mxu0
        %v3241 = vadd.f32 0.0, %v3240
        %3242 = vmatmul.f32.gmra.mxu0 %v3155
        %v3243 = vpop.f32.mrf.mxu0
        %v3244 = vadd.f32 0.0, %v3243
        %3245 = vmatmul.f32.gmra.mxu0 %v3157
        %v3246 = vpop.f32.mrf.mxu0
        %v3247 = vadd.f32 0.0, %v3246
        %3248 = vmatmul.f32.gmra.mxu0 %v3159
        %v3249 = vpop.f32.mrf.mxu0
        %v3250 = vadd.f32 0.0, %v3249
        %3251 = vmatmul.f32.gmra.mxu0 %v3161
        %v3252 = vpop.f32.mrf.mxu0
        %v3253 = vadd.f32 0.0, %v3252
        %3254 = vmatmul.f32.gmra.mxu0 %v3163
        %v3255 = vpop.f32.mrf.mxu0
        %v3256 = vadd.f32 0.0, %v3255
        %3257 = vmatmul.f32.gmra.mxu0 %v3165
        %v3258 = vpop.f32.mrf.mxu0
        %v3259 = vadd.f32 0.0, %v3258
        %3260 = vmatmul.f32.gmra.mxu0 %v3167
        %v3261 = vpop.f32.mrf.mxu0
        %v3262 = vadd.f32 0.0, %v3261
        %3263 = vmatmul.f32.gmra.mxu0 %v3169
        %v3264 = vpop.f32.mrf.mxu0
        %v3265 = vadd.f32 0.0, %v3264
        %3266 = vmatmul.f32.gmra.mxu0 %v3171
        %v3267 = vpop.f32.mrf.mxu0
        %v3268 = vadd.f32 0.0, %v3267
        %3269 = vmatmul.f32.gmra.mxu0 %v3173
        %v3270 = vpop.f32.mrf.mxu0
        %v3271 = vadd.f32 0.0, %v3270
        %3272 = vmatmul.f32.gmra.mxu0 %v3175
        %v3273 = vpop.f32.mrf.mxu0
        %v3274 = vadd.f32 0.0, %v3273
        %3275 = vmatmul.f32.gmra.mxu0 %v3177
        %v3276 = vpop.f32.mrf.mxu0
        %v3277 = vadd.f32 0.0, %v3276
        %3278 = vmatmul.f32.gmra.mxu0 %v3179
        %v3279 = vpop.f32.mrf.mxu0
        %v3280 = vadd.f32 0.0, %v3279
        %3281 = vmatmul.f32.gmra.mxu0 %v3181
        %v3282 = vpop.f32.mrf.mxu0
        %v3283 = vadd.f32 0.0, %v3282
        %3284 = vmatmul.f32.gmra.mxu0 %v3183
        %v3285 = vpop.f32.mrf.mxu0
        %v3286 = vadd.f32 0.0, %v3285
        %3287 = vmatmul.f32.gmra.mxu0 %v3185
        %v3288 = vpop.f32.mrf.mxu0
        %v3289 = vadd.f32 0.0, %v3288
        %3290 = vmatmul.f32.gmra.mxu0 %v3187
        %v3291 = vpop.f32.mrf.mxu0
        %v3292 = vadd.f32 0.0, %v3291
        %3293 = vmatmul.f32.gmra.mxu0 %v3189
        %v3294 = vpop.f32.mrf.mxu0
        %v3295 = vadd.f32 0.0, %v3294
        %3296 = vmatmul.f32.gmra.mxu0 %v3191
        %v3297 = vpop.f32.mrf.mxu0
        %v3298 = vadd.f32 0.0, %v3297
        %3299 = vmatmul.f32.gmra.mxu0 %v3193
        %v3300 = vpop.f32.mrf.mxu0
        %v3301 = vadd.f32 0.0, %v3300
        %3302 = vmatmul.f32.gmra.mxu0 %v3195
        %v3303 = vpop.f32.mrf.mxu0
        %v3304 = vadd.f32 0.0, %v3303
        %3305 = vmatmul.f32.gmra.mxu0 %v3197
        %v3306 = vpop.f32.mrf.mxu0
        %v3307 = vadd.f32 0.0, %v3306
        %3308 = vmatmul.f32.gmra.mxu0 %v3199
        %v3309 = vpop.f32.mrf.mxu0
        %v3310 = vadd.f32 0.0, %v3309
        %3311 = vmatmul.f32.gmra.mxu0 %v3201
        %v3312 = vpop.f32.mrf.mxu0
        %v3313 = vadd.f32 0.0, %v3312
        %3314 = vmatmul.f32.gmra.mxu0 %v3203
        %v3315 = vpop.f32.mrf.mxu0
        %v3316 = vadd.f32 0.0, %v3315
        %3317 = vdwg.mxu0
        %v3318 = vadd.f32 %v3025, %v3223
        %v3319 = vadd.f32 %v3026, %v3226
        %v3320 = vadd.f32 %v3027, %v3229
        %v3321 = vadd.f32 %v3028, %v3232
        %v3322 = vadd.f32 %v3029, %v3235
        %v3323 = vadd.f32 %v3030, %v3238
        %v3324 = vadd.f32 %v3031, %v3241
        %v3325 = vadd.f32 %v3032, %v3244
        %v3326 = vadd.f32 %v3033, %v3247
        %v3327 = vadd.f32 %v3034, %v3250
        %v3328 = vadd.f32 %v3035, %v3253
        %v3329 = vadd.f32 %v3036, %v3256
        %v3330 = vadd.f32 %v3037, %v3259
        %v3331 = vadd.f32 %v3038, %v3262
        %v3332 = vadd.f32 %v3039, %v3265
        %v3333 = vadd.f32 %v3040, %v3268
        %v3334 = vadd.f32 %v3041, %v3271
        %v3335 = vadd.f32 %v3042, %v3274
        %v3336 = vadd.f32 %v3043, %v3277
        %v3337 = vadd.f32 %v3044, %v3280
        %v3338 = vadd.f32 %v3045, %v3283
        %v3339 = vadd.f32 %v3046, %v3286
        %v3340 = vadd.f32 %v3047, %v3289
        %v3341 = vadd.f32 %v3048, %v3292
        %v3342 = vadd.f32 %v3049, %v3295
        %v3343 = vadd.f32 %v3050, %v3298
        %v3344 = vadd.f32 %v3051, %v3301
        %v3345 = vadd.f32 %v3052, %v3304
        %v3346 = vadd.f32 %v3053, %v3307
        %v3347 = vadd.f32 %v3054, %v3310
        %v3348 = vadd.f32 %v3055, %v3313
        %v3349 = vadd.f32 %v3056, %v3316
        %v3350 = vrot.slane %v1895, 2
        %v3351 = vrot.slane %v1896, 2
        %v3352 = vsel %vm3057, %v3350, %v3351
        %v3353 = vrot.slane %v1897, 2
        %v3354 = vsel %vm3057, %v3351, %v3353
        %v3355 = vrot.slane %v1898, 2
        %v3356 = vrot.slane %v1899, 2
        %v3357 = vsel %vm3057, %v3355, %v3356
        %v3358 = vrot.slane %v1900, 2
        %v3359 = vsel %vm3057, %v3356, %v3358
        %v3360 = vrot.slane %v1901, 2
        %v3361 = vrot.slane %v1902, 2
        %v3362 = vsel %vm3057, %v3360, %v3361
        %v3363 = vrot.slane %v1903, 2
        %v3364 = vsel %vm3057, %v3361, %v3363
        %v3365 = vrot.slane %v1904, 2
        %v3366 = vrot.slane %v1905, 2
        %v3367 = vsel %vm3057, %v3365, %v3366
        %v3368 = vrot.slane %v1906, 2
        %v3369 = vsel %vm3057, %v3366, %v3368
        %v3370 = vrot.slane %v1907, 2
        %v3371 = vrot.slane %v1908, 2
        %v3372 = vsel %vm3057, %v3370, %v3371
        %v3373 = vrot.slane %v1909, 2
        %v3374 = vsel %vm3057, %v3371, %v3373
        %v3375 = vrot.slane %v1910, 2
        %v3376 = vrot.slane %v1911, 2
        %v3377 = vsel %vm3057, %v3375, %v3376
        %v3378 = vrot.slane %v1912, 2
        %v3379 = vsel %vm3057, %v3376, %v3378
        %v3380 = vrot.slane %v1913, 2
        %v3381 = vrot.slane %v1914, 2
        %v3382 = vsel %vm3057, %v3380, %v3381
        %v3383 = vrot.slane %v1915, 2
        %v3384 = vsel %vm3057, %v3381, %v3383
        %v3385 = vrot.slane %v1916, 2
        %v3386 = vrot.slane %v1917, 2
        %v3387 = vsel %vm3057, %v3385, %v3386
        %v3388 = vrot.slane %v1918, 2
        %v3389 = vsel %vm3057, %v3386, %v3388
        %v3390 = vrot.slane %v1919, 2
        %v3391 = vrot.slane %v1920, 2
        %v3392 = vsel %vm3057, %v3390, %v3391
        %v3393 = vrot.slane %v1921, 2
        %v3394 = vsel %vm3057, %v3391, %v3393
        %v3395 = vrot.slane %v1922, 2
        %v3396 = vrot.slane %v1923, 2
        %v3397 = vsel %vm3057, %v3395, %v3396
        %v3398 = vrot.slane %v1924, 2
        %v3399 = vsel %vm3057, %v3396, %v3398
        %v3400 = vrot.slane %v1925, 2
        %v3401 = vrot.slane %v1926, 2
        %v3402 = vsel %vm3057, %v3400, %v3401
        %v3403 = vrot.slane %v1927, 2
        %v3404 = vsel %vm3057, %v3401, %v3403
        %v3405 = vrot.slane %v1928, 2
        %v3406 = vrot.slane %v1929, 2
        %v3407 = vsel %vm3057, %v3405, %v3406
        %v3408 = vrot.slane %v1930, 2
        %v3409 = vsel %vm3057, %v3406, %v3408
        %v3410 = vrot.slane %v1931, 2
        %v3411 = vrot.slane %v1932, 2
        %v3412 = vsel %vm3057, %v3410, %v3411
        %v3413 = vrot.slane %v1933, 2
        %v3414 = vsel %vm3057, %v3411, %v3413
        %v3415 = vrot.slane %v1934, 2
        %v3416 = vrot.slane %v1935, 2
        %v3417 = vsel %vm3057, %v3415, %v3416
        %v3418 = vrot.slane %v1936, 2
        %v3419 = vsel %vm3057, %v3416, %v3418
        %v3420 = vrot.slane %v1937, 2
        %v3421 = vrot.slane %v1938, 2
        %v3422 = vsel %vm3057, %v3420, %v3421
        %v3423 = vrot.slane %v1939, 2
        %v3424 = vsel %vm3057, %v3421, %v3423
        %v3425 = vrot.slane %v1940, 2
        %v3426 = vrot.slane %v1941, 2
        %v3427 = vsel %vm3057, %v3425, %v3426
        %v3428 = vrot.slane %v1942, 2
        %v3429 = vsel %vm3057, %v3426, %v3428
        %s3430 = scalar_lea.vmem [#allocation10], 32
        %v3431 = vld [vmem:[%s3430] sm:$0xff]
        %v3432 = vld [vmem:[%s3430 + $0x8] sm:$0xff]
        %v3433 = vsel %vm428, %v3352, 0
        %v3435 = vsel %vm428, %v3354, 0
        %v3437 = vsel %vm428, %v3357, 0
        %v3439 = vsel %vm428, %v3359, 0
        %v3441 = vsel %vm428, %v3362, 0
        %v3443 = vsel %vm428, %v3364, 0
        %v3445 = vsel %vm428, %v3367, 0
        %v3447 = vsel %vm428, %v3369, 0
        %v3449 = vsel %vm428, %v3372, 0
        %v3451 = vsel %vm428, %v3374, 0
        %v3453 = vsel %vm428, %v3377, 0
        %v3455 = vsel %vm428, %v3379, 0
        %v3457 = vsel %vm428, %v3382, 0
        %v3459 = vsel %vm428, %v3384, 0
        %v3461 = vsel %vm428, %v3387, 0
        %v3463 = vsel %vm428, %v3389, 0
        %v3465 = vsel %vm428, %v3392, 0
        %v3467 = vsel %vm428, %v3394, 0
        %v3469 = vsel %vm428, %v3397, 0
        %v3471 = vsel %vm428, %v3399, 0
        %v3473 = vsel %vm428, %v3402, 0
        %v3475 = vsel %vm428, %v3404, 0
        %v3477 = vsel %vm428, %v3407, 0
        %v3479 = vsel %vm428, %v3409, 0
        %v3481 = vsel %vm428, %v3412, 0
        %v3483 = vsel %vm428, %v3414, 0
        %v3485 = vsel %vm428, %v3417, 0
        %v3487 = vsel %vm428, %v3419, 0
        %v3489 = vsel %vm428, %v3422, 0
        %v3491 = vsel %vm428, %v3424, 0
        %v3493 = vsel %vm428, %v3427, 0
        %v3495 = vsel %vm428, %v3429, 0
        %3497 = vmatpush.msra.mxu0 0.0
        %3498 = vmatpush.msra.mxu0 0.0
        %3499 = vmatpush.msra.mxu0 0.0
        %3500 = vmatpush.msra.mxu0 0.0
        %3501 = vmatpush.msra.mxu0 0.0
        %3502 = vmatpush.msra.mxu0 0.0
        %3503 = vmatpush.msra.mxu0 0.0
        %3504 = vmatpush.msra.mxu0 0.0
        %3505 = vmatpush.msra.mxu0 0.0
        %3506 = vmatpush.msra.mxu0 0.0
        %3507 = vmatpush.msra.mxu0 0.0
        %3508 = vmatpush.msra.mxu0 0.0
        %3509 = vmatpush.msra.mxu0 0.0
        %3510 = vmatpush.msra.mxu0 0.0
        %3511 = vmatpush.msra.mxu0 %v3432
        %3512 = vmatpush.msra.mxu0 %v3431
        %3513 = vmatmul.f32.gmra.mxu0 %v3433
        %v3514 = vpop.f32.mrf.mxu0
        %v3515 = vadd.f32 0.0, %v3514
        %3516 = vmatmul.f32.gmra.mxu0 %v3435
        %v3517 = vpop.f32.mrf.mxu0
        %v3518 = vadd.f32 0.0, %v3517
        %3519 = vmatmul.f32.gmra.mxu0 %v3437
        %v3520 = vpop.f32.mrf.mxu0
        %v3521 = vadd.f32 0.0, %v3520
        %3522 = vmatmul.f32.gmra.mxu0 %v3439
        %v3523 = vpop.f32.mrf.mxu0
        %v3524 = vadd.f32 0.0, %v3523
        %3525 = vmatmul.f32.gmra.mxu0 %v3441
        %v3526 = vpop.f32.mrf.mxu0
        %v3527 = vadd.f32 0.0, %v3526
        %3528 = vmatmul.f32.gmra.mxu0 %v3443
        %v3529 = vpop.f32.mrf.mxu0
        %v3530 = vadd.f32 0.0, %v3529
        %3531 = vmatmul.f32.gmra.mxu0 %v3445
        %v3532 = vpop.f32.mrf.mxu0
        %v3533 = vadd.f32 0.0, %v3532
        %3534 = vmatmul.f32.gmra.mxu0 %v3447
        %v3535 = vpop.f32.mrf.mxu0
        %v3536 = vadd.f32 0.0, %v3535
        %3537 = vmatmul.f32.gmra.mxu0 %v3449
        %v3538 = vpop.f32.mrf.mxu0
        %v3539 = vadd.f32 0.0, %v3538
        %3540 = vmatmul.f32.gmra.mxu0 %v3451
        %v3541 = vpop.f32.mrf.mxu0
        %v3542 = vadd.f32 0.0, %v3541
        %3543 = vmatmul.f32.gmra.mxu0 %v3453
        %v3544 = vpop.f32.mrf.mxu0
        %v3545 = vadd.f32 0.0, %v3544
        %3546 = vmatmul.f32.gmra.mxu0 %v3455
        %v3547 = vpop.f32.mrf.mxu0
        %v3548 = vadd.f32 0.0, %v3547
        %3549 = vmatmul.f32.gmra.mxu0 %v3457
        %v3550 = vpop.f32.mrf.mxu0
        %v3551 = vadd.f32 0.0, %v3550
        %3552 = vmatmul.f32.gmra.mxu0 %v3459
        %v3553 = vpop.f32.mrf.mxu0
        %v3554 = vadd.f32 0.0, %v3553
        %3555 = vmatmul.f32.gmra.mxu0 %v3461
        %v3556 = vpop.f32.mrf.mxu0
        %v3557 = vadd.f32 0.0, %v3556
        %3558 = vmatmul.f32.gmra.mxu0 %v3463
        %v3559 = vpop.f32.mrf.mxu0
        %v3560 = vadd.f32 0.0, %v3559
        %3561 = vmatmul.f32.gmra.mxu0 %v3465
        %v3562 = vpop.f32.mrf.mxu0
        %v3563 = vadd.f32 0.0, %v3562
        %3564 = vmatmul.f32.gmra.mxu0 %v3467
        %v3565 = vpop.f32.mrf.mxu0
        %v3566 = vadd.f32 0.0, %v3565
        %3567 = vmatmul.f32.gmra.mxu0 %v3469
        %v3568 = vpop.f32.mrf.mxu0
        %v3569 = vadd.f32 0.0, %v3568
        %3570 = vmatmul.f32.gmra.mxu0 %v3471
        %v3571 = vpop.f32.mrf.mxu0
        %v3572 = vadd.f32 0.0, %v3571
        %3573 = vmatmul.f32.gmra.mxu0 %v3473
        %v3574 = vpop.f32.mrf.mxu0
        %v3575 = vadd.f32 0.0, %v3574
        %3576 = vmatmul.f32.gmra.mxu0 %v3475
        %v3577 = vpop.f32.mrf.mxu0
        %v3578 = vadd.f32 0.0, %v3577
        %3579 = vmatmul.f32.gmra.mxu0 %v3477
        %v3580 = vpop.f32.mrf.mxu0
        %v3581 = vadd.f32 0.0, %v3580
        %3582 = vmatmul.f32.gmra.mxu0 %v3479
        %v3583 = vpop.f32.mrf.mxu0
        %v3584 = vadd.f32 0.0, %v3583
        %3585 = vmatmul.f32.gmra.mxu0 %v3481
        %v3586 = vpop.f32.mrf.mxu0
        %v3587 = vadd.f32 0.0, %v3586
        %3588 = vmatmul.f32.gmra.mxu0 %v3483
        %v3589 = vpop.f32.mrf.mxu0
        %v3590 = vadd.f32 0.0, %v3589
        %3591 = vmatmul.f32.gmra.mxu0 %v3485
        %v3592 = vpop.f32.mrf.mxu0
        %v3593 = vadd.f32 0.0, %v3592
        %3594 = vmatmul.f32.gmra.mxu0 %v3487
        %v3595 = vpop.f32.mrf.mxu0
        %v3596 = vadd.f32 0.0, %v3595
        %3597 = vmatmul.f32.gmra.mxu0 %v3489
        %v3598 = vpop.f32.mrf.mxu0
        %v3599 = vadd.f32 0.0, %v3598
        %3600 = vmatmul.f32.gmra.mxu0 %v3491
        %v3601 = vpop.f32.mrf.mxu0
        %v3602 = vadd.f32 0.0, %v3601
        %3603 = vmatmul.f32.gmra.mxu0 %v3493
        %v3604 = vpop.f32.mrf.mxu0
        %v3605 = vadd.f32 0.0, %v3604
        %3606 = vmatmul.f32.gmra.mxu0 %v3495
        %v3607 = vpop.f32.mrf.mxu0
        %v3608 = vadd.f32 0.0, %v3607
        %3609 = vdwg.mxu0
        %v3610 = vadd.f32 %v3318, %v3515
        %v3611 = vadd.f32 %v3319, %v3518
        %v3612 = vadd.f32 %v3320, %v3521
        %v3613 = vadd.f32 %v3321, %v3524
        %v3614 = vadd.f32 %v3322, %v3527
        %v3615 = vadd.f32 %v3323, %v3530
        %v3616 = vadd.f32 %v3324, %v3533
        %v3617 = vadd.f32 %v3325, %v3536
        %v3618 = vadd.f32 %v3326, %v3539
        %v3619 = vadd.f32 %v3327, %v3542
        %v3620 = vadd.f32 %v3328, %v3545
        %v3621 = vadd.f32 %v3329, %v3548
        %v3622 = vadd.f32 %v3330, %v3551
        %v3623 = vadd.f32 %v3331, %v3554
        %v3624 = vadd.f32 %v3332, %v3557
        %v3625 = vadd.f32 %v3333, %v3560
        %v3626 = vadd.f32 %v3334, %v3563
        %v3627 = vadd.f32 %v3335, %v3566
        %v3628 = vadd.f32 %v3336, %v3569
        %v3629 = vadd.f32 %v3337, %v3572
        %v3630 = vadd.f32 %v3338, %v3575
        %v3631 = vadd.f32 %v3339, %v3578
        %v3632 = vadd.f32 %v3340, %v3581
        %v3633 = vadd.f32 %v3341, %v3584
        %v3634 = vadd.f32 %v3342, %v3587
        %v3635 = vadd.f32 %v3343, %v3590
        %v3636 = vadd.f32 %v3344, %v3593
        %v3637 = vadd.f32 %v3345, %v3596
        %v3638 = vadd.f32 %v3346, %v3599
        %v3639 = vadd.f32 %v3347, %v3602
        %v3640 = vadd.f32 %v3348, %v3605
        %v3641 = vadd.f32 %v3349, %v3608
        %s3642 = scalar_lea.vmem %s4, 48
        %v3643 = vld [vmem:[%s3642] sm:$0xff]
        %v3644 = vld [vmem:[%s3642 + $0x8] sm:$0xff]
        %v3646 = vsel %vm428, %v1889, 0
        %v3649 = vsel %vm428, %v1890, 0
        %3651 = vmatpush.msra.mxu0 0.0
        %3652 = vmatpush.msra.mxu0 0.0
        %3653 = vmatpush.msra.mxu0 0.0
        %3654 = vmatpush.msra.mxu0 0.0
        %3655 = vmatpush.msra.mxu0 0.0
        %3656 = vmatpush.msra.mxu0 0.0
        %3657 = vmatpush.msra.mxu0 0.0
        %3658 = vmatpush.msra.mxu0 0.0
        %3659 = vmatpush.msra.mxu0 0.0
        %3660 = vmatpush.msra.mxu0 0.0
        %3661 = vmatpush.msra.mxu0 0.0
        %3662 = vmatpush.msra.mxu0 0.0
        %3663 = vmatpush.msra.mxu0 0.0
        %3664 = vmatpush.msra.mxu0 0.0
        %3665 = vmatpush.msra.mxu0 %v3644
        %3666 = vmatpush.msra.mxu0 %v3643
        %3667 = vmatmul.f32.gmra.mxu0 %v1963
        %v3668 = vpop.f32.mrf.mxu0
        %v3669 = vadd.f32 0.0, %v3668
        %3670 = vmatmul.f32.gmra.mxu0 %v1966
        %v3671 = vpop.f32.mrf.mxu0
        %v3672 = vadd.f32 0.0, %v3671
        %3673 = vmatmul.f32.gmra.mxu0 %v1969
        %v3674 = vpop.f32.mrf.mxu0
        %v3675 = vadd.f32 0.0, %v3674
        %3676 = vmatmul.f32.gmra.mxu0 %v1972
        %v3677 = vpop.f32.mrf.mxu0
        %v3678 = vadd.f32 0.0, %v3677
        %3679 = vmatmul.f32.gmra.mxu0 %v1975
        %v3680 = vpop.f32.mrf.mxu0
        %v3681 = vadd.f32 0.0, %v3680
        %3682 = vmatmul.f32.gmra.mxu0 %v1978
        %v3683 = vpop.f32.mrf.mxu0
        %v3684 = vadd.f32 0.0, %v3683
        %3685 = vmatmul.f32.gmra.mxu0 %v1981
        %v3686 = vpop.f32.mrf.mxu0
        %v3687 = vadd.f32 0.0, %v3686
        %3688 = vmatmul.f32.gmra.mxu0 %v1984
        %v3689 = vpop.f32.mrf.mxu0
        %v3690 = vadd.f32 0.0, %v3689
        %3691 = vmatmul.f32.gmra.mxu0 %v1987
        %v3692 = vpop.f32.mrf.mxu0
        %v3693 = vadd.f32 0.0, %v3692
        %3694 = vmatmul.f32.gmra.mxu0 %v1990
        %v3695 = vpop.f32.mrf.mxu0
        %v3696 = vadd.f32 0.0, %v3695
        %3697 = vmatmul.f32.gmra.mxu0 %v1993
        %v3698 = vpop.f32.mrf.mxu0
        %v3699 = vadd.f32 0.0, %v3698
        %3700 = vmatmul.f32.gmra.mxu0 %v1996
        %v3701 = vpop.f32.mrf.mxu0
        %v3702 = vadd.f32 0.0, %v3701
        %3703 = vmatmul.f32.gmra.mxu0 %v1999
        %v3704 = vpop.f32.mrf.mxu0
        %v3705 = vadd.f32 0.0, %v3704
        %3706 = vmatmul.f32.gmra.mxu0 %v2002
        %v3707 = vpop.f32.mrf.mxu0
        %v3708 = vadd.f32 0.0, %v3707
        %3709 = vmatmul.f32.gmra.mxu0 %v2005
        %v3710 = vpop.f32.mrf.mxu0
        %v3711 = vadd.f32 0.0, %v3710
        %3712 = vmatmul.f32.gmra.mxu0 %v2008
        %v3713 = vpop.f32.mrf.mxu0
        %v3714 = vadd.f32 0.0, %v3713
        %3715 = vmatmul.f32.gmra.mxu0 %v2011
        %v3716 = vpop.f32.mrf.mxu0
        %v3717 = vadd.f32 0.0, %v3716
        %3718 = vmatmul.f32.gmra.mxu0 %v2014
        %v3719 = vpop.f32.mrf.mxu0
        %v3720 = vadd.f32 0.0, %v3719
        %3721 = vmatmul.f32.gmra.mxu0 %v2017
        %v3722 = vpop.f32.mrf.mxu0
        %v3723 = vadd.f32 0.0, %v3722
        %3724 = vmatmul.f32.gmra.mxu0 %v2020
        %v3725 = vpop.f32.mrf.mxu0
        %v3726 = vadd.f32 0.0, %v3725
        %3727 = vmatmul.f32.gmra.mxu0 %v2023
        %v3728 = vpop.f32.mrf.mxu0
        %v3729 = vadd.f32 0.0, %v3728
        %3730 = vmatmul.f32.gmra.mxu0 %v2026
        %v3731 = vpop.f32.mrf.mxu0
        %v3732 = vadd.f32 0.0, %v3731
        %3733 = vmatmul.f32.gmra.mxu0 %v2029
        %v3734 = vpop.f32.mrf.mxu0
        %v3735 = vadd.f32 0.0, %v3734
        %3736 = vmatmul.f32.gmra.mxu0 %v2032
        %v3737 = vpop.f32.mrf.mxu0
        %v3738 = vadd.f32 0.0, %v3737
        %3739 = vmatmul.f32.gmra.mxu0 %v2035
        %v3740 = vpop.f32.mrf.mxu0
        %v3741 = vadd.f32 0.0, %v3740
        %3742 = vmatmul.f32.gmra.mxu0 %v2038
        %v3743 = vpop.f32.mrf.mxu0
        %v3744 = vadd.f32 0.0, %v3743
        %3745 = vmatmul.f32.gmra.mxu0 %v2041
        %v3746 = vpop.f32.mrf.mxu0
        %v3747 = vadd.f32 0.0, %v3746
        %3748 = vmatmul.f32.gmra.mxu0 %v2044
        %v3749 = vpop.f32.mrf.mxu0
        %v3750 = vadd.f32 0.0, %v3749
        %3751 = vmatmul.f32.gmra.mxu0 %v2047
        %v3752 = vpop.f32.mrf.mxu0
        %v3753 = vadd.f32 0.0, %v3752
        %3754 = vmatmul.f32.gmra.mxu0 %v2050
        %v3755 = vpop.f32.mrf.mxu0
        %v3756 = vadd.f32 0.0, %v3755
        %3757 = vmatmul.f32.gmra.mxu0 %v3646
        %v3758 = vpop.f32.mrf.mxu0
        %v3759 = vadd.f32 0.0, %v3758
        %3760 = vmatmul.f32.gmra.mxu0 %v3649
        %v3761 = vpop.f32.mrf.mxu0
        %v3762 = vadd.f32 0.0, %v3761
        %3763 = vdwg.mxu0
        %v3764 = vadd.f32 %v3610, %v3669
        %v3765 = vadd.f32 %v3611, %v3672
        %v3766 = vadd.f32 %v3612, %v3675
        %v3767 = vadd.f32 %v3613, %v3678
        %v3768 = vadd.f32 %v3614, %v3681
        %v3769 = vadd.f32 %v3615, %v3684
        %v3770 = vadd.f32 %v3616, %v3687
        %v3771 = vadd.f32 %v3617, %v3690
        %v3772 = vadd.f32 %v3618, %v3693
        %v3773 = vadd.f32 %v3619, %v3696
        %v3774 = vadd.f32 %v3620, %v3699
        %v3775 = vadd.f32 %v3621, %v3702
        %v3776 = vadd.f32 %v3622, %v3705
        %v3777 = vadd.f32 %v3623, %v3708
        %v3778 = vadd.f32 %v3624, %v3711
        %v3779 = vadd.f32 %v3625, %v3714
        %v3780 = vadd.f32 %v3626, %v3717
        %v3781 = vadd.f32 %v3627, %v3720
        %v3782 = vadd.f32 %v3628, %v3723
        %v3783 = vadd.f32 %v3629, %v3726
        %v3784 = vadd.f32 %v3630, %v3729
        %v3785 = vadd.f32 %v3631, %v3732
        %v3786 = vadd.f32 %v3632, %v3735
        %v3787 = vadd.f32 %v3633, %v3738
        %v3788 = vadd.f32 %v3634, %v3741
        %v3789 = vadd.f32 %v3635, %v3744
        %v3790 = vadd.f32 %v3636, %v3747
        %v3791 = vadd.f32 %v3637, %v3750
        %v3792 = vadd.f32 %v3638, %v3753
        %v3793 = vadd.f32 %v3639, %v3756
        %v3794 = vadd.f32 %v3640, %v3759
        %v3795 = vadd.f32 %v3641, %v3762
        %s3796 = scalar_lea.vmem [#allocation10], 48
        %v3797 = vld [vmem:[%s3796] sm:$0xff]
        %v3798 = vld [vmem:[%s3796 + $0x8] sm:$0xff]
        %v3800 = vsel %vm428, %v1943, 0
        %v3803 = vsel %vm428, %v1944, 0
        %3805 = vmatpush.msra.mxu0 0.0
        %3806 = vmatpush.msra.mxu0 0.0
        %3807 = vmatpush.msra.mxu0 0.0
        %3808 = vmatpush.msra.mxu0 0.0
        %3809 = vmatpush.msra.mxu0 0.0
        %3810 = vmatpush.msra.mxu0 0.0
        %3811 = vmatpush.msra.mxu0 0.0
        %3812 = vmatpush.msra.mxu0 0.0
        %3813 = vmatpush.msra.mxu0 0.0
        %3814 = vmatpush.msra.mxu0 0.0
        %3815 = vmatpush.msra.mxu0 0.0
        %3816 = vmatpush.msra.mxu0 0.0
        %3817 = vmatpush.msra.mxu0 0.0
        %3818 = vmatpush.msra.mxu0 0.0
        %3819 = vmatpush.msra.mxu0 %v3798
        %3820 = vmatpush.msra.mxu0 %v3797
        %3821 = vmatmul.f32.gmra.mxu0 %v2206
        %v3822 = vpop.f32.mrf.mxu0
        %v3823 = vadd.f32 0.0, %v3822
        %3824 = vmatmul.f32.gmra.mxu0 %v2209
        %v3825 = vpop.f32.mrf.mxu0
        %v3826 = vadd.f32 0.0, %v3825
        %3827 = vmatmul.f32.gmra.mxu0 %v2212
        %v3828 = vpop.f32.mrf.mxu0
        %v3829 = vadd.f32 0.0, %v3828
        %3830 = vmatmul.f32.gmra.mxu0 %v2215
        %v3831 = vpop.f32.mrf.mxu0
        %v3832 = vadd.f32 0.0, %v3831
        %3833 = vmatmul.f32.gmra.mxu0 %v2218
        %v3834 = vpop.f32.mrf.mxu0
        %v3835 = vadd.f32 0.0, %v3834
        %3836 = vmatmul.f32.gmra.mxu0 %v2221
        %v3837 = vpop.f32.mrf.mxu0
        %v3838 = vadd.f32 0.0, %v3837
        %3839 = vmatmul.f32.gmra.mxu0 %v2224
        %v3840 = vpop.f32.mrf.mxu0
        %v3841 = vadd.f32 0.0, %v3840
        %3842 = vmatmul.f32.gmra.mxu0 %v2227
        %v3843 = vpop.f32.mrf.mxu0
        %v3844 = vadd.f32 0.0, %v3843
        %3845 = vmatmul.f32.gmra.mxu0 %v2230
        %v3846 = vpop.f32.mrf.mxu0
        %v3847 = vadd.f32 0.0, %v3846
        %3848 = vmatmul.f32.gmra.mxu0 %v2233
        %v3849 = vpop.f32.mrf.mxu0
        %v3850 = vadd.f32 0.0, %v3849
        %3851 = vmatmul.f32.gmra.mxu0 %v2236
        %v3852 = vpop.f32.mrf.mxu0
        %v3853 = vadd.f32 0.0, %v3852
        %3854 = vmatmul.f32.gmra.mxu0 %v2239
        %v3855 = vpop.f32.mrf.mxu0
        %v3856 = vadd.f32 0.0, %v3855
        %3857 = vmatmul.f32.gmra.mxu0 %v2242
        %v3858 = vpop.f32.mrf.mxu0
        %v3859 = vadd.f32 0.0, %v3858
        %3860 = vmatmul.f32.gmra.mxu0 %v2245
        %v3861 = vpop.f32.mrf.mxu0
        %v3862 = vadd.f32 0.0, %v3861
        %3863 = vmatmul.f32.gmra.mxu0 %v2248
        %v3864 = vpop.f32.mrf.mxu0
        %v3865 = vadd.f32 0.0, %v3864
        %3866 = vmatmul.f32.gmra.mxu0 %v2251
        %v3867 = vpop.f32.mrf.mxu0
        %v3868 = vadd.f32 0.0, %v3867
        %3869 = vmatmul.f32.gmra.mxu0 %v2254
        %v3870 = vpop.f32.mrf.mxu0
        %v3871 = vadd.f32 0.0, %v3870
        %3872 = vmatmul.f32.gmra.mxu0 %v2257
        %v3873 = vpop.f32.mrf.mxu0
        %v3874 = vadd.f32 0.0, %v3873
        %3875 = vmatmul.f32.gmra.mxu0 %v2260
        %v3876 = vpop.f32.mrf.mxu0
        %v3877 = vadd.f32 0.0, %v3876
        %3878 = vmatmul.f32.gmra.mxu0 %v2263
        %v3879 = vpop.f32.mrf.mxu0
        %v3880 = vadd.f32 0.0, %v3879
        %3881 = vmatmul.f32.gmra.mxu0 %v2266
        %v3882 = vpop.f32.mrf.mxu0
        %v3883 = vadd.f32 0.0, %v3882
        %3884 = vmatmul.f32.gmra.mxu0 %v2269
        %v3885 = vpop.f32.mrf.mxu0
        %v3886 = vadd.f32 0.0, %v3885
        %3887 = vmatmul.f32.gmra.mxu0 %v2272
        %v3888 = vpop.f32.mrf.mxu0
        %v3889 = vadd.f32 0.0, %v3888
        %3890 = vmatmul.f32.gmra.mxu0 %v2275
        %v3891 = vpop.f32.mrf.mxu0
        %v3892 = vadd.f32 0.0, %v3891
        %3893 = vmatmul.f32.gmra.mxu0 %v2278
        %v3894 = vpop.f32.mrf.mxu0
        %v3895 = vadd.f32 0.0, %v3894
        %3896 = vmatmul.f32.gmra.mxu0 %v2281
        %v3897 = vpop.f32.mrf.mxu0
        %v3898 = vadd.f32 0.0, %v3897
        %3899 = vmatmul.f32.gmra.mxu0 %v2284
        %v3900 = vpop.f32.mrf.mxu0
        %v3901 = vadd.f32 0.0, %v3900
        %3902 = vmatmul.f32.gmra.mxu0 %v2287
        %v3903 = vpop.f32.mrf.mxu0
        %v3904 = vadd.f32 0.0, %v3903
        %3905 = vmatmul.f32.gmra.mxu0 %v2290
        %v3906 = vpop.f32.mrf.mxu0
        %v3907 = vadd.f32 0.0, %v3906
        %3908 = vmatmul.f32.gmra.mxu0 %v2293
        %v3909 = vpop.f32.mrf.mxu0
        %v3910 = vadd.f32 0.0, %v3909
        %3911 = vmatmul.f32.gmra.mxu0 %v3800
        %v3912 = vpop.f32.mrf.mxu0
        %v3913 = vadd.f32 0.0, %v3912
        %3914 = vmatmul.f32.gmra.mxu0 %v3803
        %v3915 = vpop.f32.mrf.mxu0
        %v3916 = vadd.f32 0.0, %v3915
        %3917 = vdwg.mxu0
        %v3918 = vadd.f32 %v3764, %v3823
        %v3919 = vadd.f32 %v3765, %v3826
        %v3920 = vadd.f32 %v3766, %v3829
        %v3921 = vadd.f32 %v3767, %v3832
        %v3922 = vadd.f32 %v3768, %v3835
        %v3923 = vadd.f32 %v3769, %v3838
        %v3924 = vadd.f32 %v3770, %v3841
        %v3925 = vadd.f32 %v3771, %v3844
        %v3926 = vadd.f32 %v3772, %v3847
        %v3927 = vadd.f32 %v3773, %v3850
        %v3928 = vadd.f32 %v3774, %v3853
        %v3929 = vadd.f32 %v3775, %v3856
        %v3930 = vadd.f32 %v3776, %v3859
        %v3931 = vadd.f32 %v3777, %v3862
        %v3932 = vadd.f32 %v3778, %v3865
        %v3933 = vadd.f32 %v3779, %v3868
        %v3934 = vadd.f32 %v3780, %v3871
        %v3935 = vadd.f32 %v3781, %v3874
        %v3936 = vadd.f32 %v3782, %v3877
        %v3937 = vadd.f32 %v3783, %v3880
        %v3938 = vadd.f32 %v3784, %v3883
        %v3939 = vadd.f32 %v3785, %v3886
        %v3940 = vadd.f32 %v3786, %v3889
        %v3941 = vadd.f32 %v3787, %v3892
        %v3942 = vadd.f32 %v3788, %v3895
        %v3943 = vadd.f32 %v3789, %v3898
        %v3944 = vadd.f32 %v3790, %v3901
        %v3945 = vadd.f32 %v3791, %v3904
        %v3946 = vadd.f32 %v3792, %v3907
        %v3947 = vadd.f32 %v3793, %v3910
        %v3948 = vadd.f32 %v3794, %v3913
        %v3949 = vadd.f32 %v3795, %v3916
        %v3951 = vrot.slane %v1889, 1
        %v3952 = vrot.slane %v1890, 1
        %v3953 = vsel %vm2456, %v3951, %v3952
        %v3954 = vrot.slane %v1891, 1
        %v3955 = vsel %vm2456, %v3952, %v3954
        %s3956 = scalar_lea.vmem %s4, 64
        %v3957 = vld [vmem:[%s3956] sm:$0xff]
        %v3958 = vld [vmem:[%s3956 + $0x8] sm:$0xff]
        %v3959 = vsel %vm428, %v3953, 0
        %v3961 = vsel %vm428, %v3955, 0
        %3963 = vmatpush.msra.mxu0 0.0
        %3964 = vmatpush.msra.mxu0 0.0
        %3965 = vmatpush.msra.mxu0 0.0
        %3966 = vmatpush.msra.mxu0 0.0
        %3967 = vmatpush.msra.mxu0 0.0
        %3968 = vmatpush.msra.mxu0 0.0
        %3969 = vmatpush.msra.mxu0 0.0
        %3970 = vmatpush.msra.mxu0 0.0
        %3971 = vmatpush.msra.mxu0 0.0
        %3972 = vmatpush.msra.mxu0 0.0
        %3973 = vmatpush.msra.mxu0 0.0
        %3974 = vmatpush.msra.mxu0 0.0
        %3975 = vmatpush.msra.mxu0 0.0
        %3976 = vmatpush.msra.mxu0 0.0
        %3977 = vmatpush.msra.mxu0 %v3958
        %3978 = vmatpush.msra.mxu0 %v3957
        %3979 = vmatmul.f32.gmra.mxu0 %v2544
        %v3980 = vpop.f32.mrf.mxu0
        %v3981 = vadd.f32 0.0, %v3980
        %3982 = vmatmul.f32.gmra.mxu0 %v2546
        %v3983 = vpop.f32.mrf.mxu0
        %v3984 = vadd.f32 0.0, %v3983
        %3985 = vmatmul.f32.gmra.mxu0 %v2548
        %v3986 = vpop.f32.mrf.mxu0
        %v3987 = vadd.f32 0.0, %v3986
        %3988 = vmatmul.f32.gmra.mxu0 %v2550
        %v3989 = vpop.f32.mrf.mxu0
        %v3990 = vadd.f32 0.0, %v3989
        %3991 = vmatmul.f32.gmra.mxu0 %v2552
        %v3992 = vpop.f32.mrf.mxu0
        %v3993 = vadd.f32 0.0, %v3992
        %3994 = vmatmul.f32.gmra.mxu0 %v2554
        %v3995 = vpop.f32.mrf.mxu0
        %v3996 = vadd.f32 0.0, %v3995
        %3997 = vmatmul.f32.gmra.mxu0 %v2556
        %v3998 = vpop.f32.mrf.mxu0
        %v3999 = vadd.f32 0.0, %v3998
        %4000 = vmatmul.f32.gmra.mxu0 %v2558
        %v4001 = vpop.f32.mrf.mxu0
        %v4002 = vadd.f32 0.0, %v4001
        %4003 = vmatmul.f32.gmra.mxu0 %v2560
        %v4004 = vpop.f32.mrf.mxu0
        %v4005 = vadd.f32 0.0, %v4004
        %4006 = vmatmul.f32.gmra.mxu0 %v2562
        %v4007 = vpop.f32.mrf.mxu0
        %v4008 = vadd.f32 0.0, %v4007
        %4009 = vmatmul.f32.gmra.mxu0 %v2564
        %v4010 = vpop.f32.mrf.mxu0
        %v4011 = vadd.f32 0.0, %v4010
        %4012 = vmatmul.f32.gmra.mxu0 %v2566
        %v4013 = vpop.f32.mrf.mxu0
        %v4014 = vadd.f32 0.0, %v4013
        %4015 = vmatmul.f32.gmra.mxu0 %v2568
        %v4016 = vpop.f32.mrf.mxu0
        %v4017 = vadd.f32 0.0, %v4016
        %4018 = vmatmul.f32.gmra.mxu0 %v2570
        %v4019 = vpop.f32.mrf.mxu0
        %v4020 = vadd.f32 0.0, %v4019
        %4021 = vmatmul.f32.gmra.mxu0 %v2572
        %v4022 = vpop.f32.mrf.mxu0
        %v4023 = vadd.f32 0.0, %v4022
        %4024 = vmatmul.f32.gmra.mxu0 %v2574
        %v4025 = vpop.f32.mrf.mxu0
        %v4026 = vadd.f32 0.0, %v4025
        %4027 = vmatmul.f32.gmra.mxu0 %v2576
        %v4028 = vpop.f32.mrf.mxu0
        %v4029 = vadd.f32 0.0, %v4028
        %4030 = vmatmul.f32.gmra.mxu0 %v2578
        %v4031 = vpop.f32.mrf.mxu0
        %v4032 = vadd.f32 0.0, %v4031
        %4033 = vmatmul.f32.gmra.mxu0 %v2580
        %v4034 = vpop.f32.mrf.mxu0
        %v4035 = vadd.f32 0.0, %v4034
        %4036 = vmatmul.f32.gmra.mxu0 %v2582
        %v4037 = vpop.f32.mrf.mxu0
        %v4038 = vadd.f32 0.0, %v4037
        %4039 = vmatmul.f32.gmra.mxu0 %v2584
        %v4040 = vpop.f32.mrf.mxu0
        %v4041 = vadd.f32 0.0, %v4040
        %4042 = vmatmul.f32.gmra.mxu0 %v2586
        %v4043 = vpop.f32.mrf.mxu0
        %v4044 = vadd.f32 0.0, %v4043
        %4045 = vmatmul.f32.gmra.mxu0 %v2588
        %v4046 = vpop.f32.mrf.mxu0
        %v4047 = vadd.f32 0.0, %v4046
        %4048 = vmatmul.f32.gmra.mxu0 %v2590
        %v4049 = vpop.f32.mrf.mxu0
        %v4050 = vadd.f32 0.0, %v4049
        %4051 = vmatmul.f32.gmra.mxu0 %v2592
        %v4052 = vpop.f32.mrf.mxu0
        %v4053 = vadd.f32 0.0, %v4052
        %4054 = vmatmul.f32.gmra.mxu0 %v2594
        %v4055 = vpop.f32.mrf.mxu0
        %v4056 = vadd.f32 0.0, %v4055
        %4057 = vmatmul.f32.gmra.mxu0 %v2596
        %v4058 = vpop.f32.mrf.mxu0
        %v4059 = vadd.f32 0.0, %v4058
        %4060 = vmatmul.f32.gmra.mxu0 %v2598
        %v4061 = vpop.f32.mrf.mxu0
        %v4062 = vadd.f32 0.0, %v4061
        %4063 = vmatmul.f32.gmra.mxu0 %v2600
        %v4064 = vpop.f32.mrf.mxu0
        %v4065 = vadd.f32 0.0, %v4064
        %4066 = vmatmul.f32.gmra.mxu0 %v2602
        %v4067 = vpop.f32.mrf.mxu0
        %v4068 = vadd.f32 0.0, %v4067
        %4069 = vmatmul.f32.gmra.mxu0 %v3959
        %v4070 = vpop.f32.mrf.mxu0
        %v4071 = vadd.f32 0.0, %v4070
        %4072 = vmatmul.f32.gmra.mxu0 %v3961
        %v4073 = vpop.f32.mrf.mxu0
        %v4074 = vadd.f32 0.0, %v4073
        %4075 = vdwg.mxu0
        %v4076 = vadd.f32 %v3918, %v3981
        %v4077 = vadd.f32 %v3919, %v3984
        %v4078 = vadd.f32 %v3920, %v3987
        %v4079 = vadd.f32 %v3921, %v3990
        %v4080 = vadd.f32 %v3922, %v3993
        %v4081 = vadd.f32 %v3923, %v3996
        %v4082 = vadd.f32 %v3924, %v3999
        %v4083 = vadd.f32 %v3925, %v4002
        %v4084 = vadd.f32 %v3926, %v4005
        %v4085 = vadd.f32 %v3927, %v4008
        %v4086 = vadd.f32 %v3928, %v4011
        %v4087 = vadd.f32 %v3929, %v4014
        %v4088 = vadd.f32 %v3930, %v4017
        %v4089 = vadd.f32 %v3931, %v4020
        %v4090 = vadd.f32 %v3932, %v4023
        %v4091 = vadd.f32 %v3933, %v4026
        %v4092 = vadd.f32 %v3934, %v4029
        %v4093 = vadd.f32 %v3935, %v4032
        %v4094 = vadd.f32 %v3936, %v4035
        %v4095 = vadd.f32 %v3937, %v4038
        %v4096 = vadd.f32 %v3938, %v4041
        %v4097 = vadd.f32 %v3939, %v4044
        %v4098 = vadd.f32 %v3940, %v4047
        %v4099 = vadd.f32 %v3941, %v4050
        %v4100 = vadd.f32 %v3942, %v4053
        %v4101 = vadd.f32 %v3943, %v4056
        %v4102 = vadd.f32 %v3944, %v4059
        %v4103 = vadd.f32 %v3945, %v4062
        %v4104 = vadd.f32 %v3946, %v4065
        %v4105 = vadd.f32 %v3947, %v4068
        %v4106 = vadd.f32 %v3948, %v4071
        %v4107 = vadd.f32 %v3949, %v4074
        %v4109 = vrot.slane %v1943, 1
        %v4110 = vrot.slane %v1944, 1
        %v4111 = vsel %vm2456, %v4109, %v4110
        %v4112 = vrot.slane %v1945, 1
        %v4113 = vsel %vm2456, %v4110, %v4112
        %s4114 = scalar_lea.vmem [#allocation10], 64
        %v4115 = vld [vmem:[%s4114] sm:$0xff]
        %v4116 = vld [vmem:[%s4114 + $0x8] sm:$0xff]
        %v4117 = vsel %vm428, %v4111, 0
        %v4119 = vsel %vm428, %v4113, 0
        %4121 = vmatpush.msra.mxu0 0.0
        %4122 = vmatpush.msra.mxu0 0.0
        %4123 = vmatpush.msra.mxu0 0.0
        %4124 = vmatpush.msra.mxu0 0.0
        %4125 = vmatpush.msra.mxu0 0.0
        %4126 = vmatpush.msra.mxu0 0.0
        %4127 = vmatpush.msra.mxu0 0.0
        %4128 = vmatpush.msra.mxu0 0.0
        %4129 = vmatpush.msra.mxu0 0.0
        %4130 = vmatpush.msra.mxu0 0.0
        %4131 = vmatpush.msra.mxu0 0.0
        %4132 = vmatpush.msra.mxu0 0.0
        %4133 = vmatpush.msra.mxu0 0.0
        %4134 = vmatpush.msra.mxu0 0.0
        %4135 = vmatpush.msra.mxu0 %v4116
        %4136 = vmatpush.msra.mxu0 %v4115
        %4137 = vmatmul.f32.gmra.mxu0 %v2852
        %v4138 = vpop.f32.mrf.mxu0
        %v4139 = vadd.f32 0.0, %v4138
        %4140 = vmatmul.f32.gmra.mxu0 %v2854
        %v4141 = vpop.f32.mrf.mxu0
        %v4142 = vadd.f32 0.0, %v4141
        %4143 = vmatmul.f32.gmra.mxu0 %v2856
        %v4144 = vpop.f32.mrf.mxu0
        %v4145 = vadd.f32 0.0, %v4144
        %4146 = vmatmul.f32.gmra.mxu0 %v2858
        %v4147 = vpop.f32.mrf.mxu0
        %v4148 = vadd.f32 0.0, %v4147
        %4149 = vmatmul.f32.gmra.mxu0 %v2860
        %v4150 = vpop.f32.mrf.mxu0
        %v4151 = vadd.f32 0.0, %v4150
        %4152 = vmatmul.f32.gmra.mxu0 %v2862
        %v4153 = vpop.f32.mrf.mxu0
        %v4154 = vadd.f32 0.0, %v4153
        %4155 = vmatmul.f32.gmra.mxu0 %v2864
        %v4156 = vpop.f32.mrf.mxu0
        %v4157 = vadd.f32 0.0, %v4156
        %4158 = vmatmul.f32.gmra.mxu0 %v2866
        %v4159 = vpop.f32.mrf.mxu0
        %v4160 = vadd.f32 0.0, %v4159
        %4161 = vmatmul.f32.gmra.mxu0 %v2868
        %v4162 = vpop.f32.mrf.mxu0
        %v4163 = vadd.f32 0.0, %v4162
        %4164 = vmatmul.f32.gmra.mxu0 %v2870
        %v4165 = vpop.f32.mrf.mxu0
        %v4166 = vadd.f32 0.0, %v4165
        %4167 = vmatmul.f32.gmra.mxu0 %v2872
        %v4168 = vpop.f32.mrf.mxu0
        %v4169 = vadd.f32 0.0, %v4168
        %4170 = vmatmul.f32.gmra.mxu0 %v2874
        %v4171 = vpop.f32.mrf.mxu0
        %v4172 = vadd.f32 0.0, %v4171
        %4173 = vmatmul.f32.gmra.mxu0 %v2876
        %v4174 = vpop.f32.mrf.mxu0
        %v4175 = vadd.f32 0.0, %v4174
        %4176 = vmatmul.f32.gmra.mxu0 %v2878
        %v4177 = vpop.f32.mrf.mxu0
        %v4178 = vadd.f32 0.0, %v4177
        %4179 = vmatmul.f32.gmra.mxu0 %v2880
        %v4180 = vpop.f32.mrf.mxu0
        %v4181 = vadd.f32 0.0, %v4180
        %4182 = vmatmul.f32.gmra.mxu0 %v2882
        %v4183 = vpop.f32.mrf.mxu0
        %v4184 = vadd.f32 0.0, %v4183
        %4185 = vmatmul.f32.gmra.mxu0 %v2884
        %v4186 = vpop.f32.mrf.mxu0
        %v4187 = vadd.f32 0.0, %v4186
        %4188 = vmatmul.f32.gmra.mxu0 %v2886
        %v4189 = vpop.f32.mrf.mxu0
        %v4190 = vadd.f32 0.0, %v4189
        %4191 = vmatmul.f32.gmra.mxu0 %v2888
        %v4192 = vpop.f32.mrf.mxu0
        %v4193 = vadd.f32 0.0, %v4192
        %4194 = vmatmul.f32.gmra.mxu0 %v2890
        %v4195 = vpop.f32.mrf.mxu0
        %v4196 = vadd.f32 0.0, %v4195
        %4197 = vmatmul.f32.gmra.mxu0 %v2892
        %v4198 = vpop.f32.mrf.mxu0
        %v4199 = vadd.f32 0.0, %v4198
        %4200 = vmatmul.f32.gmra.mxu0 %v2894
        %v4201 = vpop.f32.mrf.mxu0
        %v4202 = vadd.f32 0.0, %v4201
        %4203 = vmatmul.f32.gmra.mxu0 %v2896
        %v4204 = vpop.f32.mrf.mxu0
        %v4205 = vadd.f32 0.0, %v4204
        %4206 = vmatmul.f32.gmra.mxu0 %v2898
        %v4207 = vpop.f32.mrf.mxu0
        %v4208 = vadd.f32 0.0, %v4207
        %4209 = vmatmul.f32.gmra.mxu0 %v2900
        %v4210 = vpop.f32.mrf.mxu0
        %v4211 = vadd.f32 0.0, %v4210
        %4212 = vmatmul.f32.gmra.mxu0 %v2902
        %v4213 = vpop.f32.mrf.mxu0
        %v4214 = vadd.f32 0.0, %v4213
        %4215 = vmatmul.f32.gmra.mxu0 %v2904
        %v4216 = vpop.f32.mrf.mxu0
        %v4217 = vadd.f32 0.0, %v4216
        %4218 = vmatmul.f32.gmra.mxu0 %v2906
        %v4219 = vpop.f32.mrf.mxu0
        %v4220 = vadd.f32 0.0, %v4219
        %4221 = vmatmul.f32.gmra.mxu0 %v2908
        %v4222 = vpop.f32.mrf.mxu0
        %v4223 = vadd.f32 0.0, %v4222
        %4224 = vmatmul.f32.gmra.mxu0 %v2910
        %v4225 = vpop.f32.mrf.mxu0
        %v4226 = vadd.f32 0.0, %v4225
        %4227 = vmatmul.f32.gmra.mxu0 %v4117
        %v4228 = vpop.f32.mrf.mxu0
        %v4229 = vadd.f32 0.0, %v4228
        %4230 = vmatmul.f32.gmra.mxu0 %v4119
        %v4231 = vpop.f32.mrf.mxu0
        %v4232 = vadd.f32 0.0, %v4231
        %4233 = vdwg.mxu0
        %v4234 = vadd.f32 %v4076, %v4139
        %v4235 = vadd.f32 %v4077, %v4142
        %v4236 = vadd.f32 %v4078, %v4145
        %v4237 = vadd.f32 %v4079, %v4148
        %v4238 = vadd.f32 %v4080, %v4151
        %v4239 = vadd.f32 %v4081, %v4154
        %v4240 = vadd.f32 %v4082, %v4157
        %v4241 = vadd.f32 %v4083, %v4160
        %v4242 = vadd.f32 %v4084, %v4163
        %v4243 = vadd.f32 %v4085, %v4166
        %v4244 = vadd.f32 %v4086, %v4169
        %v4245 = vadd.f32 %v4087, %v4172
        %v4246 = vadd.f32 %v4088, %v4175
        %v4247 = vadd.f32 %v4089, %v4178
        %v4248 = vadd.f32 %v4090, %v4181
        %v4249 = vadd.f32 %v4091, %v4184
        %v4250 = vadd.f32 %v4092, %v4187
        %v4251 = vadd.f32 %v4093, %v4190
        %v4252 = vadd.f32 %v4094, %v4193
        %v4253 = vadd.f32 %v4095, %v4196
        %v4254 = vadd.f32 %v4096, %v4199
        %v4255 = vadd.f32 %v4097, %v4202
        %v4256 = vadd.f32 %v4098, %v4205
        %v4257 = vadd.f32 %v4099, %v4208
        %v4258 = vadd.f32 %v4100, %v4211
        %v4259 = vadd.f32 %v4101, %v4214
        %v4260 = vadd.f32 %v4102, %v4217
        %v4261 = vadd.f32 %v4103, %v4220
        %v4262 = vadd.f32 %v4104, %v4223
        %v4263 = vadd.f32 %v4105, %v4226
        %v4264 = vadd.f32 %v4106, %v4229
        %v4265 = vadd.f32 %v4107, %v4232
        %v4266 = vrot.slane %v1889, 2
        %v4267 = vrot.slane %v1890, 2
        %v4268 = vsel %vm3057, %v4266, %v4267
        %v4269 = vrot.slane %v1891, 2
        %v4270 = vsel %vm3057, %v4267, %v4269
        %s4271 = scalar_lea.vmem %s4, 80
        %v4272 = vld [vmem:[%s4271] sm:$0xff]
        %v4273 = vld [vmem:[%s4271 + $0x8] sm:$0xff]
        %v4274 = vsel %vm428, %v4268, 0
        %v4276 = vsel %vm428, %v4270, 0
        %4278 = vmatpush.msra.mxu0 0.0
        %4279 = vmatpush.msra.mxu0 0.0
        %4280 = vmatpush.msra.mxu0 0.0
        %4281 = vmatpush.msra.mxu0 0.0
        %4282 = vmatpush.msra.mxu0 0.0
        %4283 = vmatpush.msra.mxu0 0.0
        %4284 = vmatpush.msra.mxu0 0.0
        %4285 = vmatpush.msra.mxu0 0.0
        %4286 = vmatpush.msra.mxu0 0.0
        %4287 = vmatpush.msra.mxu0 0.0
        %4288 = vmatpush.msra.mxu0 0.0
        %4289 = vmatpush.msra.mxu0 0.0
        %4290 = vmatpush.msra.mxu0 0.0
        %4291 = vmatpush.msra.mxu0 0.0
        %4292 = vmatpush.msra.mxu0 %v4273
        %4293 = vmatpush.msra.mxu0 %v4272
        %4294 = vmatmul.f32.gmra.mxu0 %v3145
        %v4295 = vpop.f32.mrf.mxu0
        %v4296 = vadd.f32 0.0, %v4295
        %4297 = vmatmul.f32.gmra.mxu0 %v3147
        %v4298 = vpop.f32.mrf.mxu0
        %v4299 = vadd.f32 0.0, %v4298
        %4300 = vmatmul.f32.gmra.mxu0 %v3149
        %v4301 = vpop.f32.mrf.mxu0
        %v4302 = vadd.f32 0.0, %v4301
        %4303 = vmatmul.f32.gmra.mxu0 %v3151
        %v4304 = vpop.f32.mrf.mxu0
        %v4305 = vadd.f32 0.0, %v4304
        %4306 = vmatmul.f32.gmra.mxu0 %v3153
        %v4307 = vpop.f32.mrf.mxu0
        %v4308 = vadd.f32 0.0, %v4307
        %4309 = vmatmul.f32.gmra.mxu0 %v3155
        %v4310 = vpop.f32.mrf.mxu0
        %v4311 = vadd.f32 0.0, %v4310
        %4312 = vmatmul.f32.gmra.mxu0 %v3157
        %v4313 = vpop.f32.mrf.mxu0
        %v4314 = vadd.f32 0.0, %v4313
        %4315 = vmatmul.f32.gmra.mxu0 %v3159
        %v4316 = vpop.f32.mrf.mxu0
        %v4317 = vadd.f32 0.0, %v4316
        %4318 = vmatmul.f32.gmra.mxu0 %v3161
        %v4319 = vpop.f32.mrf.mxu0
        %v4320 = vadd.f32 0.0, %v4319
        %4321 = vmatmul.f32.gmra.mxu0 %v3163
        %v4322 = vpop.f32.mrf.mxu0
        %v4323 = vadd.f32 0.0, %v4322
        %4324 = vmatmul.f32.gmra.mxu0 %v3165
        %v4325 = vpop.f32.mrf.mxu0
        %v4326 = vadd.f32 0.0, %v4325
        %4327 = vmatmul.f32.gmra.mxu0 %v3167
        %v4328 = vpop.f32.mrf.mxu0
        %v4329 = vadd.f32 0.0, %v4328
        %4330 = vmatmul.f32.gmra.mxu0 %v3169
        %v4331 = vpop.f32.mrf.mxu0
        %v4332 = vadd.f32 0.0, %v4331
        %4333 = vmatmul.f32.gmra.mxu0 %v3171
        %v4334 = vpop.f32.mrf.mxu0
        %v4335 = vadd.f32 0.0, %v4334
        %4336 = vmatmul.f32.gmra.mxu0 %v3173
        %v4337 = vpop.f32.mrf.mxu0
        %v4338 = vadd.f32 0.0, %v4337
        %4339 = vmatmul.f32.gmra.mxu0 %v3175
        %v4340 = vpop.f32.mrf.mxu0
        %v4341 = vadd.f32 0.0, %v4340
        %4342 = vmatmul.f32.gmra.mxu0 %v3177
        %v4343 = vpop.f32.mrf.mxu0
        %v4344 = vadd.f32 0.0, %v4343
        %4345 = vmatmul.f32.gmra.mxu0 %v3179
        %v4346 = vpop.f32.mrf.mxu0
        %v4347 = vadd.f32 0.0, %v4346
        %4348 = vmatmul.f32.gmra.mxu0 %v3181
        %v4349 = vpop.f32.mrf.mxu0
        %v4350 = vadd.f32 0.0, %v4349
        %4351 = vmatmul.f32.gmra.mxu0 %v3183
        %v4352 = vpop.f32.mrf.mxu0
        %v4353 = vadd.f32 0.0, %v4352
        %4354 = vmatmul.f32.gmra.mxu0 %v3185
        %v4355 = vpop.f32.mrf.mxu0
        %v4356 = vadd.f32 0.0, %v4355
        %4357 = vmatmul.f32.gmra.mxu0 %v3187
        %v4358 = vpop.f32.mrf.mxu0
        %v4359 = vadd.f32 0.0, %v4358
        %4360 = vmatmul.f32.gmra.mxu0 %v3189
        %v4361 = vpop.f32.mrf.mxu0
        %v4362 = vadd.f32 0.0, %v4361
        %4363 = vmatmul.f32.gmra.mxu0 %v3191
        %v4364 = vpop.f32.mrf.mxu0
        %v4365 = vadd.f32 0.0, %v4364
        %4366 = vmatmul.f32.gmra.mxu0 %v3193
        %v4367 = vpop.f32.mrf.mxu0
        %v4368 = vadd.f32 0.0, %v4367
        %4369 = vmatmul.f32.gmra.mxu0 %v3195
        %v4370 = vpop.f32.mrf.mxu0
        %v4371 = vadd.f32 0.0, %v4370
        %4372 = vmatmul.f32.gmra.mxu0 %v3197
        %v4373 = vpop.f32.mrf.mxu0
        %v4374 = vadd.f32 0.0, %v4373
        %4375 = vmatmul.f32.gmra.mxu0 %v3199
        %v4376 = vpop.f32.mrf.mxu0
        %v4377 = vadd.f32 0.0, %v4376
        %4378 = vmatmul.f32.gmra.mxu0 %v3201
        %v4379 = vpop.f32.mrf.mxu0
        %v4380 = vadd.f32 0.0, %v4379
        %4381 = vmatmul.f32.gmra.mxu0 %v3203
        %v4382 = vpop.f32.mrf.mxu0
        %v4383 = vadd.f32 0.0, %v4382
        %4384 = vmatmul.f32.gmra.mxu0 %v4274
        %v4385 = vpop.f32.mrf.mxu0
        %v4386 = vadd.f32 0.0, %v4385
        %4387 = vmatmul.f32.gmra.mxu0 %v4276
        %v4388 = vpop.f32.mrf.mxu0
        %v4389 = vadd.f32 0.0, %v4388
        %4390 = vdwg.mxu0
        %v4391 = vadd.f32 %v4234, %v4296
        %v4392 = vadd.f32 %v4235, %v4299
        %v4393 = vadd.f32 %v4236, %v4302
        %v4394 = vadd.f32 %v4237, %v4305
        %v4395 = vadd.f32 %v4238, %v4308
        %v4396 = vadd.f32 %v4239, %v4311
        %v4397 = vadd.f32 %v4240, %v4314
        %v4398 = vadd.f32 %v4241, %v4317
        %v4399 = vadd.f32 %v4242, %v4320
        %v4400 = vadd.f32 %v4243, %v4323
        %v4401 = vadd.f32 %v4244, %v4326
        %v4402 = vadd.f32 %v4245, %v4329
        %v4403 = vadd.f32 %v4246, %v4332
        %v4404 = vadd.f32 %v4247, %v4335
        %v4405 = vadd.f32 %v4248, %v4338
        %v4406 = vadd.f32 %v4249, %v4341
        %v4407 = vadd.f32 %v4250, %v4344
        %v4408 = vadd.f32 %v4251, %v4347
        %v4409 = vadd.f32 %v4252, %v4350
        %v4410 = vadd.f32 %v4253, %v4353
        %v4411 = vadd.f32 %v4254, %v4356
        %v4412 = vadd.f32 %v4255, %v4359
        %v4413 = vadd.f32 %v4256, %v4362
        %v4414 = vadd.f32 %v4257, %v4365
        %v4415 = vadd.f32 %v4258, %v4368
        %v4416 = vadd.f32 %v4259, %v4371
        %v4417 = vadd.f32 %v4260, %v4374
        %v4418 = vadd.f32 %v4261, %v4377
        %v4419 = vadd.f32 %v4262, %v4380
        %v4420 = vadd.f32 %v4263, %v4383
        %v4421 = vadd.f32 %v4264, %v4386
        %v4422 = vadd.f32 %v4265, %v4389
        %v4423 = vrot.slane %v1943, 2
        %v4424 = vrot.slane %v1944, 2
        %v4425 = vsel %vm3057, %v4423, %v4424
        %v4426 = vrot.slane %v1945, 2
        %v4427 = vsel %vm3057, %v4424, %v4426
        %s4428 = scalar_lea.vmem [#allocation10], 80
        %v4429 = vld [vmem:[%s4428] sm:$0xff]
        %v4430 = vld [vmem:[%s4428 + $0x8] sm:$0xff]
        %v4431 = vsel %vm428, %v4425, 0
        %v4433 = vsel %vm428, %v4427, 0
        %4435 = vmatpush.msra.mxu0 0.0
        %4436 = vmatpush.msra.mxu0 0.0
        %4437 = vmatpush.msra.mxu0 0.0
        %4438 = vmatpush.msra.mxu0 0.0
        %4439 = vmatpush.msra.mxu0 0.0
        %4440 = vmatpush.msra.mxu0 0.0
        %4441 = vmatpush.msra.mxu0 0.0
        %4442 = vmatpush.msra.mxu0 0.0
        %4443 = vmatpush.msra.mxu0 0.0
        %4444 = vmatpush.msra.mxu0 0.0
        %4445 = vmatpush.msra.mxu0 0.0
        %4446 = vmatpush.msra.mxu0 0.0
        %4447 = vmatpush.msra.mxu0 0.0
        %4448 = vmatpush.msra.mxu0 0.0
        %4449 = vmatpush.msra.mxu0 %v4430
        %4450 = vmatpush.msra.mxu0 %v4429
        %4451 = vmatmul.f32.gmra.mxu0 %v3437
        %v4452 = vpop.f32.mrf.mxu0
        %v4453 = vadd.f32 0.0, %v4452
        %4454 = vmatmul.f32.gmra.mxu0 %v3439
        %v4455 = vpop.f32.mrf.mxu0
        %v4456 = vadd.f32 0.0, %v4455
        %4457 = vmatmul.f32.gmra.mxu0 %v3441
        %v4458 = vpop.f32.mrf.mxu0
        %v4459 = vadd.f32 0.0, %v4458
        %4460 = vmatmul.f32.gmra.mxu0 %v3443
        %v4461 = vpop.f32.mrf.mxu0
        %v4462 = vadd.f32 0.0, %v4461
        %4463 = vmatmul.f32.gmra.mxu0 %v3445
        %v4464 = vpop.f32.mrf.mxu0
        %v4465 = vadd.f32 0.0, %v4464
        %4466 = vmatmul.f32.gmra.mxu0 %v3447
        %v4467 = vpop.f32.mrf.mxu0
        %v4468 = vadd.f32 0.0, %v4467
        %4469 = vmatmul.f32.gmra.mxu0 %v3449
        %v4470 = vpop.f32.mrf.mxu0
        %v4471 = vadd.f32 0.0, %v4470
        %4472 = vmatmul.f32.gmra.mxu0 %v3451
        %v4473 = vpop.f32.mrf.mxu0
        %v4474 = vadd.f32 0.0, %v4473
        %4475 = vmatmul.f32.gmra.mxu0 %v3453
        %v4476 = vpop.f32.mrf.mxu0
        %v4477 = vadd.f32 0.0, %v4476
        %4478 = vmatmul.f32.gmra.mxu0 %v3455
        %v4479 = vpop.f32.mrf.mxu0
        %v4480 = vadd.f32 0.0, %v4479
        %4481 = vmatmul.f32.gmra.mxu0 %v3457
        %v4482 = vpop.f32.mrf.mxu0
        %v4483 = vadd.f32 0.0, %v4482
        %4484 = vmatmul.f32.gmra.mxu0 %v3459
        %v4485 = vpop.f32.mrf.mxu0
        %v4486 = vadd.f32 0.0, %v4485
        %4487 = vmatmul.f32.gmra.mxu0 %v3461
        %v4488 = vpop.f32.mrf.mxu0
        %v4489 = vadd.f32 0.0, %v4488
        %4490 = vmatmul.f32.gmra.mxu0 %v3463
        %v4491 = vpop.f32.mrf.mxu0
        %v4492 = vadd.f32 0.0, %v4491
        %4493 = vmatmul.f32.gmra.mxu0 %v3465
        %v4494 = vpop.f32.mrf.mxu0
        %v4495 = vadd.f32 0.0, %v4494
        %4496 = vmatmul.f32.gmra.mxu0 %v3467
        %v4497 = vpop.f32.mrf.mxu0
        %v4498 = vadd.f32 0.0, %v4497
        %4499 = vmatmul.f32.gmra.mxu0 %v3469
        %v4500 = vpop.f32.mrf.mxu0
        %v4501 = vadd.f32 0.0, %v4500
        %4502 = vmatmul.f32.gmra.mxu0 %v3471
        %v4503 = vpop.f32.mrf.mxu0
        %v4504 = vadd.f32 0.0, %v4503
        %4505 = vmatmul.f32.gmra.mxu0 %v3473
        %v4506 = vpop.f32.mrf.mxu0
        %v4507 = vadd.f32 0.0, %v4506
        %4508 = vmatmul.f32.gmra.mxu0 %v3475
        %v4509 = vpop.f32.mrf.mxu0
        %v4510 = vadd.f32 0.0, %v4509
        %4511 = vmatmul.f32.gmra.mxu0 %v3477
        %v4512 = vpop.f32.mrf.mxu0
        %v4513 = vadd.f32 0.0, %v4512
        %4514 = vmatmul.f32.gmra.mxu0 %v3479
        %v4515 = vpop.f32.mrf.mxu0
        %v4516 = vadd.f32 0.0, %v4515
        %4517 = vmatmul.f32.gmra.mxu0 %v3481
        %v4518 = vpop.f32.mrf.mxu0
        %v4519 = vadd.f32 0.0, %v4518
        %4520 = vmatmul.f32.gmra.mxu0 %v3483
        %v4521 = vpop.f32.mrf.mxu0
        %v4522 = vadd.f32 0.0, %v4521
        %4523 = vmatmul.f32.gmra.mxu0 %v3485
        %v4524 = vpop.f32.mrf.mxu0
        %v4525 = vadd.f32 0.0, %v4524
        %4526 = vmatmul.f32.gmra.mxu0 %v3487
        %v4527 = vpop.f32.mrf.mxu0
        %v4528 = vadd.f32 0.0, %v4527
        %4529 = vmatmul.f32.gmra.mxu0 %v3489
        %v4530 = vpop.f32.mrf.mxu0
        %v4531 = vadd.f32 0.0, %v4530
        %4532 = vmatmul.f32.gmra.mxu0 %v3491
        %v4533 = vpop.f32.mrf.mxu0
        %v4534 = vadd.f32 0.0, %v4533
        %4535 = vmatmul.f32.gmra.mxu0 %v3493
        %v4536 = vpop.f32.mrf.mxu0
        %v4537 = vadd.f32 0.0, %v4536
        %4538 = vmatmul.f32.gmra.mxu0 %v3495
        %v4539 = vpop.f32.mrf.mxu0
        %v4540 = vadd.f32 0.0, %v4539
        %4541 = vmatmul.f32.gmra.mxu0 %v4431
        %v4542 = vpop.f32.mrf.mxu0
        %v4543 = vadd.f32 0.0, %v4542
        %4544 = vmatmul.f32.gmra.mxu0 %v4433
        %v4545 = vpop.f32.mrf.mxu0
        %v4546 = vadd.f32 0.0, %v4545
        %4547 = vdwg.mxu0
        %v4548 = vadd.f32 %v4391, %v4453
        %v4549 = vadd.f32 %v4392, %v4456
        %v4550 = vadd.f32 %v4393, %v4459
        %v4551 = vadd.f32 %v4394, %v4462
        %v4552 = vadd.f32 %v4395, %v4465
        %v4553 = vadd.f32 %v4396, %v4468
        %v4554 = vadd.f32 %v4397, %v4471
        %v4555 = vadd.f32 %v4398, %v4474
        %v4556 = vadd.f32 %v4399, %v4477
        %v4557 = vadd.f32 %v4400, %v4480
        %v4558 = vadd.f32 %v4401, %v4483
        %v4559 = vadd.f32 %v4402, %v4486
        %v4560 = vadd.f32 %v4403, %v4489
        %v4561 = vadd.f32 %v4404, %v4492
        %v4562 = vadd.f32 %v4405, %v4495
        %v4563 = vadd.f32 %v4406, %v4498
        %v4564 = vadd.f32 %v4407, %v4501
        %v4565 = vadd.f32 %v4408, %v4504
        %v4566 = vadd.f32 %v4409, %v4507
        %v4567 = vadd.f32 %v4410, %v4510
        %v4568 = vadd.f32 %v4411, %v4513
        %v4569 = vadd.f32 %v4412, %v4516
        %v4570 = vadd.f32 %v4413, %v4519
        %v4571 = vadd.f32 %v4414, %v4522
        %v4572 = vadd.f32 %v4415, %v4525
        %v4573 = vadd.f32 %v4416, %v4528
        %v4574 = vadd.f32 %v4417, %v4531
        %v4575 = vadd.f32 %v4418, %v4534
        %v4576 = vadd.f32 %v4419, %v4537
        %v4577 = vadd.f32 %v4420, %v4540
        %v4578 = vadd.f32 %v4421, %v4543
        %v4579 = vadd.f32 %v4422, %v4546
        %s4580 = scalar_lea.vmem %s4, 96
        %v4581 = vld [vmem:[%s4580] sm:$0xff]
        %v4582 = vld [vmem:[%s4580 + $0x8] sm:$0xff]
        %v4584 = vsel %vm428, %v1892, 0
        %v4587 = vsel %vm428, %v1893, 0
        %4589 = vmatpush.msra.mxu0 0.0
        %4590 = vmatpush.msra.mxu0 0.0
        %4591 = vmatpush.msra.mxu0 0.0
        %4592 = vmatpush.msra.mxu0 0.0
        %4593 = vmatpush.msra.mxu0 0.0
        %4594 = vmatpush.msra.mxu0 0.0
        %4595 = vmatpush.msra.mxu0 0.0
        %4596 = vmatpush.msra.mxu0 0.0
        %4597 = vmatpush.msra.mxu0 0.0
        %4598 = vmatpush.msra.mxu0 0.0
        %4599 = vmatpush.msra.mxu0 0.0
        %4600 = vmatpush.msra.mxu0 0.0
        %4601 = vmatpush.msra.mxu0 0.0
        %4602 = vmatpush.msra.mxu0 0.0
        %4603 = vmatpush.msra.mxu0 %v4582
        %4604 = vmatpush.msra.mxu0 %v4581
        %4605 = vmatmul.f32.gmra.mxu0 %v1969
        %v4606 = vpop.f32.mrf.mxu0
        %v4607 = vadd.f32 0.0, %v4606
        %4608 = vmatmul.f32.gmra.mxu0 %v1972
        %v4609 = vpop.f32.mrf.mxu0
        %v4610 = vadd.f32 0.0, %v4609
        %4611 = vmatmul.f32.gmra.mxu0 %v1975
        %v4612 = vpop.f32.mrf.mxu0
        %v4613 = vadd.f32 0.0, %v4612
        %4614 = vmatmul.f32.gmra.mxu0 %v1978
        %v4615 = vpop.f32.mrf.mxu0
        %v4616 = vadd.f32 0.0, %v4615
        %4617 = vmatmul.f32.gmra.mxu0 %v1981
        %v4618 = vpop.f32.mrf.mxu0
        %v4619 = vadd.f32 0.0, %v4618
        %4620 = vmatmul.f32.gmra.mxu0 %v1984
        %v4621 = vpop.f32.mrf.mxu0
        %v4622 = vadd.f32 0.0, %v4621
        %4623 = vmatmul.f32.gmra.mxu0 %v1987
        %v4624 = vpop.f32.mrf.mxu0
        %v4625 = vadd.f32 0.0, %v4624
        %4626 = vmatmul.f32.gmra.mxu0 %v1990
        %v4627 = vpop.f32.mrf.mxu0
        %v4628 = vadd.f32 0.0, %v4627
        %4629 = vmatmul.f32.gmra.mxu0 %v1993
        %v4630 = vpop.f32.mrf.mxu0
        %v4631 = vadd.f32 0.0, %v4630
        %4632 = vmatmul.f32.gmra.mxu0 %v1996
        %v4633 = vpop.f32.mrf.mxu0
        %v4634 = vadd.f32 0.0, %v4633
        %4635 = vmatmul.f32.gmra.mxu0 %v1999
        %v4636 = vpop.f32.mrf.mxu0
        %v4637 = vadd.f32 0.0, %v4636
        %4638 = vmatmul.f32.gmra.mxu0 %v2002
        %v4639 = vpop.f32.mrf.mxu0
        %v4640 = vadd.f32 0.0, %v4639
        %4641 = vmatmul.f32.gmra.mxu0 %v2005
        %v4642 = vpop.f32.mrf.mxu0
        %v4643 = vadd.f32 0.0, %v4642
        %4644 = vmatmul.f32.gmra.mxu0 %v2008
        %v4645 = vpop.f32.mrf.mxu0
        %v4646 = vadd.f32 0.0, %v4645
        %4647 = vmatmul.f32.gmra.mxu0 %v2011
        %v4648 = vpop.f32.mrf.mxu0
        %v4649 = vadd.f32 0.0, %v4648
        %4650 = vmatmul.f32.gmra.mxu0 %v2014
        %v4651 = vpop.f32.mrf.mxu0
        %v4652 = vadd.f32 0.0, %v4651
        %4653 = vmatmul.f32.gmra.mxu0 %v2017
        %v4654 = vpop.f32.mrf.mxu0
        %v4655 = vadd.f32 0.0, %v4654
        %4656 = vmatmul.f32.gmra.mxu0 %v2020
        %v4657 = vpop.f32.mrf.mxu0
        %v4658 = vadd.f32 0.0, %v4657
        %4659 = vmatmul.f32.gmra.mxu0 %v2023
        %v4660 = vpop.f32.mrf.mxu0
        %v4661 = vadd.f32 0.0, %v4660
        %4662 = vmatmul.f32.gmra.mxu0 %v2026
        %v4663 = vpop.f32.mrf.mxu0
        %v4664 = vadd.f32 0.0, %v4663
        %4665 = vmatmul.f32.gmra.mxu0 %v2029
        %v4666 = vpop.f32.mrf.mxu0
        %v4667 = vadd.f32 0.0, %v4666
        %4668 = vmatmul.f32.gmra.mxu0 %v2032
        %v4669 = vpop.f32.mrf.mxu0
        %v4670 = vadd.f32 0.0, %v4669
        %4671 = vmatmul.f32.gmra.mxu0 %v2035
        %v4672 = vpop.f32.mrf.mxu0
        %v4673 = vadd.f32 0.0, %v4672
        %4674 = vmatmul.f32.gmra.mxu0 %v2038
        %v4675 = vpop.f32.mrf.mxu0
        %v4676 = vadd.f32 0.0, %v4675
        %4677 = vmatmul.f32.gmra.mxu0 %v2041
        %v4678 = vpop.f32.mrf.mxu0
        %v4679 = vadd.f32 0.0, %v4678
        %4680 = vmatmul.f32.gmra.mxu0 %v2044
        %v4681 = vpop.f32.mrf.mxu0
        %v4682 = vadd.f32 0.0, %v4681
        %4683 = vmatmul.f32.gmra.mxu0 %v2047
        %v4684 = vpop.f32.mrf.mxu0
        %v4685 = vadd.f32 0.0, %v4684
        %4686 = vmatmul.f32.gmra.mxu0 %v2050
        %v4687 = vpop.f32.mrf.mxu0
        %v4688 = vadd.f32 0.0, %v4687
        %4689 = vmatmul.f32.gmra.mxu0 %v3646
        %v4690 = vpop.f32.mrf.mxu0
        %v4691 = vadd.f32 0.0, %v4690
        %4692 = vmatmul.f32.gmra.mxu0 %v3649
        %v4693 = vpop.f32.mrf.mxu0
        %v4694 = vadd.f32 0.0, %v4693
        %4695 = vmatmul.f32.gmra.mxu0 %v4584
        %v4696 = vpop.f32.mrf.mxu0
        %v4697 = vadd.f32 0.0, %v4696
        %4698 = vmatmul.f32.gmra.mxu0 %v4587
        %v4699 = vpop.f32.mrf.mxu0
        %v4700 = vadd.f32 0.0, %v4699
        %4701 = vdwg.mxu0
        %v4702 = vadd.f32 %v4548, %v4607
        %v4703 = vadd.f32 %v4549, %v4610
        %v4704 = vadd.f32 %v4550, %v4613
        %v4705 = vadd.f32 %v4551, %v4616
        %v4706 = vadd.f32 %v4552, %v4619
        %v4707 = vadd.f32 %v4553, %v4622
        %v4708 = vadd.f32 %v4554, %v4625
        %v4709 = vadd.f32 %v4555, %v4628
        %v4710 = vadd.f32 %v4556, %v4631
        %v4711 = vadd.f32 %v4557, %v4634
        %v4712 = vadd.f32 %v4558, %v4637
        %v4713 = vadd.f32 %v4559, %v4640
        %v4714 = vadd.f32 %v4560, %v4643
        %v4715 = vadd.f32 %v4561, %v4646
        %v4716 = vadd.f32 %v4562, %v4649
        %v4717 = vadd.f32 %v4563, %v4652
        %v4718 = vadd.f32 %v4564, %v4655
        %v4719 = vadd.f32 %v4565, %v4658
        %v4720 = vadd.f32 %v4566, %v4661
        %v4721 = vadd.f32 %v4567, %v4664
        %v4722 = vadd.f32 %v4568, %v4667
        %v4723 = vadd.f32 %v4569, %v4670
        %v4724 = vadd.f32 %v4570, %v4673
        %v4725 = vadd.f32 %v4571, %v4676
        %v4726 = vadd.f32 %v4572, %v4679
        %v4727 = vadd.f32 %v4573, %v4682
        %v4728 = vadd.f32 %v4574, %v4685
        %v4729 = vadd.f32 %v4575, %v4688
        %v4730 = vadd.f32 %v4576, %v4691
        %v4731 = vadd.f32 %v4577, %v4694
        %v4732 = vadd.f32 %v4578, %v4697
        %v4733 = vadd.f32 %v4579, %v4700
        %s4734 = scalar_lea.vmem [#allocation10], 96
        %v4735 = vld [vmem:[%s4734] sm:$0xff]
        %v4736 = vld [vmem:[%s4734 + $0x8] sm:$0xff]
        %v4738 = vsel %vm428, %v1946, 0
        %v4741 = vsel %vm428, %v1947, 0
        %4743 = vmatpush.msra.mxu0 0.0
        %4744 = vmatpush.msra.mxu0 0.0
        %4745 = vmatpush.msra.mxu0 0.0
        %4746 = vmatpush.msra.mxu0 0.0
        %4747 = vmatpush.msra.mxu0 0.0
        %4748 = vmatpush.msra.mxu0 0.0
        %4749 = vmatpush.msra.mxu0 0.0
        %4750 = vmatpush.msra.mxu0 0.0
        %4751 = vmatpush.msra.mxu0 0.0
        %4752 = vmatpush.msra.mxu0 0.0
        %4753 = vmatpush.msra.mxu0 0.0
        %4754 = vmatpush.msra.mxu0 0.0
        %4755 = vmatpush.msra.mxu0 0.0
        %4756 = vmatpush.msra.mxu0 0.0
        %4757 = vmatpush.msra.mxu0 %v4736
        %4758 = vmatpush.msra.mxu0 %v4735
        %4759 = vmatmul.f32.gmra.mxu0 %v2212
        %v4760 = vpop.f32.mrf.mxu0
        %v4761 = vadd.f32 0.0, %v4760
        %4762 = vmatmul.f32.gmra.mxu0 %v2215
        %v4763 = vpop.f32.mrf.mxu0
        %v4764 = vadd.f32 0.0, %v4763
        %4765 = vmatmul.f32.gmra.mxu0 %v2218
        %v4766 = vpop.f32.mrf.mxu0
        %v4767 = vadd.f32 0.0, %v4766
        %4768 = vmatmul.f32.gmra.mxu0 %v2221
        %v4769 = vpop.f32.mrf.mxu0
        %v4770 = vadd.f32 0.0, %v4769
        %4771 = vmatmul.f32.gmra.mxu0 %v2224
        %v4772 = vpop.f32.mrf.mxu0
        %v4773 = vadd.f32 0.0, %v4772
        %4774 = vmatmul.f32.gmra.mxu0 %v2227
        %v4775 = vpop.f32.mrf.mxu0
        %v4776 = vadd.f32 0.0, %v4775
        %4777 = vmatmul.f32.gmra.mxu0 %v2230
        %v4778 = vpop.f32.mrf.mxu0
        %v4779 = vadd.f32 0.0, %v4778
        %4780 = vmatmul.f32.gmra.mxu0 %v2233
        %v4781 = vpop.f32.mrf.mxu0
        %v4782 = vadd.f32 0.0, %v4781
        %4783 = vmatmul.f32.gmra.mxu0 %v2236
        %v4784 = vpop.f32.mrf.mxu0
        %v4785 = vadd.f32 0.0, %v4784
        %4786 = vmatmul.f32.gmra.mxu0 %v2239
        %v4787 = vpop.f32.mrf.mxu0
        %v4788 = vadd.f32 0.0, %v4787
        %4789 = vmatmul.f32.gmra.mxu0 %v2242
        %v4790 = vpop.f32.mrf.mxu0
        %v4791 = vadd.f32 0.0, %v4790
        %4792 = vmatmul.f32.gmra.mxu0 %v2245
        %v4793 = vpop.f32.mrf.mxu0
        %v4794 = vadd.f32 0.0, %v4793
        %4795 = vmatmul.f32.gmra.mxu0 %v2248
        %v4796 = vpop.f32.mrf.mxu0
        %v4797 = vadd.f32 0.0, %v4796
        %4798 = vmatmul.f32.gmra.mxu0 %v2251
        %v4799 = vpop.f32.mrf.mxu0
        %v4800 = vadd.f32 0.0, %v4799
        %4801 = vmatmul.f32.gmra.mxu0 %v2254
        %v4802 = vpop.f32.mrf.mxu0
        %v4803 = vadd.f32 0.0, %v4802
        %4804 = vmatmul.f32.gmra.mxu0 %v2257
        %v4805 = vpop.f32.mrf.mxu0
        %v4806 = vadd.f32 0.0, %v4805
        %4807 = vmatmul.f32.gmra.mxu0 %v2260
        %v4808 = vpop.f32.mrf.mxu0
        %v4809 = vadd.f32 0.0, %v4808
        %4810 = vmatmul.f32.gmra.mxu0 %v2263
        %v4811 = vpop.f32.mrf.mxu0
        %v4812 = vadd.f32 0.0, %v4811
        %4813 = vmatmul.f32.gmra.mxu0 %v2266
        %v4814 = vpop.f32.mrf.mxu0
        %v4815 = vadd.f32 0.0, %v4814
        %4816 = vmatmul.f32.gmra.mxu0 %v2269
        %v4817 = vpop.f32.mrf.mxu0
        %v4818 = vadd.f32 0.0, %v4817
        %4819 = vmatmul.f32.gmra.mxu0 %v2272
        %v4820 = vpop.f32.mrf.mxu0
        %v4821 = vadd.f32 0.0, %v4820
        %4822 = vmatmul.f32.gmra.mxu0 %v2275
        %v4823 = vpop.f32.mrf.mxu0
        %v4824 = vadd.f32 0.0, %v4823
        %4825 = vmatmul.f32.gmra.mxu0 %v2278
        %v4826 = vpop.f32.mrf.mxu0
        %v4827 = vadd.f32 0.0, %v4826
        %4828 = vmatmul.f32.gmra.mxu0 %v2281
        %v4829 = vpop.f32.mrf.mxu0
        %v4830 = vadd.f32 0.0, %v4829
        %4831 = vmatmul.f32.gmra.mxu0 %v2284
        %v4832 = vpop.f32.mrf.mxu0
        %v4833 = vadd.f32 0.0, %v4832
        %4834 = vmatmul.f32.gmra.mxu0 %v2287
        %v4835 = vpop.f32.mrf.mxu0
        %v4836 = vadd.f32 0.0, %v4835
        %4837 = vmatmul.f32.gmra.mxu0 %v2290
        %v4838 = vpop.f32.mrf.mxu0
        %v4839 = vadd.f32 0.0, %v4838
        %4840 = vmatmul.f32.gmra.mxu0 %v2293
        %v4841 = vpop.f32.mrf.mxu0
        %v4842 = vadd.f32 0.0, %v4841
        %4843 = vmatmul.f32.gmra.mxu0 %v3800
        %v4844 = vpop.f32.mrf.mxu0
        %v4845 = vadd.f32 0.0, %v4844
        %4846 = vmatmul.f32.gmra.mxu0 %v3803
        %v4847 = vpop.f32.mrf.mxu0
        %v4848 = vadd.f32 0.0, %v4847
        %4849 = vmatmul.f32.gmra.mxu0 %v4738
        %v4850 = vpop.f32.mrf.mxu0
        %v4851 = vadd.f32 0.0, %v4850
        %4852 = vmatmul.f32.gmra.mxu0 %v4741
        %v4853 = vpop.f32.mrf.mxu0
        %v4854 = vadd.f32 0.0, %v4853
        %4855 = vdwg.mxu0
        %v4856 = vadd.f32 %v4702, %v4761
        %v4857 = vadd.f32 %v4703, %v4764
        %v4858 = vadd.f32 %v4704, %v4767
        %v4859 = vadd.f32 %v4705, %v4770
        %v4860 = vadd.f32 %v4706, %v4773
        %v4861 = vadd.f32 %v4707, %v4776
        %v4862 = vadd.f32 %v4708, %v4779
        %v4863 = vadd.f32 %v4709, %v4782
        %v4864 = vadd.f32 %v4710, %v4785
        %v4865 = vadd.f32 %v4711, %v4788
        %v4866 = vadd.f32 %v4712, %v4791
        %v4867 = vadd.f32 %v4713, %v4794
        %v4868 = vadd.f32 %v4714, %v4797
        %v4869 = vadd.f32 %v4715, %v4800
        %v4870 = vadd.f32 %v4716, %v4803
        %v4871 = vadd.f32 %v4717, %v4806
        %v4872 = vadd.f32 %v4718, %v4809
        %v4873 = vadd.f32 %v4719, %v4812
        %v4874 = vadd.f32 %v4720, %v4815
        %v4875 = vadd.f32 %v4721, %v4818
        %v4876 = vadd.f32 %v4722, %v4821
        %v4877 = vadd.f32 %v4723, %v4824
        %v4878 = vadd.f32 %v4724, %v4827
        %v4879 = vadd.f32 %v4725, %v4830
        %v4880 = vadd.f32 %v4726, %v4833
        %v4881 = vadd.f32 %v4727, %v4836
        %v4882 = vadd.f32 %v4728, %v4839
        %v4883 = vadd.f32 %v4729, %v4842
        %v4884 = vadd.f32 %v4730, %v4845
        %v4885 = vadd.f32 %v4731, %v4848
        %v4886 = vadd.f32 %v4732, %v4851
        %v4887 = vadd.f32 %v4733, %v4854
        %v4889 = vrot.slane %v1892, 1
        %v4890 = vrot.slane %v1893, 1
        %v4891 = vsel %vm2456, %v4889, %v4890
        %v4892 = vrot.slane %v1894, 1
        %v4893 = vsel %vm2456, %v4890, %v4892
        %s4894 = scalar_lea.vmem %s4, 112
        %v4895 = vld [vmem:[%s4894] sm:$0xff]
        %v4896 = vld [vmem:[%s4894 + $0x8] sm:$0xff]
        %v4897 = vsel %vm428, %v4891, 0
        %v4899 = vsel %vm428, %v4893, 0
        %4901 = vmatpush.msra.mxu0 0.0
        %4902 = vmatpush.msra.mxu0 0.0
        %4903 = vmatpush.msra.mxu0 0.0
        %4904 = vmatpush.msra.mxu0 0.0
        %4905 = vmatpush.msra.mxu0 0.0
        %4906 = vmatpush.msra.mxu0 0.0
        %4907 = vmatpush.msra.mxu0 0.0
        %4908 = vmatpush.msra.mxu0 0.0
        %4909 = vmatpush.msra.mxu0 0.0
        %4910 = vmatpush.msra.mxu0 0.0
        %4911 = vmatpush.msra.mxu0 0.0
        %4912 = vmatpush.msra.mxu0 0.0
        %4913 = vmatpush.msra.mxu0 0.0
        %4914 = vmatpush.msra.mxu0 0.0
        %4915 = vmatpush.msra.mxu0 %v4896
        %4916 = vmatpush.msra.mxu0 %v4895
        %4917 = vmatmul.f32.gmra.mxu0 %v2548
        %v4918 = vpop.f32.mrf.mxu0
        %v4919 = vadd.f32 0.0, %v4918
        %4920 = vmatmul.f32.gmra.mxu0 %v2550
        %v4921 = vpop.f32.mrf.mxu0
        %v4922 = vadd.f32 0.0, %v4921
        %4923 = vmatmul.f32.gmra.mxu0 %v2552
        %v4924 = vpop.f32.mrf.mxu0
        %v4925 = vadd.f32 0.0, %v4924
        %4926 = vmatmul.f32.gmra.mxu0 %v2554
        %v4927 = vpop.f32.mrf.mxu0
        %v4928 = vadd.f32 0.0, %v4927
        %4929 = vmatmul.f32.gmra.mxu0 %v2556
        %v4930 = vpop.f32.mrf.mxu0
        %v4931 = vadd.f32 0.0, %v4930
        %4932 = vmatmul.f32.gmra.mxu0 %v2558
        %v4933 = vpop.f32.mrf.mxu0
        %v4934 = vadd.f32 0.0, %v4933
        %4935 = vmatmul.f32.gmra.mxu0 %v2560
        %v4936 = vpop.f32.mrf.mxu0
        %v4937 = vadd.f32 0.0, %v4936
        %4938 = vmatmul.f32.gmra.mxu0 %v2562
        %v4939 = vpop.f32.mrf.mxu0
        %v4940 = vadd.f32 0.0, %v4939
        %4941 = vmatmul.f32.gmra.mxu0 %v2564
        %v4942 = vpop.f32.mrf.mxu0
        %v4943 = vadd.f32 0.0, %v4942
        %4944 = vmatmul.f32.gmra.mxu0 %v2566
        %v4945 = vpop.f32.mrf.mxu0
        %v4946 = vadd.f32 0.0, %v4945
        %4947 = vmatmul.f32.gmra.mxu0 %v2568
        %v4948 = vpop.f32.mrf.mxu0
        %v4949 = vadd.f32 0.0, %v4948
        %4950 = vmatmul.f32.gmra.mxu0 %v2570
        %v4951 = vpop.f32.mrf.mxu0
        %v4952 = vadd.f32 0.0, %v4951
        %4953 = vmatmul.f32.gmra.mxu0 %v2572
        %v4954 = vpop.f32.mrf.mxu0
        %v4955 = vadd.f32 0.0, %v4954
        %4956 = vmatmul.f32.gmra.mxu0 %v2574
        %v4957 = vpop.f32.mrf.mxu0
        %v4958 = vadd.f32 0.0, %v4957
        %4959 = vmatmul.f32.gmra.mxu0 %v2576
        %v4960 = vpop.f32.mrf.mxu0
        %v4961 = vadd.f32 0.0, %v4960
        %4962 = vmatmul.f32.gmra.mxu0 %v2578
        %v4963 = vpop.f32.mrf.mxu0
        %v4964 = vadd.f32 0.0, %v4963
        %4965 = vmatmul.f32.gmra.mxu0 %v2580
        %v4966 = vpop.f32.mrf.mxu0
        %v4967 = vadd.f32 0.0, %v4966
        %4968 = vmatmul.f32.gmra.mxu0 %v2582
        %v4969 = vpop.f32.mrf.mxu0
        %v4970 = vadd.f32 0.0, %v4969
        %4971 = vmatmul.f32.gmra.mxu0 %v2584
        %v4972 = vpop.f32.mrf.mxu0
        %v4973 = vadd.f32 0.0, %v4972
        %4974 = vmatmul.f32.gmra.mxu0 %v2586
        %v4975 = vpop.f32.mrf.mxu0
        %v4976 = vadd.f32 0.0, %v4975
        %4977 = vmatmul.f32.gmra.mxu0 %v2588
        %v4978 = vpop.f32.mrf.mxu0
        %v4979 = vadd.f32 0.0, %v4978
        %4980 = vmatmul.f32.gmra.mxu0 %v2590
        %v4981 = vpop.f32.mrf.mxu0
        %v4982 = vadd.f32 0.0, %v4981
        %4983 = vmatmul.f32.gmra.mxu0 %v2592
        %v4984 = vpop.f32.mrf.mxu0
        %v4985 = vadd.f32 0.0, %v4984
        %4986 = vmatmul.f32.gmra.mxu0 %v2594
        %v4987 = vpop.f32.mrf.mxu0
        %v4988 = vadd.f32 0.0, %v4987
        %4989 = vmatmul.f32.gmra.mxu0 %v2596
        %v4990 = vpop.f32.mrf.mxu0
        %v4991 = vadd.f32 0.0, %v4990
        %4992 = vmatmul.f32.gmra.mxu0 %v2598
        %v4993 = vpop.f32.mrf.mxu0
        %v4994 = vadd.f32 0.0, %v4993
        %4995 = vmatmul.f32.gmra.mxu0 %v2600
        %v4996 = vpop.f32.mrf.mxu0
        %v4997 = vadd.f32 0.0, %v4996
        %4998 = vmatmul.f32.gmra.mxu0 %v2602
        %v4999 = vpop.f32.mrf.mxu0
        %v5000 = vadd.f32 0.0, %v4999
        %5001 = vmatmul.f32.gmra.mxu0 %v3959
        %v5002 = vpop.f32.mrf.mxu0
        %v5003 = vadd.f32 0.0, %v5002
        %5004 = vmatmul.f32.gmra.mxu0 %v3961
        %v5005 = vpop.f32.mrf.mxu0
        %v5006 = vadd.f32 0.0, %v5005
        %5007 = vmatmul.f32.gmra.mxu0 %v4897
        %v5008 = vpop.f32.mrf.mxu0
        %v5009 = vadd.f32 0.0, %v5008
        %5010 = vmatmul.f32.gmra.mxu0 %v4899
        %v5011 = vpop.f32.mrf.mxu0
        %v5012 = vadd.f32 0.0, %v5011
        %5013 = vdwg.mxu0
        %v5014 = vadd.f32 %v4856, %v4919
        %v5015 = vadd.f32 %v4857, %v4922
        %v5016 = vadd.f32 %v4858, %v4925
        %v5017 = vadd.f32 %v4859, %v4928
        %v5018 = vadd.f32 %v4860, %v4931
        %v5019 = vadd.f32 %v4861, %v4934
        %v5020 = vadd.f32 %v4862, %v4937
        %v5021 = vadd.f32 %v4863, %v4940
        %v5022 = vadd.f32 %v4864, %v4943
        %v5023 = vadd.f32 %v4865, %v4946
        %v5024 = vadd.f32 %v4866, %v4949
        %v5025 = vadd.f32 %v4867, %v4952
        %v5026 = vadd.f32 %v4868, %v4955
        %v5027 = vadd.f32 %v4869, %v4958
        %v5028 = vadd.f32 %v4870, %v4961
        %v5029 = vadd.f32 %v4871, %v4964
        %v5030 = vadd.f32 %v4872, %v4967
        %v5031 = vadd.f32 %v4873, %v4970
        %v5032 = vadd.f32 %v4874, %v4973
        %v5033 = vadd.f32 %v4875, %v4976
        %v5034 = vadd.f32 %v4876, %v4979
        %v5035 = vadd.f32 %v4877, %v4982
        %v5036 = vadd.f32 %v4878, %v4985
        %v5037 = vadd.f32 %v4879, %v4988
        %v5038 = vadd.f32 %v4880, %v4991
        %v5039 = vadd.f32 %v4881, %v4994
        %v5040 = vadd.f32 %v4882, %v4997
        %v5041 = vadd.f32 %v4883, %v5000
        %v5042 = vadd.f32 %v4884, %v5003
        %v5043 = vadd.f32 %v4885, %v5006
        %v5044 = vadd.f32 %v4886, %v5009
        %v5045 = vadd.f32 %v4887, %v5012
        %v5047 = vrot.slane %v1946, 1
        %v5048 = vrot.slane %v1947, 1
        %v5049 = vsel %vm2456, %v5047, %v5048
        %v5050 = vrot.slane %v1948, 1
        %v5051 = vsel %vm2456, %v5048, %v5050
        %s5052 = scalar_lea.vmem [#allocation10], 112
        %v5053 = vld [vmem:[%s5052] sm:$0xff]
        %v5054 = vld [vmem:[%s5052 + $0x8] sm:$0xff]
        %v5055 = vsel %vm428, %v5049, 0
        %v5057 = vsel %vm428, %v5051, 0
        %5059 = vmatpush.msra.mxu0 0.0
        %5060 = vmatpush.msra.mxu0 0.0
        %5061 = vmatpush.msra.mxu0 0.0
        %5062 = vmatpush.msra.mxu0 0.0
        %5063 = vmatpush.msra.mxu0 0.0
        %5064 = vmatpush.msra.mxu0 0.0
        %5065 = vmatpush.msra.mxu0 0.0
        %5066 = vmatpush.msra.mxu0 0.0
        %5067 = vmatpush.msra.mxu0 0.0
        %5068 = vmatpush.msra.mxu0 0.0
        %5069 = vmatpush.msra.mxu0 0.0
        %5070 = vmatpush.msra.mxu0 0.0
        %5071 = vmatpush.msra.mxu0 0.0
        %5072 = vmatpush.msra.mxu0 0.0
        %5073 = vmatpush.msra.mxu0 %v5054
        %5074 = vmatpush.msra.mxu0 %v5053
        %5075 = vmatmul.f32.gmra.mxu0 %v2856
        %v5076 = vpop.f32.mrf.mxu0
        %v5077 = vadd.f32 0.0, %v5076
        %5078 = vmatmul.f32.gmra.mxu0 %v2858
        %v5079 = vpop.f32.mrf.mxu0
        %v5080 = vadd.f32 0.0, %v5079
        %5081 = vmatmul.f32.gmra.mxu0 %v2860
        %v5082 = vpop.f32.mrf.mxu0
        %v5083 = vadd.f32 0.0, %v5082
        %5084 = vmatmul.f32.gmra.mxu0 %v2862
        %v5085 = vpop.f32.mrf.mxu0
        %v5086 = vadd.f32 0.0, %v5085
        %5087 = vmatmul.f32.gmra.mxu0 %v2864
        %v5088 = vpop.f32.mrf.mxu0
        %v5089 = vadd.f32 0.0, %v5088
        %5090 = vmatmul.f32.gmra.mxu0 %v2866
        %v5091 = vpop.f32.mrf.mxu0
        %v5092 = vadd.f32 0.0, %v5091
        %5093 = vmatmul.f32.gmra.mxu0 %v2868
        %v5094 = vpop.f32.mrf.mxu0
        %v5095 = vadd.f32 0.0, %v5094
        %5096 = vmatmul.f32.gmra.mxu0 %v2870
        %v5097 = vpop.f32.mrf.mxu0
        %v5098 = vadd.f32 0.0, %v5097
        %5099 = vmatmul.f32.gmra.mxu0 %v2872
        %v5100 = vpop.f32.mrf.mxu0
        %v5101 = vadd.f32 0.0, %v5100
        %5102 = vmatmul.f32.gmra.mxu0 %v2874
        %v5103 = vpop.f32.mrf.mxu0
        %v5104 = vadd.f32 0.0, %v5103
        %5105 = vmatmul.f32.gmra.mxu0 %v2876
        %v5106 = vpop.f32.mrf.mxu0
        %v5107 = vadd.f32 0.0, %v5106
        %5108 = vmatmul.f32.gmra.mxu0 %v2878
        %v5109 = vpop.f32.mrf.mxu0
        %v5110 = vadd.f32 0.0, %v5109
        %5111 = vmatmul.f32.gmra.mxu0 %v2880
        %v5112 = vpop.f32.mrf.mxu0
        %v5113 = vadd.f32 0.0, %v5112
        %5114 = vmatmul.f32.gmra.mxu0 %v2882
        %v5115 = vpop.f32.mrf.mxu0
        %v5116 = vadd.f32 0.0, %v5115
        %5117 = vmatmul.f32.gmra.mxu0 %v2884
        %v5118 = vpop.f32.mrf.mxu0
        %v5119 = vadd.f32 0.0, %v5118
        %5120 = vmatmul.f32.gmra.mxu0 %v2886
        %v5121 = vpop.f32.mrf.mxu0
        %v5122 = vadd.f32 0.0, %v5121
        %5123 = vmatmul.f32.gmra.mxu0 %v2888
        %v5124 = vpop.f32.mrf.mxu0
        %v5125 = vadd.f32 0.0, %v5124
        %5126 = vmatmul.f32.gmra.mxu0 %v2890
        %v5127 = vpop.f32.mrf.mxu0
        %v5128 = vadd.f32 0.0, %v5127
        %5129 = vmatmul.f32.gmra.mxu0 %v2892
        %v5130 = vpop.f32.mrf.mxu0
        %v5131 = vadd.f32 0.0, %v5130
        %5132 = vmatmul.f32.gmra.mxu0 %v2894
        %v5133 = vpop.f32.mrf.mxu0
        %v5134 = vadd.f32 0.0, %v5133
        %5135 = vmatmul.f32.gmra.mxu0 %v2896
        %v5136 = vpop.f32.mrf.mxu0
        %v5137 = vadd.f32 0.0, %v5136
        %5138 = vmatmul.f32.gmra.mxu0 %v2898
        %v5139 = vpop.f32.mrf.mxu0
        %v5140 = vadd.f32 0.0, %v5139
        %5141 = vmatmul.f32.gmra.mxu0 %v2900
        %v5142 = vpop.f32.mrf.mxu0
        %v5143 = vadd.f32 0.0, %v5142
        %5144 = vmatmul.f32.gmra.mxu0 %v2902
        %v5145 = vpop.f32.mrf.mxu0
        %v5146 = vadd.f32 0.0, %v5145
        %5147 = vmatmul.f32.gmra.mxu0 %v2904
        %v5148 = vpop.f32.mrf.mxu0
        %v5149 = vadd.f32 0.0, %v5148
        %5150 = vmatmul.f32.gmra.mxu0 %v2906
        %v5151 = vpop.f32.mrf.mxu0
        %v5152 = vadd.f32 0.0, %v5151
        %5153 = vmatmul.f32.gmra.mxu0 %v2908
        %v5154 = vpop.f32.mrf.mxu0
        %v5155 = vadd.f32 0.0, %v5154
        %5156 = vmatmul.f32.gmra.mxu0 %v2910
        %v5157 = vpop.f32.mrf.mxu0
        %v5158 = vadd.f32 0.0, %v5157
        %5159 = vmatmul.f32.gmra.mxu0 %v4117
        %v5160 = vpop.f32.mrf.mxu0
        %v5161 = vadd.f32 0.0, %v5160
        %5162 = vmatmul.f32.gmra.mxu0 %v4119
        %v5163 = vpop.f32.mrf.mxu0
        %v5164 = vadd.f32 0.0, %v5163
        %5165 = vmatmul.f32.gmra.mxu0 %v5055
        %v5166 = vpop.f32.mrf.mxu0
        %v5167 = vadd.f32 0.0, %v5166
        %5168 = vmatmul.f32.gmra.mxu0 %v5057
        %v5169 = vpop.f32.mrf.mxu0
        %v5170 = vadd.f32 0.0, %v5169
        %5171 = vdwg.mxu0
        %v5172 = vadd.f32 %v5014, %v5077
        %v5173 = vadd.f32 %v5015, %v5080
        %v5174 = vadd.f32 %v5016, %v5083
        %v5175 = vadd.f32 %v5017, %v5086
        %v5176 = vadd.f32 %v5018, %v5089
        %v5177 = vadd.f32 %v5019, %v5092
        %v5178 = vadd.f32 %v5020, %v5095
        %v5179 = vadd.f32 %v5021, %v5098
        %v5180 = vadd.f32 %v5022, %v5101
        %v5181 = vadd.f32 %v5023, %v5104
        %v5182 = vadd.f32 %v5024, %v5107
        %v5183 = vadd.f32 %v5025, %v5110
        %v5184 = vadd.f32 %v5026, %v5113
        %v5185 = vadd.f32 %v5027, %v5116
        %v5186 = vadd.f32 %v5028, %v5119
        %v5187 = vadd.f32 %v5029, %v5122
        %v5188 = vadd.f32 %v5030, %v5125
        %v5189 = vadd.f32 %v5031, %v5128
        %v5190 = vadd.f32 %v5032, %v5131
        %v5191 = vadd.f32 %v5033, %v5134
        %v5192 = vadd.f32 %v5034, %v5137
        %v5193 = vadd.f32 %v5035, %v5140
        %v5194 = vadd.f32 %v5036, %v5143
        %v5195 = vadd.f32 %v5037, %v5146
        %v5196 = vadd.f32 %v5038, %v5149
        %v5197 = vadd.f32 %v5039, %v5152
        %v5198 = vadd.f32 %v5040, %v5155
        %v5199 = vadd.f32 %v5041, %v5158
        %v5200 = vadd.f32 %v5042, %v5161
        %v5201 = vadd.f32 %v5043, %v5164
        %v5202 = vadd.f32 %v5044, %v5167
        %v5203 = vadd.f32 %v5045, %v5170
        %v5204 = vrot.slane %v1892, 2
        %v5205 = vrot.slane %v1893, 2
        %v5206 = vsel %vm3057, %v5204, %v5205
        %v5207 = vrot.slane %v1894, 2
        %v5208 = vsel %vm3057, %v5205, %v5207
        %s5209 = scalar_lea.vmem %s4, 128
        %v5210 = vld [vmem:[%s5209] sm:$0xff]
        %v5211 = vld [vmem:[%s5209 + $0x8] sm:$0xff]
        %v5212 = vsel %vm428, %v5206, 0
        %v5214 = vsel %vm428, %v5208, 0
        %5216 = vmatpush.msra.mxu0 0.0
        %5217 = vmatpush.msra.mxu0 0.0
        %5218 = vmatpush.msra.mxu0 0.0
        %5219 = vmatpush.msra.mxu0 0.0
        %5220 = vmatpush.msra.mxu0 0.0
        %5221 = vmatpush.msra.mxu0 0.0
        %5222 = vmatpush.msra.mxu0 0.0
        %5223 = vmatpush.msra.mxu0 0.0
        %5224 = vmatpush.msra.mxu0 0.0
        %5225 = vmatpush.msra.mxu0 0.0
        %5226 = vmatpush.msra.mxu0 0.0
        %5227 = vmatpush.msra.mxu0 0.0
        %5228 = vmatpush.msra.mxu0 0.0
        %5229 = vmatpush.msra.mxu0 0.0
        %5230 = vmatpush.msra.mxu0 %v5211
        %5231 = vmatpush.msra.mxu0 %v5210
        %5232 = vmatmul.f32.gmra.mxu0 %v3149
        %v5233 = vpop.f32.mrf.mxu0
        %v5234 = vadd.f32 0.0, %v5233
        %5235 = vmatmul.f32.gmra.mxu0 %v3151
        %v5236 = vpop.f32.mrf.mxu0
        %v5237 = vadd.f32 0.0, %v5236
        %5238 = vmatmul.f32.gmra.mxu0 %v3153
        %v5239 = vpop.f32.mrf.mxu0
        %v5240 = vadd.f32 0.0, %v5239
        %5241 = vmatmul.f32.gmra.mxu0 %v3155
        %v5242 = vpop.f32.mrf.mxu0
        %v5243 = vadd.f32 0.0, %v5242
        %5244 = vmatmul.f32.gmra.mxu0 %v3157
        %v5245 = vpop.f32.mrf.mxu0
        %v5246 = vadd.f32 0.0, %v5245
        %5247 = vmatmul.f32.gmra.mxu0 %v3159
        %v5248 = vpop.f32.mrf.mxu0
        %v5249 = vadd.f32 0.0, %v5248
        %5250 = vmatmul.f32.gmra.mxu0 %v3161
        %v5251 = vpop.f32.mrf.mxu0
        %v5252 = vadd.f32 0.0, %v5251
        %5253 = vmatmul.f32.gmra.mxu0 %v3163
        %v5254 = vpop.f32.mrf.mxu0
        %v5255 = vadd.f32 0.0, %v5254
        %5256 = vmatmul.f32.gmra.mxu0 %v3165
        %v5257 = vpop.f32.mrf.mxu0
        %v5258 = vadd.f32 0.0, %v5257
        %5259 = vmatmul.f32.gmra.mxu0 %v3167
        %v5260 = vpop.f32.mrf.mxu0
        %v5261 = vadd.f32 0.0, %v5260
        %5262 = vmatmul.f32.gmra.mxu0 %v3169
        %v5263 = vpop.f32.mrf.mxu0
        %v5264 = vadd.f32 0.0, %v5263
        %5265 = vmatmul.f32.gmra.mxu0 %v3171
        %v5266 = vpop.f32.mrf.mxu0
        %v5267 = vadd.f32 0.0, %v5266
        %5268 = vmatmul.f32.gmra.mxu0 %v3173
        %v5269 = vpop.f32.mrf.mxu0
        %v5270 = vadd.f32 0.0, %v5269
        %5271 = vmatmul.f32.gmra.mxu0 %v3175
        %v5272 = vpop.f32.mrf.mxu0
        %v5273 = vadd.f32 0.0, %v5272
        %5274 = vmatmul.f32.gmra.mxu0 %v3177
        %v5275 = vpop.f32.mrf.mxu0
        %v5276 = vadd.f32 0.0, %v5275
        %5277 = vmatmul.f32.gmra.mxu0 %v3179
        %v5278 = vpop.f32.mrf.mxu0
        %v5279 = vadd.f32 0.0, %v5278
        %5280 = vmatmul.f32.gmra.mxu0 %v3181
        %v5281 = vpop.f32.mrf.mxu0
        %v5282 = vadd.f32 0.0, %v5281
        %5283 = vmatmul.f32.gmra.mxu0 %v3183
        %v5284 = vpop.f32.mrf.mxu0
        %v5285 = vadd.f32 0.0, %v5284
        %5286 = vmatmul.f32.gmra.mxu0 %v3185
        %v5287 = vpop.f32.mrf.mxu0
        %v5288 = vadd.f32 0.0, %v5287
        %5289 = vmatmul.f32.gmra.mxu0 %v3187
        %v5290 = vpop.f32.mrf.mxu0
        %v5291 = vadd.f32 0.0, %v5290
        %5292 = vmatmul.f32.gmra.mxu0 %v3189
        %v5293 = vpop.f32.mrf.mxu0
        %v5294 = vadd.f32 0.0, %v5293
        %5295 = vmatmul.f32.gmra.mxu0 %v3191
        %v5296 = vpop.f32.mrf.mxu0
        %v5297 = vadd.f32 0.0, %v5296
        %5298 = vmatmul.f32.gmra.mxu0 %v3193
        %v5299 = vpop.f32.mrf.mxu0
        %v5300 = vadd.f32 0.0, %v5299
        %5301 = vmatmul.f32.gmra.mxu0 %v3195
        %v5302 = vpop.f32.mrf.mxu0
        %v5303 = vadd.f32 0.0, %v5302
        %5304 = vmatmul.f32.gmra.mxu0 %v3197
        %v5305 = vpop.f32.mrf.mxu0
        %v5306 = vadd.f32 0.0, %v5305
        %5307 = vmatmul.f32.gmra.mxu0 %v3199
        %v5308 = vpop.f32.mrf.mxu0
        %v5309 = vadd.f32 0.0, %v5308
        %5310 = vmatmul.f32.gmra.mxu0 %v3201
        %v5311 = vpop.f32.mrf.mxu0
        %v5312 = vadd.f32 0.0, %v5311
        %5313 = vmatmul.f32.gmra.mxu0 %v3203
        %v5314 = vpop.f32.mrf.mxu0
        %v5315 = vadd.f32 0.0, %v5314
        %5316 = vmatmul.f32.gmra.mxu0 %v4274
        %v5317 = vpop.f32.mrf.mxu0
        %v5318 = vadd.f32 0.0, %v5317
        %5319 = vmatmul.f32.gmra.mxu0 %v4276
        %v5320 = vpop.f32.mrf.mxu0
        %v5321 = vadd.f32 0.0, %v5320
        %5322 = vmatmul.f32.gmra.mxu0 %v5212
        %v5323 = vpop.f32.mrf.mxu0
        %v5324 = vadd.f32 0.0, %v5323
        %5325 = vmatmul.f32.gmra.mxu0 %v5214
        %v5326 = vpop.f32.mrf.mxu0
        %v5327 = vadd.f32 0.0, %v5326
        %5328 = vdwg.mxu0
        %v5329 = vadd.f32 %v5172, %v5234
        %v5330 = vadd.f32 %v5173, %v5237
        %v5331 = vadd.f32 %v5174, %v5240
        %v5332 = vadd.f32 %v5175, %v5243
        %v5333 = vadd.f32 %v5176, %v5246
        %v5334 = vadd.f32 %v5177, %v5249
        %v5335 = vadd.f32 %v5178, %v5252
        %v5336 = vadd.f32 %v5179, %v5255
        %v5337 = vadd.f32 %v5180, %v5258
        %v5338 = vadd.f32 %v5181, %v5261
        %v5339 = vadd.f32 %v5182, %v5264
        %v5340 = vadd.f32 %v5183, %v5267
        %v5341 = vadd.f32 %v5184, %v5270
        %v5342 = vadd.f32 %v5185, %v5273
        %v5343 = vadd.f32 %v5186, %v5276
        %v5344 = vadd.f32 %v5187, %v5279
        %v5345 = vadd.f32 %v5188, %v5282
        %v5346 = vadd.f32 %v5189, %v5285
        %v5347 = vadd.f32 %v5190, %v5288
        %v5348 = vadd.f32 %v5191, %v5291
        %v5349 = vadd.f32 %v5192, %v5294
        %v5350 = vadd.f32 %v5193, %v5297
        %v5351 = vadd.f32 %v5194, %v5300
        %v5352 = vadd.f32 %v5195, %v5303
        %v5353 = vadd.f32 %v5196, %v5306
        %v5354 = vadd.f32 %v5197, %v5309
        %v5355 = vadd.f32 %v5198, %v5312
        %v5356 = vadd.f32 %v5199, %v5315
        %v5357 = vadd.f32 %v5200, %v5318
        %v5358 = vadd.f32 %v5201, %v5321
        %v5359 = vadd.f32 %v5202, %v5324
        %v5360 = vadd.f32 %v5203, %v5327
        %v5361 = vrot.slane %v1946, 2
        %v5362 = vrot.slane %v1947, 2
        %v5363 = vsel %vm3057, %v5361, %v5362
        %v5364 = vrot.slane %v1948, 2
        %v5365 = vsel %vm3057, %v5362, %v5364
        %s5366 = scalar_lea.vmem [#allocation10], 128
        %v5367 = vld [vmem:[%s5366] sm:$0xff]
        %v5368 = vld [vmem:[%s5366 + $0x8] sm:$0xff]
        %v5369 = vsel %vm428, %v5363, 0
        %v5371 = vsel %vm428, %v5365, 0
        %5373 = vmatpush.msra.mxu0 0.0
        %5374 = vmatpush.msra.mxu0 0.0
        %5375 = vmatpush.msra.mxu0 0.0
        %5376 = vmatpush.msra.mxu0 0.0
        %5377 = vmatpush.msra.mxu0 0.0
        %5378 = vmatpush.msra.mxu0 0.0
        %5379 = vmatpush.msra.mxu0 0.0
        %5380 = vmatpush.msra.mxu0 0.0
        %5381 = vmatpush.msra.mxu0 0.0
        %5382 = vmatpush.msra.mxu0 0.0
        %5383 = vmatpush.msra.mxu0 0.0
        %5384 = vmatpush.msra.mxu0 0.0
        %5385 = vmatpush.msra.mxu0 0.0
        %5386 = vmatpush.msra.mxu0 0.0
        %5387 = vmatpush.msra.mxu0 %v5368
        %5388 = vmatpush.msra.mxu0 %v5367
        %5389 = vmatmul.f32.gmra.mxu0 %v3441
        %v5390 = vpop.f32.mrf.mxu0
        %v5391 = vadd.f32 0.0, %v5390
        %5392 = vmatmul.f32.gmra.mxu0 %v3443
        %v5393 = vpop.f32.mrf.mxu0
        %v5394 = vadd.f32 0.0, %v5393
        %5395 = vmatmul.f32.gmra.mxu0 %v3445
        %v5396 = vpop.f32.mrf.mxu0
        %v5397 = vadd.f32 0.0, %v5396
        %5398 = vmatmul.f32.gmra.mxu0 %v3447
        %v5399 = vpop.f32.mrf.mxu0
        %v5400 = vadd.f32 0.0, %v5399
        %5401 = vmatmul.f32.gmra.mxu0 %v3449
        %v5402 = vpop.f32.mrf.mxu0
        %v5403 = vadd.f32 0.0, %v5402
        %5404 = vmatmul.f32.gmra.mxu0 %v3451
        %v5405 = vpop.f32.mrf.mxu0
        %v5406 = vadd.f32 0.0, %v5405
        %5407 = vmatmul.f32.gmra.mxu0 %v3453
        %v5408 = vpop.f32.mrf.mxu0
        %v5409 = vadd.f32 0.0, %v5408
        %5410 = vmatmul.f32.gmra.mxu0 %v3455
        %v5411 = vpop.f32.mrf.mxu0
        %v5412 = vadd.f32 0.0, %v5411
        %5413 = vmatmul.f32.gmra.mxu0 %v3457
        %v5414 = vpop.f32.mrf.mxu0
        %v5415 = vadd.f32 0.0, %v5414
        %5416 = vmatmul.f32.gmra.mxu0 %v3459
        %v5417 = vpop.f32.mrf.mxu0
        %v5418 = vadd.f32 0.0, %v5417
        %5419 = vmatmul.f32.gmra.mxu0 %v3461
        %v5420 = vpop.f32.mrf.mxu0
        %v5421 = vadd.f32 0.0, %v5420
        %5422 = vmatmul.f32.gmra.mxu0 %v3463
        %v5423 = vpop.f32.mrf.mxu0
        %v5424 = vadd.f32 0.0, %v5423
        %5425 = vmatmul.f32.gmra.mxu0 %v3465
        %v5426 = vpop.f32.mrf.mxu0
        %v5427 = vadd.f32 0.0, %v5426
        %5428 = vmatmul.f32.gmra.mxu0 %v3467
        %v5429 = vpop.f32.mrf.mxu0
        %v5430 = vadd.f32 0.0, %v5429
        %5431 = vmatmul.f32.gmra.mxu0 %v3469
        %v5432 = vpop.f32.mrf.mxu0
        %v5433 = vadd.f32 0.0, %v5432
        %5434 = vmatmul.f32.gmra.mxu0 %v3471
        %v5435 = vpop.f32.mrf.mxu0
        %v5436 = vadd.f32 0.0, %v5435
        %5437 = vmatmul.f32.gmra.mxu0 %v3473
        %v5438 = vpop.f32.mrf.mxu0
        %v5439 = vadd.f32 0.0, %v5438
        %5440 = vmatmul.f32.gmra.mxu0 %v3475
        %v5441 = vpop.f32.mrf.mxu0
        %v5442 = vadd.f32 0.0, %v5441
        %5443 = vmatmul.f32.gmra.mxu0 %v3477
        %v5444 = vpop.f32.mrf.mxu0
        %v5445 = vadd.f32 0.0, %v5444
        %5446 = vmatmul.f32.gmra.mxu0 %v3479
        %v5447 = vpop.f32.mrf.mxu0
        %v5448 = vadd.f32 0.0, %v5447
        %5449 = vmatmul.f32.gmra.mxu0 %v3481
        %v5450 = vpop.f32.mrf.mxu0
        %v5451 = vadd.f32 0.0, %v5450
        %5452 = vmatmul.f32.gmra.mxu0 %v3483
        %v5453 = vpop.f32.mrf.mxu0
        %v5454 = vadd.f32 0.0, %v5453
        %5455 = vmatmul.f32.gmra.mxu0 %v3485
        %v5456 = vpop.f32.mrf.mxu0
        %v5457 = vadd.f32 0.0, %v5456
        %5458 = vmatmul.f32.gmra.mxu0 %v3487
        %v5459 = vpop.f32.mrf.mxu0
        %v5460 = vadd.f32 0.0, %v5459
        %5461 = vmatmul.f32.gmra.mxu0 %v3489
        %v5462 = vpop.f32.mrf.mxu0
        %v5463 = vadd.f32 0.0, %v5462
        %5464 = vmatmul.f32.gmra.mxu0 %v3491
        %v5465 = vpop.f32.mrf.mxu0
        %v5466 = vadd.f32 0.0, %v5465
        %5467 = vmatmul.f32.gmra.mxu0 %v3493
        %v5468 = vpop.f32.mrf.mxu0
        %v5469 = vadd.f32 0.0, %v5468
        %5470 = vmatmul.f32.gmra.mxu0 %v3495
        %v5471 = vpop.f32.mrf.mxu0
        %v5472 = vadd.f32 0.0, %v5471
        %5473 = vmatmul.f32.gmra.mxu0 %v4431
        %v5474 = vpop.f32.mrf.mxu0
        %v5475 = vadd.f32 0.0, %v5474
        %5476 = vmatmul.f32.gmra.mxu0 %v4433
        %v5477 = vpop.f32.mrf.mxu0
        %v5478 = vadd.f32 0.0, %v5477
        %5479 = vmatmul.f32.gmra.mxu0 %v5369
        %v5480 = vpop.f32.mrf.mxu0
        %v5481 = vadd.f32 0.0, %v5480
        %5482 = vmatmul.f32.gmra.mxu0 %v5371
        %v5483 = vpop.f32.mrf.mxu0
        %v5484 = vadd.f32 0.0, %v5483
        %5485 = vdwg.mxu0
        %v5486 = vadd.f32 %v5329, %v5391
        %v5487 = vadd.f32 %v5330, %v5394
        %v5488 = vadd.f32 %v5331, %v5397
        %v5489 = vadd.f32 %v5332, %v5400
        %v5490 = vadd.f32 %v5333, %v5403
        %v5491 = vadd.f32 %v5334, %v5406
        %v5492 = vadd.f32 %v5335, %v5409
        %v5493 = vadd.f32 %v5336, %v5412
        %v5494 = vadd.f32 %v5337, %v5415
        %v5495 = vadd.f32 %v5338, %v5418
        %v5496 = vadd.f32 %v5339, %v5421
        %v5497 = vadd.f32 %v5340, %v5424
        %v5498 = vadd.f32 %v5341, %v5427
        %v5499 = vadd.f32 %v5342, %v5430
        %v5500 = vadd.f32 %v5343, %v5433
        %v5501 = vadd.f32 %v5344, %v5436
        %v5502 = vadd.f32 %v5345, %v5439
        %v5503 = vadd.f32 %v5346, %v5442
        %v5504 = vadd.f32 %v5347, %v5445
        %v5505 = vadd.f32 %v5348, %v5448
        %v5506 = vadd.f32 %v5349, %v5451
        %v5507 = vadd.f32 %v5350, %v5454
        %v5508 = vadd.f32 %v5351, %v5457
        %v5509 = vadd.f32 %v5352, %v5460
        %v5510 = vadd.f32 %v5353, %v5463
        %v5511 = vadd.f32 %v5354, %v5466
        %v5512 = vadd.f32 %v5355, %v5469
        %v5513 = vadd.f32 %v5356, %v5472
        %v5514 = vadd.f32 %v5357, %v5475
        %v5515 = vadd.f32 %v5358, %v5478
        %v5516 = vadd.f32 %v5359, %v5481
        %v5517 = vadd.f32 %v5360, %v5484
        %v5518 = vmax.f32 %v5486, 0.0
        %v5519 = vmax.f32 %v5487, 0.0
        %v5520 = vmax.f32 %v5488, 0.0
        %v5521 = vmax.f32 %v5489, 0.0
        %v5522 = vmax.f32 %v5490, 0.0
        %v5523 = vmax.f32 %v5491, 0.0
        %v5524 = vmax.f32 %v5492, 0.0
        %v5525 = vmax.f32 %v5493, 0.0
        %v5526 = vmax.f32 %v5494, 0.0
        %v5527 = vmax.f32 %v5495, 0.0
        %v5528 = vmax.f32 %v5496, 0.0
        %v5529 = vmax.f32 %v5497, 0.0
        %v5530 = vmax.f32 %v5498, 0.0
        %v5531 = vmax.f32 %v5499, 0.0
        %v5532 = vmax.f32 %v5500, 0.0
        %v5533 = vmax.f32 %v5501, 0.0
        %v5534 = vmax.f32 %v5502, 0.0
        %v5535 = vmax.f32 %v5503, 0.0
        %v5536 = vmax.f32 %v5504, 0.0
        %v5537 = vmax.f32 %v5505, 0.0
        %v5538 = vmax.f32 %v5506, 0.0
        %v5539 = vmax.f32 %v5507, 0.0
        %v5540 = vmax.f32 %v5508, 0.0
        %v5541 = vmax.f32 %v5509, 0.0
        %v5542 = vmax.f32 %v5510, 0.0
        %v5543 = vmax.f32 %v5511, 0.0
        %v5544 = vmax.f32 %v5512, 0.0
        %v5545 = vmax.f32 %v5513, 0.0
        %v5546 = vmax.f32 %v5514, 0.0
        %v5547 = vmax.f32 %v5515, 0.0
        %v5548 = vmax.f32 %v5516, 0.0
        %v5549 = vmax.f32 %v5517, 0.0
        %s5550 = scalar_lea.vmem [#allocation4], 24
        %5551 = vst.msk [vmem:[%s5550 + $0x1] sm:$0xff] %vm428, %v5518
        %5552 = vst.msk [vmem:[%s5550 + $0x9] sm:$0xff] %vm428, %v5519
        %5553 = vst.msk [vmem:[%s5550 + $0x19] sm:$0xff] %vm428, %v5520
        %5554 = vst.msk [vmem:[%s5550 + $0x21] sm:$0xff] %vm428, %v5521
        %5555 = vst.msk [vmem:[%s5550 + $0x31] sm:$0xff] %vm428, %v5522
        %5556 = vst.msk [vmem:[%s5550 + $0x39] sm:$0xff] %vm428, %v5523
        %5557 = vst.msk [vmem:[%s5550 + $0x49] sm:$0xff] %vm428, %v5524
        %5558 = vst.msk [vmem:[%s5550 + $0x51] sm:$0xff] %vm428, %v5525
        %5559 = vst.msk [vmem:[%s5550 + $0x61] sm:$0xff] %vm428, %v5526
        %5560 = vst.msk [vmem:[%s5550 + $0x69] sm:$0xff] %vm428, %v5527
        %5561 = vst.msk [vmem:[%s5550 + $0x79] sm:$0xff] %vm428, %v5528
        %5562 = vst.msk [vmem:[%s5550 + $0x81] sm:$0xff] %vm428, %v5529
        %5563 = vst.msk [vmem:[%s5550 + $0x91] sm:$0xff] %vm428, %v5530
        %5564 = vst.msk [vmem:[%s5550 + $0x99] sm:$0xff] %vm428, %v5531
        %5565 = vst.msk [vmem:[%s5550 + $0xa9] sm:$0xff] %vm428, %v5532
        %5566 = vst.msk [vmem:[%s5550 + $0xb1] sm:$0xff] %vm428, %v5533
        %5567 = vst.msk [vmem:[%s5550 + $0xc1] sm:$0xff] %vm428, %v5534
        %5568 = vst.msk [vmem:[%s5550 + $0xc9] sm:$0xff] %vm428, %v5535
        %5569 = vst.msk [vmem:[%s5550 + $0xd9] sm:$0xff] %vm428, %v5536
        %5570 = vst.msk [vmem:[%s5550 + $0xe1] sm:$0xff] %vm428, %v5537
        %5571 = vst.msk [vmem:[%s5550 + $0xf1] sm:$0xff] %vm428, %v5538
        %5572 = vst.msk [vmem:[%s5550 + $0xf9] sm:$0xff] %vm428, %v5539
        %5573 = vst.msk [vmem:[%s5550 + $0x109] sm:$0xff] %vm428, %v5540
        %5574 = vst.msk [vmem:[%s5550 + $0x111] sm:$0xff] %vm428, %v5541
        %5575 = vst.msk [vmem:[%s5550 + $0x121] sm:$0xff] %vm428, %v5542
        %5576 = vst.msk [vmem:[%s5550 + $0x129] sm:$0xff] %vm428, %v5543
        %5577 = vst.msk [vmem:[%s5550 + $0x139] sm:$0xff] %vm428, %v5544
        %5578 = vst.msk [vmem:[%s5550 + $0x141] sm:$0xff] %vm428, %v5545
        %5579 = vst.msk [vmem:[%s5550 + $0x151] sm:$0xff] %vm428, %v5546
        %5580 = vst.msk [vmem:[%s5550 + $0x159] sm:$0xff] %vm428, %v5547
        %5581 = vst.msk [vmem:[%s5550 + $0x169] sm:$0xff] %vm428, %v5548
        %5582 = vst.msk [vmem:[%s5550 + $0x171] sm:$0xff] %vm428, %v5549
        %v5583 = vld [vmem:[#allocation4] sm:$0xff]
        %v5584 = vld [vmem:[#allocation4 + $0x8] sm:$0xff]
        %v5585 = vld [vmem:[#allocation4 + $0x10] sm:$0x3]
        %v5586 = vld [vmem:[#allocation4 + $0x18] sm:$0xff]
        %v5587 = vld [vmem:[#allocation4 + $0x20] sm:$0xff]
        %v5588 = vld [vmem:[#allocation4 + $0x28] sm:$0x3]
        %v5589 = vld [vmem:[#allocation4 + $0x30] sm:$0xff]
        %v5590 = vld [vmem:[#allocation4 + $0x38] sm:$0xff]
        %v5591 = vld [vmem:[#allocation4 + $0x40] sm:$0x3]
        %v5592 = vld [vmem:[#allocation4 + $0x48] sm:$0xff]
        %v5593 = vld [vmem:[#allocation4 + $0x50] sm:$0xff]
        %v5594 = vld [vmem:[#allocation4 + $0x58] sm:$0x3]
        %v5595 = vld [vmem:[#allocation4 + $0x60] sm:$0xff]
        %v5596 = vld [vmem:[#allocation4 + $0x68] sm:$0xff]
        %v5597 = vld [vmem:[#allocation4 + $0x70] sm:$0x3]
        %v5598 = vld [vmem:[#allocation4 + $0x78] sm:$0xff]
        %v5599 = vld [vmem:[#allocation4 + $0x80] sm:$0xff]
        %v5600 = vld [vmem:[#allocation4 + $0x88] sm:$0x3]
        %v5601 = vld [vmem:[#allocation4 + $0x90] sm:$0xff]
        %v5602 = vld [vmem:[#allocation4 + $0x98] sm:$0xff]
        %v5603 = vld [vmem:[#allocation4 + $0xa0] sm:$0x3]
        %v5604 = vld [vmem:[#allocation4 + $0xa8] sm:$0xff]
        %v5605 = vld [vmem:[#allocation4 + $0xb0] sm:$0xff]
        %v5606 = vld [vmem:[#allocation4 + $0xb8] sm:$0x3]
        %v5607 = vld [vmem:[#allocation4 + $0xc0] sm:$0xff]
        %v5608 = vld [vmem:[#allocation4 + $0xc8] sm:$0xff]
        %v5609 = vld [vmem:[#allocation4 + $0xd0] sm:$0x3]
        %v5610 = vld [vmem:[#allocation4 + $0xd8] sm:$0xff]
        %v5611 = vld [vmem:[#allocation4 + $0xe0] sm:$0xff]
        %v5612 = vld [vmem:[#allocation4 + $0xe8] sm:$0x3]
        %v5613 = vld [vmem:[#allocation4 + $0xf0] sm:$0xff]
        %v5614 = vld [vmem:[#allocation4 + $0xf8] sm:$0xff]
        %v5615 = vld [vmem:[#allocation4 + $0x100] sm:$0x3]
        %v5616 = vld [vmem:[#allocation4 + $0x108] sm:$0xff]
        %v5617 = vld [vmem:[#allocation4 + $0x110] sm:$0xff]
        %v5618 = vld [vmem:[#allocation4 + $0x118] sm:$0x3]
        %v5619 = vld [vmem:[#allocation4 + $0x120] sm:$0xff]
        %v5620 = vld [vmem:[#allocation4 + $0x128] sm:$0xff]
        %v5621 = vld [vmem:[#allocation4 + $0x130] sm:$0x3]
        %v5622 = vld [vmem:[#allocation4 + $0x138] sm:$0xff]
        %v5623 = vld [vmem:[#allocation4 + $0x140] sm:$0xff]
        %v5624 = vld [vmem:[#allocation4 + $0x148] sm:$0x3]
        %v5625 = vld [vmem:[#allocation4 + $0x150] sm:$0xff]
        %v5626 = vld [vmem:[#allocation4 + $0x158] sm:$0xff]
        %v5627 = vld [vmem:[#allocation4 + $0x160] sm:$0x3]
        %v5628 = vld [vmem:[#allocation4 + $0x168] sm:$0xff]
        %v5629 = vld [vmem:[#allocation4 + $0x170] sm:$0xff]
        %v5630 = vld [vmem:[#allocation4 + $0x178] sm:$0x3]
        %v5631 = vld [vmem:[#allocation4 + $0x180] sm:$0xff]
        %v5632 = vld [vmem:[#allocation4 + $0x188] sm:$0xff]
        %v5633 = vld [vmem:[#allocation4 + $0x190] sm:$0x3]
        %v5634 = vld [vmem:[#allocation4 + $0x198] sm:$0xff]
        %v5635 = vld [vmem:[#allocation4 + $0x1a0] sm:$0xff]
        %v5636 = vld [vmem:[#allocation4 + $0x1a8] sm:$0x3]
        %v5637 = vld [vmem:[%s8] sm:$0x1]
        %v5639 = vperm.slane %v5637, 0
        %v5641 = vadd.f32 %v5639, 0.0
        %v5642 = vld [vmem:[#allocation11] sm:$0xff]
        %v5643 = vld [vmem:[#allocation11 + $0x8] sm:$0xff]
        %v5645 = vsel %vm428, %v5583, 0
        %v5648 = vsel %vm428, %v5584, 0
        %v5651 = vsel %vm428, %v5586, 0
        %v5654 = vsel %vm428, %v5587, 0
        %v5657 = vsel %vm428, %v5589, 0
        %v5660 = vsel %vm428, %v5590, 0
        %v5663 = vsel %vm428, %v5592, 0
        %v5666 = vsel %vm428, %v5593, 0
        %v5669 = vsel %vm428, %v5595, 0
        %v5672 = vsel %vm428, %v5596, 0
        %v5675 = vsel %vm428, %v5598, 0
        %v5678 = vsel %vm428, %v5599, 0
        %v5681 = vsel %vm428, %v5601, 0
        %v5684 = vsel %vm428, %v5602, 0
        %v5687 = vsel %vm428, %v5604, 0
        %v5690 = vsel %vm428, %v5605, 0
        %v5693 = vsel %vm428, %v5607, 0
        %v5696 = vsel %vm428, %v5608, 0
        %v5699 = vsel %vm428, %v5610, 0
        %v5702 = vsel %vm428, %v5611, 0
        %v5705 = vsel %vm428, %v5613, 0
        %v5708 = vsel %vm428, %v5614, 0
        %v5711 = vsel %vm428, %v5616, 0
        %v5714 = vsel %vm428, %v5617, 0
        %v5717 = vsel %vm428, %v5619, 0
        %v5720 = vsel %vm428, %v5620, 0
        %v5723 = vsel %vm428, %v5622, 0
        %v5726 = vsel %vm428, %v5623, 0
        %v5729 = vsel %vm428, %v5625, 0
        %v5732 = vsel %vm428, %v5626, 0
        %v5735 = vsel %vm428, %v5628, 0
        %v5738 = vsel %vm428, %v5629, 0
        %5740 = vmatpush.msra.mxu0 0.0
        %5741 = vmatpush.msra.mxu0 0.0
        %5742 = vmatpush.msra.mxu0 0.0
        %5743 = vmatpush.msra.mxu0 0.0
        %5744 = vmatpush.msra.mxu0 0.0
        %5745 = vmatpush.msra.mxu0 0.0
        %5746 = vmatpush.msra.mxu0 0.0
        %5747 = vmatpush.msra.mxu0 0.0
        %5748 = vmatpush.msra.mxu0 0.0
        %5749 = vmatpush.msra.mxu0 0.0
        %5750 = vmatpush.msra.mxu0 0.0
        %5751 = vmatpush.msra.mxu0 0.0
        %5752 = vmatpush.msra.mxu0 0.0
        %5753 = vmatpush.msra.mxu0 0.0
        %5754 = vmatpush.msra.mxu0 %v5643
        %5755 = vmatpush.msra.mxu0 %v5642
        %5756 = vmatmul.f32.gmra.mxu0 %v5645
        %v5757 = vpop.f32.mrf.mxu0
        %v5758 = vadd.f32 0.0, %v5757
        %5759 = vmatmul.f32.gmra.mxu0 %v5648
        %v5760 = vpop.f32.mrf.mxu0
        %v5761 = vadd.f32 0.0, %v5760
        %5762 = vmatmul.f32.gmra.mxu0 %v5651
        %v5763 = vpop.f32.mrf.mxu0
        %v5764 = vadd.f32 0.0, %v5763
        %5765 = vmatmul.f32.gmra.mxu0 %v5654
        %v5766 = vpop.f32.mrf.mxu0
        %v5767 = vadd.f32 0.0, %v5766
        %5768 = vmatmul.f32.gmra.mxu0 %v5657
        %v5769 = vpop.f32.mrf.mxu0
        %v5770 = vadd.f32 0.0, %v5769
        %5771 = vmatmul.f32.gmra.mxu0 %v5660
        %v5772 = vpop.f32.mrf.mxu0
        %v5773 = vadd.f32 0.0, %v5772
        %5774 = vmatmul.f32.gmra.mxu0 %v5663
        %v5775 = vpop.f32.mrf.mxu0
        %v5776 = vadd.f32 0.0, %v5775
        %5777 = vmatmul.f32.gmra.mxu0 %v5666
        %v5778 = vpop.f32.mrf.mxu0
        %v5779 = vadd.f32 0.0, %v5778
        %5780 = vmatmul.f32.gmra.mxu0 %v5669
        %v5781 = vpop.f32.mrf.mxu0
        %v5782 = vadd.f32 0.0, %v5781
        %5783 = vmatmul.f32.gmra.mxu0 %v5672
        %v5784 = vpop.f32.mrf.mxu0
        %v5785 = vadd.f32 0.0, %v5784
        %5786 = vmatmul.f32.gmra.mxu0 %v5675
        %v5787 = vpop.f32.mrf.mxu0
        %v5788 = vadd.f32 0.0, %v5787
        %5789 = vmatmul.f32.gmra.mxu0 %v5678
        %v5790 = vpop.f32.mrf.mxu0
        %v5791 = vadd.f32 0.0, %v5790
        %5792 = vmatmul.f32.gmra.mxu0 %v5681
        %v5793 = vpop.f32.mrf.mxu0
        %v5794 = vadd.f32 0.0, %v5793
        %5795 = vmatmul.f32.gmra.mxu0 %v5684
        %v5796 = vpop.f32.mrf.mxu0
        %v5797 = vadd.f32 0.0, %v5796
        %5798 = vmatmul.f32.gmra.mxu0 %v5687
        %v5799 = vpop.f32.mrf.mxu0
        %v5800 = vadd.f32 0.0, %v5799
        %5801 = vmatmul.f32.gmra.mxu0 %v5690
        %v5802 = vpop.f32.mrf.mxu0
        %v5803 = vadd.f32 0.0, %v5802
        %5804 = vmatmul.f32.gmra.mxu0 %v5693
        %v5805 = vpop.f32.mrf.mxu0
        %v5806 = vadd.f32 0.0, %v5805
        %5807 = vmatmul.f32.gmra.mxu0 %v5696
        %v5808 = vpop.f32.mrf.mxu0
        %v5809 = vadd.f32 0.0, %v5808
        %5810 = vmatmul.f32.gmra.mxu0 %v5699
        %v5811 = vpop.f32.mrf.mxu0
        %v5812 = vadd.f32 0.0, %v5811
        %5813 = vmatmul.f32.gmra.mxu0 %v5702
        %v5814 = vpop.f32.mrf.mxu0
        %v5815 = vadd.f32 0.0, %v5814
        %5816 = vmatmul.f32.gmra.mxu0 %v5705
        %v5817 = vpop.f32.mrf.mxu0
        %v5818 = vadd.f32 0.0, %v5817
        %5819 = vmatmul.f32.gmra.mxu0 %v5708
        %v5820 = vpop.f32.mrf.mxu0
        %v5821 = vadd.f32 0.0, %v5820
        %5822 = vmatmul.f32.gmra.mxu0 %v5711
        %v5823 = vpop.f32.mrf.mxu0
        %v5824 = vadd.f32 0.0, %v5823
        %5825 = vmatmul.f32.gmra.mxu0 %v5714
        %v5826 = vpop.f32.mrf.mxu0
        %v5827 = vadd.f32 0.0, %v5826
        %5828 = vmatmul.f32.gmra.mxu0 %v5717
        %v5829 = vpop.f32.mrf.mxu0
        %v5830 = vadd.f32 0.0, %v5829
        %5831 = vmatmul.f32.gmra.mxu0 %v5720
        %v5832 = vpop.f32.mrf.mxu0
        %v5833 = vadd.f32 0.0, %v5832
        %5834 = vmatmul.f32.gmra.mxu0 %v5723
        %v5835 = vpop.f32.mrf.mxu0
        %v5836 = vadd.f32 0.0, %v5835
        %5837 = vmatmul.f32.gmra.mxu0 %v5726
        %v5838 = vpop.f32.mrf.mxu0
        %v5839 = vadd.f32 0.0, %v5838
        %5840 = vmatmul.f32.gmra.mxu0 %v5729
        %v5841 = vpop.f32.mrf.mxu0
        %v5842 = vadd.f32 0.0, %v5841
        %5843 = vmatmul.f32.gmra.mxu0 %v5732
        %v5844 = vpop.f32.mrf.mxu0
        %v5845 = vadd.f32 0.0, %v5844
        %5846 = vmatmul.f32.gmra.mxu0 %v5735
        %v5847 = vpop.f32.mrf.mxu0
        %v5848 = vadd.f32 0.0, %v5847
        %5849 = vmatmul.f32.gmra.mxu0 %v5738
        %v5850 = vpop.f32.mrf.mxu0
        %v5851 = vadd.f32 0.0, %v5850
        %5852 = vdwg.mxu0
        %v5853 = vadd.f32 %v5641, %v5758
        %v5854 = vadd.f32 %v5641, %v5761
        %v5855 = vadd.f32 %v5641, %v5764
        %v5856 = vadd.f32 %v5641, %v5767
        %v5857 = vadd.f32 %v5641, %v5770
        %v5858 = vadd.f32 %v5641, %v5773
        %v5859 = vadd.f32 %v5641, %v5776
        %v5860 = vadd.f32 %v5641, %v5779
        %v5861 = vadd.f32 %v5641, %v5782
        %v5862 = vadd.f32 %v5641, %v5785
        %v5863 = vadd.f32 %v5641, %v5788
        %v5864 = vadd.f32 %v5641, %v5791
        %v5865 = vadd.f32 %v5641, %v5794
        %v5866 = vadd.f32 %v5641, %v5797
        %v5867 = vadd.f32 %v5641, %v5800
        %v5868 = vadd.f32 %v5641, %v5803
        %v5869 = vadd.f32 %v5641, %v5806
        %v5870 = vadd.f32 %v5641, %v5809
        %v5871 = vadd.f32 %v5641, %v5812
        %v5872 = vadd.f32 %v5641, %v5815
        %v5873 = vadd.f32 %v5641, %v5818
        %v5874 = vadd.f32 %v5641, %v5821
        %v5875 = vadd.f32 %v5641, %v5824
        %v5876 = vadd.f32 %v5641, %v5827
        %v5877 = vadd.f32 %v5641, %v5830
        %v5878 = vadd.f32 %v5641, %v5833
        %v5879 = vadd.f32 %v5641, %v5836
        %v5880 = vadd.f32 %v5641, %v5839
        %v5881 = vadd.f32 %v5641, %v5842
        %v5882 = vadd.f32 %v5641, %v5845
        %v5883 = vadd.f32 %v5641, %v5848
        %v5884 = vadd.f32 %v5641, %v5851
        %v5901 = vrot.slane %v5583, 1
        %v5902 = vrot.slane %v5584, 1
        %v5903 = vsel %vm2456, %v5901, %v5902
        %v5904 = vrot.slane %v5585, 1
        %v5905 = vsel %vm2456, %v5902, %v5904
        %v5906 = vrot.slane %v5586, 1
        %v5907 = vrot.slane %v5587, 1
        %v5908 = vsel %vm2456, %v5906, %v5907
        %v5909 = vrot.slane %v5588, 1
        %v5910 = vsel %vm2456, %v5907, %v5909
        %v5911 = vrot.slane %v5589, 1
        %v5912 = vrot.slane %v5590, 1
        %v5913 = vsel %vm2456, %v5911, %v5912
        %v5914 = vrot.slane %v5591, 1
        %v5915 = vsel %vm2456, %v5912, %v5914
        %v5916 = vrot.slane %v5592, 1
        %v5917 = vrot.slane %v5593, 1
        %v5918 = vsel %vm2456, %v5916, %v5917
        %v5919 = vrot.slane %v5594, 1
        %v5920 = vsel %vm2456, %v5917, %v5919
        %v5921 = vrot.slane %v5595, 1
        %v5922 = vrot.slane %v5596, 1
        %v5923 = vsel %vm2456, %v5921, %v5922
        %v5924 = vrot.slane %v5597, 1
        %v5925 = vsel %vm2456, %v5922, %v5924
        %v5926 = vrot.slane %v5598, 1
        %v5927 = vrot.slane %v5599, 1
        %v5928 = vsel %vm2456, %v5926, %v5927
        %v5929 = vrot.slane %v5600, 1
        %v5930 = vsel %vm2456, %v5927, %v5929
        %v5931 = vrot.slane %v5601, 1
        %v5932 = vrot.slane %v5602, 1
        %v5933 = vsel %vm2456, %v5931, %v5932
        %v5934 = vrot.slane %v5603, 1
        %v5935 = vsel %vm2456, %v5932, %v5934
        %v5936 = vrot.slane %v5604, 1
        %v5937 = vrot.slane %v5605, 1
        %v5938 = vsel %vm2456, %v5936, %v5937
        %v5939 = vrot.slane %v5606, 1
        %v5940 = vsel %vm2456, %v5937, %v5939
        %v5941 = vrot.slane %v5607, 1
        %v5942 = vrot.slane %v5608, 1
        %v5943 = vsel %vm2456, %v5941, %v5942
        %v5944 = vrot.slane %v5609, 1
        %v5945 = vsel %vm2456, %v5942, %v5944
        %v5946 = vrot.slane %v5610, 1
        %v5947 = vrot.slane %v5611, 1
        %v5948 = vsel %vm2456, %v5946, %v5947
        %v5949 = vrot.slane %v5612, 1
        %v5950 = vsel %vm2456, %v5947, %v5949
        %v5951 = vrot.slane %v5613, 1
        %v5952 = vrot.slane %v5614, 1
        %v5953 = vsel %vm2456, %v5951, %v5952
        %v5954 = vrot.slane %v5615, 1
        %v5955 = vsel %vm2456, %v5952, %v5954
        %v5956 = vrot.slane %v5616, 1
        %v5957 = vrot.slane %v5617, 1
        %v5958 = vsel %vm2456, %v5956, %v5957
        %v5959 = vrot.slane %v5618, 1
        %v5960 = vsel %vm2456, %v5957, %v5959
        %v5961 = vrot.slane %v5619, 1
        %v5962 = vrot.slane %v5620, 1
        %v5963 = vsel %vm2456, %v5961, %v5962
        %v5964 = vrot.slane %v5621, 1
        %v5965 = vsel %vm2456, %v5962, %v5964
        %v5966 = vrot.slane %v5622, 1
        %v5967 = vrot.slane %v5623, 1
        %v5968 = vsel %vm2456, %v5966, %v5967
        %v5969 = vrot.slane %v5624, 1
        %v5970 = vsel %vm2456, %v5967, %v5969
        %v5971 = vrot.slane %v5625, 1
        %v5972 = vrot.slane %v5626, 1
        %v5973 = vsel %vm2456, %v5971, %v5972
        %v5974 = vrot.slane %v5627, 1
        %v5975 = vsel %vm2456, %v5972, %v5974
        %v5976 = vrot.slane %v5628, 1
        %v5977 = vrot.slane %v5629, 1
        %v5978 = vsel %vm2456, %v5976, %v5977
        %v5979 = vrot.slane %v5630, 1
        %v5980 = vsel %vm2456, %v5977, %v5979
        %s5981 = scalar_lea.vmem [#allocation11], 16
        %v5982 = vld [vmem:[%s5981] sm:$0xff]
        %v5983 = vld [vmem:[%s5981 + $0x8] sm:$0xff]
        %v5984 = vsel %vm428, %v5903, 0
        %v5986 = vsel %vm428, %v5905, 0
        %v5988 = vsel %vm428, %v5908, 0
        %v5990 = vsel %vm428, %v5910, 0
        %v5992 = vsel %vm428, %v5913, 0
        %v5994 = vsel %vm428, %v5915, 0
        %v5996 = vsel %vm428, %v5918, 0
        %v5998 = vsel %vm428, %v5920, 0
        %v6000 = vsel %vm428, %v5923, 0
        %v6002 = vsel %vm428, %v5925, 0
        %v6004 = vsel %vm428, %v5928, 0
        %v6006 = vsel %vm428, %v5930, 0
        %v6008 = vsel %vm428, %v5933, 0
        %v6010 = vsel %vm428, %v5935, 0
        %v6012 = vsel %vm428, %v5938, 0
        %v6014 = vsel %vm428, %v5940, 0
        %v6016 = vsel %vm428, %v5943, 0
        %v6018 = vsel %vm428, %v5945, 0
        %v6020 = vsel %vm428, %v5948, 0
        %v6022 = vsel %vm428, %v5950, 0
        %v6024 = vsel %vm428, %v5953, 0
        %v6026 = vsel %vm428, %v5955, 0
        %v6028 = vsel %vm428, %v5958, 0
        %v6030 = vsel %vm428, %v5960, 0
        %v6032 = vsel %vm428, %v5963, 0
        %v6034 = vsel %vm428, %v5965, 0
        %v6036 = vsel %vm428, %v5968, 0
        %v6038 = vsel %vm428, %v5970, 0
        %v6040 = vsel %vm428, %v5973, 0
        %v6042 = vsel %vm428, %v5975, 0
        %v6044 = vsel %vm428, %v5978, 0
        %v6046 = vsel %vm428, %v5980, 0
        %6048 = vmatpush.msra.mxu0 0.0
        %6049 = vmatpush.msra.mxu0 0.0
        %6050 = vmatpush.msra.mxu0 0.0
        %6051 = vmatpush.msra.mxu0 0.0
        %6052 = vmatpush.msra.mxu0 0.0
        %6053 = vmatpush.msra.mxu0 0.0
        %6054 = vmatpush.msra.mxu0 0.0
        %6055 = vmatpush.msra.mxu0 0.0
        %6056 = vmatpush.msra.mxu0 0.0
        %6057 = vmatpush.msra.mxu0 0.0
        %6058 = vmatpush.msra.mxu0 0.0
        %6059 = vmatpush.msra.mxu0 0.0
        %6060 = vmatpush.msra.mxu0 0.0
        %6061 = vmatpush.msra.mxu0 0.0
        %6062 = vmatpush.msra.mxu0 %v5983
        %6063 = vmatpush.msra.mxu0 %v5982
        %6064 = vmatmul.f32.gmra.mxu0 %v5984
        %v6065 = vpop.f32.mrf.mxu0
        %v6066 = vadd.f32 0.0, %v6065
        %6067 = vmatmul.f32.gmra.mxu0 %v5986
        %v6068 = vpop.f32.mrf.mxu0
        %v6069 = vadd.f32 0.0, %v6068
        %6070 = vmatmul.f32.gmra.mxu0 %v5988
        %v6071 = vpop.f32.mrf.mxu0
        %v6072 = vadd.f32 0.0, %v6071
        %6073 = vmatmul.f32.gmra.mxu0 %v5990
        %v6074 = vpop.f32.mrf.mxu0
        %v6075 = vadd.f32 0.0, %v6074
        %6076 = vmatmul.f32.gmra.mxu0 %v5992
        %v6077 = vpop.f32.mrf.mxu0
        %v6078 = vadd.f32 0.0, %v6077
        %6079 = vmatmul.f32.gmra.mxu0 %v5994
        %v6080 = vpop.f32.mrf.mxu0
        %v6081 = vadd.f32 0.0, %v6080
        %6082 = vmatmul.f32.gmra.mxu0 %v5996
        %v6083 = vpop.f32.mrf.mxu0
        %v6084 = vadd.f32 0.0, %v6083
        %6085 = vmatmul.f32.gmra.mxu0 %v5998
        %v6086 = vpop.f32.mrf.mxu0
        %v6087 = vadd.f32 0.0, %v6086
        %6088 = vmatmul.f32.gmra.mxu0 %v6000
        %v6089 = vpop.f32.mrf.mxu0
        %v6090 = vadd.f32 0.0, %v6089
        %6091 = vmatmul.f32.gmra.mxu0 %v6002
        %v6092 = vpop.f32.mrf.mxu0
        %v6093 = vadd.f32 0.0, %v6092
        %6094 = vmatmul.f32.gmra.mxu0 %v6004
        %v6095 = vpop.f32.mrf.mxu0
        %v6096 = vadd.f32 0.0, %v6095
        %6097 = vmatmul.f32.gmra.mxu0 %v6006
        %v6098 = vpop.f32.mrf.mxu0
        %v6099 = vadd.f32 0.0, %v6098
        %6100 = vmatmul.f32.gmra.mxu0 %v6008
        %v6101 = vpop.f32.mrf.mxu0
        %v6102 = vadd.f32 0.0, %v6101
        %6103 = vmatmul.f32.gmra.mxu0 %v6010
        %v6104 = vpop.f32.mrf.mxu0
        %v6105 = vadd.f32 0.0, %v6104
        %6106 = vmatmul.f32.gmra.mxu0 %v6012
        %v6107 = vpop.f32.mrf.mxu0
        %v6108 = vadd.f32 0.0, %v6107
        %6109 = vmatmul.f32.gmra.mxu0 %v6014
        %v6110 = vpop.f32.mrf.mxu0
        %v6111 = vadd.f32 0.0, %v6110
        %6112 = vmatmul.f32.gmra.mxu0 %v6016
        %v6113 = vpop.f32.mrf.mxu0
        %v6114 = vadd.f32 0.0, %v6113
        %6115 = vmatmul.f32.gmra.mxu0 %v6018
        %v6116 = vpop.f32.mrf.mxu0
        %v6117 = vadd.f32 0.0, %v6116
        %6118 = vmatmul.f32.gmra.mxu0 %v6020
        %v6119 = vpop.f32.mrf.mxu0
        %v6120 = vadd.f32 0.0, %v6119
        %6121 = vmatmul.f32.gmra.mxu0 %v6022
        %v6122 = vpop.f32.mrf.mxu0
        %v6123 = vadd.f32 0.0, %v6122
        %6124 = vmatmul.f32.gmra.mxu0 %v6024
        %v6125 = vpop.f32.mrf.mxu0
        %v6126 = vadd.f32 0.0, %v6125
        %6127 = vmatmul.f32.gmra.mxu0 %v6026
        %v6128 = vpop.f32.mrf.mxu0
        %v6129 = vadd.f32 0.0, %v6128
        %6130 = vmatmul.f32.gmra.mxu0 %v6028
        %v6131 = vpop.f32.mrf.mxu0
        %v6132 = vadd.f32 0.0, %v6131
        %6133 = vmatmul.f32.gmra.mxu0 %v6030
        %v6134 = vpop.f32.mrf.mxu0
        %v6135 = vadd.f32 0.0, %v6134
        %6136 = vmatmul.f32.gmra.mxu0 %v6032
        %v6137 = vpop.f32.mrf.mxu0
        %v6138 = vadd.f32 0.0, %v6137
        %6139 = vmatmul.f32.gmra.mxu0 %v6034
        %v6140 = vpop.f32.mrf.mxu0
        %v6141 = vadd.f32 0.0, %v6140
        %6142 = vmatmul.f32.gmra.mxu0 %v6036
        %v6143 = vpop.f32.mrf.mxu0
        %v6144 = vadd.f32 0.0, %v6143
        %6145 = vmatmul.f32.gmra.mxu0 %v6038
        %v6146 = vpop.f32.mrf.mxu0
        %v6147 = vadd.f32 0.0, %v6146
        %6148 = vmatmul.f32.gmra.mxu0 %v6040
        %v6149 = vpop.f32.mrf.mxu0
        %v6150 = vadd.f32 0.0, %v6149
        %6151 = vmatmul.f32.gmra.mxu0 %v6042
        %v6152 = vpop.f32.mrf.mxu0
        %v6153 = vadd.f32 0.0, %v6152
        %6154 = vmatmul.f32.gmra.mxu0 %v6044
        %v6155 = vpop.f32.mrf.mxu0
        %v6156 = vadd.f32 0.0, %v6155
        %6157 = vmatmul.f32.gmra.mxu0 %v6046
        %v6158 = vpop.f32.mrf.mxu0
        %v6159 = vadd.f32 0.0, %v6158
        %6160 = vdwg.mxu0
        %v6161 = vadd.f32 %v5853, %v6066
        %v6162 = vadd.f32 %v5854, %v6069
        %v6163 = vadd.f32 %v5855, %v6072
        %v6164 = vadd.f32 %v5856, %v6075
        %v6165 = vadd.f32 %v5857, %v6078
        %v6166 = vadd.f32 %v5858, %v6081
        %v6167 = vadd.f32 %v5859, %v6084
        %v6168 = vadd.f32 %v5860, %v6087
        %v6169 = vadd.f32 %v5861, %v6090
        %v6170 = vadd.f32 %v5862, %v6093
        %v6171 = vadd.f32 %v5863, %v6096
        %v6172 = vadd.f32 %v5864, %v6099
        %v6173 = vadd.f32 %v5865, %v6102
        %v6174 = vadd.f32 %v5866, %v6105
        %v6175 = vadd.f32 %v5867, %v6108
        %v6176 = vadd.f32 %v5868, %v6111
        %v6177 = vadd.f32 %v5869, %v6114
        %v6178 = vadd.f32 %v5870, %v6117
        %v6179 = vadd.f32 %v5871, %v6120
        %v6180 = vadd.f32 %v5872, %v6123
        %v6181 = vadd.f32 %v5873, %v6126
        %v6182 = vadd.f32 %v5874, %v6129
        %v6183 = vadd.f32 %v5875, %v6132
        %v6184 = vadd.f32 %v5876, %v6135
        %v6185 = vadd.f32 %v5877, %v6138
        %v6186 = vadd.f32 %v5878, %v6141
        %v6187 = vadd.f32 %v5879, %v6144
        %v6188 = vadd.f32 %v5880, %v6147
        %v6189 = vadd.f32 %v5881, %v6150
        %v6190 = vadd.f32 %v5882, %v6153
        %v6191 = vadd.f32 %v5883, %v6156
        %v6192 = vadd.f32 %v5884, %v6159
        %v6193 = vrot.slane %v5583, 2
        %v6194 = vrot.slane %v5584, 2
        %v6195 = vsel %vm3057, %v6193, %v6194
        %v6196 = vrot.slane %v5585, 2
        %v6197 = vsel %vm3057, %v6194, %v6196
        %v6198 = vrot.slane %v5586, 2
        %v6199 = vrot.slane %v5587, 2
        %v6200 = vsel %vm3057, %v6198, %v6199
        %v6201 = vrot.slane %v5588, 2
        %v6202 = vsel %vm3057, %v6199, %v6201
        %v6203 = vrot.slane %v5589, 2
        %v6204 = vrot.slane %v5590, 2
        %v6205 = vsel %vm3057, %v6203, %v6204
        %v6206 = vrot.slane %v5591, 2
        %v6207 = vsel %vm3057, %v6204, %v6206
        %v6208 = vrot.slane %v5592, 2
        %v6209 = vrot.slane %v5593, 2
        %v6210 = vsel %vm3057, %v6208, %v6209
        %v6211 = vrot.slane %v5594, 2
        %v6212 = vsel %vm3057, %v6209, %v6211
        %v6213 = vrot.slane %v5595, 2
        %v6214 = vrot.slane %v5596, 2
        %v6215 = vsel %vm3057, %v6213, %v6214
        %v6216 = vrot.slane %v5597, 2
        %v6217 = vsel %vm3057, %v6214, %v6216
        %v6218 = vrot.slane %v5598, 2
        %v6219 = vrot.slane %v5599, 2
        %v6220 = vsel %vm3057, %v6218, %v6219
        %v6221 = vrot.slane %v5600, 2
        %v6222 = vsel %vm3057, %v6219, %v6221
        %v6223 = vrot.slane %v5601, 2
        %v6224 = vrot.slane %v5602, 2
        %v6225 = vsel %vm3057, %v6223, %v6224
        %v6226 = vrot.slane %v5603, 2
        %v6227 = vsel %vm3057, %v6224, %v6226
        %v6228 = vrot.slane %v5604, 2
        %v6229 = vrot.slane %v5605, 2
        %v6230 = vsel %vm3057, %v6228, %v6229
        %v6231 = vrot.slane %v5606, 2
        %v6232 = vsel %vm3057, %v6229, %v6231
        %v6233 = vrot.slane %v5607, 2
        %v6234 = vrot.slane %v5608, 2
        %v6235 = vsel %vm3057, %v6233, %v6234
        %v6236 = vrot.slane %v5609, 2
        %v6237 = vsel %vm3057, %v6234, %v6236
        %v6238 = vrot.slane %v5610, 2
        %v6239 = vrot.slane %v5611, 2
        %v6240 = vsel %vm3057, %v6238, %v6239
        %v6241 = vrot.slane %v5612, 2
        %v6242 = vsel %vm3057, %v6239, %v6241
        %v6243 = vrot.slane %v5613, 2
        %v6244 = vrot.slane %v5614, 2
        %v6245 = vsel %vm3057, %v6243, %v6244
        %v6246 = vrot.slane %v5615, 2
        %v6247 = vsel %vm3057, %v6244, %v6246
        %v6248 = vrot.slane %v5616, 2
        %v6249 = vrot.slane %v5617, 2
        %v6250 = vsel %vm3057, %v6248, %v6249
        %v6251 = vrot.slane %v5618, 2
        %v6252 = vsel %vm3057, %v6249, %v6251
        %v6253 = vrot.slane %v5619, 2
        %v6254 = vrot.slane %v5620, 2
        %v6255 = vsel %vm3057, %v6253, %v6254
        %v6256 = vrot.slane %v5621, 2
        %v6257 = vsel %vm3057, %v6254, %v6256
        %v6258 = vrot.slane %v5622, 2
        %v6259 = vrot.slane %v5623, 2
        %v6260 = vsel %vm3057, %v6258, %v6259
        %v6261 = vrot.slane %v5624, 2
        %v6262 = vsel %vm3057, %v6259, %v6261
        %v6263 = vrot.slane %v5625, 2
        %v6264 = vrot.slane %v5626, 2
        %v6265 = vsel %vm3057, %v6263, %v6264
        %v6266 = vrot.slane %v5627, 2
        %v6267 = vsel %vm3057, %v6264, %v6266
        %v6268 = vrot.slane %v5628, 2
        %v6269 = vrot.slane %v5629, 2
        %v6270 = vsel %vm3057, %v6268, %v6269
        %v6271 = vrot.slane %v5630, 2
        %v6272 = vsel %vm3057, %v6269, %v6271
        %s6273 = scalar_lea.vmem [#allocation11], 32
        %v6274 = vld [vmem:[%s6273] sm:$0xff]
        %v6275 = vld [vmem:[%s6273 + $0x8] sm:$0xff]
        %v6276 = vsel %vm428, %v6195, 0
        %v6278 = vsel %vm428, %v6197, 0
        %v6280 = vsel %vm428, %v6200, 0
        %v6282 = vsel %vm428, %v6202, 0
        %v6284 = vsel %vm428, %v6205, 0
        %v6286 = vsel %vm428, %v6207, 0
        %v6288 = vsel %vm428, %v6210, 0
        %v6290 = vsel %vm428, %v6212, 0
        %v6292 = vsel %vm428, %v6215, 0
        %v6294 = vsel %vm428, %v6217, 0
        %v6296 = vsel %vm428, %v6220, 0
        %v6298 = vsel %vm428, %v6222, 0
        %v6300 = vsel %vm428, %v6225, 0
        %v6302 = vsel %vm428, %v6227, 0
        %v6304 = vsel %vm428, %v6230, 0
        %v6306 = vsel %vm428, %v6232, 0
        %v6308 = vsel %vm428, %v6235, 0
        %v6310 = vsel %vm428, %v6237, 0
        %v6312 = vsel %vm428, %v6240, 0
        %v6314 = vsel %vm428, %v6242, 0
        %v6316 = vsel %vm428, %v6245, 0
        %v6318 = vsel %vm428, %v6247, 0
        %v6320 = vsel %vm428, %v6250, 0
        %v6322 = vsel %vm428, %v6252, 0
        %v6324 = vsel %vm428, %v6255, 0
        %v6326 = vsel %vm428, %v6257, 0
        %v6328 = vsel %vm428, %v6260, 0
        %v6330 = vsel %vm428, %v6262, 0
        %v6332 = vsel %vm428, %v6265, 0
        %v6334 = vsel %vm428, %v6267, 0
        %v6336 = vsel %vm428, %v6270, 0
        %v6338 = vsel %vm428, %v6272, 0
        %6340 = vmatpush.msra.mxu0 0.0
        %6341 = vmatpush.msra.mxu0 0.0
        %6342 = vmatpush.msra.mxu0 0.0
        %6343 = vmatpush.msra.mxu0 0.0
        %6344 = vmatpush.msra.mxu0 0.0
        %6345 = vmatpush.msra.mxu0 0.0
        %6346 = vmatpush.msra.mxu0 0.0
        %6347 = vmatpush.msra.mxu0 0.0
        %6348 = vmatpush.msra.mxu0 0.0
        %6349 = vmatpush.msra.mxu0 0.0
        %6350 = vmatpush.msra.mxu0 0.0
        %6351 = vmatpush.msra.mxu0 0.0
        %6352 = vmatpush.msra.mxu0 0.0
        %6353 = vmatpush.msra.mxu0 0.0
        %6354 = vmatpush.msra.mxu0 %v6275
        %6355 = vmatpush.msra.mxu0 %v6274
        %6356 = vmatmul.f32.gmra.mxu0 %v6276
        %v6357 = vpop.f32.mrf.mxu0
        %v6358 = vadd.f32 0.0, %v6357
        %6359 = vmatmul.f32.gmra.mxu0 %v6278
        %v6360 = vpop.f32.mrf.mxu0
        %v6361 = vadd.f32 0.0, %v6360
        %6362 = vmatmul.f32.gmra.mxu0 %v6280
        %v6363 = vpop.f32.mrf.mxu0
        %v6364 = vadd.f32 0.0, %v6363
        %6365 = vmatmul.f32.gmra.mxu0 %v6282
        %v6366 = vpop.f32.mrf.mxu0
        %v6367 = vadd.f32 0.0, %v6366
        %6368 = vmatmul.f32.gmra.mxu0 %v6284
        %v6369 = vpop.f32.mrf.mxu0
        %v6370 = vadd.f32 0.0, %v6369
        %6371 = vmatmul.f32.gmra.mxu0 %v6286
        %v6372 = vpop.f32.mrf.mxu0
        %v6373 = vadd.f32 0.0, %v6372
        %6374 = vmatmul.f32.gmra.mxu0 %v6288
        %v6375 = vpop.f32.mrf.mxu0
        %v6376 = vadd.f32 0.0, %v6375
        %6377 = vmatmul.f32.gmra.mxu0 %v6290
        %v6378 = vpop.f32.mrf.mxu0
        %v6379 = vadd.f32 0.0, %v6378
        %6380 = vmatmul.f32.gmra.mxu0 %v6292
        %v6381 = vpop.f32.mrf.mxu0
        %v6382 = vadd.f32 0.0, %v6381
        %6383 = vmatmul.f32.gmra.mxu0 %v6294
        %v6384 = vpop.f32.mrf.mxu0
        %v6385 = vadd.f32 0.0, %v6384
        %6386 = vmatmul.f32.gmra.mxu0 %v6296
        %v6387 = vpop.f32.mrf.mxu0
        %v6388 = vadd.f32 0.0, %v6387
        %6389 = vmatmul.f32.gmra.mxu0 %v6298
        %v6390 = vpop.f32.mrf.mxu0
        %v6391 = vadd.f32 0.0, %v6390
        %6392 = vmatmul.f32.gmra.mxu0 %v6300
        %v6393 = vpop.f32.mrf.mxu0
        %v6394 = vadd.f32 0.0, %v6393
        %6395 = vmatmul.f32.gmra.mxu0 %v6302
        %v6396 = vpop.f32.mrf.mxu0
        %v6397 = vadd.f32 0.0, %v6396
        %6398 = vmatmul.f32.gmra.mxu0 %v6304
        %v6399 = vpop.f32.mrf.mxu0
        %v6400 = vadd.f32 0.0, %v6399
        %6401 = vmatmul.f32.gmra.mxu0 %v6306
        %v6402 = vpop.f32.mrf.mxu0
        %v6403 = vadd.f32 0.0, %v6402
        %6404 = vmatmul.f32.gmra.mxu0 %v6308
        %v6405 = vpop.f32.mrf.mxu0
        %v6406 = vadd.f32 0.0, %v6405
        %6407 = vmatmul.f32.gmra.mxu0 %v6310
        %v6408 = vpop.f32.mrf.mxu0
        %v6409 = vadd.f32 0.0, %v6408
        %6410 = vmatmul.f32.gmra.mxu0 %v6312
        %v6411 = vpop.f32.mrf.mxu0
        %v6412 = vadd.f32 0.0, %v6411
        %6413 = vmatmul.f32.gmra.mxu0 %v6314
        %v6414 = vpop.f32.mrf.mxu0
        %v6415 = vadd.f32 0.0, %v6414
        %6416 = vmatmul.f32.gmra.mxu0 %v6316
        %v6417 = vpop.f32.mrf.mxu0
        %v6418 = vadd.f32 0.0, %v6417
        %6419 = vmatmul.f32.gmra.mxu0 %v6318
        %v6420 = vpop.f32.mrf.mxu0
        %v6421 = vadd.f32 0.0, %v6420
        %6422 = vmatmul.f32.gmra.mxu0 %v6320
        %v6423 = vpop.f32.mrf.mxu0
        %v6424 = vadd.f32 0.0, %v6423
        %6425 = vmatmul.f32.gmra.mxu0 %v6322
        %v6426 = vpop.f32.mrf.mxu0
        %v6427 = vadd.f32 0.0, %v6426
        %6428 = vmatmul.f32.gmra.mxu0 %v6324
        %v6429 = vpop.f32.mrf.mxu0
        %v6430 = vadd.f32 0.0, %v6429
        %6431 = vmatmul.f32.gmra.mxu0 %v6326
        %v6432 = vpop.f32.mrf.mxu0
        %v6433 = vadd.f32 0.0, %v6432
        %6434 = vmatmul.f32.gmra.mxu0 %v6328
        %v6435 = vpop.f32.mrf.mxu0
        %v6436 = vadd.f32 0.0, %v6435
        %6437 = vmatmul.f32.gmra.mxu0 %v6330
        %v6438 = vpop.f32.mrf.mxu0
        %v6439 = vadd.f32 0.0, %v6438
        %6440 = vmatmul.f32.gmra.mxu0 %v6332
        %v6441 = vpop.f32.mrf.mxu0
        %v6442 = vadd.f32 0.0, %v6441
        %6443 = vmatmul.f32.gmra.mxu0 %v6334
        %v6444 = vpop.f32.mrf.mxu0
        %v6445 = vadd.f32 0.0, %v6444
        %6446 = vmatmul.f32.gmra.mxu0 %v6336
        %v6447 = vpop.f32.mrf.mxu0
        %v6448 = vadd.f32 0.0, %v6447
        %6449 = vmatmul.f32.gmra.mxu0 %v6338
        %v6450 = vpop.f32.mrf.mxu0
        %v6451 = vadd.f32 0.0, %v6450
        %6452 = vdwg.mxu0
        %v6453 = vadd.f32 %v6161, %v6358
        %v6454 = vadd.f32 %v6162, %v6361
        %v6455 = vadd.f32 %v6163, %v6364
        %v6456 = vadd.f32 %v6164, %v6367
        %v6457 = vadd.f32 %v6165, %v6370
        %v6458 = vadd.f32 %v6166, %v6373
        %v6459 = vadd.f32 %v6167, %v6376
        %v6460 = vadd.f32 %v6168, %v6379
        %v6461 = vadd.f32 %v6169, %v6382
        %v6462 = vadd.f32 %v6170, %v6385
        %v6463 = vadd.f32 %v6171, %v6388
        %v6464 = vadd.f32 %v6172, %v6391
        %v6465 = vadd.f32 %v6173, %v6394
        %v6466 = vadd.f32 %v6174, %v6397
        %v6467 = vadd.f32 %v6175, %v6400
        %v6468 = vadd.f32 %v6176, %v6403
        %v6469 = vadd.f32 %v6177, %v6406
        %v6470 = vadd.f32 %v6178, %v6409
        %v6471 = vadd.f32 %v6179, %v6412
        %v6472 = vadd.f32 %v6180, %v6415
        %v6473 = vadd.f32 %v6181, %v6418
        %v6474 = vadd.f32 %v6182, %v6421
        %v6475 = vadd.f32 %v6183, %v6424
        %v6476 = vadd.f32 %v6184, %v6427
        %v6477 = vadd.f32 %v6185, %v6430
        %v6478 = vadd.f32 %v6186, %v6433
        %v6479 = vadd.f32 %v6187, %v6436
        %v6480 = vadd.f32 %v6188, %v6439
        %v6481 = vadd.f32 %v6189, %v6442
        %v6482 = vadd.f32 %v6190, %v6445
        %v6483 = vadd.f32 %v6191, %v6448
        %v6484 = vadd.f32 %v6192, %v6451
        %s6485 = scalar_lea.vmem [#allocation11], 48
        %v6486 = vld [vmem:[%s6485] sm:$0xff]
        %v6487 = vld [vmem:[%s6485 + $0x8] sm:$0xff]
        %v6489 = vsel %vm428, %v5631, 0
        %v6492 = vsel %vm428, %v5632, 0
        %6494 = vmatpush.msra.mxu0 0.0
        %6495 = vmatpush.msra.mxu0 0.0
        %6496 = vmatpush.msra.mxu0 0.0
        %6497 = vmatpush.msra.mxu0 0.0
        %6498 = vmatpush.msra.mxu0 0.0
        %6499 = vmatpush.msra.mxu0 0.0
        %6500 = vmatpush.msra.mxu0 0.0
        %6501 = vmatpush.msra.mxu0 0.0
        %6502 = vmatpush.msra.mxu0 0.0
        %6503 = vmatpush.msra.mxu0 0.0
        %6504 = vmatpush.msra.mxu0 0.0
        %6505 = vmatpush.msra.mxu0 0.0
        %6506 = vmatpush.msra.mxu0 0.0
        %6507 = vmatpush.msra.mxu0 0.0
        %6508 = vmatpush.msra.mxu0 %v6487
        %6509 = vmatpush.msra.mxu0 %v6486
        %6510 = vmatmul.f32.gmra.mxu0 %v5651
        %v6511 = vpop.f32.mrf.mxu0
        %v6512 = vadd.f32 0.0, %v6511
        %6513 = vmatmul.f32.gmra.mxu0 %v5654
        %v6514 = vpop.f32.mrf.mxu0
        %v6515 = vadd.f32 0.0, %v6514
        %6516 = vmatmul.f32.gmra.mxu0 %v5657
        %v6517 = vpop.f32.mrf.mxu0
        %v6518 = vadd.f32 0.0, %v6517
        %6519 = vmatmul.f32.gmra.mxu0 %v5660
        %v6520 = vpop.f32.mrf.mxu0
        %v6521 = vadd.f32 0.0, %v6520
        %6522 = vmatmul.f32.gmra.mxu0 %v5663
        %v6523 = vpop.f32.mrf.mxu0
        %v6524 = vadd.f32 0.0, %v6523
        %6525 = vmatmul.f32.gmra.mxu0 %v5666
        %v6526 = vpop.f32.mrf.mxu0
        %v6527 = vadd.f32 0.0, %v6526
        %6528 = vmatmul.f32.gmra.mxu0 %v5669
        %v6529 = vpop.f32.mrf.mxu0
        %v6530 = vadd.f32 0.0, %v6529
        %6531 = vmatmul.f32.gmra.mxu0 %v5672
        %v6532 = vpop.f32.mrf.mxu0
        %v6533 = vadd.f32 0.0, %v6532
        %6534 = vmatmul.f32.gmra.mxu0 %v5675
        %v6535 = vpop.f32.mrf.mxu0
        %v6536 = vadd.f32 0.0, %v6535
        %6537 = vmatmul.f32.gmra.mxu0 %v5678
        %v6538 = vpop.f32.mrf.mxu0
        %v6539 = vadd.f32 0.0, %v6538
        %6540 = vmatmul.f32.gmra.mxu0 %v5681
        %v6541 = vpop.f32.mrf.mxu0
        %v6542 = vadd.f32 0.0, %v6541
        %6543 = vmatmul.f32.gmra.mxu0 %v5684
        %v6544 = vpop.f32.mrf.mxu0
        %v6545 = vadd.f32 0.0, %v6544
        %6546 = vmatmul.f32.gmra.mxu0 %v5687
        %v6547 = vpop.f32.mrf.mxu0
        %v6548 = vadd.f32 0.0, %v6547
        %6549 = vmatmul.f32.gmra.mxu0 %v5690
        %v6550 = vpop.f32.mrf.mxu0
        %v6551 = vadd.f32 0.0, %v6550
        %6552 = vmatmul.f32.gmra.mxu0 %v5693
        %v6553 = vpop.f32.mrf.mxu0
        %v6554 = vadd.f32 0.0, %v6553
        %6555 = vmatmul.f32.gmra.mxu0 %v5696
        %v6556 = vpop.f32.mrf.mxu0
        %v6557 = vadd.f32 0.0, %v6556
        %6558 = vmatmul.f32.gmra.mxu0 %v5699
        %v6559 = vpop.f32.mrf.mxu0
        %v6560 = vadd.f32 0.0, %v6559
        %6561 = vmatmul.f32.gmra.mxu0 %v5702
        %v6562 = vpop.f32.mrf.mxu0
        %v6563 = vadd.f32 0.0, %v6562
        %6564 = vmatmul.f32.gmra.mxu0 %v5705
        %v6565 = vpop.f32.mrf.mxu0
        %v6566 = vadd.f32 0.0, %v6565
        %6567 = vmatmul.f32.gmra.mxu0 %v5708
        %v6568 = vpop.f32.mrf.mxu0
        %v6569 = vadd.f32 0.0, %v6568
        %6570 = vmatmul.f32.gmra.mxu0 %v5711
        %v6571 = vpop.f32.mrf.mxu0
        %v6572 = vadd.f32 0.0, %v6571
        %6573 = vmatmul.f32.gmra.mxu0 %v5714
        %v6574 = vpop.f32.mrf.mxu0
        %v6575 = vadd.f32 0.0, %v6574
        %6576 = vmatmul.f32.gmra.mxu0 %v5717
        %v6577 = vpop.f32.mrf.mxu0
        %v6578 = vadd.f32 0.0, %v6577
        %6579 = vmatmul.f32.gmra.mxu0 %v5720
        %v6580 = vpop.f32.mrf.mxu0
        %v6581 = vadd.f32 0.0, %v6580
        %6582 = vmatmul.f32.gmra.mxu0 %v5723
        %v6583 = vpop.f32.mrf.mxu0
        %v6584 = vadd.f32 0.0, %v6583
        %6585 = vmatmul.f32.gmra.mxu0 %v5726
        %v6586 = vpop.f32.mrf.mxu0
        %v6587 = vadd.f32 0.0, %v6586
        %6588 = vmatmul.f32.gmra.mxu0 %v5729
        %v6589 = vpop.f32.mrf.mxu0
        %v6590 = vadd.f32 0.0, %v6589
        %6591 = vmatmul.f32.gmra.mxu0 %v5732
        %v6592 = vpop.f32.mrf.mxu0
        %v6593 = vadd.f32 0.0, %v6592
        %6594 = vmatmul.f32.gmra.mxu0 %v5735
        %v6595 = vpop.f32.mrf.mxu0
        %v6596 = vadd.f32 0.0, %v6595
        %6597 = vmatmul.f32.gmra.mxu0 %v5738
        %v6598 = vpop.f32.mrf.mxu0
        %v6599 = vadd.f32 0.0, %v6598
        %6600 = vmatmul.f32.gmra.mxu0 %v6489
        %v6601 = vpop.f32.mrf.mxu0
        %v6602 = vadd.f32 0.0, %v6601
        %6603 = vmatmul.f32.gmra.mxu0 %v6492
        %v6604 = vpop.f32.mrf.mxu0
        %v6605 = vadd.f32 0.0, %v6604
        %6606 = vdwg.mxu0
        %v6607 = vadd.f32 %v6453, %v6512
        %v6608 = vadd.f32 %v6454, %v6515
        %v6609 = vadd.f32 %v6455, %v6518
        %v6610 = vadd.f32 %v6456, %v6521
        %v6611 = vadd.f32 %v6457, %v6524
        %v6612 = vadd.f32 %v6458, %v6527
        %v6613 = vadd.f32 %v6459, %v6530
        %v6614 = vadd.f32 %v6460, %v6533
        %v6615 = vadd.f32 %v6461, %v6536
        %v6616 = vadd.f32 %v6462, %v6539
        %v6617 = vadd.f32 %v6463, %v6542
        %v6618 = vadd.f32 %v6464, %v6545
        %v6619 = vadd.f32 %v6465, %v6548
        %v6620 = vadd.f32 %v6466, %v6551
        %v6621 = vadd.f32 %v6467, %v6554
        %v6622 = vadd.f32 %v6468, %v6557
        %v6623 = vadd.f32 %v6469, %v6560
        %v6624 = vadd.f32 %v6470, %v6563
        %v6625 = vadd.f32 %v6471, %v6566
        %v6626 = vadd.f32 %v6472, %v6569
        %v6627 = vadd.f32 %v6473, %v6572
        %v6628 = vadd.f32 %v6474, %v6575
        %v6629 = vadd.f32 %v6475, %v6578
        %v6630 = vadd.f32 %v6476, %v6581
        %v6631 = vadd.f32 %v6477, %v6584
        %v6632 = vadd.f32 %v6478, %v6587
        %v6633 = vadd.f32 %v6479, %v6590
        %v6634 = vadd.f32 %v6480, %v6593
        %v6635 = vadd.f32 %v6481, %v6596
        %v6636 = vadd.f32 %v6482, %v6599
        %v6637 = vadd.f32 %v6483, %v6602
        %v6638 = vadd.f32 %v6484, %v6605
        %v6640 = vrot.slane %v5631, 1
        %v6641 = vrot.slane %v5632, 1
        %v6642 = vsel %vm2456, %v6640, %v6641
        %v6643 = vrot.slane %v5633, 1
        %v6644 = vsel %vm2456, %v6641, %v6643
        %s6645 = scalar_lea.vmem [#allocation11], 64
        %v6646 = vld [vmem:[%s6645] sm:$0xff]
        %v6647 = vld [vmem:[%s6645 + $0x8] sm:$0xff]
        %v6648 = vsel %vm428, %v6642, 0
        %v6650 = vsel %vm428, %v6644, 0
        %6652 = vmatpush.msra.mxu0 0.0
        %6653 = vmatpush.msra.mxu0 0.0
        %6654 = vmatpush.msra.mxu0 0.0
        %6655 = vmatpush.msra.mxu0 0.0
        %6656 = vmatpush.msra.mxu0 0.0
        %6657 = vmatpush.msra.mxu0 0.0
        %6658 = vmatpush.msra.mxu0 0.0
        %6659 = vmatpush.msra.mxu0 0.0
        %6660 = vmatpush.msra.mxu0 0.0
        %6661 = vmatpush.msra.mxu0 0.0
        %6662 = vmatpush.msra.mxu0 0.0
        %6663 = vmatpush.msra.mxu0 0.0
        %6664 = vmatpush.msra.mxu0 0.0
        %6665 = vmatpush.msra.mxu0 0.0
        %6666 = vmatpush.msra.mxu0 %v6647
        %6667 = vmatpush.msra.mxu0 %v6646
        %6668 = vmatmul.f32.gmra.mxu0 %v5988
        %v6669 = vpop.f32.mrf.mxu0
        %v6670 = vadd.f32 0.0, %v6669
        %6671 = vmatmul.f32.gmra.mxu0 %v5990
        %v6672 = vpop.f32.mrf.mxu0
        %v6673 = vadd.f32 0.0, %v6672
        %6674 = vmatmul.f32.gmra.mxu0 %v5992
        %v6675 = vpop.f32.mrf.mxu0
        %v6676 = vadd.f32 0.0, %v6675
        %6677 = vmatmul.f32.gmra.mxu0 %v5994
        %v6678 = vpop.f32.mrf.mxu0
        %v6679 = vadd.f32 0.0, %v6678
        %6680 = vmatmul.f32.gmra.mxu0 %v5996
        %v6681 = vpop.f32.mrf.mxu0
        %v6682 = vadd.f32 0.0, %v6681
        %6683 = vmatmul.f32.gmra.mxu0 %v5998
        %v6684 = vpop.f32.mrf.mxu0
        %v6685 = vadd.f32 0.0, %v6684
        %6686 = vmatmul.f32.gmra.mxu0 %v6000
        %v6687 = vpop.f32.mrf.mxu0
        %v6688 = vadd.f32 0.0, %v6687
        %6689 = vmatmul.f32.gmra.mxu0 %v6002
        %v6690 = vpop.f32.mrf.mxu0
        %v6691 = vadd.f32 0.0, %v6690
        %6692 = vmatmul.f32.gmra.mxu0 %v6004
        %v6693 = vpop.f32.mrf.mxu0
        %v6694 = vadd.f32 0.0, %v6693
        %6695 = vmatmul.f32.gmra.mxu0 %v6006
        %v6696 = vpop.f32.mrf.mxu0
        %v6697 = vadd.f32 0.0, %v6696
        %6698 = vmatmul.f32.gmra.mxu0 %v6008
        %v6699 = vpop.f32.mrf.mxu0
        %v6700 = vadd.f32 0.0, %v6699
        %6701 = vmatmul.f32.gmra.mxu0 %v6010
        %v6702 = vpop.f32.mrf.mxu0
        %v6703 = vadd.f32 0.0, %v6702
        %6704 = vmatmul.f32.gmra.mxu0 %v6012
        %v6705 = vpop.f32.mrf.mxu0
        %v6706 = vadd.f32 0.0, %v6705
        %6707 = vmatmul.f32.gmra.mxu0 %v6014
        %v6708 = vpop.f32.mrf.mxu0
        %v6709 = vadd.f32 0.0, %v6708
        %6710 = vmatmul.f32.gmra.mxu0 %v6016
        %v6711 = vpop.f32.mrf.mxu0
        %v6712 = vadd.f32 0.0, %v6711
        %6713 = vmatmul.f32.gmra.mxu0 %v6018
        %v6714 = vpop.f32.mrf.mxu0
        %v6715 = vadd.f32 0.0, %v6714
        %6716 = vmatmul.f32.gmra.mxu0 %v6020
        %v6717 = vpop.f32.mrf.mxu0
        %v6718 = vadd.f32 0.0, %v6717
        %6719 = vmatmul.f32.gmra.mxu0 %v6022
        %v6720 = vpop.f32.mrf.mxu0
        %v6721 = vadd.f32 0.0, %v6720
        %6722 = vmatmul.f32.gmra.mxu0 %v6024
        %v6723 = vpop.f32.mrf.mxu0
        %v6724 = vadd.f32 0.0, %v6723
        %6725 = vmatmul.f32.gmra.mxu0 %v6026
        %v6726 = vpop.f32.mrf.mxu0
        %v6727 = vadd.f32 0.0, %v6726
        %6728 = vmatmul.f32.gmra.mxu0 %v6028
        %v6729 = vpop.f32.mrf.mxu0
        %v6730 = vadd.f32 0.0, %v6729
        %6731 = vmatmul.f32.gmra.mxu0 %v6030
        %v6732 = vpop.f32.mrf.mxu0
        %v6733 = vadd.f32 0.0, %v6732
        %6734 = vmatmul.f32.gmra.mxu0 %v6032
        %v6735 = vpop.f32.mrf.mxu0
        %v6736 = vadd.f32 0.0, %v6735
        %6737 = vmatmul.f32.gmra.mxu0 %v6034
        %v6738 = vpop.f32.mrf.mxu0
        %v6739 = vadd.f32 0.0, %v6738
        %6740 = vmatmul.f32.gmra.mxu0 %v6036
        %v6741 = vpop.f32.mrf.mxu0
        %v6742 = vadd.f32 0.0, %v6741
        %6743 = vmatmul.f32.gmra.mxu0 %v6038
        %v6744 = vpop.f32.mrf.mxu0
        %v6745 = vadd.f32 0.0, %v6744
        %6746 = vmatmul.f32.gmra.mxu0 %v6040
        %v6747 = vpop.f32.mrf.mxu0
        %v6748 = vadd.f32 0.0, %v6747
        %6749 = vmatmul.f32.gmra.mxu0 %v6042
        %v6750 = vpop.f32.mrf.mxu0
        %v6751 = vadd.f32 0.0, %v6750
        %6752 = vmatmul.f32.gmra.mxu0 %v6044
        %v6753 = vpop.f32.mrf.mxu0
        %v6754 = vadd.f32 0.0, %v6753
        %6755 = vmatmul.f32.gmra.mxu0 %v6046
        %v6756 = vpop.f32.mrf.mxu0
        %v6757 = vadd.f32 0.0, %v6756
        %6758 = vmatmul.f32.gmra.mxu0 %v6648
        %v6759 = vpop.f32.mrf.mxu0
        %v6760 = vadd.f32 0.0, %v6759
        %6761 = vmatmul.f32.gmra.mxu0 %v6650
        %v6762 = vpop.f32.mrf.mxu0
        %v6763 = vadd.f32 0.0, %v6762
        %6764 = vdwg.mxu0
        %v6765 = vadd.f32 %v6607, %v6670
        %v6766 = vadd.f32 %v6608, %v6673
        %v6767 = vadd.f32 %v6609, %v6676
        %v6768 = vadd.f32 %v6610, %v6679
        %v6769 = vadd.f32 %v6611, %v6682
        %v6770 = vadd.f32 %v6612, %v6685
        %v6771 = vadd.f32 %v6613, %v6688
        %v6772 = vadd.f32 %v6614, %v6691
        %v6773 = vadd.f32 %v6615, %v6694
        %v6774 = vadd.f32 %v6616, %v6697
        %v6775 = vadd.f32 %v6617, %v6700
        %v6776 = vadd.f32 %v6618, %v6703
        %v6777 = vadd.f32 %v6619, %v6706
        %v6778 = vadd.f32 %v6620, %v6709
        %v6779 = vadd.f32 %v6621, %v6712
        %v6780 = vadd.f32 %v6622, %v6715
        %v6781 = vadd.f32 %v6623, %v6718
        %v6782 = vadd.f32 %v6624, %v6721
        %v6783 = vadd.f32 %v6625, %v6724
        %v6784 = vadd.f32 %v6626, %v6727
        %v6785 = vadd.f32 %v6627, %v6730
        %v6786 = vadd.f32 %v6628, %v6733
        %v6787 = vadd.f32 %v6629, %v6736
        %v6788 = vadd.f32 %v6630, %v6739
        %v6789 = vadd.f32 %v6631, %v6742
        %v6790 = vadd.f32 %v6632, %v6745
        %v6791 = vadd.f32 %v6633, %v6748
        %v6792 = vadd.f32 %v6634, %v6751
        %v6793 = vadd.f32 %v6635, %v6754
        %v6794 = vadd.f32 %v6636, %v6757
        %v6795 = vadd.f32 %v6637, %v6760
        %v6796 = vadd.f32 %v6638, %v6763
        %v6797 = vrot.slane %v5631, 2
        %v6798 = vrot.slane %v5632, 2
        %v6799 = vsel %vm3057, %v6797, %v6798
        %v6800 = vrot.slane %v5633, 2
        %v6801 = vsel %vm3057, %v6798, %v6800
        %s6802 = scalar_lea.vmem [#allocation11], 80
        %v6803 = vld [vmem:[%s6802] sm:$0xff]
        %v6804 = vld [vmem:[%s6802 + $0x8] sm:$0xff]
        %v6805 = vsel %vm428, %v6799, 0
        %v6807 = vsel %vm428, %v6801, 0
        %6809 = vmatpush.msra.mxu0 0.0
        %6810 = vmatpush.msra.mxu0 0.0
        %6811 = vmatpush.msra.mxu0 0.0
        %6812 = vmatpush.msra.mxu0 0.0
        %6813 = vmatpush.msra.mxu0 0.0
        %6814 = vmatpush.msra.mxu0 0.0
        %6815 = vmatpush.msra.mxu0 0.0
        %6816 = vmatpush.msra.mxu0 0.0
        %6817 = vmatpush.msra.mxu0 0.0
        %6818 = vmatpush.msra.mxu0 0.0
        %6819 = vmatpush.msra.mxu0 0.0
        %6820 = vmatpush.msra.mxu0 0.0
        %6821 = vmatpush.msra.mxu0 0.0
        %6822 = vmatpush.msra.mxu0 0.0
        %6823 = vmatpush.msra.mxu0 %v6804
        %6824 = vmatpush.msra.mxu0 %v6803
        %6825 = vmatmul.f32.gmra.mxu0 %v6280
        %v6826 = vpop.f32.mrf.mxu0
        %v6827 = vadd.f32 0.0, %v6826
        %6828 = vmatmul.f32.gmra.mxu0 %v6282
        %v6829 = vpop.f32.mrf.mxu0
        %v6830 = vadd.f32 0.0, %v6829
        %6831 = vmatmul.f32.gmra.mxu0 %v6284
        %v6832 = vpop.f32.mrf.mxu0
        %v6833 = vadd.f32 0.0, %v6832
        %6834 = vmatmul.f32.gmra.mxu0 %v6286
        %v6835 = vpop.f32.mrf.mxu0
        %v6836 = vadd.f32 0.0, %v6835
        %6837 = vmatmul.f32.gmra.mxu0 %v6288
        %v6838 = vpop.f32.mrf.mxu0
        %v6839 = vadd.f32 0.0, %v6838
        %6840 = vmatmul.f32.gmra.mxu0 %v6290
        %v6841 = vpop.f32.mrf.mxu0
        %v6842 = vadd.f32 0.0, %v6841
        %6843 = vmatmul.f32.gmra.mxu0 %v6292
        %v6844 = vpop.f32.mrf.mxu0
        %v6845 = vadd.f32 0.0, %v6844
        %6846 = vmatmul.f32.gmra.mxu0 %v6294
        %v6847 = vpop.f32.mrf.mxu0
        %v6848 = vadd.f32 0.0, %v6847
        %6849 = vmatmul.f32.gmra.mxu0 %v6296
        %v6850 = vpop.f32.mrf.mxu0
        %v6851 = vadd.f32 0.0, %v6850
        %6852 = vmatmul.f32.gmra.mxu0 %v6298
        %v6853 = vpop.f32.mrf.mxu0
        %v6854 = vadd.f32 0.0, %v6853
        %6855 = vmatmul.f32.gmra.mxu0 %v6300
        %v6856 = vpop.f32.mrf.mxu0
        %v6857 = vadd.f32 0.0, %v6856
        %6858 = vmatmul.f32.gmra.mxu0 %v6302
        %v6859 = vpop.f32.mrf.mxu0
        %v6860 = vadd.f32 0.0, %v6859
        %6861 = vmatmul.f32.gmra.mxu0 %v6304
        %v6862 = vpop.f32.mrf.mxu0
        %v6863 = vadd.f32 0.0, %v6862
        %6864 = vmatmul.f32.gmra.mxu0 %v6306
        %v6865 = vpop.f32.mrf.mxu0
        %v6866 = vadd.f32 0.0, %v6865
        %6867 = vmatmul.f32.gmra.mxu0 %v6308
        %v6868 = vpop.f32.mrf.mxu0
        %v6869 = vadd.f32 0.0, %v6868
        %6870 = vmatmul.f32.gmra.mxu0 %v6310
        %v6871 = vpop.f32.mrf.mxu0
        %v6872 = vadd.f32 0.0, %v6871
        %6873 = vmatmul.f32.gmra.mxu0 %v6312
        %v6874 = vpop.f32.mrf.mxu0
        %v6875 = vadd.f32 0.0, %v6874
        %6876 = vmatmul.f32.gmra.mxu0 %v6314
        %v6877 = vpop.f32.mrf.mxu0
        %v6878 = vadd.f32 0.0, %v6877
        %6879 = vmatmul.f32.gmra.mxu0 %v6316
        %v6880 = vpop.f32.mrf.mxu0
        %v6881 = vadd.f32 0.0, %v6880
        %6882 = vmatmul.f32.gmra.mxu0 %v6318
        %v6883 = vpop.f32.mrf.mxu0
        %v6884 = vadd.f32 0.0, %v6883
        %6885 = vmatmul.f32.gmra.mxu0 %v6320
        %v6886 = vpop.f32.mrf.mxu0
        %v6887 = vadd.f32 0.0, %v6886
        %6888 = vmatmul.f32.gmra.mxu0 %v6322
        %v6889 = vpop.f32.mrf.mxu0
        %v6890 = vadd.f32 0.0, %v6889
        %6891 = vmatmul.f32.gmra.mxu0 %v6324
        %v6892 = vpop.f32.mrf.mxu0
        %v6893 = vadd.f32 0.0, %v6892
        %6894 = vmatmul.f32.gmra.mxu0 %v6326
        %v6895 = vpop.f32.mrf.mxu0
        %v6896 = vadd.f32 0.0, %v6895
        %6897 = vmatmul.f32.gmra.mxu0 %v6328
        %v6898 = vpop.f32.mrf.mxu0
        %v6899 = vadd.f32 0.0, %v6898
        %6900 = vmatmul.f32.gmra.mxu0 %v6330
        %v6901 = vpop.f32.mrf.mxu0
        %v6902 = vadd.f32 0.0, %v6901
        %6903 = vmatmul.f32.gmra.mxu0 %v6332
        %v6904 = vpop.f32.mrf.mxu0
        %v6905 = vadd.f32 0.0, %v6904
        %6906 = vmatmul.f32.gmra.mxu0 %v6334
        %v6907 = vpop.f32.mrf.mxu0
        %v6908 = vadd.f32 0.0, %v6907
        %6909 = vmatmul.f32.gmra.mxu0 %v6336
        %v6910 = vpop.f32.mrf.mxu0
        %v6911 = vadd.f32 0.0, %v6910
        %6912 = vmatmul.f32.gmra.mxu0 %v6338
        %v6913 = vpop.f32.mrf.mxu0
        %v6914 = vadd.f32 0.0, %v6913
        %6915 = vmatmul.f32.gmra.mxu0 %v6805
        %v6916 = vpop.f32.mrf.mxu0
        %v6917 = vadd.f32 0.0, %v6916
        %6918 = vmatmul.f32.gmra.mxu0 %v6807
        %v6919 = vpop.f32.mrf.mxu0
        %v6920 = vadd.f32 0.0, %v6919
        %6921 = vdwg.mxu0
        %v6922 = vadd.f32 %v6765, %v6827
        %v6923 = vadd.f32 %v6766, %v6830
        %v6924 = vadd.f32 %v6767, %v6833
        %v6925 = vadd.f32 %v6768, %v6836
        %v6926 = vadd.f32 %v6769, %v6839
        %v6927 = vadd.f32 %v6770, %v6842
        %v6928 = vadd.f32 %v6771, %v6845
        %v6929 = vadd.f32 %v6772, %v6848
        %v6930 = vadd.f32 %v6773, %v6851
        %v6931 = vadd.f32 %v6774, %v6854
        %v6932 = vadd.f32 %v6775, %v6857
        %v6933 = vadd.f32 %v6776, %v6860
        %v6934 = vadd.f32 %v6777, %v6863
        %v6935 = vadd.f32 %v6778, %v6866
        %v6936 = vadd.f32 %v6779, %v6869
        %v6937 = vadd.f32 %v6780, %v6872
        %v6938 = vadd.f32 %v6781, %v6875
        %v6939 = vadd.f32 %v6782, %v6878
        %v6940 = vadd.f32 %v6783, %v6881
        %v6941 = vadd.f32 %v6784, %v6884
        %v6942 = vadd.f32 %v6785, %v6887
        %v6943 = vadd.f32 %v6786, %v6890
        %v6944 = vadd.f32 %v6787, %v6893
        %v6945 = vadd.f32 %v6788, %v6896
        %v6946 = vadd.f32 %v6789, %v6899
        %v6947 = vadd.f32 %v6790, %v6902
        %v6948 = vadd.f32 %v6791, %v6905
        %v6949 = vadd.f32 %v6792, %v6908
        %v6950 = vadd.f32 %v6793, %v6911
        %v6951 = vadd.f32 %v6794, %v6914
        %v6952 = vadd.f32 %v6795, %v6917
        %v6953 = vadd.f32 %v6796, %v6920
        %s6954 = scalar_lea.vmem [#allocation11], 96
        %v6955 = vld [vmem:[%s6954] sm:$0xff]
        %v6956 = vld [vmem:[%s6954 + $0x8] sm:$0xff]
        %v6958 = vsel %vm428, %v5634, 0
        %v6961 = vsel %vm428, %v5635, 0
        %6963 = vmatpush.msra.mxu0 0.0
        %6964 = vmatpush.msra.mxu0 0.0
        %6965 = vmatpush.msra.mxu0 0.0
        %6966 = vmatpush.msra.mxu0 0.0
        %6967 = vmatpush.msra.mxu0 0.0
        %6968 = vmatpush.msra.mxu0 0.0
        %6969 = vmatpush.msra.mxu0 0.0
        %6970 = vmatpush.msra.mxu0 0.0
        %6971 = vmatpush.msra.mxu0 0.0
        %6972 = vmatpush.msra.mxu0 0.0
        %6973 = vmatpush.msra.mxu0 0.0
        %6974 = vmatpush.msra.mxu0 0.0
        %6975 = vmatpush.msra.mxu0 0.0
        %6976 = vmatpush.msra.mxu0 0.0
        %6977 = vmatpush.msra.mxu0 %v6956
        %6978 = vmatpush.msra.mxu0 %v6955
        %6979 = vmatmul.f32.gmra.mxu0 %v5657
        %v6980 = vpop.f32.mrf.mxu0
        %v6981 = vadd.f32 0.0, %v6980
        %6982 = vmatmul.f32.gmra.mxu0 %v5660
        %v6983 = vpop.f32.mrf.mxu0
        %v6984 = vadd.f32 0.0, %v6983
        %6985 = vmatmul.f32.gmra.mxu0 %v5663
        %v6986 = vpop.f32.mrf.mxu0
        %v6987 = vadd.f32 0.0, %v6986
        %6988 = vmatmul.f32.gmra.mxu0 %v5666
        %v6989 = vpop.f32.mrf.mxu0
        %v6990 = vadd.f32 0.0, %v6989
        %6991 = vmatmul.f32.gmra.mxu0 %v5669
        %v6992 = vpop.f32.mrf.mxu0
        %v6993 = vadd.f32 0.0, %v6992
        %6994 = vmatmul.f32.gmra.mxu0 %v5672
        %v6995 = vpop.f32.mrf.mxu0
        %v6996 = vadd.f32 0.0, %v6995
        %6997 = vmatmul.f32.gmra.mxu0 %v5675
        %v6998 = vpop.f32.mrf.mxu0
        %v6999 = vadd.f32 0.0, %v6998
        %7000 = vmatmul.f32.gmra.mxu0 %v5678
        %v7001 = vpop.f32.mrf.mxu0
        %v7002 = vadd.f32 0.0, %v7001
        %7003 = vmatmul.f32.gmra.mxu0 %v5681
        %v7004 = vpop.f32.mrf.mxu0
        %v7005 = vadd.f32 0.0, %v7004
        %7006 = vmatmul.f32.gmra.mxu0 %v5684
        %v7007 = vpop.f32.mrf.mxu0
        %v7008 = vadd.f32 0.0, %v7007
        %7009 = vmatmul.f32.gmra.mxu0 %v5687
        %v7010 = vpop.f32.mrf.mxu0
        %v7011 = vadd.f32 0.0, %v7010
        %7012 = vmatmul.f32.gmra.mxu0 %v5690
        %v7013 = vpop.f32.mrf.mxu0
        %v7014 = vadd.f32 0.0, %v7013
        %7015 = vmatmul.f32.gmra.mxu0 %v5693
        %v7016 = vpop.f32.mrf.mxu0
        %v7017 = vadd.f32 0.0, %v7016
        %7018 = vmatmul.f32.gmra.mxu0 %v5696
        %v7019 = vpop.f32.mrf.mxu0
        %v7020 = vadd.f32 0.0, %v7019
        %7021 = vmatmul.f32.gmra.mxu0 %v5699
        %v7022 = vpop.f32.mrf.mxu0
        %v7023 = vadd.f32 0.0, %v7022
        %7024 = vmatmul.f32.gmra.mxu0 %v5702
        %v7025 = vpop.f32.mrf.mxu0
        %v7026 = vadd.f32 0.0, %v7025
        %7027 = vmatmul.f32.gmra.mxu0 %v5705
        %v7028 = vpop.f32.mrf.mxu0
        %v7029 = vadd.f32 0.0, %v7028
        %7030 = vmatmul.f32.gmra.mxu0 %v5708
        %v7031 = vpop.f32.mrf.mxu0
        %v7032 = vadd.f32 0.0, %v7031
        %7033 = vmatmul.f32.gmra.mxu0 %v5711
        %v7034 = vpop.f32.mrf.mxu0
        %v7035 = vadd.f32 0.0, %v7034
        %7036 = vmatmul.f32.gmra.mxu0 %v5714
        %v7037 = vpop.f32.mrf.mxu0
        %v7038 = vadd.f32 0.0, %v7037
        %7039 = vmatmul.f32.gmra.mxu0 %v5717
        %v7040 = vpop.f32.mrf.mxu0
        %v7041 = vadd.f32 0.0, %v7040
        %7042 = vmatmul.f32.gmra.mxu0 %v5720
        %v7043 = vpop.f32.mrf.mxu0
        %v7044 = vadd.f32 0.0, %v7043
        %7045 = vmatmul.f32.gmra.mxu0 %v5723
        %v7046 = vpop.f32.mrf.mxu0
        %v7047 = vadd.f32 0.0, %v7046
        %7048 = vmatmul.f32.gmra.mxu0 %v5726
        %v7049 = vpop.f32.mrf.mxu0
        %v7050 = vadd.f32 0.0, %v7049
        %7051 = vmatmul.f32.gmra.mxu0 %v5729
        %v7052 = vpop.f32.mrf.mxu0
        %v7053 = vadd.f32 0.0, %v7052
        %7054 = vmatmul.f32.gmra.mxu0 %v5732
        %v7055 = vpop.f32.mrf.mxu0
        %v7056 = vadd.f32 0.0, %v7055
        %7057 = vmatmul.f32.gmra.mxu0 %v5735
        %v7058 = vpop.f32.mrf.mxu0
        %v7059 = vadd.f32 0.0, %v7058
        %7060 = vmatmul.f32.gmra.mxu0 %v5738
        %v7061 = vpop.f32.mrf.mxu0
        %v7062 = vadd.f32 0.0, %v7061
        %7063 = vmatmul.f32.gmra.mxu0 %v6489
        %v7064 = vpop.f32.mrf.mxu0
        %v7065 = vadd.f32 0.0, %v7064
        %7066 = vmatmul.f32.gmra.mxu0 %v6492
        %v7067 = vpop.f32.mrf.mxu0
        %v7068 = vadd.f32 0.0, %v7067
        %7069 = vmatmul.f32.gmra.mxu0 %v6958
        %v7070 = vpop.f32.mrf.mxu0
        %v7071 = vadd.f32 0.0, %v7070
        %7072 = vmatmul.f32.gmra.mxu0 %v6961
        %v7073 = vpop.f32.mrf.mxu0
        %v7074 = vadd.f32 0.0, %v7073
        %7075 = vdwg.mxu0
        %v7076 = vadd.f32 %v6922, %v6981
        %v7077 = vadd.f32 %v6923, %v6984
        %v7078 = vadd.f32 %v6924, %v6987
        %v7079 = vadd.f32 %v6925, %v6990
        %v7080 = vadd.f32 %v6926, %v6993
        %v7081 = vadd.f32 %v6927, %v6996
        %v7082 = vadd.f32 %v6928, %v6999
        %v7083 = vadd.f32 %v6929, %v7002
        %v7084 = vadd.f32 %v6930, %v7005
        %v7085 = vadd.f32 %v6931, %v7008
        %v7086 = vadd.f32 %v6932, %v7011
        %v7087 = vadd.f32 %v6933, %v7014
        %v7088 = vadd.f32 %v6934, %v7017
        %v7089 = vadd.f32 %v6935, %v7020
        %v7090 = vadd.f32 %v6936, %v7023
        %v7091 = vadd.f32 %v6937, %v7026
        %v7092 = vadd.f32 %v6938, %v7029
        %v7093 = vadd.f32 %v6939, %v7032
        %v7094 = vadd.f32 %v6940, %v7035
        %v7095 = vadd.f32 %v6941, %v7038
        %v7096 = vadd.f32 %v6942, %v7041
        %v7097 = vadd.f32 %v6943, %v7044
        %v7098 = vadd.f32 %v6944, %v7047
        %v7099 = vadd.f32 %v6945, %v7050
        %v7100 = vadd.f32 %v6946, %v7053
        %v7101 = vadd.f32 %v6947, %v7056
        %v7102 = vadd.f32 %v6948, %v7059
        %v7103 = vadd.f32 %v6949, %v7062
        %v7104 = vadd.f32 %v6950, %v7065
        %v7105 = vadd.f32 %v6951, %v7068
        %v7106 = vadd.f32 %v6952, %v7071
        %v7107 = vadd.f32 %v6953, %v7074
        %v7109 = vrot.slane %v5634, 1
        %v7110 = vrot.slane %v5635, 1
        %v7111 = vsel %vm2456, %v7109, %v7110
        %v7112 = vrot.slane %v5636, 1
        %v7113 = vsel %vm2456, %v7110, %v7112
        %s7114 = scalar_lea.vmem [#allocation11], 112
        %v7115 = vld [vmem:[%s7114] sm:$0xff]
        %v7116 = vld [vmem:[%s7114 + $0x8] sm:$0xff]
        %v7117 = vsel %vm428, %v7111, 0
        %v7119 = vsel %vm428, %v7113, 0
        %7121 = vmatpush.msra.mxu0 0.0
        %7122 = vmatpush.msra.mxu0 0.0
        %7123 = vmatpush.msra.mxu0 0.0
        %7124 = vmatpush.msra.mxu0 0.0
        %7125 = vmatpush.msra.mxu0 0.0
        %7126 = vmatpush.msra.mxu0 0.0
        %7127 = vmatpush.msra.mxu0 0.0
        %7128 = vmatpush.msra.mxu0 0.0
        %7129 = vmatpush.msra.mxu0 0.0
        %7130 = vmatpush.msra.mxu0 0.0
        %7131 = vmatpush.msra.mxu0 0.0
        %7132 = vmatpush.msra.mxu0 0.0
        %7133 = vmatpush.msra.mxu0 0.0
        %7134 = vmatpush.msra.mxu0 0.0
        %7135 = vmatpush.msra.mxu0 %v7116
        %7136 = vmatpush.msra.mxu0 %v7115
        %7137 = vmatmul.f32.gmra.mxu0 %v5992
        %v7138 = vpop.f32.mrf.mxu0
        %v7139 = vadd.f32 0.0, %v7138
        %7140 = vmatmul.f32.gmra.mxu0 %v5994
        %v7141 = vpop.f32.mrf.mxu0
        %v7142 = vadd.f32 0.0, %v7141
        %7143 = vmatmul.f32.gmra.mxu0 %v5996
        %v7144 = vpop.f32.mrf.mxu0
        %v7145 = vadd.f32 0.0, %v7144
        %7146 = vmatmul.f32.gmra.mxu0 %v5998
        %v7147 = vpop.f32.mrf.mxu0
        %v7148 = vadd.f32 0.0, %v7147
        %7149 = vmatmul.f32.gmra.mxu0 %v6000
        %v7150 = vpop.f32.mrf.mxu0
        %v7151 = vadd.f32 0.0, %v7150
        %7152 = vmatmul.f32.gmra.mxu0 %v6002
        %v7153 = vpop.f32.mrf.mxu0
        %v7154 = vadd.f32 0.0, %v7153
        %7155 = vmatmul.f32.gmra.mxu0 %v6004
        %v7156 = vpop.f32.mrf.mxu0
        %v7157 = vadd.f32 0.0, %v7156
        %7158 = vmatmul.f32.gmra.mxu0 %v6006
        %v7159 = vpop.f32.mrf.mxu0
        %v7160 = vadd.f32 0.0, %v7159
        %7161 = vmatmul.f32.gmra.mxu0 %v6008
        %v7162 = vpop.f32.mrf.mxu0
        %v7163 = vadd.f32 0.0, %v7162
        %7164 = vmatmul.f32.gmra.mxu0 %v6010
        %v7165 = vpop.f32.mrf.mxu0
        %v7166 = vadd.f32 0.0, %v7165
        %7167 = vmatmul.f32.gmra.mxu0 %v6012
        %v7168 = vpop.f32.mrf.mxu0
        %v7169 = vadd.f32 0.0, %v7168
        %7170 = vmatmul.f32.gmra.mxu0 %v6014
        %v7171 = vpop.f32.mrf.mxu0
        %v7172 = vadd.f32 0.0, %v7171
        %7173 = vmatmul.f32.gmra.mxu0 %v6016
        %v7174 = vpop.f32.mrf.mxu0
        %v7175 = vadd.f32 0.0, %v7174
        %7176 = vmatmul.f32.gmra.mxu0 %v6018
        %v7177 = vpop.f32.mrf.mxu0
        %v7178 = vadd.f32 0.0, %v7177
        %7179 = vmatmul.f32.gmra.mxu0 %v6020
        %v7180 = vpop.f32.mrf.mxu0
        %v7181 = vadd.f32 0.0, %v7180
        %7182 = vmatmul.f32.gmra.mxu0 %v6022
        %v7183 = vpop.f32.mrf.mxu0
        %v7184 = vadd.f32 0.0, %v7183
        %7185 = vmatmul.f32.gmra.mxu0 %v6024
        %v7186 = vpop.f32.mrf.mxu0
        %v7187 = vadd.f32 0.0, %v7186
        %7188 = vmatmul.f32.gmra.mxu0 %v6026
        %v7189 = vpop.f32.mrf.mxu0
        %v7190 = vadd.f32 0.0, %v7189
        %7191 = vmatmul.f32.gmra.mxu0 %v6028
        %v7192 = vpop.f32.mrf.mxu0
        %v7193 = vadd.f32 0.0, %v7192
        %7194 = vmatmul.f32.gmra.mxu0 %v6030
        %v7195 = vpop.f32.mrf.mxu0
        %v7196 = vadd.f32 0.0, %v7195
        %7197 = vmatmul.f32.gmra.mxu0 %v6032
        %v7198 = vpop.f32.mrf.mxu0
        %v7199 = vadd.f32 0.0, %v7198
        %7200 = vmatmul.f32.gmra.mxu0 %v6034
        %v7201 = vpop.f32.mrf.mxu0
        %v7202 = vadd.f32 0.0, %v7201
        %7203 = vmatmul.f32.gmra.mxu0 %v6036
        %v7204 = vpop.f32.mrf.mxu0
        %v7205 = vadd.f32 0.0, %v7204
        %7206 = vmatmul.f32.gmra.mxu0 %v6038
        %v7207 = vpop.f32.mrf.mxu0
        %v7208 = vadd.f32 0.0, %v7207
        %7209 = vmatmul.f32.gmra.mxu0 %v6040
        %v7210 = vpop.f32.mrf.mxu0
        %v7211 = vadd.f32 0.0, %v7210
        %7212 = vmatmul.f32.gmra.mxu0 %v6042
        %v7213 = vpop.f32.mrf.mxu0
        %v7214 = vadd.f32 0.0, %v7213
        %7215 = vmatmul.f32.gmra.mxu0 %v6044
        %v7216 = vpop.f32.mrf.mxu0
        %v7217 = vadd.f32 0.0, %v7216
        %7218 = vmatmul.f32.gmra.mxu0 %v6046
        %v7219 = vpop.f32.mrf.mxu0
        %v7220 = vadd.f32 0.0, %v7219
        %7221 = vmatmul.f32.gmra.mxu0 %v6648
        %v7222 = vpop.f32.mrf.mxu0
        %v7223 = vadd.f32 0.0, %v7222
        %7224 = vmatmul.f32.gmra.mxu0 %v6650
        %v7225 = vpop.f32.mrf.mxu0
        %v7226 = vadd.f32 0.0, %v7225
        %7227 = vmatmul.f32.gmra.mxu0 %v7117
        %v7228 = vpop.f32.mrf.mxu0
        %v7229 = vadd.f32 0.0, %v7228
        %7230 = vmatmul.f32.gmra.mxu0 %v7119
        %v7231 = vpop.f32.mrf.mxu0
        %v7232 = vadd.f32 0.0, %v7231
        %7233 = vdwg.mxu0
        %v7234 = vadd.f32 %v7076, %v7139
        %v7235 = vadd.f32 %v7077, %v7142
        %v7236 = vadd.f32 %v7078, %v7145
        %v7237 = vadd.f32 %v7079, %v7148
        %v7238 = vadd.f32 %v7080, %v7151
        %v7239 = vadd.f32 %v7081, %v7154
        %v7240 = vadd.f32 %v7082, %v7157
        %v7241 = vadd.f32 %v7083, %v7160
        %v7242 = vadd.f32 %v7084, %v7163
        %v7243 = vadd.f32 %v7085, %v7166
        %v7244 = vadd.f32 %v7086, %v7169
        %v7245 = vadd.f32 %v7087, %v7172
        %v7246 = vadd.f32 %v7088, %v7175
        %v7247 = vadd.f32 %v7089, %v7178
        %v7248 = vadd.f32 %v7090, %v7181
        %v7249 = vadd.f32 %v7091, %v7184
        %v7250 = vadd.f32 %v7092, %v7187
        %v7251 = vadd.f32 %v7093, %v7190
        %v7252 = vadd.f32 %v7094, %v7193
        %v7253 = vadd.f32 %v7095, %v7196
        %v7254 = vadd.f32 %v7096, %v7199
        %v7255 = vadd.f32 %v7097, %v7202
        %v7256 = vadd.f32 %v7098, %v7205
        %v7257 = vadd.f32 %v7099, %v7208
        %v7258 = vadd.f32 %v7100, %v7211
        %v7259 = vadd.f32 %v7101, %v7214
        %v7260 = vadd.f32 %v7102, %v7217
        %v7261 = vadd.f32 %v7103, %v7220
        %v7262 = vadd.f32 %v7104, %v7223
        %v7263 = vadd.f32 %v7105, %v7226
        %v7264 = vadd.f32 %v7106, %v7229
        %v7265 = vadd.f32 %v7107, %v7232
        %v7266 = vrot.slane %v5634, 2
        %v7267 = vrot.slane %v5635, 2
        %v7268 = vsel %vm3057, %v7266, %v7267
        %v7269 = vrot.slane %v5636, 2
        %v7270 = vsel %vm3057, %v7267, %v7269
        %s7271 = scalar_lea.vmem [#allocation11], 128
        %v7272 = vld [vmem:[%s7271] sm:$0xff]
        %v7273 = vld [vmem:[%s7271 + $0x8] sm:$0xff]
        %v7274 = vsel %vm428, %v7268, 0
        %v7276 = vsel %vm428, %v7270, 0
        %7278 = vmatpush.msra.mxu0 0.0
        %7279 = vmatpush.msra.mxu0 0.0
        %7280 = vmatpush.msra.mxu0 0.0
        %7281 = vmatpush.msra.mxu0 0.0
        %7282 = vmatpush.msra.mxu0 0.0
        %7283 = vmatpush.msra.mxu0 0.0
        %7284 = vmatpush.msra.mxu0 0.0
        %7285 = vmatpush.msra.mxu0 0.0
        %7286 = vmatpush.msra.mxu0 0.0
        %7287 = vmatpush.msra.mxu0 0.0
        %7288 = vmatpush.msra.mxu0 0.0
        %7289 = vmatpush.msra.mxu0 0.0
        %7290 = vmatpush.msra.mxu0 0.0
        %7291 = vmatpush.msra.mxu0 0.0
        %7292 = vmatpush.msra.mxu0 %v7273
        %7293 = vmatpush.msra.mxu0 %v7272
        %7294 = vmatmul.f32.gmra.mxu0 %v6284
        %v7295 = vpop.f32.mrf.mxu0
        %v7296 = vadd.f32 0.0, %v7295
        %7297 = vmatmul.f32.gmra.mxu0 %v6286
        %v7298 = vpop.f32.mrf.mxu0
        %v7299 = vadd.f32 0.0, %v7298
        %7300 = vmatmul.f32.gmra.mxu0 %v6288
        %v7301 = vpop.f32.mrf.mxu0
        %v7302 = vadd.f32 0.0, %v7301
        %7303 = vmatmul.f32.gmra.mxu0 %v6290
        %v7304 = vpop.f32.mrf.mxu0
        %v7305 = vadd.f32 0.0, %v7304
        %7306 = vmatmul.f32.gmra.mxu0 %v6292
        %v7307 = vpop.f32.mrf.mxu0
        %v7308 = vadd.f32 0.0, %v7307
        %7309 = vmatmul.f32.gmra.mxu0 %v6294
        %v7310 = vpop.f32.mrf.mxu0
        %v7311 = vadd.f32 0.0, %v7310
        %7312 = vmatmul.f32.gmra.mxu0 %v6296
        %v7313 = vpop.f32.mrf.mxu0
        %v7314 = vadd.f32 0.0, %v7313
        %7315 = vmatmul.f32.gmra.mxu0 %v6298
        %v7316 = vpop.f32.mrf.mxu0
        %v7317 = vadd.f32 0.0, %v7316
        %7318 = vmatmul.f32.gmra.mxu0 %v6300
        %v7319 = vpop.f32.mrf.mxu0
        %v7320 = vadd.f32 0.0, %v7319
        %7321 = vmatmul.f32.gmra.mxu0 %v6302
        %v7322 = vpop.f32.mrf.mxu0
        %v7323 = vadd.f32 0.0, %v7322
        %7324 = vmatmul.f32.gmra.mxu0 %v6304
        %v7325 = vpop.f32.mrf.mxu0
        %v7326 = vadd.f32 0.0, %v7325
        %7327 = vmatmul.f32.gmra.mxu0 %v6306
        %v7328 = vpop.f32.mrf.mxu0
        %v7329 = vadd.f32 0.0, %v7328
        %7330 = vmatmul.f32.gmra.mxu0 %v6308
        %v7331 = vpop.f32.mrf.mxu0
        %v7332 = vadd.f32 0.0, %v7331
        %7333 = vmatmul.f32.gmra.mxu0 %v6310
        %v7334 = vpop.f32.mrf.mxu0
        %v7335 = vadd.f32 0.0, %v7334
        %7336 = vmatmul.f32.gmra.mxu0 %v6312
        %v7337 = vpop.f32.mrf.mxu0
        %v7338 = vadd.f32 0.0, %v7337
        %7339 = vmatmul.f32.gmra.mxu0 %v6314
        %v7340 = vpop.f32.mrf.mxu0
        %v7341 = vadd.f32 0.0, %v7340
        %7342 = vmatmul.f32.gmra.mxu0 %v6316
        %v7343 = vpop.f32.mrf.mxu0
        %v7344 = vadd.f32 0.0, %v7343
        %7345 = vmatmul.f32.gmra.mxu0 %v6318
        %v7346 = vpop.f32.mrf.mxu0
        %v7347 = vadd.f32 0.0, %v7346
        %7348 = vmatmul.f32.gmra.mxu0 %v6320
        %v7349 = vpop.f32.mrf.mxu0
        %v7350 = vadd.f32 0.0, %v7349
        %7351 = vmatmul.f32.gmra.mxu0 %v6322
        %v7352 = vpop.f32.mrf.mxu0
        %v7353 = vadd.f32 0.0, %v7352
        %7354 = vmatmul.f32.gmra.mxu0 %v6324
        %v7355 = vpop.f32.mrf.mxu0
        %v7356 = vadd.f32 0.0, %v7355
        %7357 = vmatmul.f32.gmra.mxu0 %v6326
        %v7358 = vpop.f32.mrf.mxu0
        %v7359 = vadd.f32 0.0, %v7358
        %7360 = vmatmul.f32.gmra.mxu0 %v6328
        %v7361 = vpop.f32.mrf.mxu0
        %v7362 = vadd.f32 0.0, %v7361
        %7363 = vmatmul.f32.gmra.mxu0 %v6330
        %v7364 = vpop.f32.mrf.mxu0
        %v7365 = vadd.f32 0.0, %v7364
        %7366 = vmatmul.f32.gmra.mxu0 %v6332
        %v7367 = vpop.f32.mrf.mxu0
        %v7368 = vadd.f32 0.0, %v7367
        %7369 = vmatmul.f32.gmra.mxu0 %v6334
        %v7370 = vpop.f32.mrf.mxu0
        %v7371 = vadd.f32 0.0, %v7370
        %7372 = vmatmul.f32.gmra.mxu0 %v6336
        %v7373 = vpop.f32.mrf.mxu0
        %v7374 = vadd.f32 0.0, %v7373
        %7375 = vmatmul.f32.gmra.mxu0 %v6338
        %v7376 = vpop.f32.mrf.mxu0
        %v7377 = vadd.f32 0.0, %v7376
        %7378 = vmatmul.f32.gmra.mxu0 %v6805
        %v7379 = vpop.f32.mrf.mxu0
        %v7380 = vadd.f32 0.0, %v7379
        %7381 = vmatmul.f32.gmra.mxu0 %v6807
        %v7382 = vpop.f32.mrf.mxu0
        %v7383 = vadd.f32 0.0, %v7382
        %7384 = vmatmul.f32.gmra.mxu0 %v7274
        %v7385 = vpop.f32.mrf.mxu0
        %v7386 = vadd.f32 0.0, %v7385
        %7387 = vmatmul.f32.gmra.mxu0 %v7276
        %v7388 = vpop.f32.mrf.mxu0
        %v7389 = vadd.f32 0.0, %v7388
        %7390 = vdwg.mxu0
        %v7391 = vadd.f32 %v7234, %v7296
        %v7392 = vadd.f32 %v7235, %v7299
        %v7393 = vadd.f32 %v7236, %v7302
        %v7394 = vadd.f32 %v7237, %v7305
        %v7395 = vadd.f32 %v7238, %v7308
        %v7396 = vadd.f32 %v7239, %v7311
        %v7397 = vadd.f32 %v7240, %v7314
        %v7398 = vadd.f32 %v7241, %v7317
        %v7399 = vadd.f32 %v7242, %v7320
        %v7400 = vadd.f32 %v7243, %v7323
        %v7401 = vadd.f32 %v7244, %v7326
        %v7402 = vadd.f32 %v7245, %v7329
        %v7403 = vadd.f32 %v7246, %v7332
        %v7404 = vadd.f32 %v7247, %v7335
        %v7405 = vadd.f32 %v7248, %v7338
        %v7406 = vadd.f32 %v7249, %v7341
        %v7407 = vadd.f32 %v7250, %v7344
        %v7408 = vadd.f32 %v7251, %v7347
        %v7409 = vadd.f32 %v7252, %v7350
        %v7410 = vadd.f32 %v7253, %v7353
        %v7411 = vadd.f32 %v7254, %v7356
        %v7412 = vadd.f32 %v7255, %v7359
        %v7413 = vadd.f32 %v7256, %v7362
        %v7414 = vadd.f32 %v7257, %v7365
        %v7415 = vadd.f32 %v7258, %v7368
        %v7416 = vadd.f32 %v7259, %v7371
        %v7417 = vadd.f32 %v7260, %v7374
        %v7418 = vadd.f32 %v7261, %v7377
        %v7419 = vadd.f32 %v7262, %v7380
        %v7420 = vadd.f32 %v7263, %v7383
        %v7421 = vadd.f32 %v7264, %v7386
        %v7422 = vadd.f32 %v7265, %v7389
        %7423 = vst.msk [vmem:[%s427] sm:$0xff] %vm428, %v7391
        %7424 = vst.msk [vmem:[%s427 + $0x8] sm:$0xff] %vm428, %v7392
        %7425 = vst.msk [vmem:[%s427 + $0x10] sm:$0xff] %vm428, %v7393
        %7426 = vst.msk [vmem:[%s427 + $0x18] sm:$0xff] %vm428, %v7394
        %7427 = vst.msk [vmem:[%s427 + $0x20] sm:$0xff] %vm428, %v7395
        %7428 = vst.msk [vmem:[%s427 + $0x28] sm:$0xff] %vm428, %v7396
        %7429 = vst.msk [vmem:[%s427 + $0x30] sm:$0xff] %vm428, %v7397
        %7430 = vst.msk [vmem:[%s427 + $0x38] sm:$0xff] %vm428, %v7398
        %7431 = vst.msk [vmem:[%s427 + $0x40] sm:$0xff] %vm428, %v7399
        %7432 = vst.msk [vmem:[%s427 + $0x48] sm:$0xff] %vm428, %v7400
        %7433 = vst.msk [vmem:[%s427 + $0x50] sm:$0xff] %vm428, %v7401
        %7434 = vst.msk [vmem:[%s427 + $0x58] sm:$0xff] %vm428, %v7402
        %7435 = vst.msk [vmem:[%s427 + $0x60] sm:$0xff] %vm428, %v7403
        %7436 = vst.msk [vmem:[%s427 + $0x68] sm:$0xff] %vm428, %v7404
        %7437 = vst.msk [vmem:[%s427 + $0x70] sm:$0xff] %vm428, %v7405
        %7438 = vst.msk [vmem:[%s427 + $0x78] sm:$0xff] %vm428, %v7406
        %7439 = vst.msk [vmem:[%s427 + $0x80] sm:$0xff] %vm428, %v7407
        %7440 = vst.msk [vmem:[%s427 + $0x88] sm:$0xff] %vm428, %v7408
        %7441 = vst.msk [vmem:[%s427 + $0x90] sm:$0xff] %vm428, %v7409
        %7442 = vst.msk [vmem:[%s427 + $0x98] sm:$0xff] %vm428, %v7410
        %7443 = vst.msk [vmem:[%s427 + $0xa0] sm:$0xff] %vm428, %v7411
        %7444 = vst.msk [vmem:[%s427 + $0xa8] sm:$0xff] %vm428, %v7412
        %7445 = vst.msk [vmem:[%s427 + $0xb0] sm:$0xff] %vm428, %v7413
        %7446 = vst.msk [vmem:[%s427 + $0xb8] sm:$0xff] %vm428, %v7414
        %7447 = vst.msk [vmem:[%s427 + $0xc0] sm:$0xff] %vm428, %v7415
        %7448 = vst.msk [vmem:[%s427 + $0xc8] sm:$0xff] %vm428, %v7416
        %7449 = vst.msk [vmem:[%s427 + $0xd0] sm:$0xff] %vm428, %v7417
        %7450 = vst.msk [vmem:[%s427 + $0xd8] sm:$0xff] %vm428, %v7418
        %7451 = vst.msk [vmem:[%s427 + $0xe0] sm:$0xff] %vm428, %v7419
        %7452 = vst.msk [vmem:[%s427 + $0xe8] sm:$0xff] %vm428, %v7420
        %7453 = vst.msk [vmem:[%s427 + $0xf0] sm:$0xff] %vm428, %v7421
        %7454 = vst.msk [vmem:[%s427 + $0xf8] sm:$0xff] %vm428, %v7422
        %s7455 = sand.u32 %s237, 1
        %s7456 = scalar_lea.sflag [#allocation7], %s7455
        %s7457 = sand.u32 %s237, 1
        %s7458 = smul.addr %s7457, 256
        %s7459 = scalar_lea.vmem [#allocation13], %s7458
        // Predicated region
        $region73: #{tpu_custom_call.1} parent=55 // pred_check
          %p7460 = pneg %p247
        $region74: #{tpu_custom_call.1} parent=55 // pred_check_branch
          %7462 = sbr.rel (%p7460) target = $region76
        $region75: #{tpu_custom_call.1} parent=55 // pred_region
          %7464 = vsyncadd %s7456, 0
          %s7465 = smul.addr %s30, 32
          %s7466 = smul.addr %s7465, 8
          %s7467 = scalar_lea.hbm %s9, %s7466
          %s7468 = sshll.u32 %s7459, 4
          %s7469 = int_to_ptr.vmem [resolvable:$true] %s7468
          %s7470 = sshll.u32 %s7467, 4
          %s7471 = int_to_ptr.hbm [resolvable:$true] %s7470
          %7476 = dma.vmem_to_hbm [thread:$0]  %s7469, 4096, %s7471, %s7456, 128, 128, 8
        $region76: #{tpu_custom_call.1} parent=55 // pred_fallthru
          _
      $region56: #{tpu_custom_call.1} parent=5 // pred_fallthru
        _
      %p7477 = scmp.le.s32.totalorder 2, %s25
      // Predicated region
      $region77: #{tpu_custom_call.1} parent=5 // pred_check
        %p7478 = pneg %p7477
      $region78: #{tpu_custom_call.1} parent=5 // pred_check_branch
        %7480 = sbr.rel (%p7478) target = $region80
      $region79: #{tpu_custom_call.1} parent=5 // pred_region
        %s7481 = ssub.s32 %s25, 2
        // Predicated region
        $region81: #{tpu_custom_call.1} parent=79 // pred_check
          %p7482 = pneg %p253
        $region82: #{tpu_custom_call.1} parent=79 // pred_check_branch
          %7484 = sbr.rel (%p7482) target = $region84
        $region83: #{tpu_custom_call.1} parent=79 // pred_region
          %s7485 = sand.u32 %s238, 1
          %s7486 = scalar_lea.sflag [#allocation7], %s7485
          %s7487 = sand.u32 %s238, 1
          %s7488 = smul.addr %s7487, 256
          %s7489 = scalar_lea.vmem [#allocation13], %s7488
          %7491 = dma.done %s7486, 4096
        $region84: #{tpu_custom_call.1} parent=79 // pred_fallthru
          _
      $region80: #{tpu_custom_call.1} parent=5 // pred_fallthru
        _
    $region6: #{tpu_custom_call.1} parent=1 // loop_footer
      %s29 = sadd.s32 1, %s25
    $region7: #{tpu_custom_call.1} parent=1 // loop_footer_branch
      %24 = sbr.rel target = $region3
    $region8: #{tpu_custom_call.1} parent=1 // loop_exit
      _
    %7492 = vsyncpa [#allocation6], 1
    %s7493 = scalar_lea.sflag [#allocation6], 1
    %7494 = vsyncpa %s7493, 1
    %7495 = vsyncpa [#allocation9], 1
    %s7496 = scalar_lea.sflag [#allocation9], 1
    %7497 = vsyncpa %s7496, 1
    %7498 = vsyncpa [#allocation12], 1
    %7499 = vsyncpa [#allocation7], 1
    %s7500 = scalar_lea.sflag [#allocation7], 1
    %7501 = vsyncpa %s7500, 1

</llo_original>
